<compile_context>
chip_gen: v7x
topology: tpu7x:2x2x1
jax: 0.10.0
libtpu: 0.0.40
codegen_flags: <defaults>
</compile_context>

<pallas_src>
import jax
import jax.numpy as jnp
from jax import lax
from jax.experimental import pallas as pl
from jax.experimental.pallas import tpu as pltpu

FILTER_SIZES = (3, 4, 5)
NUM_FILTERS = len(FILTER_SIZES)
TOTAL_TAPS = sum(FILTER_SIZES)       # 12
NUM_CLASSES = 5


def cnn_text_kernel(x_ref, w_ref, cb_ref, fcw_ref, fcb_ref, out_ref):
    # x_ref   : (block_b, T, C)   NWC batch block (lane-dense on C), bf16/f32
    # w_ref   : (C, 12)           all conv taps, filter-major / tap-minor
    # cb_ref  : (1, 3)            conv biases (f32)
    # fcw_ref : (3, 5)            fc weight transposed for right-multiply (f32)
    # fcb_ref : (1, 5)            fc bias (f32)
    # out_ref : (block_b, 5)
    block_b, seq_len, c_dim = x_ref.shape

    # One MXU contraction over C for the entire block: every conv tap at every time step.
    x2 = x_ref[...].reshape(block_b * seq_len, c_dim)                 # merge leading dims
    y = jnp.dot(x2, w_ref[...], preferred_element_type=jnp.float32)   # (block_b*T, 12)
    y = y.reshape(block_b, seq_len, TOTAL_TAPS)                       # time on sublane axis

    feats = []
    off = 0
    for fs in FILTER_SIZES:
        tout = seq_len - fs + 1                                       # valid conv positions
        acc = y[:, 0:tout, off:off + 1]                               # tap k = 0
        for k in range(1, fs):                                        # sublane(row) shifted adds
            acc = acc + y[:, k:k + tout, off + k:off + k + 1]
        feats.append(jnp.max(acc, axis=1))                            # max_pool1d -> (block_b, 1)
        off += fs

    feat = jnp.concatenate(feats, axis=1)                             # (block_b, 3)
    # relu(conv + bias) then max  ==  relu(max(conv) + bias)  (ReLU monotone, bias per-filter)
    feat = jnp.maximum(feat + cb_ref[...], 0.0)
    # TODO(synk): training-mode dropout (pltpu.prng_*) not implemented; eval mode == identity.
    logits = jnp.dot(feat, fcw_ref[...], preferred_element_type=jnp.float32) + fcb_ref[...]
    out_ref[...] = logits.astype(out_ref.dtype)


def cnn_forward(x_ncw, params, *, block_b=None, compute_dtype=jnp.bfloat16):
    """x_ncw: (B, C, T) float32, exactly like the PyTorch module input (NCW)."""
    conv_ws, conv_b, fc_w, fc_b = params
    B, C, T = x_ncw.shape
    assert T >= max(FILTER_SIZES), "sequence shorter than the largest conv filter"

    # Lane-dense NWC layout (embedding dim on lanes, time on sublanes) + bf16 for HBM bytes.
    x_nwc = jnp.transpose(x_ncw, (0, 2, 1)).astype(compute_dtype)           # (B, T, C)
    wall = jnp.concatenate(list(conv_ws), axis=1).astype(compute_dtype)     # (C, 12)
    cb = conv_b.reshape(1, NUM_FILTERS).astype(jnp.float32)
    fcw_t = fc_w.T.astype(jnp.float32)                                      # (3, 5)
    fcb = fc_b.reshape(1, NUM_CLASSES).astype(jnp.float32)

    # Generation-dependent VMEM budget: 128 MiB on v5e/v6e, 64 MiB per TC on v7x.
    vmem_cap = 64 << 20
    try:
        vmem_cap = int(pltpu.get_tpu_info().vmem_capacity_bytes)
    except Exception:
        pass
    vmem_limit = int(min(vmem_cap * 3 // 4, 112 << 20))                     # ~48 MiB v7x, ~96 MiB v6e

    if block_b is None:
        in_size = jnp.dtype(compute_dtype).itemsize
        # double-buffered x block + possible in-kernel copy + f32 tap responses, per batch row
        per_row = 3 * T * C * in_size + 2 * T * TOTAL_TAPS * 4
        block_b = int(vmem_limit // per_row)
        block_b = min(block_b, 1024)                  # diminishing returns past ~512-1024 rows
    block_b = max(8, (block_b // 8) * 8)              # sublane-aligned output rows
    block_b = min(block_b, (B + 7) // 8 * 8)          # don't tile past the (rounded) batch

    b_pad = (B + block_b - 1) // block_b * block_b
    if b_pad != B:
        # TODO(synk): for very large ragged batches, mask the final block instead of padding.
        x_nwc = jnp.pad(x_nwc, ((0, b_pad - B), (0, 0), (0, 0)))
    grid = (b_pad // block_b,)

    out = pl.pallas_call(
        cnn_text_kernel,
        out_shape=jax.ShapeDtypeStruct((b_pad, NUM_CLASSES), jnp.float32),
        grid=grid,
        in_specs=[
            pl.BlockSpec((block_b, T, C), lambda b: (b, 0, 0)),          # x (NWC batch block)
            pl.BlockSpec((C, TOTAL_TAPS), lambda b: (0, 0)),             # packed conv taps
            pl.BlockSpec((1, NUM_FILTERS), lambda b: (0, 0)),            # conv biases
            pl.BlockSpec((NUM_FILTERS, NUM_CLASSES), lambda b: (0, 0)),  # fc weight^T
            pl.BlockSpec((1, NUM_CLASSES), lambda b: (0, 0)),            # fc bias
        ],
        out_specs=pl.BlockSpec((block_b, NUM_CLASSES), lambda b: (b, 0)),
        compiler_params=pltpu.CompilerParams(
            dimension_semantics=("parallel",),
            vmem_limit_bytes=vmem_limit,
        ),
    )(x_nwc, wall, cb, fcw_t, fcb)
    return out[:B]


def ref_forward(x_ncw, params):
    """Pure-JAX f32 reference mirroring the PyTorch forward (eval mode)."""
    conv_ws, conv_b, fc_w, fc_b = params
    B, C, T = x_ncw.shape
    feats = []
    for i, w in enumerate(conv_ws):
        fs = w.shape[1]
        tout = T - fs + 1
        conv = jnp.zeros((B, tout), jnp.float32)
        for k in range(fs):
            conv = conv + jnp.einsum('bct,c->bt', x_ncw[:, :, k:k + tout], w[:, k],
                                     precision=lax.Precision.HIGHEST)
        conv = jax.nn.relu(conv + conv_b[i])               # relu(conv + bias), then max-pool
        feats.append(jnp.max(conv, axis=1, keepdims=True))
    feat = jnp.concatenate(feats, axis=1)                  # (B, 3)
    return jnp.dot(feat, fc_w.T, precision=lax.Precision.HIGHEST) + fc_b


if __name__ == "__main__":
    key = jax.random.PRNGKey(0)
    ks = jax.random.split(key, 7)

    batch = 100         # ragged w.r.t. the tiled call below (exercises padding)
    embed_dim = 128     # word_embedding_size (small for the test; module default is 300)
    seq_len = 16

    x = jax.random.normal(ks[0], (batch, embed_dim, seq_len), jnp.float32)   # NCW like PyTorch
    conv_ws = tuple(jax.random.normal(k, (embed_dim, fs), jnp.float32) * 0.1
                    for k, fs in zip(ks[1:4], FILTER_SIZES))
    conv_b = jax.random.normal(ks[4], (NUM_FILTERS,), jnp.float32) * 0.1
    fc_w = jax.random.normal(ks[5], (NUM_CLASSES, NUM_FILTERS), jnp.float32) * 0.1
    fc_b = jax.random.normal(ks[6], (NUM_CLASSES,), jnp.float32) * 0.1
    params = (conv_ws, conv_b, fc_w, fc_b)

    ref = jax.block_until_ready(ref_forward(x, params))

    out_auto = jax.block_until_ready(cnn_forward(x, params))                # auto block_b, 1 step
    out_tiled = jax.block_until_ready(cnn_forward(x, params, block_b=32))   # 4 grid steps + pad

    assert out_auto.shape == (batch, NUM_CLASSES)
    # bf16 inputs with f32 accumulation -> loosened tolerance vs the f32 reference.
    assert jnp.allclose(out_auto, ref, atol=3e-2, rtol=3e-2), (out_auto, ref)
    assert jnp.allclose(out_tiled, ref, atol=3e-2, rtol=3e-2), (out_tiled, ref)
    print("KERNEL_OK")
</pallas_src>

<mosaic_0001>
module attributes {stable_mosaic.version = 11 : i64} {
  func.func @cnn_text_kernel(%arg0: i32, %arg1: memref<104x16x128xbf16, #tpu.memory_space<vmem>>, %arg2: memref<128x12xbf16, #tpu.memory_space<vmem>>, %arg3: memref<1x3xf32, #tpu.memory_space<vmem>>, %arg4: memref<3x5xf32, #tpu.memory_space<vmem>>, %arg5: memref<1x5xf32, #tpu.memory_space<vmem>>, %arg6: memref<104x5xf32, #tpu.memory_space<vmem>>) attributes {dimension_semantics = [#tpu.dimension_semantics<parallel>], iteration_bounds = array<i64: 1>, scalar_prefetch = 0 : i64, scratch_operands = 0 : i64, tpu.core_type = #tpu.core_type<tc>, window_params = [{transform_indices = @transform_0, window_bounds = array<i64: 104, 16, 128>}, {pipeline_mode = #tpu.pipeline_mode<synchronous>, transform_indices = @transform_1, window_bounds = array<i64: 128, 12>}, {pipeline_mode = #tpu.pipeline_mode<synchronous>, transform_indices = @transform_2, window_bounds = array<i64: 1, 3>}, {pipeline_mode = #tpu.pipeline_mode<synchronous>, transform_indices = @transform_3, window_bounds = array<i64: 3, 5>}, {pipeline_mode = #tpu.pipeline_mode<synchronous>, transform_indices = @transform_4, window_bounds = array<i64: 1, 5>}, {transform_indices = @transform_5, window_bounds = array<i64: 104, 5>}]} {
    %c0 = arith.constant 0 : index
    %c0_0 = arith.constant 0 : index
    %c0_1 = arith.constant 0 : index
    %0 = vector.load %arg1[%c0, %c0_0, %c0_1] : memref<104x16x128xbf16, #tpu.memory_space<vmem>>, vector<104x16x128xbf16>
    %1 = vector.shape_cast %0 : vector<104x16x128xbf16> to vector<1664x128xbf16>
    %c0_2 = arith.constant 0 : index
    %c0_3 = arith.constant 0 : index
    %2 = vector.load %arg2[%c0_2, %c0_3] : memref<128x12xbf16, #tpu.memory_space<vmem>>, vector<128x12xbf16>
    %cst = arith.constant dense<0.000000e+00> : vector<1664x12xf32>
    %3 = tpu.matmul %1, %2, %cst {dimension_numbers = #tpu.dot_dimension_numbers<[1], [0], [0], [1], [0, 0, 1, 1], [], []>} : vector<1664x128xbf16>, vector<128x12xbf16>, vector<1664x12xf32> -> vector<1664x12xf32>
    %4 = vector.shape_cast %3 : vector<1664x12xf32> to vector<104x16x12xf32>
    %5 = vector.extract_strided_slice %4 {offsets = [0, 0, 0], sizes = [104, 14, 1], strides = [1, 1, 1]} : vector<104x16x12xf32> to vector<104x14x1xf32>
    %6 = vector.extract_strided_slice %4 {offsets = [0, 1, 1], sizes = [104, 14, 1], strides = [1, 1, 1]} : vector<104x16x12xf32> to vector<104x14x1xf32>
    %7 = arith.addf %5, %6 : vector<104x14x1xf32>
    %8 = vector.extract_strided_slice %4 {offsets = [0, 2, 2], sizes = [104, 14, 1], strides = [1, 1, 1]} : vector<104x16x12xf32> to vector<104x14x1xf32>
    %9 = arith.addf %7, %8 : vector<104x14x1xf32>
    %cst_4 = arith.constant dense<0xFF800000> : vector<104x1xf32>
    %10 = vector.multi_reduction <maximumf>, %9, %cst_4 [1] : vector<104x14x1xf32> to vector<104x1xf32>
    %11 = vector.extract_strided_slice %4 {offsets = [0, 0, 3], sizes = [104, 13, 1], strides = [1, 1, 1]} : vector<104x16x12xf32> to vector<104x13x1xf32>
    %12 = vector.extract_strided_slice %4 {offsets = [0, 1, 4], sizes = [104, 13, 1], strides = [1, 1, 1]} : vector<104x16x12xf32> to vector<104x13x1xf32>
    %13 = arith.addf %11, %12 : vector<104x13x1xf32>
    %14 = vector.extract_strided_slice %4 {offsets = [0, 2, 5], sizes = [104, 13, 1], strides = [1, 1, 1]} : vector<104x16x12xf32> to vector<104x13x1xf32>
    %15 = arith.addf %13, %14 : vector<104x13x1xf32>
    %16 = vector.extract_strided_slice %4 {offsets = [0, 3, 6], sizes = [104, 13, 1], strides = [1, 1, 1]} : vector<104x16x12xf32> to vector<104x13x1xf32>
    %17 = arith.addf %15, %16 : vector<104x13x1xf32>
    %cst_5 = arith.constant dense<0xFF800000> : vector<104x1xf32>
    %18 = vector.multi_reduction <maximumf>, %17, %cst_5 [1] : vector<104x13x1xf32> to vector<104x1xf32>
    %19 = vector.extract_strided_slice %4 {offsets = [0, 0, 7], sizes = [104, 12, 1], strides = [1, 1, 1]} : vector<104x16x12xf32> to vector<104x12x1xf32>
    %20 = vector.extract_strided_slice %4 {offsets = [0, 1, 8], sizes = [104, 12, 1], strides = [1, 1, 1]} : vector<104x16x12xf32> to vector<104x12x1xf32>
    %21 = arith.addf %19, %20 : vector<104x12x1xf32>
    %22 = vector.extract_strided_slice %4 {offsets = [0, 2, 9], sizes = [104, 12, 1], strides = [1, 1, 1]} : vector<104x16x12xf32> to vector<104x12x1xf32>
    %23 = arith.addf %21, %22 : vector<104x12x1xf32>
    %24 = vector.extract_strided_slice %4 {offsets = [0, 3, 10], sizes = [104, 12, 1], strides = [1, 1, 1]} : vector<104x16x12xf32> to vector<104x12x1xf32>
    %25 = arith.addf %23, %24 : vector<104x12x1xf32>
    %26 = vector.extract_strided_slice %4 {offsets = [0, 4, 11], sizes = [104, 12, 1], strides = [1, 1, 1]} : vector<104x16x12xf32> to vector<104x12x1xf32>
    %27 = arith.addf %25, %26 : vector<104x12x1xf32>
    %cst_6 = arith.constant dense<0xFF800000> : vector<104x1xf32>
    %28 = vector.multi_reduction <maximumf>, %27, %cst_6 [1] : vector<104x12x1xf32> to vector<104x1xf32>
    %29 = tpu.concatenate %10, %18, %28 in 1 : vector<104x1xf32>, vector<104x1xf32>, vector<104x1xf32> -> vector<104x3xf32>
    %c0_7 = arith.constant 0 : index
    %c0_8 = arith.constant 0 : index
    %30 = vector.load %arg3[%c0_7, %c0_8] : memref<1x3xf32, #tpu.memory_space<vmem>>, vector<1x3xf32>
    %31 = vector.broadcast %30 : vector<1x3xf32> to vector<104x3xf32>
    %32 = arith.addf %29, %31 : vector<104x3xf32>
    %cst_9 = arith.constant 0.000000e+00 : f32
    %33 = vector.broadcast %cst_9 : f32 to vector<104x3xf32>
    %34 = arith.maximumf %32, %33 : vector<104x3xf32>
    %c0_10 = arith.constant 0 : index
    %c0_11 = arith.constant 0 : index
    %35 = vector.load %arg4[%c0_10, %c0_11] : memref<3x5xf32, #tpu.memory_space<vmem>>, vector<3x5xf32>
    %cst_12 = arith.constant dense<0.000000e+00> : vector<104x5xf32>
    %36 = tpu.matmul %34, %35, %cst_12 {dimension_numbers = #tpu.dot_dimension_numbers<[1], [0], [0], [1], [0, 0, 1, 1], [], []>} : vector<104x3xf32>, vector<3x5xf32>, vector<104x5xf32> -> vector<104x5xf32>
    %c0_13 = arith.constant 0 : index
    %c0_14 = arith.constant 0 : index
    %37 = vector.load %arg5[%c0_13, %c0_14] : memref<1x5xf32, #tpu.memory_space<vmem>>, vector<1x5xf32>
    %38 = vector.broadcast %37 : vector<1x5xf32> to vector<104x5xf32>
    %39 = arith.addf %36, %38 : vector<104x5xf32>
    %c0_15 = arith.constant 0 : index
    %c0_16 = arith.constant 0 : index
    %40 = vector.load %arg6[%c0_15, %c0_16] : memref<104x5xf32, #tpu.memory_space<vmem>>, vector<104x5xf32>
    tpu.vector_store %arg6[%c0_15, %c0_16], %39 {strides = array<i32>} : memref<104x5xf32, #tpu.memory_space<vmem>>, vector<104x5xf32>,
    return
  }
  func.func @transform_0(%arg0: i32) -> (i32, i32, i32) {
    %c0_i32 = arith.constant 0 : i32
    %c0_i32_0 = arith.constant 0 : i32
    %c0_i32_1 = arith.constant 0 : i32
    return %arg0, %c0_i32, %c0_i32_0 : i32, i32, i32
  }
  func.func @transform_1(%arg0: i32) -> (i32, i32) {
    %c0_i32 = arith.constant 0 : i32
    %c0_i32_0 = arith.constant 0 : i32
    %c0_i32_1 = arith.constant 0 : i32
    return %c0_i32, %c0_i32_0 : i32, i32
  }
  func.func @transform_2(%arg0: i32) -> (i32, i32) {
    %c0_i32 = arith.constant 0 : i32
    %c0_i32_0 = arith.constant 0 : i32
    %c0_i32_1 = arith.constant 0 : i32
    return %c0_i32, %c0_i32_0 : i32, i32
  }
  func.func @transform_3(%arg0: i32) -> (i32, i32) {
    %c0_i32 = arith.constant 0 : i32
    %c0_i32_0 = arith.constant 0 : i32
    %c0_i32_1 = arith.constant 0 : i32
    return %c0_i32, %c0_i32_0 : i32, i32
  }
  func.func @transform_4(%arg0: i32) -> (i32, i32) {
    %c0_i32 = arith.constant 0 : i32
    %c0_i32_0 = arith.constant 0 : i32
    %c0_i32_1 = arith.constant 0 : i32
    return %c0_i32, %c0_i32_0 : i32, i32
  }
  func.func @transform_5(%arg0: i32) -> (i32, i32) {
    %c0_i32 = arith.constant 0 : i32
    %c0_i32_0 = arith.constant 0 : i32
    return %arg0, %c0_i32 : i32, i32
  }
}

</mosaic_0001>

<llo_original>
// kernel: tpu_custom_call.1
$region0: #{tpu_custom_call.1}
  #allocation0 [shape = 'u32[]', space=smem, size = 0x4, offset = 0x4, fixed_abs, tag = 'smem constant byte address 0x4 - core index']
  #allocation1 [shape = 'u32[144,128]{1,0:T(1,128)}', space=vmem, size = 0x12000, scoped, tag = 'internal scratch']
  %s0 = inlined_call_operand.hbm [shape: bf16[104,16,128], index: 0, kind: input, shape index: {}]
  %s1 = inlined_call_operand.vmem [shape: bf16[128,12], index: 1, kind: input, shape index: {}]
  %s2 = inlined_call_operand.vmem [shape: f32[1,3], index: 2, kind: input, shape index: {}]
  %s3 = inlined_call_operand.vmem [shape: f32[3,5], index: 3, kind: input, shape index: {}]
  %s4 = inlined_call_operand.vmem [shape: f32[1,5], index: 4, kind: input, shape index: {}]
  %s5 = inlined_call_operand.vmem [shape: f32[104,5], index: 5, kind: output, shape index: {}]
  %s6 = sld [smem:[#allocation0]]
  $region34: #{tpu_custom_call.1} parent=0
    _
  %s8 = ssub.s32 1, %s6
  %s9 = scalar_select 0, %s8, %s6
  $region1: #{tpu_custom_call.1} parent=0
    #allocation2 [shape = 'u8[425984]{0}', space=vmem, size = 0x68000, scoped, tag = 'input window, operand 0, single buffered']
    #allocation3 [shape = 's32[1]{0}', space=sflag, size = 0x4, scoped, tag = 'scoped memory for tpu_custom_call.1']
    %10 = vsyncpa [#allocation3], 0
    // Predicated region
    $region2: #{tpu_custom_call.1} parent=1 // pred_check
      _
    $region3: #{tpu_custom_call.1} parent=1 // pred_check_branch
      %12 = sbr.rel (0) target = $region5
    $region4: #{tpu_custom_call.1} parent=1 // pred_region
      %s14 = ssub.s32 13312, 13312
      %15 = vsyncadd [#allocation3], %s14
      %s16 = sshll.u32 [#allocation2], 4
      %s17 = int_to_ptr.vmem [resolvable:$true] %s16
      %22 = dma.hbm_to_vmem [thread:$0]  %s0, 13312, %s17, [#allocation3], 64, 64, 4
    $region5: #{tpu_custom_call.1} parent=1 // pred_fallthru
      _
    // Predicated region
    $region6: #{tpu_custom_call.1} parent=1 // pred_check
      _
    $region7: #{tpu_custom_call.1} parent=1 // pred_check_branch
      %24 = sbr.rel (0) target = $region9
    $region8: #{tpu_custom_call.1} parent=1 // pred_region
      _
    $region9: #{tpu_custom_call.1} parent=1 // pred_fallthru
      _
    // Predicated region
    $region10: #{tpu_custom_call.1} parent=1 // pred_check
      _
    $region11: #{tpu_custom_call.1} parent=1 // pred_check_branch
      %26 = sbr.rel (0) target = $region13
    $region12: #{tpu_custom_call.1} parent=1 // pred_region
      _
    $region13: #{tpu_custom_call.1} parent=1 // pred_fallthru
      _
    // Predicated region
    $region14: #{tpu_custom_call.1} parent=1 // pred_check
      _
    $region15: #{tpu_custom_call.1} parent=1 // pred_check_branch
      %28 = sbr.rel (0) target = $region17
    $region16: #{tpu_custom_call.1} parent=1 // pred_region
      _
    $region17: #{tpu_custom_call.1} parent=1 // pred_fallthru
      _
    // Predicated region
    $region18: #{tpu_custom_call.1} parent=1 // pred_check
      _
    $region19: #{tpu_custom_call.1} parent=1 // pred_check_branch
      %30 = sbr.rel (0) target = $region21
    $region20: #{tpu_custom_call.1} parent=1 // pred_region
      _
    $region21: #{tpu_custom_call.1} parent=1 // pred_fallthru
      _
    // Predicated region
    $region22: #{tpu_custom_call.1} parent=1 // pred_check
      _
    $region23: #{tpu_custom_call.1} parent=1 // pred_check_branch
      %32 = sbr.rel (0) target = $region25
    $region24: #{tpu_custom_call.1} parent=1 // pred_region
      %33 = dma.done [#allocation3], 13312
    $region25: #{tpu_custom_call.1} parent=1 // pred_fallthru
      _
    %v35 = vld [vmem:[#allocation2] sm:$0xf]
    %v36 = vld [vmem:[#allocation2 + $0x4] sm:$0xf]
    %v37 = vld [vmem:[#allocation2 + $0x8] sm:$0xf]
    %v38 = vld [vmem:[#allocation2 + $0xc] sm:$0xf]
    %v39 = vld [vmem:[#allocation2 + $0x10] sm:$0xf]
    %v40 = vld [vmem:[#allocation2 + $0x14] sm:$0xf]
    %v41 = vld [vmem:[#allocation2 + $0x18] sm:$0xf]
    %v42 = vld [vmem:[#allocation2 + $0x1c] sm:$0xf]
    %v43 = vld [vmem:[#allocation2 + $0x20] sm:$0xf]
    %v44 = vld [vmem:[#allocation2 + $0x24] sm:$0xf]
    %v45 = vld [vmem:[#allocation2 + $0x28] sm:$0xf]
    %v46 = vld [vmem:[#allocation2 + $0x2c] sm:$0xf]
    %v47 = vld [vmem:[#allocation2 + $0x30] sm:$0xf]
    %v48 = vld [vmem:[#allocation2 + $0x34] sm:$0xf]
    %v49 = vld [vmem:[#allocation2 + $0x38] sm:$0xf]
    %v50 = vld [vmem:[#allocation2 + $0x3c] sm:$0xf]
    %v51 = vld [vmem:[#allocation2 + $0x40] sm:$0xf]
    %v52 = vld [vmem:[#allocation2 + $0x44] sm:$0xf]
    %v53 = vld [vmem:[#allocation2 + $0x48] sm:$0xf]
    %v54 = vld [vmem:[#allocation2 + $0x4c] sm:$0xf]
    %v55 = vld [vmem:[#allocation2 + $0x50] sm:$0xf]
    %v56 = vld [vmem:[#allocation2 + $0x54] sm:$0xf]
    %v57 = vld [vmem:[#allocation2 + $0x58] sm:$0xf]
    %v58 = vld [vmem:[#allocation2 + $0x5c] sm:$0xf]
    %v59 = vld [vmem:[#allocation2 + $0x60] sm:$0xf]
    %v60 = vld [vmem:[#allocation2 + $0x64] sm:$0xf]
    %v61 = vld [vmem:[#allocation2 + $0x68] sm:$0xf]
    %v62 = vld [vmem:[#allocation2 + $0x6c] sm:$0xf]
    %v63 = vld [vmem:[#allocation2 + $0x70] sm:$0xf]
    %v64 = vld [vmem:[#allocation2 + $0x74] sm:$0xf]
    %v65 = vld [vmem:[#allocation2 + $0x78] sm:$0xf]
    %v66 = vld [vmem:[#allocation2 + $0x7c] sm:$0xf]
    %v67 = vld [vmem:[#allocation2 + $0x80] sm:$0xf]
    %v68 = vld [vmem:[#allocation2 + $0x84] sm:$0xf]
    %v69 = vld [vmem:[#allocation2 + $0x88] sm:$0xf]
    %v70 = vld [vmem:[#allocation2 + $0x8c] sm:$0xf]
    %v71 = vld [vmem:[#allocation2 + $0x90] sm:$0xf]
    %v72 = vld [vmem:[#allocation2 + $0x94] sm:$0xf]
    %v73 = vld [vmem:[#allocation2 + $0x98] sm:$0xf]
    %v74 = vld [vmem:[#allocation2 + $0x9c] sm:$0xf]
    %v75 = vld [vmem:[#allocation2 + $0xa0] sm:$0xf]
    %v76 = vld [vmem:[#allocation2 + $0xa4] sm:$0xf]
    %v77 = vld [vmem:[#allocation2 + $0xa8] sm:$0xf]
    %v78 = vld [vmem:[#allocation2 + $0xac] sm:$0xf]
    %v79 = vld [vmem:[#allocation2 + $0xb0] sm:$0xf]
    %v80 = vld [vmem:[#allocation2 + $0xb4] sm:$0xf]
    %v81 = vld [vmem:[#allocation2 + $0xb8] sm:$0xf]
    %v82 = vld [vmem:[#allocation2 + $0xbc] sm:$0xf]
    %v83 = vld [vmem:[#allocation2 + $0xc0] sm:$0xf]
    %v84 = vld [vmem:[#allocation2 + $0xc4] sm:$0xf]
    %v85 = vld [vmem:[#allocation2 + $0xc8] sm:$0xf]
    %v86 = vld [vmem:[#allocation2 + $0xcc] sm:$0xf]
    %v87 = vld [vmem:[#allocation2 + $0xd0] sm:$0xf]
    %v88 = vld [vmem:[#allocation2 + $0xd4] sm:$0xf]
    %v89 = vld [vmem:[#allocation2 + $0xd8] sm:$0xf]
    %v90 = vld [vmem:[#allocation2 + $0xdc] sm:$0xf]
    %v91 = vld [vmem:[#allocation2 + $0xe0] sm:$0xf]
    %v92 = vld [vmem:[#allocation2 + $0xe4] sm:$0xf]
    %v93 = vld [vmem:[#allocation2 + $0xe8] sm:$0xf]
    %v94 = vld [vmem:[#allocation2 + $0xec] sm:$0xf]
    %v95 = vld [vmem:[#allocation2 + $0xf0] sm:$0xf]
    %v96 = vld [vmem:[#allocation2 + $0xf4] sm:$0xf]
    %v97 = vld [vmem:[#allocation2 + $0xf8] sm:$0xf]
    %v98 = vld [vmem:[#allocation2 + $0xfc] sm:$0xf]
    %v99 = vld [vmem:[#allocation2 + $0x100] sm:$0xf]
    %v100 = vld [vmem:[#allocation2 + $0x104] sm:$0xf]
    %v101 = vld [vmem:[#allocation2 + $0x108] sm:$0xf]
    %v102 = vld [vmem:[#allocation2 + $0x10c] sm:$0xf]
    %v103 = vld [vmem:[#allocation2 + $0x110] sm:$0xf]
    %v104 = vld [vmem:[#allocation2 + $0x114] sm:$0xf]
    %v105 = vld [vmem:[#allocation2 + $0x118] sm:$0xf]
    %v106 = vld [vmem:[#allocation2 + $0x11c] sm:$0xf]
    %v107 = vld [vmem:[#allocation2 + $0x120] sm:$0xf]
    %v108 = vld [vmem:[#allocation2 + $0x124] sm:$0xf]
    %v109 = vld [vmem:[#allocation2 + $0x128] sm:$0xf]
    %v110 = vld [vmem:[#allocation2 + $0x12c] sm:$0xf]
    %v111 = vld [vmem:[#allocation2 + $0x130] sm:$0xf]
    %v112 = vld [vmem:[#allocation2 + $0x134] sm:$0xf]
    %v113 = vld [vmem:[#allocation2 + $0x138] sm:$0xf]
    %v114 = vld [vmem:[#allocation2 + $0x13c] sm:$0xf]
    %v115 = vld [vmem:[#allocation2 + $0x140] sm:$0xf]
    %v116 = vld [vmem:[#allocation2 + $0x144] sm:$0xf]
    %v117 = vld [vmem:[#allocation2 + $0x148] sm:$0xf]
    %v118 = vld [vmem:[#allocation2 + $0x14c] sm:$0xf]
    %v119 = vld [vmem:[#allocation2 + $0x150] sm:$0xf]
    %v120 = vld [vmem:[#allocation2 + $0x154] sm:$0xf]
    %v121 = vld [vmem:[#allocation2 + $0x158] sm:$0xf]
    %v122 = vld [vmem:[#allocation2 + $0x15c] sm:$0xf]
    %v123 = vld [vmem:[#allocation2 + $0x160] sm:$0xf]
    %v124 = vld [vmem:[#allocation2 + $0x164] sm:$0xf]
    %v125 = vld [vmem:[#allocation2 + $0x168] sm:$0xf]
    %v126 = vld [vmem:[#allocation2 + $0x16c] sm:$0xf]
    %v127 = vld [vmem:[#allocation2 + $0x170] sm:$0xf]
    %v128 = vld [vmem:[#allocation2 + $0x174] sm:$0xf]
    %v129 = vld [vmem:[#allocation2 + $0x178] sm:$0xf]
    %v130 = vld [vmem:[#allocation2 + $0x17c] sm:$0xf]
    %v131 = vld [vmem:[#allocation2 + $0x180] sm:$0xf]
    %v132 = vld [vmem:[#allocation2 + $0x184] sm:$0xf]
    %v133 = vld [vmem:[#allocation2 + $0x188] sm:$0xf]
    %v134 = vld [vmem:[#allocation2 + $0x18c] sm:$0xf]
    %v135 = vld [vmem:[#allocation2 + $0x190] sm:$0xf]
    %v136 = vld [vmem:[#allocation2 + $0x194] sm:$0xf]
    %v137 = vld [vmem:[#allocation2 + $0x198] sm:$0xf]
    %v138 = vld [vmem:[#allocation2 + $0x19c] sm:$0xf]
    %v139 = vld [vmem:[#allocation2 + $0x1a0] sm:$0xf]
    %v140 = vld [vmem:[#allocation2 + $0x1a4] sm:$0xf]
    %v141 = vld [vmem:[#allocation2 + $0x1a8] sm:$0xf]
    %v142 = vld [vmem:[#allocation2 + $0x1ac] sm:$0xf]
    %v143 = vld [vmem:[#allocation2 + $0x1b0] sm:$0xf]
    %v144 = vld [vmem:[#allocation2 + $0x1b4] sm:$0xf]
    %v145 = vld [vmem:[#allocation2 + $0x1b8] sm:$0xf]
    %v146 = vld [vmem:[#allocation2 + $0x1bc] sm:$0xf]
    %v147 = vld [vmem:[#allocation2 + $0x1c0] sm:$0xf]
    %v148 = vld [vmem:[#allocation2 + $0x1c4] sm:$0xf]
    %v149 = vld [vmem:[#allocation2 + $0x1c8] sm:$0xf]
    %v150 = vld [vmem:[#allocation2 + $0x1cc] sm:$0xf]
    %v151 = vld [vmem:[#allocation2 + $0x1d0] sm:$0xf]
    %v152 = vld [vmem:[#allocation2 + $0x1d4] sm:$0xf]
    %v153 = vld [vmem:[#allocation2 + $0x1d8] sm:$0xf]
    %v154 = vld [vmem:[#allocation2 + $0x1dc] sm:$0xf]
    %v155 = vld [vmem:[#allocation2 + $0x1e0] sm:$0xf]
    %v156 = vld [vmem:[#allocation2 + $0x1e4] sm:$0xf]
    %v157 = vld [vmem:[#allocation2 + $0x1e8] sm:$0xf]
    %v158 = vld [vmem:[#allocation2 + $0x1ec] sm:$0xf]
    %v159 = vld [vmem:[#allocation2 + $0x1f0] sm:$0xf]
    %v160 = vld [vmem:[#allocation2 + $0x1f4] sm:$0xf]
    %v161 = vld [vmem:[#allocation2 + $0x1f8] sm:$0xf]
    %v162 = vld [vmem:[#allocation2 + $0x1fc] sm:$0xf]
    %v163 = vld [vmem:[#allocation2 + $0x200] sm:$0xf]
    %v164 = vld [vmem:[#allocation2 + $0x204] sm:$0xf]
    %v165 = vld [vmem:[#allocation2 + $0x208] sm:$0xf]
    %v166 = vld [vmem:[#allocation2 + $0x20c] sm:$0xf]
    %v167 = vld [vmem:[#allocation2 + $0x210] sm:$0xf]
    %v168 = vld [vmem:[#allocation2 + $0x214] sm:$0xf]
    %v169 = vld [vmem:[#allocation2 + $0x218] sm:$0xf]
    %v170 = vld [vmem:[#allocation2 + $0x21c] sm:$0xf]
    %v171 = vld [vmem:[#allocation2 + $0x220] sm:$0xf]
    %v172 = vld [vmem:[#allocation2 + $0x224] sm:$0xf]
    %v173 = vld [vmem:[#allocation2 + $0x228] sm:$0xf]
    %v174 = vld [vmem:[#allocation2 + $0x22c] sm:$0xf]
    %v175 = vld [vmem:[#allocation2 + $0x230] sm:$0xf]
    %v176 = vld [vmem:[#allocation2 + $0x234] sm:$0xf]
    %v177 = vld [vmem:[#allocation2 + $0x238] sm:$0xf]
    %v178 = vld [vmem:[#allocation2 + $0x23c] sm:$0xf]
    %v179 = vld [vmem:[#allocation2 + $0x240] sm:$0xf]
    %v180 = vld [vmem:[#allocation2 + $0x244] sm:$0xf]
    %v181 = vld [vmem:[#allocation2 + $0x248] sm:$0xf]
    %v182 = vld [vmem:[#allocation2 + $0x24c] sm:$0xf]
    %v183 = vld [vmem:[#allocation2 + $0x250] sm:$0xf]
    %v184 = vld [vmem:[#allocation2 + $0x254] sm:$0xf]
    %v185 = vld [vmem:[#allocation2 + $0x258] sm:$0xf]
    %v186 = vld [vmem:[#allocation2 + $0x25c] sm:$0xf]
    %v187 = vld [vmem:[#allocation2 + $0x260] sm:$0xf]
    %v188 = vld [vmem:[#allocation2 + $0x264] sm:$0xf]
    %v189 = vld [vmem:[#allocation2 + $0x268] sm:$0xf]
    %v190 = vld [vmem:[#allocation2 + $0x26c] sm:$0xf]
    %v191 = vld [vmem:[#allocation2 + $0x270] sm:$0xf]
    %v192 = vld [vmem:[#allocation2 + $0x274] sm:$0xf]
    %v193 = vld [vmem:[#allocation2 + $0x278] sm:$0xf]
    %v194 = vld [vmem:[#allocation2 + $0x27c] sm:$0xf]
    %v195 = vld [vmem:[#allocation2 + $0x280] sm:$0xf]
    %v196 = vld [vmem:[#allocation2 + $0x284] sm:$0xf]
    %v197 = vld [vmem:[#allocation2 + $0x288] sm:$0xf]
    %v198 = vld [vmem:[#allocation2 + $0x28c] sm:$0xf]
    %v199 = vld [vmem:[#allocation2 + $0x290] sm:$0xf]
    %v200 = vld [vmem:[#allocation2 + $0x294] sm:$0xf]
    %v201 = vld [vmem:[#allocation2 + $0x298] sm:$0xf]
    %v202 = vld [vmem:[#allocation2 + $0x29c] sm:$0xf]
    %v203 = vld [vmem:[#allocation2 + $0x2a0] sm:$0xf]
    %v204 = vld [vmem:[#allocation2 + $0x2a4] sm:$0xf]
    %v205 = vld [vmem:[#allocation2 + $0x2a8] sm:$0xf]
    %v206 = vld [vmem:[#allocation2 + $0x2ac] sm:$0xf]
    %v207 = vld [vmem:[#allocation2 + $0x2b0] sm:$0xf]
    %v208 = vld [vmem:[#allocation2 + $0x2b4] sm:$0xf]
    %v209 = vld [vmem:[#allocation2 + $0x2b8] sm:$0xf]
    %v210 = vld [vmem:[#allocation2 + $0x2bc] sm:$0xf]
    %v211 = vld [vmem:[#allocation2 + $0x2c0] sm:$0xf]
    %v212 = vld [vmem:[#allocation2 + $0x2c4] sm:$0xf]
    %v213 = vld [vmem:[#allocation2 + $0x2c8] sm:$0xf]
    %v214 = vld [vmem:[#allocation2 + $0x2cc] sm:$0xf]
    %v215 = vld [vmem:[#allocation2 + $0x2d0] sm:$0xf]
    %v216 = vld [vmem:[#allocation2 + $0x2d4] sm:$0xf]
    %v217 = vld [vmem:[#allocation2 + $0x2d8] sm:$0xf]
    %v218 = vld [vmem:[#allocation2 + $0x2dc] sm:$0xf]
    %v219 = vld [vmem:[#allocation2 + $0x2e0] sm:$0xf]
    %v220 = vld [vmem:[#allocation2 + $0x2e4] sm:$0xf]
    %v221 = vld [vmem:[#allocation2 + $0x2e8] sm:$0xf]
    %v222 = vld [vmem:[#allocation2 + $0x2ec] sm:$0xf]
    %v223 = vld [vmem:[#allocation2 + $0x2f0] sm:$0xf]
    %v224 = vld [vmem:[#allocation2 + $0x2f4] sm:$0xf]
    %v225 = vld [vmem:[#allocation2 + $0x2f8] sm:$0xf]
    %v226 = vld [vmem:[#allocation2 + $0x2fc] sm:$0xf]
    %v227 = vld [vmem:[#allocation2 + $0x300] sm:$0xf]
    %v228 = vld [vmem:[#allocation2 + $0x304] sm:$0xf]
    %v229 = vld [vmem:[#allocation2 + $0x308] sm:$0xf]
    %v230 = vld [vmem:[#allocation2 + $0x30c] sm:$0xf]
    %v231 = vld [vmem:[#allocation2 + $0x310] sm:$0xf]
    %v232 = vld [vmem:[#allocation2 + $0x314] sm:$0xf]
    %v233 = vld [vmem:[#allocation2 + $0x318] sm:$0xf]
    %v234 = vld [vmem:[#allocation2 + $0x31c] sm:$0xf]
    %v235 = vld [vmem:[#allocation2 + $0x320] sm:$0xf]
    %v236 = vld [vmem:[#allocation2 + $0x324] sm:$0xf]
    %v237 = vld [vmem:[#allocation2 + $0x328] sm:$0xf]
    %v238 = vld [vmem:[#allocation2 + $0x32c] sm:$0xf]
    %v239 = vld [vmem:[#allocation2 + $0x330] sm:$0xf]
    %v240 = vld [vmem:[#allocation2 + $0x334] sm:$0xf]
    %v241 = vld [vmem:[#allocation2 + $0x338] sm:$0xf]
    %v242 = vld [vmem:[#allocation2 + $0x33c] sm:$0xf]
    %v243 = vld [vmem:[%s1] sm:$0xf]
    %v244 = vld [vmem:[%s1 + $0x4] sm:$0xf]
    %v245 = vld [vmem:[%s1 + $0x8] sm:$0xf]
    %v246 = vld [vmem:[%s1 + $0xc] sm:$0xf]
    %v247 = vld [vmem:[%s1 + $0x10] sm:$0xf]
    %v248 = vld [vmem:[%s1 + $0x14] sm:$0xf]
    %v249 = vld [vmem:[%s1 + $0x18] sm:$0xf]
    %v250 = vld [vmem:[%s1 + $0x1c] sm:$0xf]
    %v251 = vld [vmem:[%s1 + $0x20] sm:$0xf]
    %v252 = vld [vmem:[%s1 + $0x24] sm:$0xf]
    %v253 = vld [vmem:[%s1 + $0x28] sm:$0xf]
    %v254 = vld [vmem:[%s1 + $0x2c] sm:$0xf]
    %v255 = vld [vmem:[%s1 + $0x30] sm:$0xf]
    %v256 = vld [vmem:[%s1 + $0x34] sm:$0xf]
    %v257 = vld [vmem:[%s1 + $0x38] sm:$0xf]
    %v258 = vld [vmem:[%s1 + $0x3c] sm:$0xf]
    %v467 = vunpack.c.l.b16 %v35
    %v468 = vunpack.c.l.b16 %v36
    %v469 = vunpack.c.l.b16 %v37
    %v470 = vunpack.c.l.b16 %v38
    %v471 = vunpack.c.l.b16 %v39
    %v472 = vunpack.c.l.b16 %v40
    %v473 = vunpack.c.l.b16 %v41
    %v474 = vunpack.c.l.b16 %v42
    %v475 = vunpack.c.l.b16 %v43
    %v476 = vunpack.c.l.b16 %v44
    %v477 = vunpack.c.l.b16 %v45
    %v478 = vunpack.c.l.b16 %v46
    %v479 = vunpack.c.l.b16 %v47
    %v480 = vunpack.c.l.b16 %v48
    %v481 = vunpack.c.l.b16 %v49
    %v482 = vunpack.c.l.b16 %v50
    %v483 = vunpack.c.l.b16 %v51
    %v484 = vunpack.c.l.b16 %v52
    %v485 = vunpack.c.l.b16 %v53
    %v486 = vunpack.c.l.b16 %v54
    %v487 = vunpack.c.l.b16 %v55
    %v488 = vunpack.c.l.b16 %v56
    %v489 = vunpack.c.l.b16 %v57
    %v490 = vunpack.c.l.b16 %v58
    %v491 = vunpack.c.l.b16 %v59
    %v492 = vunpack.c.l.b16 %v60
    %v493 = vunpack.c.l.b16 %v61
    %v494 = vunpack.c.l.b16 %v62
    %v495 = vunpack.c.l.b16 %v63
    %v496 = vunpack.c.l.b16 %v64
    %v497 = vunpack.c.l.b16 %v65
    %v498 = vunpack.c.l.b16 %v66
    %v499 = vunpack.c.l.b16 %v67
    %v500 = vunpack.c.l.b16 %v68
    %v501 = vunpack.c.l.b16 %v69
    %v502 = vunpack.c.l.b16 %v70
    %v503 = vunpack.c.l.b16 %v71
    %v504 = vunpack.c.l.b16 %v72
    %v505 = vunpack.c.l.b16 %v73
    %v506 = vunpack.c.l.b16 %v74
    %v507 = vunpack.c.l.b16 %v75
    %v508 = vunpack.c.l.b16 %v76
    %v509 = vunpack.c.l.b16 %v77
    %v510 = vunpack.c.l.b16 %v78
    %v511 = vunpack.c.l.b16 %v79
    %v512 = vunpack.c.l.b16 %v80
    %v513 = vunpack.c.l.b16 %v81
    %v514 = vunpack.c.l.b16 %v82
    %v515 = vunpack.c.l.b16 %v83
    %v516 = vunpack.c.l.b16 %v84
    %v517 = vunpack.c.l.b16 %v85
    %v518 = vunpack.c.l.b16 %v86
    %v519 = vunpack.c.l.b16 %v87
    %v520 = vunpack.c.l.b16 %v88
    %v521 = vunpack.c.l.b16 %v89
    %v522 = vunpack.c.l.b16 %v90
    %v523 = vunpack.c.l.b16 %v91
    %v524 = vunpack.c.l.b16 %v92
    %v525 = vunpack.c.l.b16 %v93
    %v526 = vunpack.c.l.b16 %v94
    %v527 = vunpack.c.l.b16 %v95
    %v528 = vunpack.c.l.b16 %v96
    %v529 = vunpack.c.l.b16 %v97
    %v530 = vunpack.c.l.b16 %v98
    %v531 = vunpack.c.l.b16 %v99
    %v532 = vunpack.c.l.b16 %v100
    %v533 = vunpack.c.l.b16 %v101
    %v534 = vunpack.c.l.b16 %v102
    %v535 = vunpack.c.l.b16 %v103
    %v536 = vunpack.c.l.b16 %v104
    %v537 = vunpack.c.l.b16 %v105
    %v538 = vunpack.c.l.b16 %v106
    %v539 = vunpack.c.l.b16 %v107
    %v540 = vunpack.c.l.b16 %v108
    %v541 = vunpack.c.l.b16 %v109
    %v542 = vunpack.c.l.b16 %v110
    %v543 = vunpack.c.l.b16 %v111
    %v544 = vunpack.c.l.b16 %v112
    %v545 = vunpack.c.l.b16 %v113
    %v546 = vunpack.c.l.b16 %v114
    %v547 = vunpack.c.l.b16 %v115
    %v548 = vunpack.c.l.b16 %v116
    %v549 = vunpack.c.l.b16 %v117
    %v550 = vunpack.c.l.b16 %v118
    %v551 = vunpack.c.l.b16 %v119
    %v552 = vunpack.c.l.b16 %v120
    %v553 = vunpack.c.l.b16 %v121
    %v554 = vunpack.c.l.b16 %v122
    %v555 = vunpack.c.l.b16 %v123
    %v556 = vunpack.c.l.b16 %v124
    %v557 = vunpack.c.l.b16 %v125
    %v558 = vunpack.c.l.b16 %v126
    %v559 = vunpack.c.l.b16 %v127
    %v560 = vunpack.c.l.b16 %v128
    %v561 = vunpack.c.l.b16 %v129
    %v562 = vunpack.c.l.b16 %v130
    %v563 = vunpack.c.l.b16 %v131
    %v564 = vunpack.c.l.b16 %v132
    %v565 = vunpack.c.l.b16 %v133
    %v566 = vunpack.c.l.b16 %v134
    %v567 = vunpack.c.l.b16 %v135
    %v568 = vunpack.c.l.b16 %v136
    %v569 = vunpack.c.l.b16 %v137
    %v570 = vunpack.c.l.b16 %v138
    %v571 = vunpack.c.l.b16 %v139
    %v572 = vunpack.c.l.b16 %v140
    %v573 = vunpack.c.l.b16 %v141
    %v574 = vunpack.c.l.b16 %v142
    %v575 = vunpack.c.l.b16 %v143
    %v576 = vunpack.c.l.b16 %v144
    %v577 = vunpack.c.l.b16 %v145
    %v578 = vunpack.c.l.b16 %v146
    %v579 = vunpack.c.l.b16 %v147
    %v580 = vunpack.c.l.b16 %v148
    %v581 = vunpack.c.l.b16 %v149
    %v582 = vunpack.c.l.b16 %v150
    %v583 = vunpack.c.l.b16 %v151
    %v584 = vunpack.c.l.b16 %v152
    %v585 = vunpack.c.l.b16 %v153
    %v586 = vunpack.c.l.b16 %v154
    %v587 = vunpack.c.l.b16 %v155
    %v588 = vunpack.c.l.b16 %v156
    %v589 = vunpack.c.l.b16 %v157
    %v590 = vunpack.c.l.b16 %v158
    %v591 = vunpack.c.l.b16 %v159
    %v592 = vunpack.c.l.b16 %v160
    %v593 = vunpack.c.l.b16 %v161
    %v594 = vunpack.c.l.b16 %v162
    %v595 = vunpack.c.l.b16 %v163
    %v596 = vunpack.c.l.b16 %v164
    %v597 = vunpack.c.l.b16 %v165
    %v598 = vunpack.c.l.b16 %v166
    %v599 = vunpack.c.l.b16 %v167
    %v600 = vunpack.c.l.b16 %v168
    %v601 = vunpack.c.l.b16 %v169
    %v602 = vunpack.c.l.b16 %v170
    %v603 = vunpack.c.l.b16 %v171
    %v604 = vunpack.c.l.b16 %v172
    %v605 = vunpack.c.l.b16 %v173
    %v606 = vunpack.c.l.b16 %v174
    %v607 = vunpack.c.l.b16 %v175
    %v608 = vunpack.c.l.b16 %v176
    %v609 = vunpack.c.l.b16 %v177
    %v610 = vunpack.c.l.b16 %v178
    %v611 = vunpack.c.l.b16 %v179
    %v612 = vunpack.c.l.b16 %v180
    %v613 = vunpack.c.l.b16 %v181
    %v614 = vunpack.c.l.b16 %v182
    %v615 = vunpack.c.l.b16 %v183
    %v616 = vunpack.c.l.b16 %v184
    %v617 = vunpack.c.l.b16 %v185
    %v618 = vunpack.c.l.b16 %v186
    %v619 = vunpack.c.l.b16 %v187
    %v620 = vunpack.c.l.b16 %v188
    %v621 = vunpack.c.l.b16 %v189
    %v622 = vunpack.c.l.b16 %v190
    %v623 = vunpack.c.l.b16 %v191
    %v624 = vunpack.c.l.b16 %v192
    %v625 = vunpack.c.l.b16 %v193
    %v626 = vunpack.c.l.b16 %v194
    %v627 = vunpack.c.l.b16 %v195
    %v628 = vunpack.c.l.b16 %v196
    %v629 = vunpack.c.l.b16 %v197
    %v630 = vunpack.c.l.b16 %v198
    %v631 = vunpack.c.l.b16 %v199
    %v632 = vunpack.c.l.b16 %v200
    %v633 = vunpack.c.l.b16 %v201
    %v634 = vunpack.c.l.b16 %v202
    %v635 = vunpack.c.l.b16 %v203
    %v636 = vunpack.c.l.b16 %v204
    %v637 = vunpack.c.l.b16 %v205
    %v638 = vunpack.c.l.b16 %v206
    %v639 = vunpack.c.l.b16 %v207
    %v640 = vunpack.c.l.b16 %v208
    %v641 = vunpack.c.l.b16 %v209
    %v642 = vunpack.c.l.b16 %v210
    %v643 = vunpack.c.l.b16 %v211
    %v644 = vunpack.c.l.b16 %v212
    %v645 = vunpack.c.l.b16 %v213
    %v646 = vunpack.c.l.b16 %v214
    %v647 = vunpack.c.l.b16 %v215
    %v648 = vunpack.c.l.b16 %v216
    %v649 = vunpack.c.l.b16 %v217
    %v650 = vunpack.c.l.b16 %v218
    %v651 = vunpack.c.l.b16 %v219
    %v652 = vunpack.c.l.b16 %v220
    %v653 = vunpack.c.l.b16 %v221
    %v654 = vunpack.c.l.b16 %v222
    %v655 = vunpack.c.l.b16 %v223
    %v656 = vunpack.c.l.b16 %v224
    %v657 = vunpack.c.l.b16 %v225
    %v658 = vunpack.c.l.b16 %v226
    %v659 = vunpack.c.l.b16 %v227
    %v660 = vunpack.c.l.b16 %v228
    %v661 = vunpack.c.l.b16 %v229
    %v662 = vunpack.c.l.b16 %v230
    %v663 = vunpack.c.l.b16 %v231
    %v664 = vunpack.c.l.b16 %v232
    %v665 = vunpack.c.l.b16 %v233
    %v666 = vunpack.c.l.b16 %v234
    %v667 = vunpack.c.l.b16 %v235
    %v668 = vunpack.c.l.b16 %v236
    %v669 = vunpack.c.l.b16 %v237
    %v670 = vunpack.c.l.b16 %v238
    %v671 = vunpack.c.l.b16 %v239
    %v672 = vunpack.c.l.b16 %v240
    %v673 = vunpack.c.l.b16 %v241
    %v674 = vunpack.c.l.b16 %v242
    %v675 = vpack.c.b16 %v468, %v467
    %v676 = vpack.c.b16 %v470, %v469
    %v677 = vpack.c.b16 %v472, %v471
    %v678 = vpack.c.b16 %v474, %v473
    %v679 = vpack.c.b16 %v476, %v475
    %v680 = vpack.c.b16 %v478, %v477
    %v681 = vpack.c.b16 %v480, %v479
    %v682 = vpack.c.b16 %v482, %v481
    %v683 = vpack.c.b16 %v484, %v483
    %v684 = vpack.c.b16 %v486, %v485
    %v685 = vpack.c.b16 %v488, %v487
    %v686 = vpack.c.b16 %v490, %v489
    %v687 = vpack.c.b16 %v492, %v491
    %v688 = vpack.c.b16 %v494, %v493
    %v689 = vpack.c.b16 %v496, %v495
    %v690 = vpack.c.b16 %v498, %v497
    %v691 = vpack.c.b16 %v500, %v499
    %v692 = vpack.c.b16 %v502, %v501
    %v693 = vpack.c.b16 %v504, %v503
    %v694 = vpack.c.b16 %v506, %v505
    %v695 = vpack.c.b16 %v508, %v507
    %v696 = vpack.c.b16 %v510, %v509
    %v697 = vpack.c.b16 %v512, %v511
    %v698 = vpack.c.b16 %v514, %v513
    %v699 = vpack.c.b16 %v516, %v515
    %v700 = vpack.c.b16 %v518, %v517
    %v701 = vpack.c.b16 %v520, %v519
    %v702 = vpack.c.b16 %v522, %v521
    %v703 = vpack.c.b16 %v524, %v523
    %v704 = vpack.c.b16 %v526, %v525
    %v705 = vpack.c.b16 %v528, %v527
    %v706 = vpack.c.b16 %v530, %v529
    %v707 = vpack.c.b16 %v532, %v531
    %v708 = vpack.c.b16 %v534, %v533
    %v709 = vpack.c.b16 %v536, %v535
    %v710 = vpack.c.b16 %v538, %v537
    %v711 = vpack.c.b16 %v540, %v539
    %v712 = vpack.c.b16 %v542, %v541
    %v713 = vpack.c.b16 %v544, %v543
    %v714 = vpack.c.b16 %v546, %v545
    %v715 = vpack.c.b16 %v548, %v547
    %v716 = vpack.c.b16 %v550, %v549
    %v717 = vpack.c.b16 %v552, %v551
    %v718 = vpack.c.b16 %v554, %v553
    %v719 = vpack.c.b16 %v556, %v555
    %v720 = vpack.c.b16 %v558, %v557
    %v721 = vpack.c.b16 %v560, %v559
    %v722 = vpack.c.b16 %v562, %v561
    %v723 = vpack.c.b16 %v564, %v563
    %v724 = vpack.c.b16 %v566, %v565
    %v725 = vpack.c.b16 %v568, %v567
    %v726 = vpack.c.b16 %v570, %v569
    %v727 = vpack.c.b16 %v572, %v571
    %v728 = vpack.c.b16 %v574, %v573
    %v729 = vpack.c.b16 %v576, %v575
    %v730 = vpack.c.b16 %v578, %v577
    %v731 = vpack.c.b16 %v580, %v579
    %v732 = vpack.c.b16 %v582, %v581
    %v733 = vpack.c.b16 %v584, %v583
    %v734 = vpack.c.b16 %v586, %v585
    %v735 = vpack.c.b16 %v588, %v587
    %v736 = vpack.c.b16 %v590, %v589
    %v737 = vpack.c.b16 %v592, %v591
    %v738 = vpack.c.b16 %v594, %v593
    %v739 = vpack.c.b16 %v596, %v595
    %v740 = vpack.c.b16 %v598, %v597
    %v741 = vpack.c.b16 %v600, %v599
    %v742 = vpack.c.b16 %v602, %v601
    %v743 = vpack.c.b16 %v604, %v603
    %v744 = vpack.c.b16 %v606, %v605
    %v745 = vpack.c.b16 %v608, %v607
    %v746 = vpack.c.b16 %v610, %v609
    %v747 = vpack.c.b16 %v612, %v611
    %v748 = vpack.c.b16 %v614, %v613
    %v749 = vpack.c.b16 %v616, %v615
    %v750 = vpack.c.b16 %v618, %v617
    %v751 = vpack.c.b16 %v620, %v619
    %v752 = vpack.c.b16 %v622, %v621
    %v753 = vpack.c.b16 %v624, %v623
    %v754 = vpack.c.b16 %v626, %v625
    %v755 = vpack.c.b16 %v628, %v627
    %v756 = vpack.c.b16 %v630, %v629
    %v757 = vpack.c.b16 %v632, %v631
    %v758 = vpack.c.b16 %v634, %v633
    %v759 = vpack.c.b16 %v636, %v635
    %v760 = vpack.c.b16 %v638, %v637
    %v761 = vpack.c.b16 %v640, %v639
    %v762 = vpack.c.b16 %v642, %v641
    %v763 = vpack.c.b16 %v644, %v643
    %v764 = vpack.c.b16 %v646, %v645
    %v765 = vpack.c.b16 %v648, %v647
    %v766 = vpack.c.b16 %v650, %v649
    %v767 = vpack.c.b16 %v652, %v651
    %v768 = vpack.c.b16 %v654, %v653
    %v769 = vpack.c.b16 %v656, %v655
    %v770 = vpack.c.b16 %v658, %v657
    %v771 = vpack.c.b16 %v660, %v659
    %v772 = vpack.c.b16 %v662, %v661
    %v773 = vpack.c.b16 %v664, %v663
    %v774 = vpack.c.b16 %v666, %v665
    %v775 = vpack.c.b16 %v668, %v667
    %v776 = vpack.c.b16 %v670, %v669
    %v777 = vpack.c.b16 %v672, %v671
    %v778 = vpack.c.b16 %v674, %v673
    %v899 = vunpack.c.l.b16 %v243
    %v900 = vunpack.c.l.b16 %v244
    %v901 = vunpack.c.l.b16 %v245
    %v902 = vunpack.c.l.b16 %v246
    %v903 = vunpack.c.l.b16 %v247
    %v904 = vunpack.c.l.b16 %v248
    %v905 = vunpack.c.l.b16 %v249
    %v906 = vunpack.c.l.b16 %v250
    %v907 = vunpack.c.l.b16 %v251
    %v908 = vunpack.c.l.b16 %v252
    %v909 = vunpack.c.l.b16 %v253
    %v910 = vunpack.c.l.b16 %v254
    %v911 = vunpack.c.l.b16 %v255
    %v912 = vunpack.c.l.b16 %v256
    %v913 = vunpack.c.l.b16 %v257
    %v914 = vunpack.c.l.b16 %v258
    %v915 = vpack.c.b16 %v900, %v899
    %v916 = vpack.c.b16 %v902, %v901
    %v917 = vpack.c.b16 %v904, %v903
    %v918 = vpack.c.b16 %v906, %v905
    %v919 = vpack.c.b16 %v908, %v907
    %v920 = vpack.c.b16 %v910, %v909
    %v921 = vpack.c.b16 %v912, %v911
    %v922 = vpack.c.b16 %v914, %v913
    %931 = vmatprep.subr.bf16.mxu0 0
    %932 = vmatpush1.bf16.msra.mxu0 %v915
    %933 = vmatprep.subr.bf16.mxu0 0
    %934 = vmatpush1.bf16.msra.mxu0 %v916
    %935 = vmatprep.subr.bf16.mxu0 0
    %936 = vmatpush1.bf16.msra.mxu0 %v917
    %937 = vmatprep.subr.bf16.mxu0 0
    %938 = vmatpush1.bf16.msra.mxu0 %v918
    %939 = vmatprep.subr.bf16.mxu0 0
    %940 = vmatpush1.bf16.msra.mxu0 %v919
    %941 = vmatprep.subr.bf16.mxu0 0
    %942 = vmatpush1.bf16.msra.mxu0 %v920
    %943 = vmatprep.subr.bf16.mxu0 0
    %944 = vmatpush1.bf16.msra.mxu0 %v921
    %945 = vmatprep.subr.bf16.mxu0 0
    %946 = vmatpush1.bf16.msra.mxu0 %v922
    %947 = vmatprep.subr.bf16.mxu0 0
    %948 = vmatpush1.bf16.msra.mxu0 0
    %949 = vmatprep.subr.bf16.mxu0 0
    %950 = vmatpush1.bf16.msra.mxu0 0
    %951 = vmatprep.subr.bf16.mxu0 0
    %952 = vmatpush1.bf16.msra.mxu0 0
    %953 = vmatprep.subr.bf16.mxu0 0
    %954 = vmatpush1.bf16.msra.mxu0 0
    %955 = vmatprep.subr.bf16.mxu0 0
    %956 = vmatpush1.bf16.msra.mxu0 0
    %957 = vmatprep.subr.bf16.mxu0 0
    %958 = vmatpush1.bf16.msra.mxu0 0
    %959 = vmatprep.subr.bf16.mxu0 0
    %960 = vmatpush1.bf16.msra.mxu0 0
    %961 = vmatprep.subr.bf16.mxu0 0
    %962 = vmatpush1.bf16.msra.mxu0 0
    %963 = vmatprep.mubr.bf16.mxu0 0
    %964 = vmatmul.mubr.bf16.gmra.mrb[0].mxu0 %v675
    %v965 = vpop.f32.mrb[0].mxu0
    %v966 = vadd.f32 0.0, %v965
    %v967 = vpop.f32.mrb[0].mxu0
    %v968 = vpop.f32.mrb[0].mxu0
    %v969 = vadd.f32 0.0, %v968
    %v970 = vpop.f32.mrb[0].mxu0
    %971 = vmatprep.mubr.bf16.mxu0 0
    %972 = vmatmul.mubr.bf16.gmra.mrb[0].mxu0 %v676
    %v973 = vpop.f32.mrb[0].mxu0
    %v974 = vadd.f32 0.0, %v973
    %v975 = vpop.f32.mrb[0].mxu0
    %v976 = vpop.f32.mrb[0].mxu0
    %v977 = vadd.f32 0.0, %v976
    %v978 = vpop.f32.mrb[0].mxu0
    %979 = vmatprep.mubr.bf16.mxu0 0
    %980 = vmatmul.mubr.bf16.gmra.mrb[0].mxu0 %v677
    %v981 = vpop.f32.mrb[0].mxu0
    %v982 = vadd.f32 0.0, %v981
    %v983 = vpop.f32.mrb[0].mxu0
    %v984 = vpop.f32.mrb[0].mxu0
    %v985 = vadd.f32 0.0, %v984
    %v986 = vpop.f32.mrb[0].mxu0
    %987 = vmatprep.mubr.bf16.mxu0 0
    %988 = vmatmul.mubr.bf16.gmra.mrb[0].mxu0 %v678
    %v989 = vpop.f32.mrb[0].mxu0
    %v990 = vadd.f32 0.0, %v989
    %v991 = vpop.f32.mrb[0].mxu0
    %v992 = vpop.f32.mrb[0].mxu0
    %v993 = vadd.f32 0.0, %v992
    %v994 = vpop.f32.mrb[0].mxu0
    %995 = vmatprep.mubr.bf16.mxu0 0
    %996 = vmatmul.mubr.bf16.gmra.mrb[0].mxu0 %v679
    %v997 = vpop.f32.mrb[0].mxu0
    %v998 = vadd.f32 0.0, %v997
    %v999 = vpop.f32.mrb[0].mxu0
    %v1000 = vpop.f32.mrb[0].mxu0
    %v1001 = vadd.f32 0.0, %v1000
    %v1002 = vpop.f32.mrb[0].mxu0
    %1003 = vmatprep.mubr.bf16.mxu0 0
    %1004 = vmatmul.mubr.bf16.gmra.mrb[0].mxu0 %v680
    %v1005 = vpop.f32.mrb[0].mxu0
    %v1006 = vadd.f32 0.0, %v1005
    %v1007 = vpop.f32.mrb[0].mxu0
    %v1008 = vpop.f32.mrb[0].mxu0
    %v1009 = vadd.f32 0.0, %v1008
    %v1010 = vpop.f32.mrb[0].mxu0
    %1011 = vmatprep.mubr.bf16.mxu0 0
    %1012 = vmatmul.mubr.bf16.gmra.mrb[0].mxu0 %v681
    %v1013 = vpop.f32.mrb[0].mxu0
    %v1014 = vadd.f32 0.0, %v1013
    %v1015 = vpop.f32.mrb[0].mxu0
    %v1016 = vpop.f32.mrb[0].mxu0
    %v1017 = vadd.f32 0.0, %v1016
    %v1018 = vpop.f32.mrb[0].mxu0
    %1019 = vmatprep.mubr.bf16.mxu0 0
    %1020 = vmatmul.mubr.bf16.gmra.mrb[0].mxu0 %v682
    %v1021 = vpop.f32.mrb[0].mxu0
    %v1022 = vadd.f32 0.0, %v1021
    %v1023 = vpop.f32.mrb[0].mxu0
    %v1024 = vpop.f32.mrb[0].mxu0
    %v1025 = vadd.f32 0.0, %v1024
    %v1026 = vpop.f32.mrb[0].mxu0
    %1027 = vmatprep.mubr.bf16.mxu0 0
    %1028 = vmatmul.mubr.bf16.gmra.mrb[0].mxu0 %v683
    %v1029 = vpop.f32.mrb[0].mxu0
    %v1030 = vadd.f32 0.0, %v1029
    %v1031 = vpop.f32.mrb[0].mxu0
    %v1032 = vpop.f32.mrb[0].mxu0
    %v1033 = vadd.f32 0.0, %v1032
    %v1034 = vpop.f32.mrb[0].mxu0
    %1035 = vmatprep.mubr.bf16.mxu0 0
    %1036 = vmatmul.mubr.bf16.gmra.mrb[0].mxu0 %v684
    %v1037 = vpop.f32.mrb[0].mxu0
    %v1038 = vadd.f32 0.0, %v1037
    %v1039 = vpop.f32.mrb[0].mxu0
    %v1040 = vpop.f32.mrb[0].mxu0
    %v1041 = vadd.f32 0.0, %v1040
    %v1042 = vpop.f32.mrb[0].mxu0
    %1043 = vmatprep.mubr.bf16.mxu0 0
    %1044 = vmatmul.mubr.bf16.gmra.mrb[0].mxu0 %v685
    %v1045 = vpop.f32.mrb[0].mxu0
    %v1046 = vadd.f32 0.0, %v1045
    %v1047 = vpop.f32.mrb[0].mxu0
    %v1048 = vpop.f32.mrb[0].mxu0
    %v1049 = vadd.f32 0.0, %v1048
    %v1050 = vpop.f32.mrb[0].mxu0
    %1051 = vmatprep.mubr.bf16.mxu0 0
    %1052 = vmatmul.mubr.bf16.gmra.mrb[0].mxu0 %v686
    %v1053 = vpop.f32.mrb[0].mxu0
    %v1054 = vadd.f32 0.0, %v1053
    %v1055 = vpop.f32.mrb[0].mxu0
    %v1056 = vpop.f32.mrb[0].mxu0
    %v1057 = vadd.f32 0.0, %v1056
    %v1058 = vpop.f32.mrb[0].mxu0
    %1059 = vmatprep.mubr.bf16.mxu0 0
    %1060 = vmatmul.mubr.bf16.gmra.mrb[0].mxu0 %v687
    %v1061 = vpop.f32.mrb[0].mxu0
    %v1062 = vadd.f32 0.0, %v1061
    %v1063 = vpop.f32.mrb[0].mxu0
    %v1064 = vpop.f32.mrb[0].mxu0
    %v1065 = vadd.f32 0.0, %v1064
    %v1066 = vpop.f32.mrb[0].mxu0
    %1067 = vmatprep.mubr.bf16.mxu0 0
    %1068 = vmatmul.mubr.bf16.gmra.mrb[0].mxu0 %v688
    %v1069 = vpop.f32.mrb[0].mxu0
    %v1070 = vadd.f32 0.0, %v1069
    %v1071 = vpop.f32.mrb[0].mxu0
    %v1072 = vpop.f32.mrb[0].mxu0
    %v1073 = vadd.f32 0.0, %v1072
    %v1074 = vpop.f32.mrb[0].mxu0
    %1075 = vmatprep.mubr.bf16.mxu0 0
    %1076 = vmatmul.mubr.bf16.gmra.mrb[0].mxu0 %v689
    %v1077 = vpop.f32.mrb[0].mxu0
    %v1078 = vadd.f32 0.0, %v1077
    %v1079 = vpop.f32.mrb[0].mxu0
    %v1080 = vpop.f32.mrb[0].mxu0
    %v1081 = vadd.f32 0.0, %v1080
    %v1082 = vpop.f32.mrb[0].mxu0
    %1083 = vmatprep.mubr.bf16.mxu0 0
    %1084 = vmatmul.mubr.bf16.gmra.mrb[0].mxu0 %v690
    %v1085 = vpop.f32.mrb[0].mxu0
    %v1086 = vadd.f32 0.0, %v1085
    %v1087 = vpop.f32.mrb[0].mxu0
    %v1088 = vpop.f32.mrb[0].mxu0
    %v1089 = vadd.f32 0.0, %v1088
    %v1090 = vpop.f32.mrb[0].mxu0
    %1091 = vmatprep.mubr.bf16.mxu0 0
    %1092 = vmatmul.mubr.bf16.gmra.mrb[0].mxu0 %v691
    %v1093 = vpop.f32.mrb[0].mxu0
    %v1094 = vadd.f32 0.0, %v1093
    %v1095 = vpop.f32.mrb[0].mxu0
    %v1096 = vpop.f32.mrb[0].mxu0
    %v1097 = vadd.f32 0.0, %v1096
    %v1098 = vpop.f32.mrb[0].mxu0
    %1099 = vmatprep.mubr.bf16.mxu0 0
    %1100 = vmatmul.mubr.bf16.gmra.mrb[0].mxu0 %v692
    %v1101 = vpop.f32.mrb[0].mxu0
    %v1102 = vadd.f32 0.0, %v1101
    %v1103 = vpop.f32.mrb[0].mxu0
    %v1104 = vpop.f32.mrb[0].mxu0
    %v1105 = vadd.f32 0.0, %v1104
    %v1106 = vpop.f32.mrb[0].mxu0
    %1107 = vmatprep.mubr.bf16.mxu0 0
    %1108 = vmatmul.mubr.bf16.gmra.mrb[0].mxu0 %v693
    %v1109 = vpop.f32.mrb[0].mxu0
    %v1110 = vadd.f32 0.0, %v1109
    %v1111 = vpop.f32.mrb[0].mxu0
    %v1112 = vpop.f32.mrb[0].mxu0
    %v1113 = vadd.f32 0.0, %v1112
    %v1114 = vpop.f32.mrb[0].mxu0
    %1115 = vmatprep.mubr.bf16.mxu0 0
    %1116 = vmatmul.mubr.bf16.gmra.mrb[0].mxu0 %v694
    %v1117 = vpop.f32.mrb[0].mxu0
    %v1118 = vadd.f32 0.0, %v1117
    %v1119 = vpop.f32.mrb[0].mxu0
    %v1120 = vpop.f32.mrb[0].mxu0
    %v1121 = vadd.f32 0.0, %v1120
    %v1122 = vpop.f32.mrb[0].mxu0
    %1123 = vmatprep.mubr.bf16.mxu0 0
    %1124 = vmatmul.mubr.bf16.gmra.mrb[0].mxu0 %v695
    %v1125 = vpop.f32.mrb[0].mxu0
    %v1126 = vadd.f32 0.0, %v1125
    %v1127 = vpop.f32.mrb[0].mxu0
    %v1128 = vpop.f32.mrb[0].mxu0
    %v1129 = vadd.f32 0.0, %v1128
    %v1130 = vpop.f32.mrb[0].mxu0
    %1131 = vmatprep.mubr.bf16.mxu0 0
    %1132 = vmatmul.mubr.bf16.gmra.mrb[0].mxu0 %v696
    %v1133 = vpop.f32.mrb[0].mxu0
    %v1134 = vadd.f32 0.0, %v1133
    %v1135 = vpop.f32.mrb[0].mxu0
    %v1136 = vpop.f32.mrb[0].mxu0
    %v1137 = vadd.f32 0.0, %v1136
    %v1138 = vpop.f32.mrb[0].mxu0
    %1139 = vmatprep.mubr.bf16.mxu0 0
    %1140 = vmatmul.mubr.bf16.gmra.mrb[0].mxu0 %v697
    %v1141 = vpop.f32.mrb[0].mxu0
    %v1142 = vadd.f32 0.0, %v1141
    %v1143 = vpop.f32.mrb[0].mxu0
    %v1144 = vpop.f32.mrb[0].mxu0
    %v1145 = vadd.f32 0.0, %v1144
    %v1146 = vpop.f32.mrb[0].mxu0
    %1147 = vmatprep.mubr.bf16.mxu0 0
    %1148 = vmatmul.mubr.bf16.gmra.mrb[0].mxu0 %v698
    %v1149 = vpop.f32.mrb[0].mxu0
    %v1150 = vadd.f32 0.0, %v1149
    %v1151 = vpop.f32.mrb[0].mxu0
    %v1152 = vpop.f32.mrb[0].mxu0
    %v1153 = vadd.f32 0.0, %v1152
    %v1154 = vpop.f32.mrb[0].mxu0
    %1155 = vmatprep.mubr.bf16.mxu0 0
    %1156 = vmatmul.mubr.bf16.gmra.mrb[0].mxu0 %v699
    %v1157 = vpop.f32.mrb[0].mxu0
    %v1158 = vadd.f32 0.0, %v1157
    %v1159 = vpop.f32.mrb[0].mxu0
    %v1160 = vpop.f32.mrb[0].mxu0
    %v1161 = vadd.f32 0.0, %v1160
    %v1162 = vpop.f32.mrb[0].mxu0
    %1163 = vmatprep.mubr.bf16.mxu0 0
    %1164 = vmatmul.mubr.bf16.gmra.mrb[0].mxu0 %v700
    %v1165 = vpop.f32.mrb[0].mxu0
    %v1166 = vadd.f32 0.0, %v1165
    %v1167 = vpop.f32.mrb[0].mxu0
    %v1168 = vpop.f32.mrb[0].mxu0
    %v1169 = vadd.f32 0.0, %v1168
    %v1170 = vpop.f32.mrb[0].mxu0
    %1171 = vmatprep.mubr.bf16.mxu0 0
    %1172 = vmatmul.mubr.bf16.gmra.mrb[0].mxu0 %v701
    %v1173 = vpop.f32.mrb[0].mxu0
    %v1174 = vadd.f32 0.0, %v1173
    %v1175 = vpop.f32.mrb[0].mxu0
    %v1176 = vpop.f32.mrb[0].mxu0
    %v1177 = vadd.f32 0.0, %v1176
    %v1178 = vpop.f32.mrb[0].mxu0
    %1179 = vmatprep.mubr.bf16.mxu0 0
    %1180 = vmatmul.mubr.bf16.gmra.mrb[0].mxu0 %v702
    %v1181 = vpop.f32.mrb[0].mxu0
    %v1182 = vadd.f32 0.0, %v1181
    %v1183 = vpop.f32.mrb[0].mxu0
    %v1184 = vpop.f32.mrb[0].mxu0
    %v1185 = vadd.f32 0.0, %v1184
    %v1186 = vpop.f32.mrb[0].mxu0
    %1187 = vmatprep.mubr.bf16.mxu0 0
    %1188 = vmatmul.mubr.bf16.gmra.mrb[0].mxu0 %v703
    %v1189 = vpop.f32.mrb[0].mxu0
    %v1190 = vadd.f32 0.0, %v1189
    %v1191 = vpop.f32.mrb[0].mxu0
    %v1192 = vpop.f32.mrb[0].mxu0
    %v1193 = vadd.f32 0.0, %v1192
    %v1194 = vpop.f32.mrb[0].mxu0
    %1195 = vmatprep.mubr.bf16.mxu0 0
    %1196 = vmatmul.mubr.bf16.gmra.mrb[0].mxu0 %v704
    %v1197 = vpop.f32.mrb[0].mxu0
    %v1198 = vadd.f32 0.0, %v1197
    %v1199 = vpop.f32.mrb[0].mxu0
    %v1200 = vpop.f32.mrb[0].mxu0
    %v1201 = vadd.f32 0.0, %v1200
    %v1202 = vpop.f32.mrb[0].mxu0
    %1203 = vmatprep.mubr.bf16.mxu0 0
    %1204 = vmatmul.mubr.bf16.gmra.mrb[0].mxu0 %v705
    %v1205 = vpop.f32.mrb[0].mxu0
    %v1206 = vadd.f32 0.0, %v1205
    %v1207 = vpop.f32.mrb[0].mxu0
    %v1208 = vpop.f32.mrb[0].mxu0
    %v1209 = vadd.f32 0.0, %v1208
    %v1210 = vpop.f32.mrb[0].mxu0
    %1211 = vmatprep.mubr.bf16.mxu0 0
    %1212 = vmatmul.mubr.bf16.gmra.mrb[0].mxu0 %v706
    %v1213 = vpop.f32.mrb[0].mxu0
    %v1214 = vadd.f32 0.0, %v1213
    %v1215 = vpop.f32.mrb[0].mxu0
    %v1216 = vpop.f32.mrb[0].mxu0
    %v1217 = vadd.f32 0.0, %v1216
    %v1218 = vpop.f32.mrb[0].mxu0
    %1219 = vmatprep.mubr.bf16.mxu0 0
    %1220 = vmatmul.mubr.bf16.gmra.mrb[0].mxu0 %v707
    %v1221 = vpop.f32.mrb[0].mxu0
    %v1222 = vadd.f32 0.0, %v1221
    %v1223 = vpop.f32.mrb[0].mxu0
    %v1224 = vpop.f32.mrb[0].mxu0
    %v1225 = vadd.f32 0.0, %v1224
    %v1226 = vpop.f32.mrb[0].mxu0
    %1227 = vmatprep.mubr.bf16.mxu0 0
    %1228 = vmatmul.mubr.bf16.gmra.mrb[0].mxu0 %v708
    %v1229 = vpop.f32.mrb[0].mxu0
    %v1230 = vadd.f32 0.0, %v1229
    %v1231 = vpop.f32.mrb[0].mxu0
    %v1232 = vpop.f32.mrb[0].mxu0
    %v1233 = vadd.f32 0.0, %v1232
    %v1234 = vpop.f32.mrb[0].mxu0
    %1235 = vmatprep.mubr.bf16.mxu0 0
    %1236 = vmatmul.mubr.bf16.gmra.mrb[0].mxu0 %v709
    %v1237 = vpop.f32.mrb[0].mxu0
    %v1238 = vadd.f32 0.0, %v1237
    %v1239 = vpop.f32.mrb[0].mxu0
    %v1240 = vpop.f32.mrb[0].mxu0
    %v1241 = vadd.f32 0.0, %v1240
    %v1242 = vpop.f32.mrb[0].mxu0
    %1243 = vmatprep.mubr.bf16.mxu0 0
    %1244 = vmatmul.mubr.bf16.gmra.mrb[0].mxu0 %v710
    %v1245 = vpop.f32.mrb[0].mxu0
    %v1246 = vadd.f32 0.0, %v1245
    %v1247 = vpop.f32.mrb[0].mxu0
    %v1248 = vpop.f32.mrb[0].mxu0
    %v1249 = vadd.f32 0.0, %v1248
    %v1250 = vpop.f32.mrb[0].mxu0
    %1251 = vmatprep.mubr.bf16.mxu0 0
    %1252 = vmatmul.mubr.bf16.gmra.mrb[0].mxu0 %v711
    %v1253 = vpop.f32.mrb[0].mxu0
    %v1254 = vadd.f32 0.0, %v1253
    %v1255 = vpop.f32.mrb[0].mxu0
    %v1256 = vpop.f32.mrb[0].mxu0
    %v1257 = vadd.f32 0.0, %v1256
    %v1258 = vpop.f32.mrb[0].mxu0
    %1259 = vmatprep.mubr.bf16.mxu0 0
    %1260 = vmatmul.mubr.bf16.gmra.mrb[0].mxu0 %v712
    %v1261 = vpop.f32.mrb[0].mxu0
    %v1262 = vadd.f32 0.0, %v1261
    %v1263 = vpop.f32.mrb[0].mxu0
    %v1264 = vpop.f32.mrb[0].mxu0
    %v1265 = vadd.f32 0.0, %v1264
    %v1266 = vpop.f32.mrb[0].mxu0
    %1267 = vmatprep.mubr.bf16.mxu0 0
    %1268 = vmatmul.mubr.bf16.gmra.mrb[0].mxu0 %v713
    %v1269 = vpop.f32.mrb[0].mxu0
    %v1270 = vadd.f32 0.0, %v1269
    %v1271 = vpop.f32.mrb[0].mxu0
    %v1272 = vpop.f32.mrb[0].mxu0
    %v1273 = vadd.f32 0.0, %v1272
    %v1274 = vpop.f32.mrb[0].mxu0
    %1275 = vmatprep.mubr.bf16.mxu0 0
    %1276 = vmatmul.mubr.bf16.gmra.mrb[0].mxu0 %v714
    %v1277 = vpop.f32.mrb[0].mxu0
    %v1278 = vadd.f32 0.0, %v1277
    %v1279 = vpop.f32.mrb[0].mxu0
    %v1280 = vpop.f32.mrb[0].mxu0
    %v1281 = vadd.f32 0.0, %v1280
    %v1282 = vpop.f32.mrb[0].mxu0
    %1283 = vmatprep.mubr.bf16.mxu0 0
    %1284 = vmatmul.mubr.bf16.gmra.mrb[0].mxu0 %v715
    %v1285 = vpop.f32.mrb[0].mxu0
    %v1286 = vadd.f32 0.0, %v1285
    %v1287 = vpop.f32.mrb[0].mxu0
    %v1288 = vpop.f32.mrb[0].mxu0
    %v1289 = vadd.f32 0.0, %v1288
    %v1290 = vpop.f32.mrb[0].mxu0
    %1291 = vmatprep.mubr.bf16.mxu0 0
    %1292 = vmatmul.mubr.bf16.gmra.mrb[0].mxu0 %v716
    %v1293 = vpop.f32.mrb[0].mxu0
    %v1294 = vadd.f32 0.0, %v1293
    %v1295 = vpop.f32.mrb[0].mxu0
    %v1296 = vpop.f32.mrb[0].mxu0
    %v1297 = vadd.f32 0.0, %v1296
    %v1298 = vpop.f32.mrb[0].mxu0
    %1299 = vmatprep.mubr.bf16.mxu0 0
    %1300 = vmatmul.mubr.bf16.gmra.mrb[0].mxu0 %v717
    %v1301 = vpop.f32.mrb[0].mxu0
    %v1302 = vadd.f32 0.0, %v1301
    %v1303 = vpop.f32.mrb[0].mxu0
    %v1304 = vpop.f32.mrb[0].mxu0
    %v1305 = vadd.f32 0.0, %v1304
    %v1306 = vpop.f32.mrb[0].mxu0
    %1307 = vmatprep.mubr.bf16.mxu0 0
    %1308 = vmatmul.mubr.bf16.gmra.mrb[0].mxu0 %v718
    %v1309 = vpop.f32.mrb[0].mxu0
    %v1310 = vadd.f32 0.0, %v1309
    %v1311 = vpop.f32.mrb[0].mxu0
    %v1312 = vpop.f32.mrb[0].mxu0
    %v1313 = vadd.f32 0.0, %v1312
    %v1314 = vpop.f32.mrb[0].mxu0
    %1315 = vmatprep.mubr.bf16.mxu0 0
    %1316 = vmatmul.mubr.bf16.gmra.mrb[0].mxu0 %v719
    %v1317 = vpop.f32.mrb[0].mxu0
    %v1318 = vadd.f32 0.0, %v1317
    %v1319 = vpop.f32.mrb[0].mxu0
    %v1320 = vpop.f32.mrb[0].mxu0
    %v1321 = vadd.f32 0.0, %v1320
    %v1322 = vpop.f32.mrb[0].mxu0
    %1323 = vmatprep.mubr.bf16.mxu0 0
    %1324 = vmatmul.mubr.bf16.gmra.mrb[0].mxu0 %v720
    %v1325 = vpop.f32.mrb[0].mxu0
    %v1326 = vadd.f32 0.0, %v1325
    %v1327 = vpop.f32.mrb[0].mxu0
    %v1328 = vpop.f32.mrb[0].mxu0
    %v1329 = vadd.f32 0.0, %v1328
    %v1330 = vpop.f32.mrb[0].mxu0
    %1331 = vmatprep.mubr.bf16.mxu0 0
    %1332 = vmatmul.mubr.bf16.gmra.mrb[0].mxu0 %v721
    %v1333 = vpop.f32.mrb[0].mxu0
    %v1334 = vadd.f32 0.0, %v1333
    %v1335 = vpop.f32.mrb[0].mxu0
    %v1336 = vpop.f32.mrb[0].mxu0
    %v1337 = vadd.f32 0.0, %v1336
    %v1338 = vpop.f32.mrb[0].mxu0
    %1339 = vmatprep.mubr.bf16.mxu0 0
    %1340 = vmatmul.mubr.bf16.gmra.mrb[0].mxu0 %v722
    %v1341 = vpop.f32.mrb[0].mxu0
    %v1342 = vadd.f32 0.0, %v1341
    %v1343 = vpop.f32.mrb[0].mxu0
    %v1344 = vpop.f32.mrb[0].mxu0
    %v1345 = vadd.f32 0.0, %v1344
    %v1346 = vpop.f32.mrb[0].mxu0
    %1347 = vmatprep.mubr.bf16.mxu0 0
    %1348 = vmatmul.mubr.bf16.gmra.mrb[0].mxu0 %v723
    %v1349 = vpop.f32.mrb[0].mxu0
    %v1350 = vadd.f32 0.0, %v1349
    %v1351 = vpop.f32.mrb[0].mxu0
    %v1352 = vpop.f32.mrb[0].mxu0
    %v1353 = vadd.f32 0.0, %v1352
    %v1354 = vpop.f32.mrb[0].mxu0
    %1355 = vmatprep.mubr.bf16.mxu0 0
    %1356 = vmatmul.mubr.bf16.gmra.mrb[0].mxu0 %v724
    %v1357 = vpop.f32.mrb[0].mxu0
    %v1358 = vadd.f32 0.0, %v1357
    %v1359 = vpop.f32.mrb[0].mxu0
    %v1360 = vpop.f32.mrb[0].mxu0
    %v1361 = vadd.f32 0.0, %v1360
    %v1362 = vpop.f32.mrb[0].mxu0
    %1363 = vmatprep.mubr.bf16.mxu0 0
    %1364 = vmatmul.mubr.bf16.gmra.mrb[0].mxu0 %v725
    %v1365 = vpop.f32.mrb[0].mxu0
    %v1366 = vadd.f32 0.0, %v1365
    %v1367 = vpop.f32.mrb[0].mxu0
    %v1368 = vpop.f32.mrb[0].mxu0
    %v1369 = vadd.f32 0.0, %v1368
    %v1370 = vpop.f32.mrb[0].mxu0
    %1371 = vmatprep.mubr.bf16.mxu0 0
    %1372 = vmatmul.mubr.bf16.gmra.mrb[0].mxu0 %v726
    %v1373 = vpop.f32.mrb[0].mxu0
    %v1374 = vadd.f32 0.0, %v1373
    %v1375 = vpop.f32.mrb[0].mxu0
    %v1376 = vpop.f32.mrb[0].mxu0
    %v1377 = vadd.f32 0.0, %v1376
    %v1378 = vpop.f32.mrb[0].mxu0
    %1379 = vmatprep.mubr.bf16.mxu0 0
    %1380 = vmatmul.mubr.bf16.gmra.mrb[0].mxu0 %v727
    %v1381 = vpop.f32.mrb[0].mxu0
    %v1382 = vadd.f32 0.0, %v1381
    %v1383 = vpop.f32.mrb[0].mxu0
    %v1384 = vpop.f32.mrb[0].mxu0
    %v1385 = vadd.f32 0.0, %v1384
    %v1386 = vpop.f32.mrb[0].mxu0
    %1387 = vmatprep.mubr.bf16.mxu0 0
    %1388 = vmatmul.mubr.bf16.gmra.mrb[0].mxu0 %v728
    %v1389 = vpop.f32.mrb[0].mxu0
    %v1390 = vadd.f32 0.0, %v1389
    %v1391 = vpop.f32.mrb[0].mxu0
    %v1392 = vpop.f32.mrb[0].mxu0
    %v1393 = vadd.f32 0.0, %v1392
    %v1394 = vpop.f32.mrb[0].mxu0
    %1395 = vmatprep.mubr.bf16.mxu0 0
    %1396 = vmatmul.mubr.bf16.gmra.mrb[0].mxu0 %v729
    %v1397 = vpop.f32.mrb[0].mxu0
    %v1398 = vadd.f32 0.0, %v1397
    %v1399 = vpop.f32.mrb[0].mxu0
    %v1400 = vpop.f32.mrb[0].mxu0
    %v1401 = vadd.f32 0.0, %v1400
    %v1402 = vpop.f32.mrb[0].mxu0
    %1403 = vmatprep.mubr.bf16.mxu0 0
    %1404 = vmatmul.mubr.bf16.gmra.mrb[0].mxu0 %v730
    %v1405 = vpop.f32.mrb[0].mxu0
    %v1406 = vadd.f32 0.0, %v1405
    %v1407 = vpop.f32.mrb[0].mxu0
    %v1408 = vpop.f32.mrb[0].mxu0
    %v1409 = vadd.f32 0.0, %v1408
    %v1410 = vpop.f32.mrb[0].mxu0
    %1411 = vmatprep.mubr.bf16.mxu0 0
    %1412 = vmatmul.mubr.bf16.gmra.mrb[0].mxu0 %v731
    %v1413 = vpop.f32.mrb[0].mxu0
    %v1414 = vadd.f32 0.0, %v1413
    %v1415 = vpop.f32.mrb[0].mxu0
    %v1416 = vpop.f32.mrb[0].mxu0
    %v1417 = vadd.f32 0.0, %v1416
    %v1418 = vpop.f32.mrb[0].mxu0
    %1419 = vmatprep.mubr.bf16.mxu0 0
    %1420 = vmatmul.mubr.bf16.gmra.mrb[0].mxu0 %v732
    %v1421 = vpop.f32.mrb[0].mxu0
    %v1422 = vadd.f32 0.0, %v1421
    %v1423 = vpop.f32.mrb[0].mxu0
    %v1424 = vpop.f32.mrb[0].mxu0
    %v1425 = vadd.f32 0.0, %v1424
    %v1426 = vpop.f32.mrb[0].mxu0
    %1427 = vmatprep.mubr.bf16.mxu0 0
    %1428 = vmatmul.mubr.bf16.gmra.mrb[0].mxu0 %v733
    %v1429 = vpop.f32.mrb[0].mxu0
    %v1430 = vadd.f32 0.0, %v1429
    %v1431 = vpop.f32.mrb[0].mxu0
    %v1432 = vpop.f32.mrb[0].mxu0
    %v1433 = vadd.f32 0.0, %v1432
    %v1434 = vpop.f32.mrb[0].mxu0
    %1435 = vmatprep.mubr.bf16.mxu0 0
    %1436 = vmatmul.mubr.bf16.gmra.mrb[0].mxu0 %v734
    %v1437 = vpop.f32.mrb[0].mxu0
    %v1438 = vadd.f32 0.0, %v1437
    %v1439 = vpop.f32.mrb[0].mxu0
    %v1440 = vpop.f32.mrb[0].mxu0
    %v1441 = vadd.f32 0.0, %v1440
    %v1442 = vpop.f32.mrb[0].mxu0
    %1443 = vmatprep.mubr.bf16.mxu0 0
    %1444 = vmatmul.mubr.bf16.gmra.mrb[0].mxu0 %v735
    %v1445 = vpop.f32.mrb[0].mxu0
    %v1446 = vadd.f32 0.0, %v1445
    %v1447 = vpop.f32.mrb[0].mxu0
    %v1448 = vpop.f32.mrb[0].mxu0
    %v1449 = vadd.f32 0.0, %v1448
    %v1450 = vpop.f32.mrb[0].mxu0
    %1451 = vmatprep.mubr.bf16.mxu0 0
    %1452 = vmatmul.mubr.bf16.gmra.mrb[0].mxu0 %v736
    %v1453 = vpop.f32.mrb[0].mxu0
    %v1454 = vadd.f32 0.0, %v1453
    %v1455 = vpop.f32.mrb[0].mxu0
    %v1456 = vpop.f32.mrb[0].mxu0
    %v1457 = vadd.f32 0.0, %v1456
    %v1458 = vpop.f32.mrb[0].mxu0
    %1459 = vmatprep.mubr.bf16.mxu0 0
    %1460 = vmatmul.mubr.bf16.gmra.mrb[0].mxu0 %v737
    %v1461 = vpop.f32.mrb[0].mxu0
    %v1462 = vadd.f32 0.0, %v1461
    %v1463 = vpop.f32.mrb[0].mxu0
    %v1464 = vpop.f32.mrb[0].mxu0
    %v1465 = vadd.f32 0.0, %v1464
    %v1466 = vpop.f32.mrb[0].mxu0
    %1467 = vmatprep.mubr.bf16.mxu0 0
    %1468 = vmatmul.mubr.bf16.gmra.mrb[0].mxu0 %v738
    %v1469 = vpop.f32.mrb[0].mxu0
    %v1470 = vadd.f32 0.0, %v1469
    %v1471 = vpop.f32.mrb[0].mxu0
    %v1472 = vpop.f32.mrb[0].mxu0
    %v1473 = vadd.f32 0.0, %v1472
    %v1474 = vpop.f32.mrb[0].mxu0
    %1475 = vmatprep.mubr.bf16.mxu0 0
    %1476 = vmatmul.mubr.bf16.gmra.mrb[0].mxu0 %v739
    %v1477 = vpop.f32.mrb[0].mxu0
    %v1478 = vadd.f32 0.0, %v1477
    %v1479 = vpop.f32.mrb[0].mxu0
    %v1480 = vpop.f32.mrb[0].mxu0
    %v1481 = vadd.f32 0.0, %v1480
    %v1482 = vpop.f32.mrb[0].mxu0
    %1483 = vmatprep.mubr.bf16.mxu0 0
    %1484 = vmatmul.mubr.bf16.gmra.mrb[0].mxu0 %v740
    %v1485 = vpop.f32.mrb[0].mxu0
    %v1486 = vadd.f32 0.0, %v1485
    %v1487 = vpop.f32.mrb[0].mxu0
    %v1488 = vpop.f32.mrb[0].mxu0
    %v1489 = vadd.f32 0.0, %v1488
    %v1490 = vpop.f32.mrb[0].mxu0
    %1491 = vmatprep.mubr.bf16.mxu0 0
    %1492 = vmatmul.mubr.bf16.gmra.mrb[0].mxu0 %v741
    %v1493 = vpop.f32.mrb[0].mxu0
    %v1494 = vadd.f32 0.0, %v1493
    %v1495 = vpop.f32.mrb[0].mxu0
    %v1496 = vpop.f32.mrb[0].mxu0
    %v1497 = vadd.f32 0.0, %v1496
    %v1498 = vpop.f32.mrb[0].mxu0
    %1499 = vmatprep.mubr.bf16.mxu0 0
    %1500 = vmatmul.mubr.bf16.gmra.mrb[0].mxu0 %v742
    %v1501 = vpop.f32.mrb[0].mxu0
    %v1502 = vadd.f32 0.0, %v1501
    %v1503 = vpop.f32.mrb[0].mxu0
    %v1504 = vpop.f32.mrb[0].mxu0
    %v1505 = vadd.f32 0.0, %v1504
    %v1506 = vpop.f32.mrb[0].mxu0
    %1507 = vmatprep.mubr.bf16.mxu0 0
    %1508 = vmatmul.mubr.bf16.gmra.mrb[0].mxu0 %v743
    %v1509 = vpop.f32.mrb[0].mxu0
    %v1510 = vadd.f32 0.0, %v1509
    %v1511 = vpop.f32.mrb[0].mxu0
    %v1512 = vpop.f32.mrb[0].mxu0
    %v1513 = vadd.f32 0.0, %v1512
    %v1514 = vpop.f32.mrb[0].mxu0
    %1515 = vmatprep.mubr.bf16.mxu0 0
    %1516 = vmatmul.mubr.bf16.gmra.mrb[0].mxu0 %v744
    %v1517 = vpop.f32.mrb[0].mxu0
    %v1518 = vadd.f32 0.0, %v1517
    %v1519 = vpop.f32.mrb[0].mxu0
    %v1520 = vpop.f32.mrb[0].mxu0
    %v1521 = vadd.f32 0.0, %v1520
    %v1522 = vpop.f32.mrb[0].mxu0
    %1523 = vmatprep.mubr.bf16.mxu0 0
    %1524 = vmatmul.mubr.bf16.gmra.mrb[0].mxu0 %v745
    %v1525 = vpop.f32.mrb[0].mxu0
    %v1526 = vadd.f32 0.0, %v1525
    %v1527 = vpop.f32.mrb[0].mxu0
    %v1528 = vpop.f32.mrb[0].mxu0
    %v1529 = vadd.f32 0.0, %v1528
    %v1530 = vpop.f32.mrb[0].mxu0
    %1531 = vmatprep.mubr.bf16.mxu0 0
    %1532 = vmatmul.mubr.bf16.gmra.mrb[0].mxu0 %v746
    %v1533 = vpop.f32.mrb[0].mxu0
    %v1534 = vadd.f32 0.0, %v1533
    %v1535 = vpop.f32.mrb[0].mxu0
    %v1536 = vpop.f32.mrb[0].mxu0
    %v1537 = vadd.f32 0.0, %v1536
    %v1538 = vpop.f32.mrb[0].mxu0
    %1539 = vmatprep.mubr.bf16.mxu0 0
    %1540 = vmatmul.mubr.bf16.gmra.mrb[0].mxu0 %v747
    %v1541 = vpop.f32.mrb[0].mxu0
    %v1542 = vadd.f32 0.0, %v1541
    %v1543 = vpop.f32.mrb[0].mxu0
    %v1544 = vpop.f32.mrb[0].mxu0
    %v1545 = vadd.f32 0.0, %v1544
    %v1546 = vpop.f32.mrb[0].mxu0
    %1547 = vmatprep.mubr.bf16.mxu0 0
    %1548 = vmatmul.mubr.bf16.gmra.mrb[0].mxu0 %v748
    %v1549 = vpop.f32.mrb[0].mxu0
    %v1550 = vadd.f32 0.0, %v1549
    %v1551 = vpop.f32.mrb[0].mxu0
    %v1552 = vpop.f32.mrb[0].mxu0
    %v1553 = vadd.f32 0.0, %v1552
    %v1554 = vpop.f32.mrb[0].mxu0
    %1555 = vmatprep.mubr.bf16.mxu0 0
    %1556 = vmatmul.mubr.bf16.gmra.mrb[0].mxu0 %v749
    %v1557 = vpop.f32.mrb[0].mxu0
    %v1558 = vadd.f32 0.0, %v1557
    %v1559 = vpop.f32.mrb[0].mxu0
    %v1560 = vpop.f32.mrb[0].mxu0
    %v1561 = vadd.f32 0.0, %v1560
    %v1562 = vpop.f32.mrb[0].mxu0
    %1563 = vmatprep.mubr.bf16.mxu0 0
    %1564 = vmatmul.mubr.bf16.gmra.mrb[0].mxu0 %v750
    %v1565 = vpop.f32.mrb[0].mxu0
    %v1566 = vadd.f32 0.0, %v1565
    %v1567 = vpop.f32.mrb[0].mxu0
    %v1568 = vpop.f32.mrb[0].mxu0
    %v1569 = vadd.f32 0.0, %v1568
    %v1570 = vpop.f32.mrb[0].mxu0
    %1571 = vmatprep.mubr.bf16.mxu0 0
    %1572 = vmatmul.mubr.bf16.gmra.mrb[0].mxu0 %v751
    %v1573 = vpop.f32.mrb[0].mxu0
    %v1574 = vadd.f32 0.0, %v1573
    %v1575 = vpop.f32.mrb[0].mxu0
    %v1576 = vpop.f32.mrb[0].mxu0
    %v1577 = vadd.f32 0.0, %v1576
    %v1578 = vpop.f32.mrb[0].mxu0
    %1579 = vmatprep.mubr.bf16.mxu0 0
    %1580 = vmatmul.mubr.bf16.gmra.mrb[0].mxu0 %v752
    %v1581 = vpop.f32.mrb[0].mxu0
    %v1582 = vadd.f32 0.0, %v1581
    %v1583 = vpop.f32.mrb[0].mxu0
    %v1584 = vpop.f32.mrb[0].mxu0
    %v1585 = vadd.f32 0.0, %v1584
    %v1586 = vpop.f32.mrb[0].mxu0
    %1587 = vmatprep.mubr.bf16.mxu0 0
    %1588 = vmatmul.mubr.bf16.gmra.mrb[0].mxu0 %v753
    %v1589 = vpop.f32.mrb[0].mxu0
    %v1590 = vadd.f32 0.0, %v1589
    %v1591 = vpop.f32.mrb[0].mxu0
    %v1592 = vpop.f32.mrb[0].mxu0
    %v1593 = vadd.f32 0.0, %v1592
    %v1594 = vpop.f32.mrb[0].mxu0
    %1595 = vmatprep.mubr.bf16.mxu0 0
    %1596 = vmatmul.mubr.bf16.gmra.mrb[0].mxu0 %v754
    %v1597 = vpop.f32.mrb[0].mxu0
    %v1598 = vadd.f32 0.0, %v1597
    %v1599 = vpop.f32.mrb[0].mxu0
    %v1600 = vpop.f32.mrb[0].mxu0
    %v1601 = vadd.f32 0.0, %v1600
    %v1602 = vpop.f32.mrb[0].mxu0
    %1603 = vmatprep.mubr.bf16.mxu0 0
    %1604 = vmatmul.mubr.bf16.gmra.mrb[0].mxu0 %v755
    %v1605 = vpop.f32.mrb[0].mxu0
    %v1606 = vadd.f32 0.0, %v1605
    %v1607 = vpop.f32.mrb[0].mxu0
    %v1608 = vpop.f32.mrb[0].mxu0
    %v1609 = vadd.f32 0.0, %v1608
    %v1610 = vpop.f32.mrb[0].mxu0
    %1611 = vmatprep.mubr.bf16.mxu0 0
    %1612 = vmatmul.mubr.bf16.gmra.mrb[0].mxu0 %v756
    %v1613 = vpop.f32.mrb[0].mxu0
    %v1614 = vadd.f32 0.0, %v1613
    %v1615 = vpop.f32.mrb[0].mxu0
    %v1616 = vpop.f32.mrb[0].mxu0
    %v1617 = vadd.f32 0.0, %v1616
    %v1618 = vpop.f32.mrb[0].mxu0
    %1619 = vmatprep.mubr.bf16.mxu0 0
    %1620 = vmatmul.mubr.bf16.gmra.mrb[0].mxu0 %v757
    %v1621 = vpop.f32.mrb[0].mxu0
    %v1622 = vadd.f32 0.0, %v1621
    %v1623 = vpop.f32.mrb[0].mxu0
    %v1624 = vpop.f32.mrb[0].mxu0
    %v1625 = vadd.f32 0.0, %v1624
    %v1626 = vpop.f32.mrb[0].mxu0
    %1627 = vmatprep.mubr.bf16.mxu0 0
    %1628 = vmatmul.mubr.bf16.gmra.mrb[0].mxu0 %v758
    %v1629 = vpop.f32.mrb[0].mxu0
    %v1630 = vadd.f32 0.0, %v1629
    %v1631 = vpop.f32.mrb[0].mxu0
    %v1632 = vpop.f32.mrb[0].mxu0
    %v1633 = vadd.f32 0.0, %v1632
    %v1634 = vpop.f32.mrb[0].mxu0
    %1635 = vmatprep.mubr.bf16.mxu0 0
    %1636 = vmatmul.mubr.bf16.gmra.mrb[0].mxu0 %v759
    %v1637 = vpop.f32.mrb[0].mxu0
    %v1638 = vadd.f32 0.0, %v1637
    %v1639 = vpop.f32.mrb[0].mxu0
    %v1640 = vpop.f32.mrb[0].mxu0
    %v1641 = vadd.f32 0.0, %v1640
    %v1642 = vpop.f32.mrb[0].mxu0
    %1643 = vmatprep.mubr.bf16.mxu0 0
    %1644 = vmatmul.mubr.bf16.gmra.mrb[0].mxu0 %v760
    %v1645 = vpop.f32.mrb[0].mxu0
    %v1646 = vadd.f32 0.0, %v1645
    %v1647 = vpop.f32.mrb[0].mxu0
    %v1648 = vpop.f32.mrb[0].mxu0
    %v1649 = vadd.f32 0.0, %v1648
    %v1650 = vpop.f32.mrb[0].mxu0
    %1651 = vmatprep.mubr.bf16.mxu0 0
    %1652 = vmatmul.mubr.bf16.gmra.mrb[0].mxu0 %v761
    %v1653 = vpop.f32.mrb[0].mxu0
    %v1654 = vadd.f32 0.0, %v1653
    %v1655 = vpop.f32.mrb[0].mxu0
    %v1656 = vpop.f32.mrb[0].mxu0
    %v1657 = vadd.f32 0.0, %v1656
    %v1658 = vpop.f32.mrb[0].mxu0
    %1659 = vmatprep.mubr.bf16.mxu0 0
    %1660 = vmatmul.mubr.bf16.gmra.mrb[0].mxu0 %v762
    %v1661 = vpop.f32.mrb[0].mxu0
    %v1662 = vadd.f32 0.0, %v1661
    %v1663 = vpop.f32.mrb[0].mxu0
    %v1664 = vpop.f32.mrb[0].mxu0
    %v1665 = vadd.f32 0.0, %v1664
    %v1666 = vpop.f32.mrb[0].mxu0
    %1667 = vmatprep.mubr.bf16.mxu0 0
    %1668 = vmatmul.mubr.bf16.gmra.mrb[0].mxu0 %v763
    %v1669 = vpop.f32.mrb[0].mxu0
    %v1670 = vadd.f32 0.0, %v1669
    %v1671 = vpop.f32.mrb[0].mxu0
    %v1672 = vpop.f32.mrb[0].mxu0
    %v1673 = vadd.f32 0.0, %v1672
    %v1674 = vpop.f32.mrb[0].mxu0
    %1675 = vmatprep.mubr.bf16.mxu0 0
    %1676 = vmatmul.mubr.bf16.gmra.mrb[0].mxu0 %v764
    %v1677 = vpop.f32.mrb[0].mxu0
    %v1678 = vadd.f32 0.0, %v1677
    %v1679 = vpop.f32.mrb[0].mxu0
    %v1680 = vpop.f32.mrb[0].mxu0
    %v1681 = vadd.f32 0.0, %v1680
    %v1682 = vpop.f32.mrb[0].mxu0
    %1683 = vmatprep.mubr.bf16.mxu0 0
    %1684 = vmatmul.mubr.bf16.gmra.mrb[0].mxu0 %v765
    %v1685 = vpop.f32.mrb[0].mxu0
    %v1686 = vadd.f32 0.0, %v1685
    %v1687 = vpop.f32.mrb[0].mxu0
    %v1688 = vpop.f32.mrb[0].mxu0
    %v1689 = vadd.f32 0.0, %v1688
    %v1690 = vpop.f32.mrb[0].mxu0
    %1691 = vmatprep.mubr.bf16.mxu0 0
    %1692 = vmatmul.mubr.bf16.gmra.mrb[0].mxu0 %v766
    %v1693 = vpop.f32.mrb[0].mxu0
    %v1694 = vadd.f32 0.0, %v1693
    %v1695 = vpop.f32.mrb[0].mxu0
    %v1696 = vpop.f32.mrb[0].mxu0
    %v1697 = vadd.f32 0.0, %v1696
    %v1698 = vpop.f32.mrb[0].mxu0
    %1699 = vmatprep.mubr.bf16.mxu0 0
    %1700 = vmatmul.mubr.bf16.gmra.mrb[0].mxu0 %v767
    %v1701 = vpop.f32.mrb[0].mxu0
    %v1702 = vadd.f32 0.0, %v1701
    %v1703 = vpop.f32.mrb[0].mxu0
    %v1704 = vpop.f32.mrb[0].mxu0
    %v1705 = vadd.f32 0.0, %v1704
    %v1706 = vpop.f32.mrb[0].mxu0
    %1707 = vmatprep.mubr.bf16.mxu0 0
    %1708 = vmatmul.mubr.bf16.gmra.mrb[0].mxu0 %v768
    %v1709 = vpop.f32.mrb[0].mxu0
    %v1710 = vadd.f32 0.0, %v1709
    %v1711 = vpop.f32.mrb[0].mxu0
    %v1712 = vpop.f32.mrb[0].mxu0
    %v1713 = vadd.f32 0.0, %v1712
    %v1714 = vpop.f32.mrb[0].mxu0
    %1715 = vmatprep.mubr.bf16.mxu0 0
    %1716 = vmatmul.mubr.bf16.gmra.mrb[0].mxu0 %v769
    %v1717 = vpop.f32.mrb[0].mxu0
    %v1718 = vadd.f32 0.0, %v1717
    %v1719 = vpop.f32.mrb[0].mxu0
    %v1720 = vpop.f32.mrb[0].mxu0
    %v1721 = vadd.f32 0.0, %v1720
    %v1722 = vpop.f32.mrb[0].mxu0
    %1723 = vmatprep.mubr.bf16.mxu0 0
    %1724 = vmatmul.mubr.bf16.gmra.mrb[0].mxu0 %v770
    %v1725 = vpop.f32.mrb[0].mxu0
    %v1726 = vadd.f32 0.0, %v1725
    %v1727 = vpop.f32.mrb[0].mxu0
    %v1728 = vpop.f32.mrb[0].mxu0
    %v1729 = vadd.f32 0.0, %v1728
    %v1730 = vpop.f32.mrb[0].mxu0
    %1731 = vmatprep.mubr.bf16.mxu0 0
    %1732 = vmatmul.mubr.bf16.gmra.mrb[0].mxu0 %v771
    %v1733 = vpop.f32.mrb[0].mxu0
    %v1734 = vadd.f32 0.0, %v1733
    %v1735 = vpop.f32.mrb[0].mxu0
    %v1736 = vpop.f32.mrb[0].mxu0
    %v1737 = vadd.f32 0.0, %v1736
    %v1738 = vpop.f32.mrb[0].mxu0
    %1739 = vmatprep.mubr.bf16.mxu0 0
    %1740 = vmatmul.mubr.bf16.gmra.mrb[0].mxu0 %v772
    %v1741 = vpop.f32.mrb[0].mxu0
    %v1742 = vadd.f32 0.0, %v1741
    %v1743 = vpop.f32.mrb[0].mxu0
    %v1744 = vpop.f32.mrb[0].mxu0
    %v1745 = vadd.f32 0.0, %v1744
    %v1746 = vpop.f32.mrb[0].mxu0
    %1747 = vmatprep.mubr.bf16.mxu0 0
    %1748 = vmatmul.mubr.bf16.gmra.mrb[0].mxu0 %v773
    %v1749 = vpop.f32.mrb[0].mxu0
    %v1750 = vadd.f32 0.0, %v1749
    %v1751 = vpop.f32.mrb[0].mxu0
    %v1752 = vpop.f32.mrb[0].mxu0
    %v1753 = vadd.f32 0.0, %v1752
    %v1754 = vpop.f32.mrb[0].mxu0
    %1755 = vmatprep.mubr.bf16.mxu0 0
    %1756 = vmatmul.mubr.bf16.gmra.mrb[0].mxu0 %v774
    %v1757 = vpop.f32.mrb[0].mxu0
    %v1758 = vadd.f32 0.0, %v1757
    %v1759 = vpop.f32.mrb[0].mxu0
    %v1760 = vpop.f32.mrb[0].mxu0
    %v1761 = vadd.f32 0.0, %v1760
    %v1762 = vpop.f32.mrb[0].mxu0
    %1763 = vmatprep.mubr.bf16.mxu0 0
    %1764 = vmatmul.mubr.bf16.gmra.mrb[0].mxu0 %v775
    %v1765 = vpop.f32.mrb[0].mxu0
    %v1766 = vadd.f32 0.0, %v1765
    %v1767 = vpop.f32.mrb[0].mxu0
    %v1768 = vpop.f32.mrb[0].mxu0
    %v1769 = vadd.f32 0.0, %v1768
    %v1770 = vpop.f32.mrb[0].mxu0
    %1771 = vmatprep.mubr.bf16.mxu0 0
    %1772 = vmatmul.mubr.bf16.gmra.mrb[0].mxu0 %v776
    %v1773 = vpop.f32.mrb[0].mxu0
    %v1774 = vadd.f32 0.0, %v1773
    %v1775 = vpop.f32.mrb[0].mxu0
    %v1776 = vpop.f32.mrb[0].mxu0
    %v1777 = vadd.f32 0.0, %v1776
    %v1778 = vpop.f32.mrb[0].mxu0
    %1779 = vmatprep.mubr.bf16.mxu0 0
    %1780 = vmatmul.mubr.bf16.gmra.mrb[0].mxu0 %v777
    %v1781 = vpop.f32.mrb[0].mxu0
    %v1782 = vadd.f32 0.0, %v1781
    %v1783 = vpop.f32.mrb[0].mxu0
    %v1784 = vpop.f32.mrb[0].mxu0
    %v1785 = vadd.f32 0.0, %v1784
    %v1786 = vpop.f32.mrb[0].mxu0
    %1787 = vmatprep.mubr.bf16.mxu0 0
    %1788 = vmatmul.mubr.bf16.gmra.mrb[0].mxu0 %v778
    %v1789 = vpop.f32.mrb[0].mxu0
    %v1790 = vadd.f32 0.0, %v1789
    %v1791 = vpop.f32.mrb[0].mxu0
    %v1792 = vpop.f32.mrb[0].mxu0
    %v1793 = vadd.f32 0.0, %v1792
    %v1794 = vpop.f32.mrb[0].mxu0
    %1795 = vdwg.mxu0
    %vm2004 = vcmask 1046528
    %v2005 = vrot.slane %v966, 1
    %v2006 = vrot.slane %v969, 1
    %v2007 = vsel %vm2004, %v2005, %v2006
    %v2008 = vrot.slane %v974, 1
    %v2009 = vrot.slane %v977, 1
    %v2010 = vsel %vm2004, %v2008, %v2009
    %v2011 = vrot.slane %v982, 1
    %v2012 = vrot.slane %v985, 1
    %v2013 = vsel %vm2004, %v2011, %v2012
    %v2014 = vrot.slane %v990, 1
    %v2015 = vrot.slane %v993, 1
    %v2016 = vsel %vm2004, %v2014, %v2015
    %v2017 = vrot.slane %v998, 1
    %v2018 = vrot.slane %v1001, 1
    %v2019 = vsel %vm2004, %v2017, %v2018
    %v2020 = vrot.slane %v1006, 1
    %v2021 = vrot.slane %v1009, 1
    %v2022 = vsel %vm2004, %v2020, %v2021
    %v2023 = vrot.slane %v1014, 1
    %v2024 = vrot.slane %v1017, 1
    %v2025 = vsel %vm2004, %v2023, %v2024
    %v2026 = vrot.slane %v1022, 1
    %v2027 = vrot.slane %v1025, 1
    %v2028 = vsel %vm2004, %v2026, %v2027
    %v2029 = vrot.slane %v1030, 1
    %v2030 = vrot.slane %v1033, 1
    %v2031 = vsel %vm2004, %v2029, %v2030
    %v2032 = vrot.slane %v1038, 1
    %v2033 = vrot.slane %v1041, 1
    %v2034 = vsel %vm2004, %v2032, %v2033
    %v2035 = vrot.slane %v1046, 1
    %v2036 = vrot.slane %v1049, 1
    %v2037 = vsel %vm2004, %v2035, %v2036
    %v2038 = vrot.slane %v1054, 1
    %v2039 = vrot.slane %v1057, 1
    %v2040 = vsel %vm2004, %v2038, %v2039
    %v2041 = vrot.slane %v1062, 1
    %v2042 = vrot.slane %v1065, 1
    %v2043 = vsel %vm2004, %v2041, %v2042
    %v2044 = vrot.slane %v1070, 1
    %v2045 = vrot.slane %v1073, 1
    %v2046 = vsel %vm2004, %v2044, %v2045
    %v2047 = vrot.slane %v1078, 1
    %v2048 = vrot.slane %v1081, 1
    %v2049 = vsel %vm2004, %v2047, %v2048
    %v2050 = vrot.slane %v1086, 1
    %v2051 = vrot.slane %v1089, 1
    %v2052 = vsel %vm2004, %v2050, %v2051
    %v2053 = vrot.slane %v1094, 1
    %v2054 = vrot.slane %v1097, 1
    %v2055 = vsel %vm2004, %v2053, %v2054
    %v2056 = vrot.slane %v1102, 1
    %v2057 = vrot.slane %v1105, 1
    %v2058 = vsel %vm2004, %v2056, %v2057
    %v2059 = vrot.slane %v1110, 1
    %v2060 = vrot.slane %v1113, 1
    %v2061 = vsel %vm2004, %v2059, %v2060
    %v2062 = vrot.slane %v1118, 1
    %v2063 = vrot.slane %v1121, 1
    %v2064 = vsel %vm2004, %v2062, %v2063
    %v2065 = vrot.slane %v1126, 1
    %v2066 = vrot.slane %v1129, 1
    %v2067 = vsel %vm2004, %v2065, %v2066
    %v2068 = vrot.slane %v1134, 1
    %v2069 = vrot.slane %v1137, 1
    %v2070 = vsel %vm2004, %v2068, %v2069
    %v2071 = vrot.slane %v1142, 1
    %v2072 = vrot.slane %v1145, 1
    %v2073 = vsel %vm2004, %v2071, %v2072
    %v2074 = vrot.slane %v1150, 1
    %v2075 = vrot.slane %v1153, 1
    %v2076 = vsel %vm2004, %v2074, %v2075
    %v2077 = vrot.slane %v1158, 1
    %v2078 = vrot.slane %v1161, 1
    %v2079 = vsel %vm2004, %v2077, %v2078
    %v2080 = vrot.slane %v1166, 1
    %v2081 = vrot.slane %v1169, 1
    %v2082 = vsel %vm2004, %v2080, %v2081
    %v2083 = vrot.slane %v1174, 1
    %v2084 = vrot.slane %v1177, 1
    %v2085 = vsel %vm2004, %v2083, %v2084
    %v2086 = vrot.slane %v1182, 1
    %v2087 = vrot.slane %v1185, 1
    %v2088 = vsel %vm2004, %v2086, %v2087
    %v2089 = vrot.slane %v1190, 1
    %v2090 = vrot.slane %v1193, 1
    %v2091 = vsel %vm2004, %v2089, %v2090
    %v2092 = vrot.slane %v1198, 1
    %v2093 = vrot.slane %v1201, 1
    %v2094 = vsel %vm2004, %v2092, %v2093
    %v2095 = vrot.slane %v1206, 1
    %v2096 = vrot.slane %v1209, 1
    %v2097 = vsel %vm2004, %v2095, %v2096
    %v2098 = vrot.slane %v1214, 1
    %v2099 = vrot.slane %v1217, 1
    %v2100 = vsel %vm2004, %v2098, %v2099
    %v2101 = vrot.slane %v1222, 1
    %v2102 = vrot.slane %v1225, 1
    %v2103 = vsel %vm2004, %v2101, %v2102
    %v2104 = vrot.slane %v1230, 1
    %v2105 = vrot.slane %v1233, 1
    %v2106 = vsel %vm2004, %v2104, %v2105
    %v2107 = vrot.slane %v1238, 1
    %v2108 = vrot.slane %v1241, 1
    %v2109 = vsel %vm2004, %v2107, %v2108
    %v2110 = vrot.slane %v1246, 1
    %v2111 = vrot.slane %v1249, 1
    %v2112 = vsel %vm2004, %v2110, %v2111
    %v2113 = vrot.slane %v1254, 1
    %v2114 = vrot.slane %v1257, 1
    %v2115 = vsel %vm2004, %v2113, %v2114
    %v2116 = vrot.slane %v1262, 1
    %v2117 = vrot.slane %v1265, 1
    %v2118 = vsel %vm2004, %v2116, %v2117
    %v2119 = vrot.slane %v1270, 1
    %v2120 = vrot.slane %v1273, 1
    %v2121 = vsel %vm2004, %v2119, %v2120
    %v2122 = vrot.slane %v1278, 1
    %v2123 = vrot.slane %v1281, 1
    %v2124 = vsel %vm2004, %v2122, %v2123
    %v2125 = vrot.slane %v1286, 1
    %v2126 = vrot.slane %v1289, 1
    %v2127 = vsel %vm2004, %v2125, %v2126
    %v2128 = vrot.slane %v1294, 1
    %v2129 = vrot.slane %v1297, 1
    %v2130 = vsel %vm2004, %v2128, %v2129
    %v2131 = vrot.slane %v1302, 1
    %v2132 = vrot.slane %v1305, 1
    %v2133 = vsel %vm2004, %v2131, %v2132
    %v2134 = vrot.slane %v1310, 1
    %v2135 = vrot.slane %v1313, 1
    %v2136 = vsel %vm2004, %v2134, %v2135
    %v2137 = vrot.slane %v1318, 1
    %v2138 = vrot.slane %v1321, 1
    %v2139 = vsel %vm2004, %v2137, %v2138
    %v2140 = vrot.slane %v1326, 1
    %v2141 = vrot.slane %v1329, 1
    %v2142 = vsel %vm2004, %v2140, %v2141
    %v2143 = vrot.slane %v1334, 1
    %v2144 = vrot.slane %v1337, 1
    %v2145 = vsel %vm2004, %v2143, %v2144
    %v2146 = vrot.slane %v1342, 1
    %v2147 = vrot.slane %v1345, 1
    %v2148 = vsel %vm2004, %v2146, %v2147
    %v2149 = vrot.slane %v1350, 1
    %v2150 = vrot.slane %v1353, 1
    %v2151 = vsel %vm2004, %v2149, %v2150
    %v2152 = vrot.slane %v1358, 1
    %v2153 = vrot.slane %v1361, 1
    %v2154 = vsel %vm2004, %v2152, %v2153
    %v2155 = vrot.slane %v1366, 1
    %v2156 = vrot.slane %v1369, 1
    %v2157 = vsel %vm2004, %v2155, %v2156
    %v2158 = vrot.slane %v1374, 1
    %v2159 = vrot.slane %v1377, 1
    %v2160 = vsel %vm2004, %v2158, %v2159
    %v2161 = vrot.slane %v1382, 1
    %v2162 = vrot.slane %v1385, 1
    %v2163 = vsel %vm2004, %v2161, %v2162
    %v2164 = vrot.slane %v1390, 1
    %v2165 = vrot.slane %v1393, 1
    %v2166 = vsel %vm2004, %v2164, %v2165
    %v2167 = vrot.slane %v1398, 1
    %v2168 = vrot.slane %v1401, 1
    %v2169 = vsel %vm2004, %v2167, %v2168
    %v2170 = vrot.slane %v1406, 1
    %v2171 = vrot.slane %v1409, 1
    %v2172 = vsel %vm2004, %v2170, %v2171
    %v2173 = vrot.slane %v1414, 1
    %v2174 = vrot.slane %v1417, 1
    %v2175 = vsel %vm2004, %v2173, %v2174
    %v2176 = vrot.slane %v1422, 1
    %v2177 = vrot.slane %v1425, 1
    %v2178 = vsel %vm2004, %v2176, %v2177
    %v2179 = vrot.slane %v1430, 1
    %v2180 = vrot.slane %v1433, 1
    %v2181 = vsel %vm2004, %v2179, %v2180
    %v2182 = vrot.slane %v1438, 1
    %v2183 = vrot.slane %v1441, 1
    %v2184 = vsel %vm2004, %v2182, %v2183
    %v2185 = vrot.slane %v1446, 1
    %v2186 = vrot.slane %v1449, 1
    %v2187 = vsel %vm2004, %v2185, %v2186
    %v2188 = vrot.slane %v1454, 1
    %v2189 = vrot.slane %v1457, 1
    %v2190 = vsel %vm2004, %v2188, %v2189
    %v2191 = vrot.slane %v1462, 1
    %v2192 = vrot.slane %v1465, 1
    %v2193 = vsel %vm2004, %v2191, %v2192
    %v2194 = vrot.slane %v1470, 1
    %v2195 = vrot.slane %v1473, 1
    %v2196 = vsel %vm2004, %v2194, %v2195
    %v2197 = vrot.slane %v1478, 1
    %v2198 = vrot.slane %v1481, 1
    %v2199 = vsel %vm2004, %v2197, %v2198
    %v2200 = vrot.slane %v1486, 1
    %v2201 = vrot.slane %v1489, 1
    %v2202 = vsel %vm2004, %v2200, %v2201
    %v2203 = vrot.slane %v1494, 1
    %v2204 = vrot.slane %v1497, 1
    %v2205 = vsel %vm2004, %v2203, %v2204
    %v2206 = vrot.slane %v1502, 1
    %v2207 = vrot.slane %v1505, 1
    %v2208 = vsel %vm2004, %v2206, %v2207
    %v2209 = vrot.slane %v1510, 1
    %v2210 = vrot.slane %v1513, 1
    %v2211 = vsel %vm2004, %v2209, %v2210
    %v2212 = vrot.slane %v1518, 1
    %v2213 = vrot.slane %v1521, 1
    %v2214 = vsel %vm2004, %v2212, %v2213
    %v2215 = vrot.slane %v1526, 1
    %v2216 = vrot.slane %v1529, 1
    %v2217 = vsel %vm2004, %v2215, %v2216
    %v2218 = vrot.slane %v1534, 1
    %v2219 = vrot.slane %v1537, 1
    %v2220 = vsel %vm2004, %v2218, %v2219
    %v2221 = vrot.slane %v1542, 1
    %v2222 = vrot.slane %v1545, 1
    %v2223 = vsel %vm2004, %v2221, %v2222
    %v2224 = vrot.slane %v1550, 1
    %v2225 = vrot.slane %v1553, 1
    %v2226 = vsel %vm2004, %v2224, %v2225
    %v2227 = vrot.slane %v1558, 1
    %v2228 = vrot.slane %v1561, 1
    %v2229 = vsel %vm2004, %v2227, %v2228
    %v2230 = vrot.slane %v1566, 1
    %v2231 = vrot.slane %v1569, 1
    %v2232 = vsel %vm2004, %v2230, %v2231
    %v2233 = vrot.slane %v1574, 1
    %v2234 = vrot.slane %v1577, 1
    %v2235 = vsel %vm2004, %v2233, %v2234
    %v2236 = vrot.slane %v1582, 1
    %v2237 = vrot.slane %v1585, 1
    %v2238 = vsel %vm2004, %v2236, %v2237
    %v2239 = vrot.slane %v1590, 1
    %v2240 = vrot.slane %v1593, 1
    %v2241 = vsel %vm2004, %v2239, %v2240
    %v2242 = vrot.slane %v1598, 1
    %v2243 = vrot.slane %v1601, 1
    %v2244 = vsel %vm2004, %v2242, %v2243
    %v2245 = vrot.slane %v1606, 1
    %v2246 = vrot.slane %v1609, 1
    %v2247 = vsel %vm2004, %v2245, %v2246
    %v2248 = vrot.slane %v1614, 1
    %v2249 = vrot.slane %v1617, 1
    %v2250 = vsel %vm2004, %v2248, %v2249
    %v2251 = vrot.slane %v1622, 1
    %v2252 = vrot.slane %v1625, 1
    %v2253 = vsel %vm2004, %v2251, %v2252
    %v2254 = vrot.slane %v1630, 1
    %v2255 = vrot.slane %v1633, 1
    %v2256 = vsel %vm2004, %v2254, %v2255
    %v2257 = vrot.slane %v1638, 1
    %v2258 = vrot.slane %v1641, 1
    %v2259 = vsel %vm2004, %v2257, %v2258
    %v2260 = vrot.slane %v1646, 1
    %v2261 = vrot.slane %v1649, 1
    %v2262 = vsel %vm2004, %v2260, %v2261
    %v2263 = vrot.slane %v1654, 1
    %v2264 = vrot.slane %v1657, 1
    %v2265 = vsel %vm2004, %v2263, %v2264
    %v2266 = vrot.slane %v1662, 1
    %v2267 = vrot.slane %v1665, 1
    %v2268 = vsel %vm2004, %v2266, %v2267
    %v2269 = vrot.slane %v1670, 1
    %v2270 = vrot.slane %v1673, 1
    %v2271 = vsel %vm2004, %v2269, %v2270
    %v2272 = vrot.slane %v1678, 1
    %v2273 = vrot.slane %v1681, 1
    %v2274 = vsel %vm2004, %v2272, %v2273
    %v2275 = vrot.slane %v1686, 1
    %v2276 = vrot.slane %v1689, 1
    %v2277 = vsel %vm2004, %v2275, %v2276
    %v2278 = vrot.slane %v1694, 1
    %v2279 = vrot.slane %v1697, 1
    %v2280 = vsel %vm2004, %v2278, %v2279
    %v2281 = vrot.slane %v1702, 1
    %v2282 = vrot.slane %v1705, 1
    %v2283 = vsel %vm2004, %v2281, %v2282
    %v2284 = vrot.slane %v1710, 1
    %v2285 = vrot.slane %v1713, 1
    %v2286 = vsel %vm2004, %v2284, %v2285
    %v2287 = vrot.slane %v1718, 1
    %v2288 = vrot.slane %v1721, 1
    %v2289 = vsel %vm2004, %v2287, %v2288
    %v2290 = vrot.slane %v1726, 1
    %v2291 = vrot.slane %v1729, 1
    %v2292 = vsel %vm2004, %v2290, %v2291
    %v2293 = vrot.slane %v1734, 1
    %v2294 = vrot.slane %v1737, 1
    %v2295 = vsel %vm2004, %v2293, %v2294
    %v2296 = vrot.slane %v1742, 1
    %v2297 = vrot.slane %v1745, 1
    %v2298 = vsel %vm2004, %v2296, %v2297
    %v2299 = vrot.slane %v1750, 1
    %v2300 = vrot.slane %v1753, 1
    %v2301 = vsel %vm2004, %v2299, %v2300
    %v2302 = vrot.slane %v1758, 1
    %v2303 = vrot.slane %v1761, 1
    %v2304 = vsel %vm2004, %v2302, %v2303
    %v2305 = vrot.slane %v1766, 1
    %v2306 = vrot.slane %v1769, 1
    %v2307 = vsel %vm2004, %v2305, %v2306
    %v2308 = vrot.slane %v1774, 1
    %v2309 = vrot.slane %v1777, 1
    %v2310 = vsel %vm2004, %v2308, %v2309
    %v2311 = vrot.slane %v1782, 1
    %v2312 = vrot.slane %v1785, 1
    %v2313 = vsel %vm2004, %v2311, %v2312
    %v2314 = vrot.slane %v1790, 1
    %v2315 = vrot.slane %v1793, 1
    %v2316 = vsel %vm2004, %v2314, %v2315
    %2317 = vrot.lane.b32.xlu0 %v2007, 127
    %v2318 = vpop.permute.xlu0 %2317
    %2319 = vrot.lane.b32.xlu0 %v2006, 127
    %v2320 = vpop.permute.xlu0 %2319
    %2321 = vrot.lane.b32.xlu0 %v2010, 127
    %v2322 = vpop.permute.xlu0 %2321
    %2323 = vrot.lane.b32.xlu0 %v2009, 127
    %v2324 = vpop.permute.xlu0 %2323
    %2325 = vrot.lane.b32.xlu0 %v2013, 127
    %v2326 = vpop.permute.xlu0 %2325
    %2327 = vrot.lane.b32.xlu0 %v2012, 127
    %v2328 = vpop.permute.xlu0 %2327
    %2329 = vrot.lane.b32.xlu0 %v2016, 127
    %v2330 = vpop.permute.xlu0 %2329
    %2331 = vrot.lane.b32.xlu0 %v2015, 127
    %v2332 = vpop.permute.xlu0 %2331
    %2333 = vrot.lane.b32.xlu0 %v2019, 127
    %v2334 = vpop.permute.xlu0 %2333
    %2335 = vrot.lane.b32.xlu0 %v2018, 127
    %v2336 = vpop.permute.xlu0 %2335
    %2337 = vrot.lane.b32.xlu0 %v2022, 127
    %v2338 = vpop.permute.xlu0 %2337
    %2339 = vrot.lane.b32.xlu0 %v2021, 127
    %v2340 = vpop.permute.xlu0 %2339
    %2341 = vrot.lane.b32.xlu0 %v2025, 127
    %v2342 = vpop.permute.xlu0 %2341
    %2343 = vrot.lane.b32.xlu0 %v2024, 127
    %v2344 = vpop.permute.xlu0 %2343
    %2345 = vrot.lane.b32.xlu0 %v2028, 127
    %v2346 = vpop.permute.xlu0 %2345
    %2347 = vrot.lane.b32.xlu0 %v2027, 127
    %v2348 = vpop.permute.xlu0 %2347
    %2349 = vrot.lane.b32.xlu0 %v2031, 127
    %v2350 = vpop.permute.xlu0 %2349
    %2351 = vrot.lane.b32.xlu0 %v2030, 127
    %v2352 = vpop.permute.xlu0 %2351
    %2353 = vrot.lane.b32.xlu0 %v2034, 127
    %v2354 = vpop.permute.xlu0 %2353
    %2355 = vrot.lane.b32.xlu0 %v2033, 127
    %v2356 = vpop.permute.xlu0 %2355
    %2357 = vrot.lane.b32.xlu0 %v2037, 127
    %v2358 = vpop.permute.xlu0 %2357
    %2359 = vrot.lane.b32.xlu0 %v2036, 127
    %v2360 = vpop.permute.xlu0 %2359
    %2361 = vrot.lane.b32.xlu0 %v2040, 127
    %v2362 = vpop.permute.xlu0 %2361
    %2363 = vrot.lane.b32.xlu0 %v2039, 127
    %v2364 = vpop.permute.xlu0 %2363
    %2365 = vrot.lane.b32.xlu0 %v2043, 127
    %v2366 = vpop.permute.xlu0 %2365
    %2367 = vrot.lane.b32.xlu0 %v2042, 127
    %v2368 = vpop.permute.xlu0 %2367
    %2369 = vrot.lane.b32.xlu0 %v2046, 127
    %v2370 = vpop.permute.xlu0 %2369
    %2371 = vrot.lane.b32.xlu0 %v2045, 127
    %v2372 = vpop.permute.xlu0 %2371
    %2373 = vrot.lane.b32.xlu0 %v2049, 127
    %v2374 = vpop.permute.xlu0 %2373
    %2375 = vrot.lane.b32.xlu0 %v2048, 127
    %v2376 = vpop.permute.xlu0 %2375
    %2377 = vrot.lane.b32.xlu0 %v2052, 127
    %v2378 = vpop.permute.xlu0 %2377
    %2379 = vrot.lane.b32.xlu0 %v2051, 127
    %v2380 = vpop.permute.xlu0 %2379
    %2381 = vrot.lane.b32.xlu0 %v2055, 127
    %v2382 = vpop.permute.xlu0 %2381
    %2383 = vrot.lane.b32.xlu0 %v2054, 127
    %v2384 = vpop.permute.xlu0 %2383
    %2385 = vrot.lane.b32.xlu0 %v2058, 127
    %v2386 = vpop.permute.xlu0 %2385
    %2387 = vrot.lane.b32.xlu0 %v2057, 127
    %v2388 = vpop.permute.xlu0 %2387
    %2389 = vrot.lane.b32.xlu0 %v2061, 127
    %v2390 = vpop.permute.xlu0 %2389
    %2391 = vrot.lane.b32.xlu0 %v2060, 127
    %v2392 = vpop.permute.xlu0 %2391
    %2393 = vrot.lane.b32.xlu0 %v2064, 127
    %v2394 = vpop.permute.xlu0 %2393
    %2395 = vrot.lane.b32.xlu0 %v2063, 127
    %v2396 = vpop.permute.xlu0 %2395
    %2397 = vrot.lane.b32.xlu0 %v2067, 127
    %v2398 = vpop.permute.xlu0 %2397
    %2399 = vrot.lane.b32.xlu0 %v2066, 127
    %v2400 = vpop.permute.xlu0 %2399
    %2401 = vrot.lane.b32.xlu0 %v2070, 127
    %v2402 = vpop.permute.xlu0 %2401
    %2403 = vrot.lane.b32.xlu0 %v2069, 127
    %v2404 = vpop.permute.xlu0 %2403
    %2405 = vrot.lane.b32.xlu0 %v2073, 127
    %v2406 = vpop.permute.xlu0 %2405
    %2407 = vrot.lane.b32.xlu0 %v2072, 127
    %v2408 = vpop.permute.xlu0 %2407
    %2409 = vrot.lane.b32.xlu0 %v2076, 127
    %v2410 = vpop.permute.xlu0 %2409
    %2411 = vrot.lane.b32.xlu0 %v2075, 127
    %v2412 = vpop.permute.xlu0 %2411
    %2413 = vrot.lane.b32.xlu0 %v2079, 127
    %v2414 = vpop.permute.xlu0 %2413
    %2415 = vrot.lane.b32.xlu0 %v2078, 127
    %v2416 = vpop.permute.xlu0 %2415
    %2417 = vrot.lane.b32.xlu0 %v2082, 127
    %v2418 = vpop.permute.xlu0 %2417
    %2419 = vrot.lane.b32.xlu0 %v2081, 127
    %v2420 = vpop.permute.xlu0 %2419
    %2421 = vrot.lane.b32.xlu0 %v2085, 127
    %v2422 = vpop.permute.xlu0 %2421
    %2423 = vrot.lane.b32.xlu0 %v2084, 127
    %v2424 = vpop.permute.xlu0 %2423
    %2425 = vrot.lane.b32.xlu0 %v2088, 127
    %v2426 = vpop.permute.xlu0 %2425
    %2427 = vrot.lane.b32.xlu0 %v2087, 127
    %v2428 = vpop.permute.xlu0 %2427
    %2429 = vrot.lane.b32.xlu0 %v2091, 127
    %v2430 = vpop.permute.xlu0 %2429
    %2431 = vrot.lane.b32.xlu0 %v2090, 127
    %v2432 = vpop.permute.xlu0 %2431
    %2433 = vrot.lane.b32.xlu0 %v2094, 127
    %v2434 = vpop.permute.xlu0 %2433
    %2435 = vrot.lane.b32.xlu0 %v2093, 127
    %v2436 = vpop.permute.xlu0 %2435
    %2437 = vrot.lane.b32.xlu0 %v2097, 127
    %v2438 = vpop.permute.xlu0 %2437
    %2439 = vrot.lane.b32.xlu0 %v2096, 127
    %v2440 = vpop.permute.xlu0 %2439
    %2441 = vrot.lane.b32.xlu0 %v2100, 127
    %v2442 = vpop.permute.xlu0 %2441
    %2443 = vrot.lane.b32.xlu0 %v2099, 127
    %v2444 = vpop.permute.xlu0 %2443
    %2445 = vrot.lane.b32.xlu0 %v2103, 127
    %v2446 = vpop.permute.xlu0 %2445
    %2447 = vrot.lane.b32.xlu0 %v2102, 127
    %v2448 = vpop.permute.xlu0 %2447
    %2449 = vrot.lane.b32.xlu0 %v2106, 127
    %v2450 = vpop.permute.xlu0 %2449
    %2451 = vrot.lane.b32.xlu0 %v2105, 127
    %v2452 = vpop.permute.xlu0 %2451
    %2453 = vrot.lane.b32.xlu0 %v2109, 127
    %v2454 = vpop.permute.xlu0 %2453
    %2455 = vrot.lane.b32.xlu0 %v2108, 127
    %v2456 = vpop.permute.xlu0 %2455
    %2457 = vrot.lane.b32.xlu0 %v2112, 127
    %v2458 = vpop.permute.xlu0 %2457
    %2459 = vrot.lane.b32.xlu0 %v2111, 127
    %v2460 = vpop.permute.xlu0 %2459
    %2461 = vrot.lane.b32.xlu0 %v2115, 127
    %v2462 = vpop.permute.xlu0 %2461
    %2463 = vrot.lane.b32.xlu0 %v2114, 127
    %v2464 = vpop.permute.xlu0 %2463
    %2465 = vrot.lane.b32.xlu0 %v2118, 127
    %v2466 = vpop.permute.xlu0 %2465
    %2467 = vrot.lane.b32.xlu0 %v2117, 127
    %v2468 = vpop.permute.xlu0 %2467
    %2469 = vrot.lane.b32.xlu0 %v2121, 127
    %v2470 = vpop.permute.xlu0 %2469
    %2471 = vrot.lane.b32.xlu0 %v2120, 127
    %v2472 = vpop.permute.xlu0 %2471
    %2473 = vrot.lane.b32.xlu0 %v2124, 127
    %v2474 = vpop.permute.xlu0 %2473
    %2475 = vrot.lane.b32.xlu0 %v2123, 127
    %v2476 = vpop.permute.xlu0 %2475
    %2477 = vrot.lane.b32.xlu0 %v2127, 127
    %v2478 = vpop.permute.xlu0 %2477
    %2479 = vrot.lane.b32.xlu0 %v2126, 127
    %v2480 = vpop.permute.xlu0 %2479
    %2481 = vrot.lane.b32.xlu0 %v2130, 127
    %v2482 = vpop.permute.xlu0 %2481
    %2483 = vrot.lane.b32.xlu0 %v2129, 127
    %v2484 = vpop.permute.xlu0 %2483
    %2485 = vrot.lane.b32.xlu0 %v2133, 127
    %v2486 = vpop.permute.xlu0 %2485
    %2487 = vrot.lane.b32.xlu0 %v2132, 127
    %v2488 = vpop.permute.xlu0 %2487
    %2489 = vrot.lane.b32.xlu0 %v2136, 127
    %v2490 = vpop.permute.xlu0 %2489
    %2491 = vrot.lane.b32.xlu0 %v2135, 127
    %v2492 = vpop.permute.xlu0 %2491
    %2493 = vrot.lane.b32.xlu0 %v2139, 127
    %v2494 = vpop.permute.xlu0 %2493
    %2495 = vrot.lane.b32.xlu0 %v2138, 127
    %v2496 = vpop.permute.xlu0 %2495
    %2497 = vrot.lane.b32.xlu0 %v2142, 127
    %v2498 = vpop.permute.xlu0 %2497
    %2499 = vrot.lane.b32.xlu0 %v2141, 127
    %v2500 = vpop.permute.xlu0 %2499
    %2501 = vrot.lane.b32.xlu0 %v2145, 127
    %v2502 = vpop.permute.xlu0 %2501
    %2503 = vrot.lane.b32.xlu0 %v2144, 127
    %v2504 = vpop.permute.xlu0 %2503
    %2505 = vrot.lane.b32.xlu0 %v2148, 127
    %v2506 = vpop.permute.xlu0 %2505
    %2507 = vrot.lane.b32.xlu0 %v2147, 127
    %v2508 = vpop.permute.xlu0 %2507
    %2509 = vrot.lane.b32.xlu0 %v2151, 127
    %v2510 = vpop.permute.xlu0 %2509
    %2511 = vrot.lane.b32.xlu0 %v2150, 127
    %v2512 = vpop.permute.xlu0 %2511
    %2513 = vrot.lane.b32.xlu0 %v2154, 127
    %v2514 = vpop.permute.xlu0 %2513
    %2515 = vrot.lane.b32.xlu0 %v2153, 127
    %v2516 = vpop.permute.xlu0 %2515
    %2517 = vrot.lane.b32.xlu0 %v2157, 127
    %v2518 = vpop.permute.xlu0 %2517
    %2519 = vrot.lane.b32.xlu0 %v2156, 127
    %v2520 = vpop.permute.xlu0 %2519
    %2521 = vrot.lane.b32.xlu0 %v2160, 127
    %v2522 = vpop.permute.xlu0 %2521
    %2523 = vrot.lane.b32.xlu0 %v2159, 127
    %v2524 = vpop.permute.xlu0 %2523
    %2525 = vrot.lane.b32.xlu0 %v2163, 127
    %v2526 = vpop.permute.xlu0 %2525
    %2527 = vrot.lane.b32.xlu0 %v2162, 127
    %v2528 = vpop.permute.xlu0 %2527
    %2529 = vrot.lane.b32.xlu0 %v2166, 127
    %v2530 = vpop.permute.xlu0 %2529
    %2531 = vrot.lane.b32.xlu0 %v2165, 127
    %v2532 = vpop.permute.xlu0 %2531
    %2533 = vrot.lane.b32.xlu0 %v2169, 127
    %v2534 = vpop.permute.xlu0 %2533
    %2535 = vrot.lane.b32.xlu0 %v2168, 127
    %v2536 = vpop.permute.xlu0 %2535
    %2537 = vrot.lane.b32.xlu0 %v2172, 127
    %v2538 = vpop.permute.xlu0 %2537
    %2539 = vrot.lane.b32.xlu0 %v2171, 127
    %v2540 = vpop.permute.xlu0 %2539
    %2541 = vrot.lane.b32.xlu0 %v2175, 127
    %v2542 = vpop.permute.xlu0 %2541
    %2543 = vrot.lane.b32.xlu0 %v2174, 127
    %v2544 = vpop.permute.xlu0 %2543
    %2545 = vrot.lane.b32.xlu0 %v2178, 127
    %v2546 = vpop.permute.xlu0 %2545
    %2547 = vrot.lane.b32.xlu0 %v2177, 127
    %v2548 = vpop.permute.xlu0 %2547
    %2549 = vrot.lane.b32.xlu0 %v2181, 127
    %v2550 = vpop.permute.xlu0 %2549
    %2551 = vrot.lane.b32.xlu0 %v2180, 127
    %v2552 = vpop.permute.xlu0 %2551
    %2553 = vrot.lane.b32.xlu0 %v2184, 127
    %v2554 = vpop.permute.xlu0 %2553
    %2555 = vrot.lane.b32.xlu0 %v2183, 127
    %v2556 = vpop.permute.xlu0 %2555
    %2557 = vrot.lane.b32.xlu0 %v2187, 127
    %v2558 = vpop.permute.xlu0 %2557
    %2559 = vrot.lane.b32.xlu0 %v2186, 127
    %v2560 = vpop.permute.xlu0 %2559
    %2561 = vrot.lane.b32.xlu0 %v2190, 127
    %v2562 = vpop.permute.xlu0 %2561
    %2563 = vrot.lane.b32.xlu0 %v2189, 127
    %v2564 = vpop.permute.xlu0 %2563
    %2565 = vrot.lane.b32.xlu0 %v2193, 127
    %v2566 = vpop.permute.xlu0 %2565
    %2567 = vrot.lane.b32.xlu0 %v2192, 127
    %v2568 = vpop.permute.xlu0 %2567
    %2569 = vrot.lane.b32.xlu0 %v2196, 127
    %v2570 = vpop.permute.xlu0 %2569
    %2571 = vrot.lane.b32.xlu0 %v2195, 127
    %v2572 = vpop.permute.xlu0 %2571
    %2573 = vrot.lane.b32.xlu0 %v2199, 127
    %v2574 = vpop.permute.xlu0 %2573
    %2575 = vrot.lane.b32.xlu0 %v2198, 127
    %v2576 = vpop.permute.xlu0 %2575
    %2577 = vrot.lane.b32.xlu0 %v2202, 127
    %v2578 = vpop.permute.xlu0 %2577
    %2579 = vrot.lane.b32.xlu0 %v2201, 127
    %v2580 = vpop.permute.xlu0 %2579
    %2581 = vrot.lane.b32.xlu0 %v2205, 127
    %v2582 = vpop.permute.xlu0 %2581
    %2583 = vrot.lane.b32.xlu0 %v2204, 127
    %v2584 = vpop.permute.xlu0 %2583
    %2585 = vrot.lane.b32.xlu0 %v2208, 127
    %v2586 = vpop.permute.xlu0 %2585
    %2587 = vrot.lane.b32.xlu0 %v2207, 127
    %v2588 = vpop.permute.xlu0 %2587
    %2589 = vrot.lane.b32.xlu0 %v2211, 127
    %v2590 = vpop.permute.xlu0 %2589
    %2591 = vrot.lane.b32.xlu0 %v2210, 127
    %v2592 = vpop.permute.xlu0 %2591
    %2593 = vrot.lane.b32.xlu0 %v2214, 127
    %v2594 = vpop.permute.xlu0 %2593
    %2595 = vrot.lane.b32.xlu0 %v2213, 127
    %v2596 = vpop.permute.xlu0 %2595
    %2597 = vrot.lane.b32.xlu0 %v2217, 127
    %v2598 = vpop.permute.xlu0 %2597
    %2599 = vrot.lane.b32.xlu0 %v2216, 127
    %v2600 = vpop.permute.xlu0 %2599
    %2601 = vrot.lane.b32.xlu0 %v2220, 127
    %v2602 = vpop.permute.xlu0 %2601
    %2603 = vrot.lane.b32.xlu0 %v2219, 127
    %v2604 = vpop.permute.xlu0 %2603
    %2605 = vrot.lane.b32.xlu0 %v2223, 127
    %v2606 = vpop.permute.xlu0 %2605
    %2607 = vrot.lane.b32.xlu0 %v2222, 127
    %v2608 = vpop.permute.xlu0 %2607
    %2609 = vrot.lane.b32.xlu0 %v2226, 127
    %v2610 = vpop.permute.xlu0 %2609
    %2611 = vrot.lane.b32.xlu0 %v2225, 127
    %v2612 = vpop.permute.xlu0 %2611
    %2613 = vrot.lane.b32.xlu0 %v2229, 127
    %v2614 = vpop.permute.xlu0 %2613
    %2615 = vrot.lane.b32.xlu0 %v2228, 127
    %v2616 = vpop.permute.xlu0 %2615
    %2617 = vrot.lane.b32.xlu0 %v2232, 127
    %v2618 = vpop.permute.xlu0 %2617
    %2619 = vrot.lane.b32.xlu0 %v2231, 127
    %v2620 = vpop.permute.xlu0 %2619
    %2621 = vrot.lane.b32.xlu0 %v2235, 127
    %v2622 = vpop.permute.xlu0 %2621
    %2623 = vrot.lane.b32.xlu0 %v2234, 127
    %v2624 = vpop.permute.xlu0 %2623
    %2625 = vrot.lane.b32.xlu0 %v2238, 127
    %v2626 = vpop.permute.xlu0 %2625
    %2627 = vrot.lane.b32.xlu0 %v2237, 127
    %v2628 = vpop.permute.xlu0 %2627
    %2629 = vrot.lane.b32.xlu0 %v2241, 127
    %v2630 = vpop.permute.xlu0 %2629
    %2631 = vrot.lane.b32.xlu0 %v2240, 127
    %v2632 = vpop.permute.xlu0 %2631
    %2633 = vrot.lane.b32.xlu0 %v2244, 127
    %v2634 = vpop.permute.xlu0 %2633
    %2635 = vrot.lane.b32.xlu0 %v2243, 127
    %v2636 = vpop.permute.xlu0 %2635
    %2637 = vrot.lane.b32.xlu0 %v2247, 127
    %v2638 = vpop.permute.xlu0 %2637
    %2639 = vrot.lane.b32.xlu0 %v2246, 127
    %v2640 = vpop.permute.xlu0 %2639
    %2641 = vrot.lane.b32.xlu0 %v2250, 127
    %v2642 = vpop.permute.xlu0 %2641
    %2643 = vrot.lane.b32.xlu0 %v2249, 127
    %v2644 = vpop.permute.xlu0 %2643
    %2645 = vrot.lane.b32.xlu0 %v2253, 127
    %v2646 = vpop.permute.xlu0 %2645
    %2647 = vrot.lane.b32.xlu0 %v2252, 127
    %v2648 = vpop.permute.xlu0 %2647
    %2649 = vrot.lane.b32.xlu0 %v2256, 127
    %v2650 = vpop.permute.xlu0 %2649
    %2651 = vrot.lane.b32.xlu0 %v2255, 127
    %v2652 = vpop.permute.xlu0 %2651
    %2653 = vrot.lane.b32.xlu0 %v2259, 127
    %v2654 = vpop.permute.xlu0 %2653
    %2655 = vrot.lane.b32.xlu0 %v2258, 127
    %v2656 = vpop.permute.xlu0 %2655
    %2657 = vrot.lane.b32.xlu0 %v2262, 127
    %v2658 = vpop.permute.xlu0 %2657
    %2659 = vrot.lane.b32.xlu0 %v2261, 127
    %v2660 = vpop.permute.xlu0 %2659
    %2661 = vrot.lane.b32.xlu0 %v2265, 127
    %v2662 = vpop.permute.xlu0 %2661
    %2663 = vrot.lane.b32.xlu0 %v2264, 127
    %v2664 = vpop.permute.xlu0 %2663
    %2665 = vrot.lane.b32.xlu0 %v2268, 127
    %v2666 = vpop.permute.xlu0 %2665
    %2667 = vrot.lane.b32.xlu0 %v2267, 127
    %v2668 = vpop.permute.xlu0 %2667
    %2669 = vrot.lane.b32.xlu0 %v2271, 127
    %v2670 = vpop.permute.xlu0 %2669
    %2671 = vrot.lane.b32.xlu0 %v2270, 127
    %v2672 = vpop.permute.xlu0 %2671
    %2673 = vrot.lane.b32.xlu0 %v2274, 127
    %v2674 = vpop.permute.xlu0 %2673
    %2675 = vrot.lane.b32.xlu0 %v2273, 127
    %v2676 = vpop.permute.xlu0 %2675
    %2677 = vrot.lane.b32.xlu0 %v2277, 127
    %v2678 = vpop.permute.xlu0 %2677
    %2679 = vrot.lane.b32.xlu0 %v2276, 127
    %v2680 = vpop.permute.xlu0 %2679
    %2681 = vrot.lane.b32.xlu0 %v2280, 127
    %v2682 = vpop.permute.xlu0 %2681
    %2683 = vrot.lane.b32.xlu0 %v2279, 127
    %v2684 = vpop.permute.xlu0 %2683
    %2685 = vrot.lane.b32.xlu0 %v2283, 127
    %v2686 = vpop.permute.xlu0 %2685
    %2687 = vrot.lane.b32.xlu0 %v2282, 127
    %v2688 = vpop.permute.xlu0 %2687
    %2689 = vrot.lane.b32.xlu0 %v2286, 127
    %v2690 = vpop.permute.xlu0 %2689
    %2691 = vrot.lane.b32.xlu0 %v2285, 127
    %v2692 = vpop.permute.xlu0 %2691
    %2693 = vrot.lane.b32.xlu0 %v2289, 127
    %v2694 = vpop.permute.xlu0 %2693
    %2695 = vrot.lane.b32.xlu0 %v2288, 127
    %v2696 = vpop.permute.xlu0 %2695
    %2697 = vrot.lane.b32.xlu0 %v2292, 127
    %v2698 = vpop.permute.xlu0 %2697
    %2699 = vrot.lane.b32.xlu0 %v2291, 127
    %v2700 = vpop.permute.xlu0 %2699
    %2701 = vrot.lane.b32.xlu0 %v2295, 127
    %v2702 = vpop.permute.xlu0 %2701
    %2703 = vrot.lane.b32.xlu0 %v2294, 127
    %v2704 = vpop.permute.xlu0 %2703
    %2705 = vrot.lane.b32.xlu0 %v2298, 127
    %v2706 = vpop.permute.xlu0 %2705
    %2707 = vrot.lane.b32.xlu0 %v2297, 127
    %v2708 = vpop.permute.xlu0 %2707
    %2709 = vrot.lane.b32.xlu0 %v2301, 127
    %v2710 = vpop.permute.xlu0 %2709
    %2711 = vrot.lane.b32.xlu0 %v2300, 127
    %v2712 = vpop.permute.xlu0 %2711
    %2713 = vrot.lane.b32.xlu0 %v2304, 127
    %v2714 = vpop.permute.xlu0 %2713
    %2715 = vrot.lane.b32.xlu0 %v2303, 127
    %v2716 = vpop.permute.xlu0 %2715
    %2717 = vrot.lane.b32.xlu0 %v2307, 127
    %v2718 = vpop.permute.xlu0 %2717
    %2719 = vrot.lane.b32.xlu0 %v2306, 127
    %v2720 = vpop.permute.xlu0 %2719
    %2721 = vrot.lane.b32.xlu0 %v2310, 127
    %v2722 = vpop.permute.xlu0 %2721
    %2723 = vrot.lane.b32.xlu0 %v2309, 127
    %v2724 = vpop.permute.xlu0 %2723
    %2725 = vrot.lane.b32.xlu0 %v2313, 127
    %v2726 = vpop.permute.xlu0 %2725
    %2727 = vrot.lane.b32.xlu0 %v2312, 127
    %v2728 = vpop.permute.xlu0 %2727
    %2729 = vrot.lane.b32.xlu0 %v2316, 127
    %v2730 = vpop.permute.xlu0 %2729
    %2731 = vrot.lane.b32.xlu0 %v2315, 127
    %v2732 = vpop.permute.xlu0 %2731
    %v2941 = vadd.f32 %v966, %v2318
    %v2942 = vadd.f32 %v969, %v2320
    %v2943 = vadd.f32 %v974, %v2322
    %v2944 = vadd.f32 %v977, %v2324
    %v2945 = vadd.f32 %v982, %v2326
    %v2946 = vadd.f32 %v985, %v2328
    %v2947 = vadd.f32 %v990, %v2330
    %v2948 = vadd.f32 %v993, %v2332
    %v2949 = vadd.f32 %v998, %v2334
    %v2950 = vadd.f32 %v1001, %v2336
    %v2951 = vadd.f32 %v1006, %v2338
    %v2952 = vadd.f32 %v1009, %v2340
    %v2953 = vadd.f32 %v1014, %v2342
    %v2954 = vadd.f32 %v1017, %v2344
    %v2955 = vadd.f32 %v1022, %v2346
    %v2956 = vadd.f32 %v1025, %v2348
    %v2957 = vadd.f32 %v1030, %v2350
    %v2958 = vadd.f32 %v1033, %v2352
    %v2959 = vadd.f32 %v1038, %v2354
    %v2960 = vadd.f32 %v1041, %v2356
    %v2961 = vadd.f32 %v1046, %v2358
    %v2962 = vadd.f32 %v1049, %v2360
    %v2963 = vadd.f32 %v1054, %v2362
    %v2964 = vadd.f32 %v1057, %v2364
    %v2965 = vadd.f32 %v1062, %v2366
    %v2966 = vadd.f32 %v1065, %v2368
    %v2967 = vadd.f32 %v1070, %v2370
    %v2968 = vadd.f32 %v1073, %v2372
    %v2969 = vadd.f32 %v1078, %v2374
    %v2970 = vadd.f32 %v1081, %v2376
    %v2971 = vadd.f32 %v1086, %v2378
    %v2972 = vadd.f32 %v1089, %v2380
    %v2973 = vadd.f32 %v1094, %v2382
    %v2974 = vadd.f32 %v1097, %v2384
    %v2975 = vadd.f32 %v1102, %v2386
    %v2976 = vadd.f32 %v1105, %v2388
    %v2977 = vadd.f32 %v1110, %v2390
    %v2978 = vadd.f32 %v1113, %v2392
    %v2979 = vadd.f32 %v1118, %v2394
    %v2980 = vadd.f32 %v1121, %v2396
    %v2981 = vadd.f32 %v1126, %v2398
    %v2982 = vadd.f32 %v1129, %v2400
    %v2983 = vadd.f32 %v1134, %v2402
    %v2984 = vadd.f32 %v1137, %v2404
    %v2985 = vadd.f32 %v1142, %v2406
    %v2986 = vadd.f32 %v1145, %v2408
    %v2987 = vadd.f32 %v1150, %v2410
    %v2988 = vadd.f32 %v1153, %v2412
    %v2989 = vadd.f32 %v1158, %v2414
    %v2990 = vadd.f32 %v1161, %v2416
    %v2991 = vadd.f32 %v1166, %v2418
    %v2992 = vadd.f32 %v1169, %v2420
    %v2993 = vadd.f32 %v1174, %v2422
    %v2994 = vadd.f32 %v1177, %v2424
    %v2995 = vadd.f32 %v1182, %v2426
    %v2996 = vadd.f32 %v1185, %v2428
    %v2997 = vadd.f32 %v1190, %v2430
    %v2998 = vadd.f32 %v1193, %v2432
    %v2999 = vadd.f32 %v1198, %v2434
    %v3000 = vadd.f32 %v1201, %v2436
    %v3001 = vadd.f32 %v1206, %v2438
    %v3002 = vadd.f32 %v1209, %v2440
    %v3003 = vadd.f32 %v1214, %v2442
    %v3004 = vadd.f32 %v1217, %v2444
    %v3005 = vadd.f32 %v1222, %v2446
    %v3006 = vadd.f32 %v1225, %v2448
    %v3007 = vadd.f32 %v1230, %v2450
    %v3008 = vadd.f32 %v1233, %v2452
    %v3009 = vadd.f32 %v1238, %v2454
    %v3010 = vadd.f32 %v1241, %v2456
    %v3011 = vadd.f32 %v1246, %v2458
    %v3012 = vadd.f32 %v1249, %v2460
    %v3013 = vadd.f32 %v1254, %v2462
    %v3014 = vadd.f32 %v1257, %v2464
    %v3015 = vadd.f32 %v1262, %v2466
    %v3016 = vadd.f32 %v1265, %v2468
    %v3017 = vadd.f32 %v1270, %v2470
    %v3018 = vadd.f32 %v1273, %v2472
    %v3019 = vadd.f32 %v1278, %v2474
    %v3020 = vadd.f32 %v1281, %v2476
    %v3021 = vadd.f32 %v1286, %v2478
    %v3022 = vadd.f32 %v1289, %v2480
    %v3023 = vadd.f32 %v1294, %v2482
    %v3024 = vadd.f32 %v1297, %v2484
    %v3025 = vadd.f32 %v1302, %v2486
    %v3026 = vadd.f32 %v1305, %v2488
    %v3027 = vadd.f32 %v1310, %v2490
    %v3028 = vadd.f32 %v1313, %v2492
    %v3029 = vadd.f32 %v1318, %v2494
    %v3030 = vadd.f32 %v1321, %v2496
    %v3031 = vadd.f32 %v1326, %v2498
    %v3032 = vadd.f32 %v1329, %v2500
    %v3033 = vadd.f32 %v1334, %v2502
    %v3034 = vadd.f32 %v1337, %v2504
    %v3035 = vadd.f32 %v1342, %v2506
    %v3036 = vadd.f32 %v1345, %v2508
    %v3037 = vadd.f32 %v1350, %v2510
    %v3038 = vadd.f32 %v1353, %v2512
    %v3039 = vadd.f32 %v1358, %v2514
    %v3040 = vadd.f32 %v1361, %v2516
    %v3041 = vadd.f32 %v1366, %v2518
    %v3042 = vadd.f32 %v1369, %v2520
    %v3043 = vadd.f32 %v1374, %v2522
    %v3044 = vadd.f32 %v1377, %v2524
    %v3045 = vadd.f32 %v1382, %v2526
    %v3046 = vadd.f32 %v1385, %v2528
    %v3047 = vadd.f32 %v1390, %v2530
    %v3048 = vadd.f32 %v1393, %v2532
    %v3049 = vadd.f32 %v1398, %v2534
    %v3050 = vadd.f32 %v1401, %v2536
    %v3051 = vadd.f32 %v1406, %v2538
    %v3052 = vadd.f32 %v1409, %v2540
    %v3053 = vadd.f32 %v1414, %v2542
    %v3054 = vadd.f32 %v1417, %v2544
    %v3055 = vadd.f32 %v1422, %v2546
    %v3056 = vadd.f32 %v1425, %v2548
    %v3057 = vadd.f32 %v1430, %v2550
    %v3058 = vadd.f32 %v1433, %v2552
    %v3059 = vadd.f32 %v1438, %v2554
    %v3060 = vadd.f32 %v1441, %v2556
    %v3061 = vadd.f32 %v1446, %v2558
    %v3062 = vadd.f32 %v1449, %v2560
    %v3063 = vadd.f32 %v1454, %v2562
    %v3064 = vadd.f32 %v1457, %v2564
    %v3065 = vadd.f32 %v1462, %v2566
    %v3066 = vadd.f32 %v1465, %v2568
    %v3067 = vadd.f32 %v1470, %v2570
    %v3068 = vadd.f32 %v1473, %v2572
    %v3069 = vadd.f32 %v1478, %v2574
    %v3070 = vadd.f32 %v1481, %v2576
    %v3071 = vadd.f32 %v1486, %v2578
    %v3072 = vadd.f32 %v1489, %v2580
    %v3073 = vadd.f32 %v1494, %v2582
    %v3074 = vadd.f32 %v1497, %v2584
    %v3075 = vadd.f32 %v1502, %v2586
    %v3076 = vadd.f32 %v1505, %v2588
    %v3077 = vadd.f32 %v1510, %v2590
    %v3078 = vadd.f32 %v1513, %v2592
    %v3079 = vadd.f32 %v1518, %v2594
    %v3080 = vadd.f32 %v1521, %v2596
    %v3081 = vadd.f32 %v1526, %v2598
    %v3082 = vadd.f32 %v1529, %v2600
    %v3083 = vadd.f32 %v1534, %v2602
    %v3084 = vadd.f32 %v1537, %v2604
    %v3085 = vadd.f32 %v1542, %v2606
    %v3086 = vadd.f32 %v1545, %v2608
    %v3087 = vadd.f32 %v1550, %v2610
    %v3088 = vadd.f32 %v1553, %v2612
    %v3089 = vadd.f32 %v1558, %v2614
    %v3090 = vadd.f32 %v1561, %v2616
    %v3091 = vadd.f32 %v1566, %v2618
    %v3092 = vadd.f32 %v1569, %v2620
    %v3093 = vadd.f32 %v1574, %v2622
    %v3094 = vadd.f32 %v1577, %v2624
    %v3095 = vadd.f32 %v1582, %v2626
    %v3096 = vadd.f32 %v1585, %v2628
    %v3097 = vadd.f32 %v1590, %v2630
    %v3098 = vadd.f32 %v1593, %v2632
    %v3099 = vadd.f32 %v1598, %v2634
    %v3100 = vadd.f32 %v1601, %v2636
    %v3101 = vadd.f32 %v1606, %v2638
    %v3102 = vadd.f32 %v1609, %v2640
    %v3103 = vadd.f32 %v1614, %v2642
    %v3104 = vadd.f32 %v1617, %v2644
    %v3105 = vadd.f32 %v1622, %v2646
    %v3106 = vadd.f32 %v1625, %v2648
    %v3107 = vadd.f32 %v1630, %v2650
    %v3108 = vadd.f32 %v1633, %v2652
    %v3109 = vadd.f32 %v1638, %v2654
    %v3110 = vadd.f32 %v1641, %v2656
    %v3111 = vadd.f32 %v1646, %v2658
    %v3112 = vadd.f32 %v1649, %v2660
    %v3113 = vadd.f32 %v1654, %v2662
    %v3114 = vadd.f32 %v1657, %v2664
    %v3115 = vadd.f32 %v1662, %v2666
    %v3116 = vadd.f32 %v1665, %v2668
    %v3117 = vadd.f32 %v1670, %v2670
    %v3118 = vadd.f32 %v1673, %v2672
    %v3119 = vadd.f32 %v1678, %v2674
    %v3120 = vadd.f32 %v1681, %v2676
    %v3121 = vadd.f32 %v1686, %v2678
    %v3122 = vadd.f32 %v1689, %v2680
    %v3123 = vadd.f32 %v1694, %v2682
    %v3124 = vadd.f32 %v1697, %v2684
    %v3125 = vadd.f32 %v1702, %v2686
    %v3126 = vadd.f32 %v1705, %v2688
    %v3127 = vadd.f32 %v1710, %v2690
    %v3128 = vadd.f32 %v1713, %v2692
    %v3129 = vadd.f32 %v1718, %v2694
    %v3130 = vadd.f32 %v1721, %v2696
    %v3131 = vadd.f32 %v1726, %v2698
    %v3132 = vadd.f32 %v1729, %v2700
    %v3133 = vadd.f32 %v1734, %v2702
    %v3134 = vadd.f32 %v1737, %v2704
    %v3135 = vadd.f32 %v1742, %v2706
    %v3136 = vadd.f32 %v1745, %v2708
    %v3137 = vadd.f32 %v1750, %v2710
    %v3138 = vadd.f32 %v1753, %v2712
    %v3139 = vadd.f32 %v1758, %v2714
    %v3140 = vadd.f32 %v1761, %v2716
    %v3141 = vadd.f32 %v1766, %v2718
    %v3142 = vadd.f32 %v1769, %v2720
    %v3143 = vadd.f32 %v1774, %v2722
    %v3144 = vadd.f32 %v1777, %v2724
    %v3145 = vadd.f32 %v1782, %v2726
    %v3146 = vadd.f32 %v1785, %v2728
    %v3147 = vadd.f32 %v1790, %v2730
    %v3148 = vadd.f32 %v1793, %v2732
    %vm3149 = vcmask 1045504
    %v3150 = vrot.slane %v966, 2
    %v3151 = vrot.slane %v969, 2
    %v3152 = vsel %vm3149, %v3150, %v3151
    %v3153 = vrot.slane %v974, 2
    %v3154 = vrot.slane %v977, 2
    %v3155 = vsel %vm3149, %v3153, %v3154
    %v3156 = vrot.slane %v982, 2
    %v3157 = vrot.slane %v985, 2
    %v3158 = vsel %vm3149, %v3156, %v3157
    %v3159 = vrot.slane %v990, 2
    %v3160 = vrot.slane %v993, 2
    %v3161 = vsel %vm3149, %v3159, %v3160
    %v3162 = vrot.slane %v998, 2
    %v3163 = vrot.slane %v1001, 2
    %v3164 = vsel %vm3149, %v3162, %v3163
    %v3165 = vrot.slane %v1006, 2
    %v3166 = vrot.slane %v1009, 2
    %v3167 = vsel %vm3149, %v3165, %v3166
    %v3168 = vrot.slane %v1014, 2
    %v3169 = vrot.slane %v1017, 2
    %v3170 = vsel %vm3149, %v3168, %v3169
    %v3171 = vrot.slane %v1022, 2
    %v3172 = vrot.slane %v1025, 2
    %v3173 = vsel %vm3149, %v3171, %v3172
    %v3174 = vrot.slane %v1030, 2
    %v3175 = vrot.slane %v1033, 2
    %v3176 = vsel %vm3149, %v3174, %v3175
    %v3177 = vrot.slane %v1038, 2
    %v3178 = vrot.slane %v1041, 2
    %v3179 = vsel %vm3149, %v3177, %v3178
    %v3180 = vrot.slane %v1046, 2
    %v3181 = vrot.slane %v1049, 2
    %v3182 = vsel %vm3149, %v3180, %v3181
    %v3183 = vrot.slane %v1054, 2
    %v3184 = vrot.slane %v1057, 2
    %v3185 = vsel %vm3149, %v3183, %v3184
    %v3186 = vrot.slane %v1062, 2
    %v3187 = vrot.slane %v1065, 2
    %v3188 = vsel %vm3149, %v3186, %v3187
    %v3189 = vrot.slane %v1070, 2
    %v3190 = vrot.slane %v1073, 2
    %v3191 = vsel %vm3149, %v3189, %v3190
    %v3192 = vrot.slane %v1078, 2
    %v3193 = vrot.slane %v1081, 2
    %v3194 = vsel %vm3149, %v3192, %v3193
    %v3195 = vrot.slane %v1086, 2
    %v3196 = vrot.slane %v1089, 2
    %v3197 = vsel %vm3149, %v3195, %v3196
    %v3198 = vrot.slane %v1094, 2
    %v3199 = vrot.slane %v1097, 2
    %v3200 = vsel %vm3149, %v3198, %v3199
    %v3201 = vrot.slane %v1102, 2
    %v3202 = vrot.slane %v1105, 2
    %v3203 = vsel %vm3149, %v3201, %v3202
    %v3204 = vrot.slane %v1110, 2
    %v3205 = vrot.slane %v1113, 2
    %v3206 = vsel %vm3149, %v3204, %v3205
    %v3207 = vrot.slane %v1118, 2
    %v3208 = vrot.slane %v1121, 2
    %v3209 = vsel %vm3149, %v3207, %v3208
    %v3210 = vrot.slane %v1126, 2
    %v3211 = vrot.slane %v1129, 2
    %v3212 = vsel %vm3149, %v3210, %v3211
    %v3213 = vrot.slane %v1134, 2
    %v3214 = vrot.slane %v1137, 2
    %v3215 = vsel %vm3149, %v3213, %v3214
    %v3216 = vrot.slane %v1142, 2
    %v3217 = vrot.slane %v1145, 2
    %v3218 = vsel %vm3149, %v3216, %v3217
    %v3219 = vrot.slane %v1150, 2
    %v3220 = vrot.slane %v1153, 2
    %v3221 = vsel %vm3149, %v3219, %v3220
    %v3222 = vrot.slane %v1158, 2
    %v3223 = vrot.slane %v1161, 2
    %v3224 = vsel %vm3149, %v3222, %v3223
    %v3225 = vrot.slane %v1166, 2
    %v3226 = vrot.slane %v1169, 2
    %v3227 = vsel %vm3149, %v3225, %v3226
    %v3228 = vrot.slane %v1174, 2
    %v3229 = vrot.slane %v1177, 2
    %v3230 = vsel %vm3149, %v3228, %v3229
    %v3231 = vrot.slane %v1182, 2
    %v3232 = vrot.slane %v1185, 2
    %v3233 = vsel %vm3149, %v3231, %v3232
    %v3234 = vrot.slane %v1190, 2
    %v3235 = vrot.slane %v1193, 2
    %v3236 = vsel %vm3149, %v3234, %v3235
    %v3237 = vrot.slane %v1198, 2
    %v3238 = vrot.slane %v1201, 2
    %v3239 = vsel %vm3149, %v3237, %v3238
    %v3240 = vrot.slane %v1206, 2
    %v3241 = vrot.slane %v1209, 2
    %v3242 = vsel %vm3149, %v3240, %v3241
    %v3243 = vrot.slane %v1214, 2
    %v3244 = vrot.slane %v1217, 2
    %v3245 = vsel %vm3149, %v3243, %v3244
    %v3246 = vrot.slane %v1222, 2
    %v3247 = vrot.slane %v1225, 2
    %v3248 = vsel %vm3149, %v3246, %v3247
    %v3249 = vrot.slane %v1230, 2
    %v3250 = vrot.slane %v1233, 2
    %v3251 = vsel %vm3149, %v3249, %v3250
    %v3252 = vrot.slane %v1238, 2
    %v3253 = vrot.slane %v1241, 2
    %v3254 = vsel %vm3149, %v3252, %v3253
    %v3255 = vrot.slane %v1246, 2
    %v3256 = vrot.slane %v1249, 2
    %v3257 = vsel %vm3149, %v3255, %v3256
    %v3258 = vrot.slane %v1254, 2
    %v3259 = vrot.slane %v1257, 2
    %v3260 = vsel %vm3149, %v3258, %v3259
    %v3261 = vrot.slane %v1262, 2
    %v3262 = vrot.slane %v1265, 2
    %v3263 = vsel %vm3149, %v3261, %v3262
    %v3264 = vrot.slane %v1270, 2
    %v3265 = vrot.slane %v1273, 2
    %v3266 = vsel %vm3149, %v3264, %v3265
    %v3267 = vrot.slane %v1278, 2
    %v3268 = vrot.slane %v1281, 2
    %v3269 = vsel %vm3149, %v3267, %v3268
    %v3270 = vrot.slane %v1286, 2
    %v3271 = vrot.slane %v1289, 2
    %v3272 = vsel %vm3149, %v3270, %v3271
    %v3273 = vrot.slane %v1294, 2
    %v3274 = vrot.slane %v1297, 2
    %v3275 = vsel %vm3149, %v3273, %v3274
    %v3276 = vrot.slane %v1302, 2
    %v3277 = vrot.slane %v1305, 2
    %v3278 = vsel %vm3149, %v3276, %v3277
    %v3279 = vrot.slane %v1310, 2
    %v3280 = vrot.slane %v1313, 2
    %v3281 = vsel %vm3149, %v3279, %v3280
    %v3282 = vrot.slane %v1318, 2
    %v3283 = vrot.slane %v1321, 2
    %v3284 = vsel %vm3149, %v3282, %v3283
    %v3285 = vrot.slane %v1326, 2
    %v3286 = vrot.slane %v1329, 2
    %v3287 = vsel %vm3149, %v3285, %v3286
    %v3288 = vrot.slane %v1334, 2
    %v3289 = vrot.slane %v1337, 2
    %v3290 = vsel %vm3149, %v3288, %v3289
    %v3291 = vrot.slane %v1342, 2
    %v3292 = vrot.slane %v1345, 2
    %v3293 = vsel %vm3149, %v3291, %v3292
    %v3294 = vrot.slane %v1350, 2
    %v3295 = vrot.slane %v1353, 2
    %v3296 = vsel %vm3149, %v3294, %v3295
    %v3297 = vrot.slane %v1358, 2
    %v3298 = vrot.slane %v1361, 2
    %v3299 = vsel %vm3149, %v3297, %v3298
    %v3300 = vrot.slane %v1366, 2
    %v3301 = vrot.slane %v1369, 2
    %v3302 = vsel %vm3149, %v3300, %v3301
    %v3303 = vrot.slane %v1374, 2
    %v3304 = vrot.slane %v1377, 2
    %v3305 = vsel %vm3149, %v3303, %v3304
    %v3306 = vrot.slane %v1382, 2
    %v3307 = vrot.slane %v1385, 2
    %v3308 = vsel %vm3149, %v3306, %v3307
    %v3309 = vrot.slane %v1390, 2
    %v3310 = vrot.slane %v1393, 2
    %v3311 = vsel %vm3149, %v3309, %v3310
    %v3312 = vrot.slane %v1398, 2
    %v3313 = vrot.slane %v1401, 2
    %v3314 = vsel %vm3149, %v3312, %v3313
    %v3315 = vrot.slane %v1406, 2
    %v3316 = vrot.slane %v1409, 2
    %v3317 = vsel %vm3149, %v3315, %v3316
    %v3318 = vrot.slane %v1414, 2
    %v3319 = vrot.slane %v1417, 2
    %v3320 = vsel %vm3149, %v3318, %v3319
    %v3321 = vrot.slane %v1422, 2
    %v3322 = vrot.slane %v1425, 2
    %v3323 = vsel %vm3149, %v3321, %v3322
    %v3324 = vrot.slane %v1430, 2
    %v3325 = vrot.slane %v1433, 2
    %v3326 = vsel %vm3149, %v3324, %v3325
    %v3327 = vrot.slane %v1438, 2
    %v3328 = vrot.slane %v1441, 2
    %v3329 = vsel %vm3149, %v3327, %v3328
    %v3330 = vrot.slane %v1446, 2
    %v3331 = vrot.slane %v1449, 2
    %v3332 = vsel %vm3149, %v3330, %v3331
    %v3333 = vrot.slane %v1454, 2
    %v3334 = vrot.slane %v1457, 2
    %v3335 = vsel %vm3149, %v3333, %v3334
    %v3336 = vrot.slane %v1462, 2
    %v3337 = vrot.slane %v1465, 2
    %v3338 = vsel %vm3149, %v3336, %v3337
    %v3339 = vrot.slane %v1470, 2
    %v3340 = vrot.slane %v1473, 2
    %v3341 = vsel %vm3149, %v3339, %v3340
    %v3342 = vrot.slane %v1478, 2
    %v3343 = vrot.slane %v1481, 2
    %v3344 = vsel %vm3149, %v3342, %v3343
    %v3345 = vrot.slane %v1486, 2
    %v3346 = vrot.slane %v1489, 2
    %v3347 = vsel %vm3149, %v3345, %v3346
    %v3348 = vrot.slane %v1494, 2
    %v3349 = vrot.slane %v1497, 2
    %v3350 = vsel %vm3149, %v3348, %v3349
    %v3351 = vrot.slane %v1502, 2
    %v3352 = vrot.slane %v1505, 2
    %v3353 = vsel %vm3149, %v3351, %v3352
    %v3354 = vrot.slane %v1510, 2
    %v3355 = vrot.slane %v1513, 2
    %v3356 = vsel %vm3149, %v3354, %v3355
    %v3357 = vrot.slane %v1518, 2
    %v3358 = vrot.slane %v1521, 2
    %v3359 = vsel %vm3149, %v3357, %v3358
    %v3360 = vrot.slane %v1526, 2
    %v3361 = vrot.slane %v1529, 2
    %v3362 = vsel %vm3149, %v3360, %v3361
    %v3363 = vrot.slane %v1534, 2
    %v3364 = vrot.slane %v1537, 2
    %v3365 = vsel %vm3149, %v3363, %v3364
    %v3366 = vrot.slane %v1542, 2
    %v3367 = vrot.slane %v1545, 2
    %v3368 = vsel %vm3149, %v3366, %v3367
    %v3369 = vrot.slane %v1550, 2
    %v3370 = vrot.slane %v1553, 2
    %v3371 = vsel %vm3149, %v3369, %v3370
    %v3372 = vrot.slane %v1558, 2
    %v3373 = vrot.slane %v1561, 2
    %v3374 = vsel %vm3149, %v3372, %v3373
    %v3375 = vrot.slane %v1566, 2
    %v3376 = vrot.slane %v1569, 2
    %v3377 = vsel %vm3149, %v3375, %v3376
    %v3378 = vrot.slane %v1574, 2
    %v3379 = vrot.slane %v1577, 2
    %v3380 = vsel %vm3149, %v3378, %v3379
    %v3381 = vrot.slane %v1582, 2
    %v3382 = vrot.slane %v1585, 2
    %v3383 = vsel %vm3149, %v3381, %v3382
    %v3384 = vrot.slane %v1590, 2
    %v3385 = vrot.slane %v1593, 2
    %v3386 = vsel %vm3149, %v3384, %v3385
    %v3387 = vrot.slane %v1598, 2
    %v3388 = vrot.slane %v1601, 2
    %v3389 = vsel %vm3149, %v3387, %v3388
    %v3390 = vrot.slane %v1606, 2
    %v3391 = vrot.slane %v1609, 2
    %v3392 = vsel %vm3149, %v3390, %v3391
    %v3393 = vrot.slane %v1614, 2
    %v3394 = vrot.slane %v1617, 2
    %v3395 = vsel %vm3149, %v3393, %v3394
    %v3396 = vrot.slane %v1622, 2
    %v3397 = vrot.slane %v1625, 2
    %v3398 = vsel %vm3149, %v3396, %v3397
    %v3399 = vrot.slane %v1630, 2
    %v3400 = vrot.slane %v1633, 2
    %v3401 = vsel %vm3149, %v3399, %v3400
    %v3402 = vrot.slane %v1638, 2
    %v3403 = vrot.slane %v1641, 2
    %v3404 = vsel %vm3149, %v3402, %v3403
    %v3405 = vrot.slane %v1646, 2
    %v3406 = vrot.slane %v1649, 2
    %v3407 = vsel %vm3149, %v3405, %v3406
    %v3408 = vrot.slane %v1654, 2
    %v3409 = vrot.slane %v1657, 2
    %v3410 = vsel %vm3149, %v3408, %v3409
    %v3411 = vrot.slane %v1662, 2
    %v3412 = vrot.slane %v1665, 2
    %v3413 = vsel %vm3149, %v3411, %v3412
    %v3414 = vrot.slane %v1670, 2
    %v3415 = vrot.slane %v1673, 2
    %v3416 = vsel %vm3149, %v3414, %v3415
    %v3417 = vrot.slane %v1678, 2
    %v3418 = vrot.slane %v1681, 2
    %v3419 = vsel %vm3149, %v3417, %v3418
    %v3420 = vrot.slane %v1686, 2
    %v3421 = vrot.slane %v1689, 2
    %v3422 = vsel %vm3149, %v3420, %v3421
    %v3423 = vrot.slane %v1694, 2
    %v3424 = vrot.slane %v1697, 2
    %v3425 = vsel %vm3149, %v3423, %v3424
    %v3426 = vrot.slane %v1702, 2
    %v3427 = vrot.slane %v1705, 2
    %v3428 = vsel %vm3149, %v3426, %v3427
    %v3429 = vrot.slane %v1710, 2
    %v3430 = vrot.slane %v1713, 2
    %v3431 = vsel %vm3149, %v3429, %v3430
    %v3432 = vrot.slane %v1718, 2
    %v3433 = vrot.slane %v1721, 2
    %v3434 = vsel %vm3149, %v3432, %v3433
    %v3435 = vrot.slane %v1726, 2
    %v3436 = vrot.slane %v1729, 2
    %v3437 = vsel %vm3149, %v3435, %v3436
    %v3438 = vrot.slane %v1734, 2
    %v3439 = vrot.slane %v1737, 2
    %v3440 = vsel %vm3149, %v3438, %v3439
    %v3441 = vrot.slane %v1742, 2
    %v3442 = vrot.slane %v1745, 2
    %v3443 = vsel %vm3149, %v3441, %v3442
    %v3444 = vrot.slane %v1750, 2
    %v3445 = vrot.slane %v1753, 2
    %v3446 = vsel %vm3149, %v3444, %v3445
    %v3447 = vrot.slane %v1758, 2
    %v3448 = vrot.slane %v1761, 2
    %v3449 = vsel %vm3149, %v3447, %v3448
    %v3450 = vrot.slane %v1766, 2
    %v3451 = vrot.slane %v1769, 2
    %v3452 = vsel %vm3149, %v3450, %v3451
    %v3453 = vrot.slane %v1774, 2
    %v3454 = vrot.slane %v1777, 2
    %v3455 = vsel %vm3149, %v3453, %v3454
    %v3456 = vrot.slane %v1782, 2
    %v3457 = vrot.slane %v1785, 2
    %v3458 = vsel %vm3149, %v3456, %v3457
    %v3459 = vrot.slane %v1790, 2
    %v3460 = vrot.slane %v1793, 2
    %v3461 = vsel %vm3149, %v3459, %v3460
    %3462 = vrot.lane.b32.xlu0 %v3152, 126
    %v3463 = vpop.permute.xlu0 %3462
    %3464 = vrot.lane.b32.xlu0 %v3151, 126
    %v3465 = vpop.permute.xlu0 %3464
    %3466 = vrot.lane.b32.xlu0 %v3155, 126
    %v3467 = vpop.permute.xlu0 %3466
    %3468 = vrot.lane.b32.xlu0 %v3154, 126
    %v3469 = vpop.permute.xlu0 %3468
    %3470 = vrot.lane.b32.xlu0 %v3158, 126
    %v3471 = vpop.permute.xlu0 %3470
    %3472 = vrot.lane.b32.xlu0 %v3157, 126
    %v3473 = vpop.permute.xlu0 %3472
    %3474 = vrot.lane.b32.xlu0 %v3161, 126
    %v3475 = vpop.permute.xlu0 %3474
    %3476 = vrot.lane.b32.xlu0 %v3160, 126
    %v3477 = vpop.permute.xlu0 %3476
    %3478 = vrot.lane.b32.xlu0 %v3164, 126
    %v3479 = vpop.permute.xlu0 %3478
    %3480 = vrot.lane.b32.xlu0 %v3163, 126
    %v3481 = vpop.permute.xlu0 %3480
    %3482 = vrot.lane.b32.xlu0 %v3167, 126
    %v3483 = vpop.permute.xlu0 %3482
    %3484 = vrot.lane.b32.xlu0 %v3166, 126
    %v3485 = vpop.permute.xlu0 %3484
    %3486 = vrot.lane.b32.xlu0 %v3170, 126
    %v3487 = vpop.permute.xlu0 %3486
    %3488 = vrot.lane.b32.xlu0 %v3169, 126
    %v3489 = vpop.permute.xlu0 %3488
    %3490 = vrot.lane.b32.xlu0 %v3173, 126
    %v3491 = vpop.permute.xlu0 %3490
    %3492 = vrot.lane.b32.xlu0 %v3172, 126
    %v3493 = vpop.permute.xlu0 %3492
    %3494 = vrot.lane.b32.xlu0 %v3176, 126
    %v3495 = vpop.permute.xlu0 %3494
    %3496 = vrot.lane.b32.xlu0 %v3175, 126
    %v3497 = vpop.permute.xlu0 %3496
    %3498 = vrot.lane.b32.xlu0 %v3179, 126
    %v3499 = vpop.permute.xlu0 %3498
    %3500 = vrot.lane.b32.xlu0 %v3178, 126
    %v3501 = vpop.permute.xlu0 %3500
    %3502 = vrot.lane.b32.xlu0 %v3182, 126
    %v3503 = vpop.permute.xlu0 %3502
    %3504 = vrot.lane.b32.xlu0 %v3181, 126
    %v3505 = vpop.permute.xlu0 %3504
    %3506 = vrot.lane.b32.xlu0 %v3185, 126
    %v3507 = vpop.permute.xlu0 %3506
    %3508 = vrot.lane.b32.xlu0 %v3184, 126
    %v3509 = vpop.permute.xlu0 %3508
    %3510 = vrot.lane.b32.xlu0 %v3188, 126
    %v3511 = vpop.permute.xlu0 %3510
    %3512 = vrot.lane.b32.xlu0 %v3187, 126
    %v3513 = vpop.permute.xlu0 %3512
    %3514 = vrot.lane.b32.xlu0 %v3191, 126
    %v3515 = vpop.permute.xlu0 %3514
    %3516 = vrot.lane.b32.xlu0 %v3190, 126
    %v3517 = vpop.permute.xlu0 %3516
    %3518 = vrot.lane.b32.xlu0 %v3194, 126
    %v3519 = vpop.permute.xlu0 %3518
    %3520 = vrot.lane.b32.xlu0 %v3193, 126
    %v3521 = vpop.permute.xlu0 %3520
    %3522 = vrot.lane.b32.xlu0 %v3197, 126
    %v3523 = vpop.permute.xlu0 %3522
    %3524 = vrot.lane.b32.xlu0 %v3196, 126
    %v3525 = vpop.permute.xlu0 %3524
    %3526 = vrot.lane.b32.xlu0 %v3200, 126
    %v3527 = vpop.permute.xlu0 %3526
    %3528 = vrot.lane.b32.xlu0 %v3199, 126
    %v3529 = vpop.permute.xlu0 %3528
    %3530 = vrot.lane.b32.xlu0 %v3203, 126
    %v3531 = vpop.permute.xlu0 %3530
    %3532 = vrot.lane.b32.xlu0 %v3202, 126
    %v3533 = vpop.permute.xlu0 %3532
    %3534 = vrot.lane.b32.xlu0 %v3206, 126
    %v3535 = vpop.permute.xlu0 %3534
    %3536 = vrot.lane.b32.xlu0 %v3205, 126
    %v3537 = vpop.permute.xlu0 %3536
    %3538 = vrot.lane.b32.xlu0 %v3209, 126
    %v3539 = vpop.permute.xlu0 %3538
    %3540 = vrot.lane.b32.xlu0 %v3208, 126
    %v3541 = vpop.permute.xlu0 %3540
    %3542 = vrot.lane.b32.xlu0 %v3212, 126
    %v3543 = vpop.permute.xlu0 %3542
    %3544 = vrot.lane.b32.xlu0 %v3211, 126
    %v3545 = vpop.permute.xlu0 %3544
    %3546 = vrot.lane.b32.xlu0 %v3215, 126
    %v3547 = vpop.permute.xlu0 %3546
    %3548 = vrot.lane.b32.xlu0 %v3214, 126
    %v3549 = vpop.permute.xlu0 %3548
    %3550 = vrot.lane.b32.xlu0 %v3218, 126
    %v3551 = vpop.permute.xlu0 %3550
    %3552 = vrot.lane.b32.xlu0 %v3217, 126
    %v3553 = vpop.permute.xlu0 %3552
    %3554 = vrot.lane.b32.xlu0 %v3221, 126
    %v3555 = vpop.permute.xlu0 %3554
    %3556 = vrot.lane.b32.xlu0 %v3220, 126
    %v3557 = vpop.permute.xlu0 %3556
    %3558 = vrot.lane.b32.xlu0 %v3224, 126
    %v3559 = vpop.permute.xlu0 %3558
    %3560 = vrot.lane.b32.xlu0 %v3223, 126
    %v3561 = vpop.permute.xlu0 %3560
    %3562 = vrot.lane.b32.xlu0 %v3227, 126
    %v3563 = vpop.permute.xlu0 %3562
    %3564 = vrot.lane.b32.xlu0 %v3226, 126
    %v3565 = vpop.permute.xlu0 %3564
    %3566 = vrot.lane.b32.xlu0 %v3230, 126
    %v3567 = vpop.permute.xlu0 %3566
    %3568 = vrot.lane.b32.xlu0 %v3229, 126
    %v3569 = vpop.permute.xlu0 %3568
    %3570 = vrot.lane.b32.xlu0 %v3233, 126
    %v3571 = vpop.permute.xlu0 %3570
    %3572 = vrot.lane.b32.xlu0 %v3232, 126
    %v3573 = vpop.permute.xlu0 %3572
    %3574 = vrot.lane.b32.xlu0 %v3236, 126
    %v3575 = vpop.permute.xlu0 %3574
    %3576 = vrot.lane.b32.xlu0 %v3235, 126
    %v3577 = vpop.permute.xlu0 %3576
    %3578 = vrot.lane.b32.xlu0 %v3239, 126
    %v3579 = vpop.permute.xlu0 %3578
    %3580 = vrot.lane.b32.xlu0 %v3238, 126
    %v3581 = vpop.permute.xlu0 %3580
    %3582 = vrot.lane.b32.xlu0 %v3242, 126
    %v3583 = vpop.permute.xlu0 %3582
    %3584 = vrot.lane.b32.xlu0 %v3241, 126
    %v3585 = vpop.permute.xlu0 %3584
    %3586 = vrot.lane.b32.xlu0 %v3245, 126
    %v3587 = vpop.permute.xlu0 %3586
    %3588 = vrot.lane.b32.xlu0 %v3244, 126
    %v3589 = vpop.permute.xlu0 %3588
    %3590 = vrot.lane.b32.xlu0 %v3248, 126
    %v3591 = vpop.permute.xlu0 %3590
    %3592 = vrot.lane.b32.xlu0 %v3247, 126
    %v3593 = vpop.permute.xlu0 %3592
    %3594 = vrot.lane.b32.xlu0 %v3251, 126
    %v3595 = vpop.permute.xlu0 %3594
    %3596 = vrot.lane.b32.xlu0 %v3250, 126
    %v3597 = vpop.permute.xlu0 %3596
    %3598 = vrot.lane.b32.xlu0 %v3254, 126
    %v3599 = vpop.permute.xlu0 %3598
    %3600 = vrot.lane.b32.xlu0 %v3253, 126
    %v3601 = vpop.permute.xlu0 %3600
    %3602 = vrot.lane.b32.xlu0 %v3257, 126
    %v3603 = vpop.permute.xlu0 %3602
    %3604 = vrot.lane.b32.xlu0 %v3256, 126
    %v3605 = vpop.permute.xlu0 %3604
    %3606 = vrot.lane.b32.xlu0 %v3260, 126
    %v3607 = vpop.permute.xlu0 %3606
    %3608 = vrot.lane.b32.xlu0 %v3259, 126
    %v3609 = vpop.permute.xlu0 %3608
    %3610 = vrot.lane.b32.xlu0 %v3263, 126
    %v3611 = vpop.permute.xlu0 %3610
    %3612 = vrot.lane.b32.xlu0 %v3262, 126
    %v3613 = vpop.permute.xlu0 %3612
    %3614 = vrot.lane.b32.xlu0 %v3266, 126
    %v3615 = vpop.permute.xlu0 %3614
    %3616 = vrot.lane.b32.xlu0 %v3265, 126
    %v3617 = vpop.permute.xlu0 %3616
    %3618 = vrot.lane.b32.xlu0 %v3269, 126
    %v3619 = vpop.permute.xlu0 %3618
    %3620 = vrot.lane.b32.xlu0 %v3268, 126
    %v3621 = vpop.permute.xlu0 %3620
    %3622 = vrot.lane.b32.xlu0 %v3272, 126
    %v3623 = vpop.permute.xlu0 %3622
    %3624 = vrot.lane.b32.xlu0 %v3271, 126
    %v3625 = vpop.permute.xlu0 %3624
    %3626 = vrot.lane.b32.xlu0 %v3275, 126
    %v3627 = vpop.permute.xlu0 %3626
    %3628 = vrot.lane.b32.xlu0 %v3274, 126
    %v3629 = vpop.permute.xlu0 %3628
    %3630 = vrot.lane.b32.xlu0 %v3278, 126
    %v3631 = vpop.permute.xlu0 %3630
    %3632 = vrot.lane.b32.xlu0 %v3277, 126
    %v3633 = vpop.permute.xlu0 %3632
    %3634 = vrot.lane.b32.xlu0 %v3281, 126
    %v3635 = vpop.permute.xlu0 %3634
    %3636 = vrot.lane.b32.xlu0 %v3280, 126
    %v3637 = vpop.permute.xlu0 %3636
    %3638 = vrot.lane.b32.xlu0 %v3284, 126
    %v3639 = vpop.permute.xlu0 %3638
    %3640 = vrot.lane.b32.xlu0 %v3283, 126
    %v3641 = vpop.permute.xlu0 %3640
    %3642 = vrot.lane.b32.xlu0 %v3287, 126
    %v3643 = vpop.permute.xlu0 %3642
    %3644 = vrot.lane.b32.xlu0 %v3286, 126
    %v3645 = vpop.permute.xlu0 %3644
    %3646 = vrot.lane.b32.xlu0 %v3290, 126
    %v3647 = vpop.permute.xlu0 %3646
    %3648 = vrot.lane.b32.xlu0 %v3289, 126
    %v3649 = vpop.permute.xlu0 %3648
    %3650 = vrot.lane.b32.xlu0 %v3293, 126
    %v3651 = vpop.permute.xlu0 %3650
    %3652 = vrot.lane.b32.xlu0 %v3292, 126
    %v3653 = vpop.permute.xlu0 %3652
    %3654 = vrot.lane.b32.xlu0 %v3296, 126
    %v3655 = vpop.permute.xlu0 %3654
    %3656 = vrot.lane.b32.xlu0 %v3295, 126
    %v3657 = vpop.permute.xlu0 %3656
    %3658 = vrot.lane.b32.xlu0 %v3299, 126
    %v3659 = vpop.permute.xlu0 %3658
    %3660 = vrot.lane.b32.xlu0 %v3298, 126
    %v3661 = vpop.permute.xlu0 %3660
    %3662 = vrot.lane.b32.xlu0 %v3302, 126
    %v3663 = vpop.permute.xlu0 %3662
    %3664 = vrot.lane.b32.xlu0 %v3301, 126
    %v3665 = vpop.permute.xlu0 %3664
    %3666 = vrot.lane.b32.xlu0 %v3305, 126
    %v3667 = vpop.permute.xlu0 %3666
    %3668 = vrot.lane.b32.xlu0 %v3304, 126
    %v3669 = vpop.permute.xlu0 %3668
    %3670 = vrot.lane.b32.xlu0 %v3308, 126
    %v3671 = vpop.permute.xlu0 %3670
    %3672 = vrot.lane.b32.xlu0 %v3307, 126
    %v3673 = vpop.permute.xlu0 %3672
    %3674 = vrot.lane.b32.xlu0 %v3311, 126
    %v3675 = vpop.permute.xlu0 %3674
    %3676 = vrot.lane.b32.xlu0 %v3310, 126
    %v3677 = vpop.permute.xlu0 %3676
    %3678 = vrot.lane.b32.xlu0 %v3314, 126
    %v3679 = vpop.permute.xlu0 %3678
    %3680 = vrot.lane.b32.xlu0 %v3313, 126
    %v3681 = vpop.permute.xlu0 %3680
    %3682 = vrot.lane.b32.xlu0 %v3317, 126
    %v3683 = vpop.permute.xlu0 %3682
    %3684 = vrot.lane.b32.xlu0 %v3316, 126
    %v3685 = vpop.permute.xlu0 %3684
    %3686 = vrot.lane.b32.xlu0 %v3320, 126
    %v3687 = vpop.permute.xlu0 %3686
    %3688 = vrot.lane.b32.xlu0 %v3319, 126
    %v3689 = vpop.permute.xlu0 %3688
    %3690 = vrot.lane.b32.xlu0 %v3323, 126
    %v3691 = vpop.permute.xlu0 %3690
    %3692 = vrot.lane.b32.xlu0 %v3322, 126
    %v3693 = vpop.permute.xlu0 %3692
    %3694 = vrot.lane.b32.xlu0 %v3326, 126
    %v3695 = vpop.permute.xlu0 %3694
    %3696 = vrot.lane.b32.xlu0 %v3325, 126
    %v3697 = vpop.permute.xlu0 %3696
    %3698 = vrot.lane.b32.xlu0 %v3329, 126
    %v3699 = vpop.permute.xlu0 %3698
    %3700 = vrot.lane.b32.xlu0 %v3328, 126
    %v3701 = vpop.permute.xlu0 %3700
    %3702 = vrot.lane.b32.xlu0 %v3332, 126
    %v3703 = vpop.permute.xlu0 %3702
    %3704 = vrot.lane.b32.xlu0 %v3331, 126
    %v3705 = vpop.permute.xlu0 %3704
    %3706 = vrot.lane.b32.xlu0 %v3335, 126
    %v3707 = vpop.permute.xlu0 %3706
    %3708 = vrot.lane.b32.xlu0 %v3334, 126
    %v3709 = vpop.permute.xlu0 %3708
    %3710 = vrot.lane.b32.xlu0 %v3338, 126
    %v3711 = vpop.permute.xlu0 %3710
    %3712 = vrot.lane.b32.xlu0 %v3337, 126
    %v3713 = vpop.permute.xlu0 %3712
    %3714 = vrot.lane.b32.xlu0 %v3341, 126
    %v3715 = vpop.permute.xlu0 %3714
    %3716 = vrot.lane.b32.xlu0 %v3340, 126
    %v3717 = vpop.permute.xlu0 %3716
    %3718 = vrot.lane.b32.xlu0 %v3344, 126
    %v3719 = vpop.permute.xlu0 %3718
    %3720 = vrot.lane.b32.xlu0 %v3343, 126
    %v3721 = vpop.permute.xlu0 %3720
    %3722 = vrot.lane.b32.xlu0 %v3347, 126
    %v3723 = vpop.permute.xlu0 %3722
    %3724 = vrot.lane.b32.xlu0 %v3346, 126
    %v3725 = vpop.permute.xlu0 %3724
    %3726 = vrot.lane.b32.xlu0 %v3350, 126
    %v3727 = vpop.permute.xlu0 %3726
    %3728 = vrot.lane.b32.xlu0 %v3349, 126
    %v3729 = vpop.permute.xlu0 %3728
    %3730 = vrot.lane.b32.xlu0 %v3353, 126
    %v3731 = vpop.permute.xlu0 %3730
    %3732 = vrot.lane.b32.xlu0 %v3352, 126
    %v3733 = vpop.permute.xlu0 %3732
    %3734 = vrot.lane.b32.xlu0 %v3356, 126
    %v3735 = vpop.permute.xlu0 %3734
    %3736 = vrot.lane.b32.xlu0 %v3355, 126
    %v3737 = vpop.permute.xlu0 %3736
    %3738 = vrot.lane.b32.xlu0 %v3359, 126
    %v3739 = vpop.permute.xlu0 %3738
    %3740 = vrot.lane.b32.xlu0 %v3358, 126
    %v3741 = vpop.permute.xlu0 %3740
    %3742 = vrot.lane.b32.xlu0 %v3362, 126
    %v3743 = vpop.permute.xlu0 %3742
    %3744 = vrot.lane.b32.xlu0 %v3361, 126
    %v3745 = vpop.permute.xlu0 %3744
    %3746 = vrot.lane.b32.xlu0 %v3365, 126
    %v3747 = vpop.permute.xlu0 %3746
    %3748 = vrot.lane.b32.xlu0 %v3364, 126
    %v3749 = vpop.permute.xlu0 %3748
    %3750 = vrot.lane.b32.xlu0 %v3368, 126
    %v3751 = vpop.permute.xlu0 %3750
    %3752 = vrot.lane.b32.xlu0 %v3367, 126
    %v3753 = vpop.permute.xlu0 %3752
    %3754 = vrot.lane.b32.xlu0 %v3371, 126
    %v3755 = vpop.permute.xlu0 %3754
    %3756 = vrot.lane.b32.xlu0 %v3370, 126
    %v3757 = vpop.permute.xlu0 %3756
    %3758 = vrot.lane.b32.xlu0 %v3374, 126
    %v3759 = vpop.permute.xlu0 %3758
    %3760 = vrot.lane.b32.xlu0 %v3373, 126
    %v3761 = vpop.permute.xlu0 %3760
    %3762 = vrot.lane.b32.xlu0 %v3377, 126
    %v3763 = vpop.permute.xlu0 %3762
    %3764 = vrot.lane.b32.xlu0 %v3376, 126
    %v3765 = vpop.permute.xlu0 %3764
    %3766 = vrot.lane.b32.xlu0 %v3380, 126
    %v3767 = vpop.permute.xlu0 %3766
    %3768 = vrot.lane.b32.xlu0 %v3379, 126
    %v3769 = vpop.permute.xlu0 %3768
    %3770 = vrot.lane.b32.xlu0 %v3383, 126
    %v3771 = vpop.permute.xlu0 %3770
    %3772 = vrot.lane.b32.xlu0 %v3382, 126
    %v3773 = vpop.permute.xlu0 %3772
    %3774 = vrot.lane.b32.xlu0 %v3386, 126
    %v3775 = vpop.permute.xlu0 %3774
    %3776 = vrot.lane.b32.xlu0 %v3385, 126
    %v3777 = vpop.permute.xlu0 %3776
    %3778 = vrot.lane.b32.xlu0 %v3389, 126
    %v3779 = vpop.permute.xlu0 %3778
    %3780 = vrot.lane.b32.xlu0 %v3388, 126
    %v3781 = vpop.permute.xlu0 %3780
    %3782 = vrot.lane.b32.xlu0 %v3392, 126
    %v3783 = vpop.permute.xlu0 %3782
    %3784 = vrot.lane.b32.xlu0 %v3391, 126
    %v3785 = vpop.permute.xlu0 %3784
    %3786 = vrot.lane.b32.xlu0 %v3395, 126
    %v3787 = vpop.permute.xlu0 %3786
    %3788 = vrot.lane.b32.xlu0 %v3394, 126
    %v3789 = vpop.permute.xlu0 %3788
    %3790 = vrot.lane.b32.xlu0 %v3398, 126
    %v3791 = vpop.permute.xlu0 %3790
    %3792 = vrot.lane.b32.xlu0 %v3397, 126
    %v3793 = vpop.permute.xlu0 %3792
    %3794 = vrot.lane.b32.xlu0 %v3401, 126
    %v3795 = vpop.permute.xlu0 %3794
    %3796 = vrot.lane.b32.xlu0 %v3400, 126
    %v3797 = vpop.permute.xlu0 %3796
    %3798 = vrot.lane.b32.xlu0 %v3404, 126
    %v3799 = vpop.permute.xlu0 %3798
    %3800 = vrot.lane.b32.xlu0 %v3403, 126
    %v3801 = vpop.permute.xlu0 %3800
    %3802 = vrot.lane.b32.xlu0 %v3407, 126
    %v3803 = vpop.permute.xlu0 %3802
    %3804 = vrot.lane.b32.xlu0 %v3406, 126
    %v3805 = vpop.permute.xlu0 %3804
    %3806 = vrot.lane.b32.xlu0 %v3410, 126
    %v3807 = vpop.permute.xlu0 %3806
    %3808 = vrot.lane.b32.xlu0 %v3409, 126
    %v3809 = vpop.permute.xlu0 %3808
    %3810 = vrot.lane.b32.xlu0 %v3413, 126
    %v3811 = vpop.permute.xlu0 %3810
    %3812 = vrot.lane.b32.xlu0 %v3412, 126
    %v3813 = vpop.permute.xlu0 %3812
    %3814 = vrot.lane.b32.xlu0 %v3416, 126
    %v3815 = vpop.permute.xlu0 %3814
    %3816 = vrot.lane.b32.xlu0 %v3415, 126
    %v3817 = vpop.permute.xlu0 %3816
    %3818 = vrot.lane.b32.xlu0 %v3419, 126
    %v3819 = vpop.permute.xlu0 %3818
    %3820 = vrot.lane.b32.xlu0 %v3418, 126
    %v3821 = vpop.permute.xlu0 %3820
    %3822 = vrot.lane.b32.xlu0 %v3422, 126
    %v3823 = vpop.permute.xlu0 %3822
    %3824 = vrot.lane.b32.xlu0 %v3421, 126
    %v3825 = vpop.permute.xlu0 %3824
    %3826 = vrot.lane.b32.xlu0 %v3425, 126
    %v3827 = vpop.permute.xlu0 %3826
    %3828 = vrot.lane.b32.xlu0 %v3424, 126
    %v3829 = vpop.permute.xlu0 %3828
    %3830 = vrot.lane.b32.xlu0 %v3428, 126
    %v3831 = vpop.permute.xlu0 %3830
    %3832 = vrot.lane.b32.xlu0 %v3427, 126
    %v3833 = vpop.permute.xlu0 %3832
    %3834 = vrot.lane.b32.xlu0 %v3431, 126
    %v3835 = vpop.permute.xlu0 %3834
    %3836 = vrot.lane.b32.xlu0 %v3430, 126
    %v3837 = vpop.permute.xlu0 %3836
    %3838 = vrot.lane.b32.xlu0 %v3434, 126
    %v3839 = vpop.permute.xlu0 %3838
    %3840 = vrot.lane.b32.xlu0 %v3433, 126
    %v3841 = vpop.permute.xlu0 %3840
    %3842 = vrot.lane.b32.xlu0 %v3437, 126
    %v3843 = vpop.permute.xlu0 %3842
    %3844 = vrot.lane.b32.xlu0 %v3436, 126
    %v3845 = vpop.permute.xlu0 %3844
    %3846 = vrot.lane.b32.xlu0 %v3440, 126
    %v3847 = vpop.permute.xlu0 %3846
    %3848 = vrot.lane.b32.xlu0 %v3439, 126
    %v3849 = vpop.permute.xlu0 %3848
    %3850 = vrot.lane.b32.xlu0 %v3443, 126
    %v3851 = vpop.permute.xlu0 %3850
    %3852 = vrot.lane.b32.xlu0 %v3442, 126
    %v3853 = vpop.permute.xlu0 %3852
    %3854 = vrot.lane.b32.xlu0 %v3446, 126
    %v3855 = vpop.permute.xlu0 %3854
    %3856 = vrot.lane.b32.xlu0 %v3445, 126
    %v3857 = vpop.permute.xlu0 %3856
    %3858 = vrot.lane.b32.xlu0 %v3449, 126
    %v3859 = vpop.permute.xlu0 %3858
    %3860 = vrot.lane.b32.xlu0 %v3448, 126
    %v3861 = vpop.permute.xlu0 %3860
    %3862 = vrot.lane.b32.xlu0 %v3452, 126
    %v3863 = vpop.permute.xlu0 %3862
    %3864 = vrot.lane.b32.xlu0 %v3451, 126
    %v3865 = vpop.permute.xlu0 %3864
    %3866 = vrot.lane.b32.xlu0 %v3455, 126
    %v3867 = vpop.permute.xlu0 %3866
    %3868 = vrot.lane.b32.xlu0 %v3454, 126
    %v3869 = vpop.permute.xlu0 %3868
    %3870 = vrot.lane.b32.xlu0 %v3458, 126
    %v3871 = vpop.permute.xlu0 %3870
    %3872 = vrot.lane.b32.xlu0 %v3457, 126
    %v3873 = vpop.permute.xlu0 %3872
    %3874 = vrot.lane.b32.xlu0 %v3461, 126
    %v3875 = vpop.permute.xlu0 %3874
    %3876 = vrot.lane.b32.xlu0 %v3460, 126
    %v3877 = vpop.permute.xlu0 %3876
    %v4086 = vadd.f32 %v2941, %v3463
    %v4087 = vadd.f32 %v2942, %v3465
    %v4088 = vadd.f32 %v2943, %v3467
    %v4089 = vadd.f32 %v2944, %v3469
    %v4090 = vadd.f32 %v2945, %v3471
    %v4091 = vadd.f32 %v2946, %v3473
    %v4092 = vadd.f32 %v2947, %v3475
    %v4093 = vadd.f32 %v2948, %v3477
    %v4094 = vadd.f32 %v2949, %v3479
    %v4095 = vadd.f32 %v2950, %v3481
    %v4096 = vadd.f32 %v2951, %v3483
    %v4097 = vadd.f32 %v2952, %v3485
    %v4098 = vadd.f32 %v2953, %v3487
    %v4099 = vadd.f32 %v2954, %v3489
    %v4100 = vadd.f32 %v2955, %v3491
    %v4101 = vadd.f32 %v2956, %v3493
    %v4102 = vadd.f32 %v2957, %v3495
    %v4103 = vadd.f32 %v2958, %v3497
    %v4104 = vadd.f32 %v2959, %v3499
    %v4105 = vadd.f32 %v2960, %v3501
    %v4106 = vadd.f32 %v2961, %v3503
    %v4107 = vadd.f32 %v2962, %v3505
    %v4108 = vadd.f32 %v2963, %v3507
    %v4109 = vadd.f32 %v2964, %v3509
    %v4110 = vadd.f32 %v2965, %v3511
    %v4111 = vadd.f32 %v2966, %v3513
    %v4112 = vadd.f32 %v2967, %v3515
    %v4113 = vadd.f32 %v2968, %v3517
    %v4114 = vadd.f32 %v2969, %v3519
    %v4115 = vadd.f32 %v2970, %v3521
    %v4116 = vadd.f32 %v2971, %v3523
    %v4117 = vadd.f32 %v2972, %v3525
    %v4118 = vadd.f32 %v2973, %v3527
    %v4119 = vadd.f32 %v2974, %v3529
    %v4120 = vadd.f32 %v2975, %v3531
    %v4121 = vadd.f32 %v2976, %v3533
    %v4122 = vadd.f32 %v2977, %v3535
    %v4123 = vadd.f32 %v2978, %v3537
    %v4124 = vadd.f32 %v2979, %v3539
    %v4125 = vadd.f32 %v2980, %v3541
    %v4126 = vadd.f32 %v2981, %v3543
    %v4127 = vadd.f32 %v2982, %v3545
    %v4128 = vadd.f32 %v2983, %v3547
    %v4129 = vadd.f32 %v2984, %v3549
    %v4130 = vadd.f32 %v2985, %v3551
    %v4131 = vadd.f32 %v2986, %v3553
    %v4132 = vadd.f32 %v2987, %v3555
    %v4133 = vadd.f32 %v2988, %v3557
    %v4134 = vadd.f32 %v2989, %v3559
    %v4135 = vadd.f32 %v2990, %v3561
    %v4136 = vadd.f32 %v2991, %v3563
    %v4137 = vadd.f32 %v2992, %v3565
    %v4138 = vadd.f32 %v2993, %v3567
    %v4139 = vadd.f32 %v2994, %v3569
    %v4140 = vadd.f32 %v2995, %v3571
    %v4141 = vadd.f32 %v2996, %v3573
    %v4142 = vadd.f32 %v2997, %v3575
    %v4143 = vadd.f32 %v2998, %v3577
    %v4144 = vadd.f32 %v2999, %v3579
    %v4145 = vadd.f32 %v3000, %v3581
    %v4146 = vadd.f32 %v3001, %v3583
    %v4147 = vadd.f32 %v3002, %v3585
    %v4148 = vadd.f32 %v3003, %v3587
    %v4149 = vadd.f32 %v3004, %v3589
    %v4150 = vadd.f32 %v3005, %v3591
    %v4151 = vadd.f32 %v3006, %v3593
    %v4152 = vadd.f32 %v3007, %v3595
    %v4153 = vadd.f32 %v3008, %v3597
    %v4154 = vadd.f32 %v3009, %v3599
    %v4155 = vadd.f32 %v3010, %v3601
    %v4156 = vadd.f32 %v3011, %v3603
    %v4157 = vadd.f32 %v3012, %v3605
    %v4158 = vadd.f32 %v3013, %v3607
    %v4159 = vadd.f32 %v3014, %v3609
    %v4160 = vadd.f32 %v3015, %v3611
    %v4161 = vadd.f32 %v3016, %v3613
    %v4162 = vadd.f32 %v3017, %v3615
    %v4163 = vadd.f32 %v3018, %v3617
    %v4164 = vadd.f32 %v3019, %v3619
    %v4165 = vadd.f32 %v3020, %v3621
    %v4166 = vadd.f32 %v3021, %v3623
    %v4167 = vadd.f32 %v3022, %v3625
    %v4168 = vadd.f32 %v3023, %v3627
    %v4169 = vadd.f32 %v3024, %v3629
    %v4170 = vadd.f32 %v3025, %v3631
    %v4171 = vadd.f32 %v3026, %v3633
    %v4172 = vadd.f32 %v3027, %v3635
    %v4173 = vadd.f32 %v3028, %v3637
    %v4174 = vadd.f32 %v3029, %v3639
    %v4175 = vadd.f32 %v3030, %v3641
    %v4176 = vadd.f32 %v3031, %v3643
    %v4177 = vadd.f32 %v3032, %v3645
    %v4178 = vadd.f32 %v3033, %v3647
    %v4179 = vadd.f32 %v3034, %v3649
    %v4180 = vadd.f32 %v3035, %v3651
    %v4181 = vadd.f32 %v3036, %v3653
    %v4182 = vadd.f32 %v3037, %v3655
    %v4183 = vadd.f32 %v3038, %v3657
    %v4184 = vadd.f32 %v3039, %v3659
    %v4185 = vadd.f32 %v3040, %v3661
    %v4186 = vadd.f32 %v3041, %v3663
    %v4187 = vadd.f32 %v3042, %v3665
    %v4188 = vadd.f32 %v3043, %v3667
    %v4189 = vadd.f32 %v3044, %v3669
    %v4190 = vadd.f32 %v3045, %v3671
    %v4191 = vadd.f32 %v3046, %v3673
    %v4192 = vadd.f32 %v3047, %v3675
    %v4193 = vadd.f32 %v3048, %v3677
    %v4194 = vadd.f32 %v3049, %v3679
    %v4195 = vadd.f32 %v3050, %v3681
    %v4196 = vadd.f32 %v3051, %v3683
    %v4197 = vadd.f32 %v3052, %v3685
    %v4198 = vadd.f32 %v3053, %v3687
    %v4199 = vadd.f32 %v3054, %v3689
    %v4200 = vadd.f32 %v3055, %v3691
    %v4201 = vadd.f32 %v3056, %v3693
    %v4202 = vadd.f32 %v3057, %v3695
    %v4203 = vadd.f32 %v3058, %v3697
    %v4204 = vadd.f32 %v3059, %v3699
    %v4205 = vadd.f32 %v3060, %v3701
    %v4206 = vadd.f32 %v3061, %v3703
    %v4207 = vadd.f32 %v3062, %v3705
    %v4208 = vadd.f32 %v3063, %v3707
    %v4209 = vadd.f32 %v3064, %v3709
    %v4210 = vadd.f32 %v3065, %v3711
    %v4211 = vadd.f32 %v3066, %v3713
    %v4212 = vadd.f32 %v3067, %v3715
    %v4213 = vadd.f32 %v3068, %v3717
    %v4214 = vadd.f32 %v3069, %v3719
    %v4215 = vadd.f32 %v3070, %v3721
    %v4216 = vadd.f32 %v3071, %v3723
    %v4217 = vadd.f32 %v3072, %v3725
    %v4218 = vadd.f32 %v3073, %v3727
    %v4219 = vadd.f32 %v3074, %v3729
    %v4220 = vadd.f32 %v3075, %v3731
    %v4221 = vadd.f32 %v3076, %v3733
    %v4222 = vadd.f32 %v3077, %v3735
    %v4223 = vadd.f32 %v3078, %v3737
    %v4224 = vadd.f32 %v3079, %v3739
    %v4225 = vadd.f32 %v3080, %v3741
    %v4226 = vadd.f32 %v3081, %v3743
    %v4227 = vadd.f32 %v3082, %v3745
    %v4228 = vadd.f32 %v3083, %v3747
    %v4229 = vadd.f32 %v3084, %v3749
    %v4230 = vadd.f32 %v3085, %v3751
    %v4231 = vadd.f32 %v3086, %v3753
    %v4232 = vadd.f32 %v3087, %v3755
    %v4233 = vadd.f32 %v3088, %v3757
    %v4234 = vadd.f32 %v3089, %v3759
    %v4235 = vadd.f32 %v3090, %v3761
    %v4236 = vadd.f32 %v3091, %v3763
    %v4237 = vadd.f32 %v3092, %v3765
    %v4238 = vadd.f32 %v3093, %v3767
    %v4239 = vadd.f32 %v3094, %v3769
    %v4240 = vadd.f32 %v3095, %v3771
    %v4241 = vadd.f32 %v3096, %v3773
    %v4242 = vadd.f32 %v3097, %v3775
    %v4243 = vadd.f32 %v3098, %v3777
    %v4244 = vadd.f32 %v3099, %v3779
    %v4245 = vadd.f32 %v3100, %v3781
    %v4246 = vadd.f32 %v3101, %v3783
    %v4247 = vadd.f32 %v3102, %v3785
    %v4248 = vadd.f32 %v3103, %v3787
    %v4249 = vadd.f32 %v3104, %v3789
    %v4250 = vadd.f32 %v3105, %v3791
    %v4251 = vadd.f32 %v3106, %v3793
    %v4252 = vadd.f32 %v3107, %v3795
    %v4253 = vadd.f32 %v3108, %v3797
    %v4254 = vadd.f32 %v3109, %v3799
    %v4255 = vadd.f32 %v3110, %v3801
    %v4256 = vadd.f32 %v3111, %v3803
    %v4257 = vadd.f32 %v3112, %v3805
    %v4258 = vadd.f32 %v3113, %v3807
    %v4259 = vadd.f32 %v3114, %v3809
    %v4260 = vadd.f32 %v3115, %v3811
    %v4261 = vadd.f32 %v3116, %v3813
    %v4262 = vadd.f32 %v3117, %v3815
    %v4263 = vadd.f32 %v3118, %v3817
    %v4264 = vadd.f32 %v3119, %v3819
    %v4265 = vadd.f32 %v3120, %v3821
    %v4266 = vadd.f32 %v3121, %v3823
    %v4267 = vadd.f32 %v3122, %v3825
    %v4268 = vadd.f32 %v3123, %v3827
    %v4269 = vadd.f32 %v3124, %v3829
    %v4270 = vadd.f32 %v3125, %v3831
    %v4271 = vadd.f32 %v3126, %v3833
    %v4272 = vadd.f32 %v3127, %v3835
    %v4273 = vadd.f32 %v3128, %v3837
    %v4274 = vadd.f32 %v3129, %v3839
    %v4275 = vadd.f32 %v3130, %v3841
    %v4276 = vadd.f32 %v3131, %v3843
    %v4277 = vadd.f32 %v3132, %v3845
    %v4278 = vadd.f32 %v3133, %v3847
    %v4279 = vadd.f32 %v3134, %v3849
    %v4280 = vadd.f32 %v3135, %v3851
    %v4281 = vadd.f32 %v3136, %v3853
    %v4282 = vadd.f32 %v3137, %v3855
    %v4283 = vadd.f32 %v3138, %v3857
    %v4284 = vadd.f32 %v3139, %v3859
    %v4285 = vadd.f32 %v3140, %v3861
    %v4286 = vadd.f32 %v3141, %v3863
    %v4287 = vadd.f32 %v3142, %v3865
    %v4288 = vadd.f32 %v3143, %v3867
    %v4289 = vadd.f32 %v3144, %v3869
    %v4290 = vadd.f32 %v3145, %v3871
    %v4291 = vadd.f32 %v3146, %v3873
    %v4292 = vadd.f32 %v3147, %v3875
    %v4293 = vadd.f32 %v3148, %v3877
    %vm4294 = vcmask 7168
    %v4295 = vsel %vm4294, %v4086, -inf
    %vm4296 = vcmask 5120
    %v4297 = vsel %vm4296, %v4087, -inf
    %v4298 = vmax.f32 %v4295, %v4297
    %v4299 = vrot.slane %v4298, 4
    %v4300 = vmax.f32 %v4298, %v4299
    %v4301 = vrot.slane %v4300, 2
    %v4302 = vmax.f32 %v4300, %v4301
    %v4303 = vrot.slane %v4302, 1
    %v4304 = vmax.f32 %v4302, %v4303
    %v4305 = vsel %vm4294, %v4088, -inf
    %v4306 = vsel %vm4296, %v4089, -inf
    %v4307 = vmax.f32 %v4305, %v4306
    %v4308 = vrot.slane %v4307, 4
    %v4309 = vmax.f32 %v4307, %v4308
    %v4310 = vrot.slane %v4309, 2
    %v4311 = vmax.f32 %v4309, %v4310
    %v4312 = vrot.slane %v4311, 1
    %v4313 = vmax.f32 %v4311, %v4312
    %v4314 = vsel %vm4294, %v4090, -inf
    %v4315 = vsel %vm4296, %v4091, -inf
    %v4316 = vmax.f32 %v4314, %v4315
    %v4317 = vrot.slane %v4316, 4
    %v4318 = vmax.f32 %v4316, %v4317
    %v4319 = vrot.slane %v4318, 2
    %v4320 = vmax.f32 %v4318, %v4319
    %v4321 = vrot.slane %v4320, 1
    %v4322 = vmax.f32 %v4320, %v4321
    %v4323 = vsel %vm4294, %v4092, -inf
    %v4324 = vsel %vm4296, %v4093, -inf
    %v4325 = vmax.f32 %v4323, %v4324
    %v4326 = vrot.slane %v4325, 4
    %v4327 = vmax.f32 %v4325, %v4326
    %v4328 = vrot.slane %v4327, 2
    %v4329 = vmax.f32 %v4327, %v4328
    %v4330 = vrot.slane %v4329, 1
    %v4331 = vmax.f32 %v4329, %v4330
    %v4332 = vsel %vm4294, %v4094, -inf
    %v4333 = vsel %vm4296, %v4095, -inf
    %v4334 = vmax.f32 %v4332, %v4333
    %v4335 = vrot.slane %v4334, 4
    %v4336 = vmax.f32 %v4334, %v4335
    %v4337 = vrot.slane %v4336, 2
    %v4338 = vmax.f32 %v4336, %v4337
    %v4339 = vrot.slane %v4338, 1
    %v4340 = vmax.f32 %v4338, %v4339
    %v4341 = vsel %vm4294, %v4096, -inf
    %v4342 = vsel %vm4296, %v4097, -inf
    %v4343 = vmax.f32 %v4341, %v4342
    %v4344 = vrot.slane %v4343, 4
    %v4345 = vmax.f32 %v4343, %v4344
    %v4346 = vrot.slane %v4345, 2
    %v4347 = vmax.f32 %v4345, %v4346
    %v4348 = vrot.slane %v4347, 1
    %v4349 = vmax.f32 %v4347, %v4348
    %v4350 = vsel %vm4294, %v4098, -inf
    %v4351 = vsel %vm4296, %v4099, -inf
    %v4352 = vmax.f32 %v4350, %v4351
    %v4353 = vrot.slane %v4352, 4
    %v4354 = vmax.f32 %v4352, %v4353
    %v4355 = vrot.slane %v4354, 2
    %v4356 = vmax.f32 %v4354, %v4355
    %v4357 = vrot.slane %v4356, 1
    %v4358 = vmax.f32 %v4356, %v4357
    %v4359 = vsel %vm4294, %v4100, -inf
    %v4360 = vsel %vm4296, %v4101, -inf
    %v4361 = vmax.f32 %v4359, %v4360
    %v4362 = vrot.slane %v4361, 4
    %v4363 = vmax.f32 %v4361, %v4362
    %v4364 = vrot.slane %v4363, 2
    %v4365 = vmax.f32 %v4363, %v4364
    %v4366 = vrot.slane %v4365, 1
    %v4367 = vmax.f32 %v4365, %v4366
    %v4368 = vsel %vm4294, %v4102, -inf
    %v4369 = vsel %vm4296, %v4103, -inf
    %v4370 = vmax.f32 %v4368, %v4369
    %v4371 = vrot.slane %v4370, 4
    %v4372 = vmax.f32 %v4370, %v4371
    %v4373 = vrot.slane %v4372, 2
    %v4374 = vmax.f32 %v4372, %v4373
    %v4375 = vrot.slane %v4374, 1
    %v4376 = vmax.f32 %v4374, %v4375
    %v4377 = vsel %vm4294, %v4104, -inf
    %v4378 = vsel %vm4296, %v4105, -inf
    %v4379 = vmax.f32 %v4377, %v4378
    %v4380 = vrot.slane %v4379, 4
    %v4381 = vmax.f32 %v4379, %v4380
    %v4382 = vrot.slane %v4381, 2
    %v4383 = vmax.f32 %v4381, %v4382
    %v4384 = vrot.slane %v4383, 1
    %v4385 = vmax.f32 %v4383, %v4384
    %v4386 = vsel %vm4294, %v4106, -inf
    %v4387 = vsel %vm4296, %v4107, -inf
    %v4388 = vmax.f32 %v4386, %v4387
    %v4389 = vrot.slane %v4388, 4
    %v4390 = vmax.f32 %v4388, %v4389
    %v4391 = vrot.slane %v4390, 2
    %v4392 = vmax.f32 %v4390, %v4391
    %v4393 = vrot.slane %v4392, 1
    %v4394 = vmax.f32 %v4392, %v4393
    %v4395 = vsel %vm4294, %v4108, -inf
    %v4396 = vsel %vm4296, %v4109, -inf
    %v4397 = vmax.f32 %v4395, %v4396
    %v4398 = vrot.slane %v4397, 4
    %v4399 = vmax.f32 %v4397, %v4398
    %v4400 = vrot.slane %v4399, 2
    %v4401 = vmax.f32 %v4399, %v4400
    %v4402 = vrot.slane %v4401, 1
    %v4403 = vmax.f32 %v4401, %v4402
    %v4404 = vsel %vm4294, %v4110, -inf
    %v4405 = vsel %vm4296, %v4111, -inf
    %v4406 = vmax.f32 %v4404, %v4405
    %v4407 = vrot.slane %v4406, 4
    %v4408 = vmax.f32 %v4406, %v4407
    %v4409 = vrot.slane %v4408, 2
    %v4410 = vmax.f32 %v4408, %v4409
    %v4411 = vrot.slane %v4410, 1
    %v4412 = vmax.f32 %v4410, %v4411
    %v4413 = vsel %vm4294, %v4112, -inf
    %v4414 = vsel %vm4296, %v4113, -inf
    %v4415 = vmax.f32 %v4413, %v4414
    %v4416 = vrot.slane %v4415, 4
    %v4417 = vmax.f32 %v4415, %v4416
    %v4418 = vrot.slane %v4417, 2
    %v4419 = vmax.f32 %v4417, %v4418
    %v4420 = vrot.slane %v4419, 1
    %v4421 = vmax.f32 %v4419, %v4420
    %v4422 = vsel %vm4294, %v4114, -inf
    %v4423 = vsel %vm4296, %v4115, -inf
    %v4424 = vmax.f32 %v4422, %v4423
    %v4425 = vrot.slane %v4424, 4
    %v4426 = vmax.f32 %v4424, %v4425
    %v4427 = vrot.slane %v4426, 2
    %v4428 = vmax.f32 %v4426, %v4427
    %v4429 = vrot.slane %v4428, 1
    %v4430 = vmax.f32 %v4428, %v4429
    %v4431 = vsel %vm4294, %v4116, -inf
    %v4432 = vsel %vm4296, %v4117, -inf
    %v4433 = vmax.f32 %v4431, %v4432
    %v4434 = vrot.slane %v4433, 4
    %v4435 = vmax.f32 %v4433, %v4434
    %v4436 = vrot.slane %v4435, 2
    %v4437 = vmax.f32 %v4435, %v4436
    %v4438 = vrot.slane %v4437, 1
    %v4439 = vmax.f32 %v4437, %v4438
    %v4440 = vsel %vm4294, %v4118, -inf
    %v4441 = vsel %vm4296, %v4119, -inf
    %v4442 = vmax.f32 %v4440, %v4441
    %v4443 = vrot.slane %v4442, 4
    %v4444 = vmax.f32 %v4442, %v4443
    %v4445 = vrot.slane %v4444, 2
    %v4446 = vmax.f32 %v4444, %v4445
    %v4447 = vrot.slane %v4446, 1
    %v4448 = vmax.f32 %v4446, %v4447
    %v4449 = vsel %vm4294, %v4120, -inf
    %v4450 = vsel %vm4296, %v4121, -inf
    %v4451 = vmax.f32 %v4449, %v4450
    %v4452 = vrot.slane %v4451, 4
    %v4453 = vmax.f32 %v4451, %v4452
    %v4454 = vrot.slane %v4453, 2
    %v4455 = vmax.f32 %v4453, %v4454
    %v4456 = vrot.slane %v4455, 1
    %v4457 = vmax.f32 %v4455, %v4456
    %v4458 = vsel %vm4294, %v4122, -inf
    %v4459 = vsel %vm4296, %v4123, -inf
    %v4460 = vmax.f32 %v4458, %v4459
    %v4461 = vrot.slane %v4460, 4
    %v4462 = vmax.f32 %v4460, %v4461
    %v4463 = vrot.slane %v4462, 2
    %v4464 = vmax.f32 %v4462, %v4463
    %v4465 = vrot.slane %v4464, 1
    %v4466 = vmax.f32 %v4464, %v4465
    %v4467 = vsel %vm4294, %v4124, -inf
    %v4468 = vsel %vm4296, %v4125, -inf
    %v4469 = vmax.f32 %v4467, %v4468
    %v4470 = vrot.slane %v4469, 4
    %v4471 = vmax.f32 %v4469, %v4470
    %v4472 = vrot.slane %v4471, 2
    %v4473 = vmax.f32 %v4471, %v4472
    %v4474 = vrot.slane %v4473, 1
    %v4475 = vmax.f32 %v4473, %v4474
    %v4476 = vsel %vm4294, %v4126, -inf
    %v4477 = vsel %vm4296, %v4127, -inf
    %v4478 = vmax.f32 %v4476, %v4477
    %v4479 = vrot.slane %v4478, 4
    %v4480 = vmax.f32 %v4478, %v4479
    %v4481 = vrot.slane %v4480, 2
    %v4482 = vmax.f32 %v4480, %v4481
    %v4483 = vrot.slane %v4482, 1
    %v4484 = vmax.f32 %v4482, %v4483
    %v4485 = vsel %vm4294, %v4128, -inf
    %v4486 = vsel %vm4296, %v4129, -inf
    %v4487 = vmax.f32 %v4485, %v4486
    %v4488 = vrot.slane %v4487, 4
    %v4489 = vmax.f32 %v4487, %v4488
    %v4490 = vrot.slane %v4489, 2
    %v4491 = vmax.f32 %v4489, %v4490
    %v4492 = vrot.slane %v4491, 1
    %v4493 = vmax.f32 %v4491, %v4492
    %v4494 = vsel %vm4294, %v4130, -inf
    %v4495 = vsel %vm4296, %v4131, -inf
    %v4496 = vmax.f32 %v4494, %v4495
    %v4497 = vrot.slane %v4496, 4
    %v4498 = vmax.f32 %v4496, %v4497
    %v4499 = vrot.slane %v4498, 2
    %v4500 = vmax.f32 %v4498, %v4499
    %v4501 = vrot.slane %v4500, 1
    %v4502 = vmax.f32 %v4500, %v4501
    %v4503 = vsel %vm4294, %v4132, -inf
    %v4504 = vsel %vm4296, %v4133, -inf
    %v4505 = vmax.f32 %v4503, %v4504
    %v4506 = vrot.slane %v4505, 4
    %v4507 = vmax.f32 %v4505, %v4506
    %v4508 = vrot.slane %v4507, 2
    %v4509 = vmax.f32 %v4507, %v4508
    %v4510 = vrot.slane %v4509, 1
    %v4511 = vmax.f32 %v4509, %v4510
    %v4512 = vsel %vm4294, %v4134, -inf
    %v4513 = vsel %vm4296, %v4135, -inf
    %v4514 = vmax.f32 %v4512, %v4513
    %v4515 = vrot.slane %v4514, 4
    %v4516 = vmax.f32 %v4514, %v4515
    %v4517 = vrot.slane %v4516, 2
    %v4518 = vmax.f32 %v4516, %v4517
    %v4519 = vrot.slane %v4518, 1
    %v4520 = vmax.f32 %v4518, %v4519
    %v4521 = vsel %vm4294, %v4136, -inf
    %v4522 = vsel %vm4296, %v4137, -inf
    %v4523 = vmax.f32 %v4521, %v4522
    %v4524 = vrot.slane %v4523, 4
    %v4525 = vmax.f32 %v4523, %v4524
    %v4526 = vrot.slane %v4525, 2
    %v4527 = vmax.f32 %v4525, %v4526
    %v4528 = vrot.slane %v4527, 1
    %v4529 = vmax.f32 %v4527, %v4528
    %v4530 = vsel %vm4294, %v4138, -inf
    %v4531 = vsel %vm4296, %v4139, -inf
    %v4532 = vmax.f32 %v4530, %v4531
    %v4533 = vrot.slane %v4532, 4
    %v4534 = vmax.f32 %v4532, %v4533
    %v4535 = vrot.slane %v4534, 2
    %v4536 = vmax.f32 %v4534, %v4535
    %v4537 = vrot.slane %v4536, 1
    %v4538 = vmax.f32 %v4536, %v4537
    %v4539 = vsel %vm4294, %v4140, -inf
    %v4540 = vsel %vm4296, %v4141, -inf
    %v4541 = vmax.f32 %v4539, %v4540
    %v4542 = vrot.slane %v4541, 4
    %v4543 = vmax.f32 %v4541, %v4542
    %v4544 = vrot.slane %v4543, 2
    %v4545 = vmax.f32 %v4543, %v4544
    %v4546 = vrot.slane %v4545, 1
    %v4547 = vmax.f32 %v4545, %v4546
    %v4548 = vsel %vm4294, %v4142, -inf
    %v4549 = vsel %vm4296, %v4143, -inf
    %v4550 = vmax.f32 %v4548, %v4549
    %v4551 = vrot.slane %v4550, 4
    %v4552 = vmax.f32 %v4550, %v4551
    %v4553 = vrot.slane %v4552, 2
    %v4554 = vmax.f32 %v4552, %v4553
    %v4555 = vrot.slane %v4554, 1
    %v4556 = vmax.f32 %v4554, %v4555
    %v4557 = vsel %vm4294, %v4144, -inf
    %v4558 = vsel %vm4296, %v4145, -inf
    %v4559 = vmax.f32 %v4557, %v4558
    %v4560 = vrot.slane %v4559, 4
    %v4561 = vmax.f32 %v4559, %v4560
    %v4562 = vrot.slane %v4561, 2
    %v4563 = vmax.f32 %v4561, %v4562
    %v4564 = vrot.slane %v4563, 1
    %v4565 = vmax.f32 %v4563, %v4564
    %v4566 = vsel %vm4294, %v4146, -inf
    %v4567 = vsel %vm4296, %v4147, -inf
    %v4568 = vmax.f32 %v4566, %v4567
    %v4569 = vrot.slane %v4568, 4
    %v4570 = vmax.f32 %v4568, %v4569
    %v4571 = vrot.slane %v4570, 2
    %v4572 = vmax.f32 %v4570, %v4571
    %v4573 = vrot.slane %v4572, 1
    %v4574 = vmax.f32 %v4572, %v4573
    %v4575 = vsel %vm4294, %v4148, -inf
    %v4576 = vsel %vm4296, %v4149, -inf
    %v4577 = vmax.f32 %v4575, %v4576
    %v4578 = vrot.slane %v4577, 4
    %v4579 = vmax.f32 %v4577, %v4578
    %v4580 = vrot.slane %v4579, 2
    %v4581 = vmax.f32 %v4579, %v4580
    %v4582 = vrot.slane %v4581, 1
    %v4583 = vmax.f32 %v4581, %v4582
    %v4584 = vsel %vm4294, %v4150, -inf
    %v4585 = vsel %vm4296, %v4151, -inf
    %v4586 = vmax.f32 %v4584, %v4585
    %v4587 = vrot.slane %v4586, 4
    %v4588 = vmax.f32 %v4586, %v4587
    %v4589 = vrot.slane %v4588, 2
    %v4590 = vmax.f32 %v4588, %v4589
    %v4591 = vrot.slane %v4590, 1
    %v4592 = vmax.f32 %v4590, %v4591
    %v4593 = vsel %vm4294, %v4152, -inf
    %v4594 = vsel %vm4296, %v4153, -inf
    %v4595 = vmax.f32 %v4593, %v4594
    %v4596 = vrot.slane %v4595, 4
    %v4597 = vmax.f32 %v4595, %v4596
    %v4598 = vrot.slane %v4597, 2
    %v4599 = vmax.f32 %v4597, %v4598
    %v4600 = vrot.slane %v4599, 1
    %v4601 = vmax.f32 %v4599, %v4600
    %v4602 = vsel %vm4294, %v4154, -inf
    %v4603 = vsel %vm4296, %v4155, -inf
    %v4604 = vmax.f32 %v4602, %v4603
    %v4605 = vrot.slane %v4604, 4
    %v4606 = vmax.f32 %v4604, %v4605
    %v4607 = vrot.slane %v4606, 2
    %v4608 = vmax.f32 %v4606, %v4607
    %v4609 = vrot.slane %v4608, 1
    %v4610 = vmax.f32 %v4608, %v4609
    %v4611 = vsel %vm4294, %v4156, -inf
    %v4612 = vsel %vm4296, %v4157, -inf
    %v4613 = vmax.f32 %v4611, %v4612
    %v4614 = vrot.slane %v4613, 4
    %v4615 = vmax.f32 %v4613, %v4614
    %v4616 = vrot.slane %v4615, 2
    %v4617 = vmax.f32 %v4615, %v4616
    %v4618 = vrot.slane %v4617, 1
    %v4619 = vmax.f32 %v4617, %v4618
    %v4620 = vsel %vm4294, %v4158, -inf
    %v4621 = vsel %vm4296, %v4159, -inf
    %v4622 = vmax.f32 %v4620, %v4621
    %v4623 = vrot.slane %v4622, 4
    %v4624 = vmax.f32 %v4622, %v4623
    %v4625 = vrot.slane %v4624, 2
    %v4626 = vmax.f32 %v4624, %v4625
    %v4627 = vrot.slane %v4626, 1
    %v4628 = vmax.f32 %v4626, %v4627
    %v4629 = vsel %vm4294, %v4160, -inf
    %v4630 = vsel %vm4296, %v4161, -inf
    %v4631 = vmax.f32 %v4629, %v4630
    %v4632 = vrot.slane %v4631, 4
    %v4633 = vmax.f32 %v4631, %v4632
    %v4634 = vrot.slane %v4633, 2
    %v4635 = vmax.f32 %v4633, %v4634
    %v4636 = vrot.slane %v4635, 1
    %v4637 = vmax.f32 %v4635, %v4636
    %v4638 = vsel %vm4294, %v4162, -inf
    %v4639 = vsel %vm4296, %v4163, -inf
    %v4640 = vmax.f32 %v4638, %v4639
    %v4641 = vrot.slane %v4640, 4
    %v4642 = vmax.f32 %v4640, %v4641
    %v4643 = vrot.slane %v4642, 2
    %v4644 = vmax.f32 %v4642, %v4643
    %v4645 = vrot.slane %v4644, 1
    %v4646 = vmax.f32 %v4644, %v4645
    %v4647 = vsel %vm4294, %v4164, -inf
    %v4648 = vsel %vm4296, %v4165, -inf
    %v4649 = vmax.f32 %v4647, %v4648
    %v4650 = vrot.slane %v4649, 4
    %v4651 = vmax.f32 %v4649, %v4650
    %v4652 = vrot.slane %v4651, 2
    %v4653 = vmax.f32 %v4651, %v4652
    %v4654 = vrot.slane %v4653, 1
    %v4655 = vmax.f32 %v4653, %v4654
    %v4656 = vsel %vm4294, %v4166, -inf
    %v4657 = vsel %vm4296, %v4167, -inf
    %v4658 = vmax.f32 %v4656, %v4657
    %v4659 = vrot.slane %v4658, 4
    %v4660 = vmax.f32 %v4658, %v4659
    %v4661 = vrot.slane %v4660, 2
    %v4662 = vmax.f32 %v4660, %v4661
    %v4663 = vrot.slane %v4662, 1
    %v4664 = vmax.f32 %v4662, %v4663
    %v4665 = vsel %vm4294, %v4168, -inf
    %v4666 = vsel %vm4296, %v4169, -inf
    %v4667 = vmax.f32 %v4665, %v4666
    %v4668 = vrot.slane %v4667, 4
    %v4669 = vmax.f32 %v4667, %v4668
    %v4670 = vrot.slane %v4669, 2
    %v4671 = vmax.f32 %v4669, %v4670
    %v4672 = vrot.slane %v4671, 1
    %v4673 = vmax.f32 %v4671, %v4672
    %v4674 = vsel %vm4294, %v4170, -inf
    %v4675 = vsel %vm4296, %v4171, -inf
    %v4676 = vmax.f32 %v4674, %v4675
    %v4677 = vrot.slane %v4676, 4
    %v4678 = vmax.f32 %v4676, %v4677
    %v4679 = vrot.slane %v4678, 2
    %v4680 = vmax.f32 %v4678, %v4679
    %v4681 = vrot.slane %v4680, 1
    %v4682 = vmax.f32 %v4680, %v4681
    %v4683 = vsel %vm4294, %v4172, -inf
    %v4684 = vsel %vm4296, %v4173, -inf
    %v4685 = vmax.f32 %v4683, %v4684
    %v4686 = vrot.slane %v4685, 4
    %v4687 = vmax.f32 %v4685, %v4686
    %v4688 = vrot.slane %v4687, 2
    %v4689 = vmax.f32 %v4687, %v4688
    %v4690 = vrot.slane %v4689, 1
    %v4691 = vmax.f32 %v4689, %v4690
    %v4692 = vsel %vm4294, %v4174, -inf
    %v4693 = vsel %vm4296, %v4175, -inf
    %v4694 = vmax.f32 %v4692, %v4693
    %v4695 = vrot.slane %v4694, 4
    %v4696 = vmax.f32 %v4694, %v4695
    %v4697 = vrot.slane %v4696, 2
    %v4698 = vmax.f32 %v4696, %v4697
    %v4699 = vrot.slane %v4698, 1
    %v4700 = vmax.f32 %v4698, %v4699
    %v4701 = vsel %vm4294, %v4176, -inf
    %v4702 = vsel %vm4296, %v4177, -inf
    %v4703 = vmax.f32 %v4701, %v4702
    %v4704 = vrot.slane %v4703, 4
    %v4705 = vmax.f32 %v4703, %v4704
    %v4706 = vrot.slane %v4705, 2
    %v4707 = vmax.f32 %v4705, %v4706
    %v4708 = vrot.slane %v4707, 1
    %v4709 = vmax.f32 %v4707, %v4708
    %v4710 = vsel %vm4294, %v4178, -inf
    %v4711 = vsel %vm4296, %v4179, -inf
    %v4712 = vmax.f32 %v4710, %v4711
    %v4713 = vrot.slane %v4712, 4
    %v4714 = vmax.f32 %v4712, %v4713
    %v4715 = vrot.slane %v4714, 2
    %v4716 = vmax.f32 %v4714, %v4715
    %v4717 = vrot.slane %v4716, 1
    %v4718 = vmax.f32 %v4716, %v4717
    %v4719 = vsel %vm4294, %v4180, -inf
    %v4720 = vsel %vm4296, %v4181, -inf
    %v4721 = vmax.f32 %v4719, %v4720
    %v4722 = vrot.slane %v4721, 4
    %v4723 = vmax.f32 %v4721, %v4722
    %v4724 = vrot.slane %v4723, 2
    %v4725 = vmax.f32 %v4723, %v4724
    %v4726 = vrot.slane %v4725, 1
    %v4727 = vmax.f32 %v4725, %v4726
    %v4728 = vsel %vm4294, %v4182, -inf
    %v4729 = vsel %vm4296, %v4183, -inf
    %v4730 = vmax.f32 %v4728, %v4729
    %v4731 = vrot.slane %v4730, 4
    %v4732 = vmax.f32 %v4730, %v4731
    %v4733 = vrot.slane %v4732, 2
    %v4734 = vmax.f32 %v4732, %v4733
    %v4735 = vrot.slane %v4734, 1
    %v4736 = vmax.f32 %v4734, %v4735
    %v4737 = vsel %vm4294, %v4184, -inf
    %v4738 = vsel %vm4296, %v4185, -inf
    %v4739 = vmax.f32 %v4737, %v4738
    %v4740 = vrot.slane %v4739, 4
    %v4741 = vmax.f32 %v4739, %v4740
    %v4742 = vrot.slane %v4741, 2
    %v4743 = vmax.f32 %v4741, %v4742
    %v4744 = vrot.slane %v4743, 1
    %v4745 = vmax.f32 %v4743, %v4744
    %v4746 = vsel %vm4294, %v4186, -inf
    %v4747 = vsel %vm4296, %v4187, -inf
    %v4748 = vmax.f32 %v4746, %v4747
    %v4749 = vrot.slane %v4748, 4
    %v4750 = vmax.f32 %v4748, %v4749
    %v4751 = vrot.slane %v4750, 2
    %v4752 = vmax.f32 %v4750, %v4751
    %v4753 = vrot.slane %v4752, 1
    %v4754 = vmax.f32 %v4752, %v4753
    %v4755 = vsel %vm4294, %v4188, -inf
    %v4756 = vsel %vm4296, %v4189, -inf
    %v4757 = vmax.f32 %v4755, %v4756
    %v4758 = vrot.slane %v4757, 4
    %v4759 = vmax.f32 %v4757, %v4758
    %v4760 = vrot.slane %v4759, 2
    %v4761 = vmax.f32 %v4759, %v4760
    %v4762 = vrot.slane %v4761, 1
    %v4763 = vmax.f32 %v4761, %v4762
    %v4764 = vsel %vm4294, %v4190, -inf
    %v4765 = vsel %vm4296, %v4191, -inf
    %v4766 = vmax.f32 %v4764, %v4765
    %v4767 = vrot.slane %v4766, 4
    %v4768 = vmax.f32 %v4766, %v4767
    %v4769 = vrot.slane %v4768, 2
    %v4770 = vmax.f32 %v4768, %v4769
    %v4771 = vrot.slane %v4770, 1
    %v4772 = vmax.f32 %v4770, %v4771
    %v4773 = vsel %vm4294, %v4192, -inf
    %v4774 = vsel %vm4296, %v4193, -inf
    %v4775 = vmax.f32 %v4773, %v4774
    %v4776 = vrot.slane %v4775, 4
    %v4777 = vmax.f32 %v4775, %v4776
    %v4778 = vrot.slane %v4777, 2
    %v4779 = vmax.f32 %v4777, %v4778
    %v4780 = vrot.slane %v4779, 1
    %v4781 = vmax.f32 %v4779, %v4780
    %v4782 = vsel %vm4294, %v4194, -inf
    %v4783 = vsel %vm4296, %v4195, -inf
    %v4784 = vmax.f32 %v4782, %v4783
    %v4785 = vrot.slane %v4784, 4
    %v4786 = vmax.f32 %v4784, %v4785
    %v4787 = vrot.slane %v4786, 2
    %v4788 = vmax.f32 %v4786, %v4787
    %v4789 = vrot.slane %v4788, 1
    %v4790 = vmax.f32 %v4788, %v4789
    %v4791 = vsel %vm4294, %v4196, -inf
    %v4792 = vsel %vm4296, %v4197, -inf
    %v4793 = vmax.f32 %v4791, %v4792
    %v4794 = vrot.slane %v4793, 4
    %v4795 = vmax.f32 %v4793, %v4794
    %v4796 = vrot.slane %v4795, 2
    %v4797 = vmax.f32 %v4795, %v4796
    %v4798 = vrot.slane %v4797, 1
    %v4799 = vmax.f32 %v4797, %v4798
    %v4800 = vsel %vm4294, %v4198, -inf
    %v4801 = vsel %vm4296, %v4199, -inf
    %v4802 = vmax.f32 %v4800, %v4801
    %v4803 = vrot.slane %v4802, 4
    %v4804 = vmax.f32 %v4802, %v4803
    %v4805 = vrot.slane %v4804, 2
    %v4806 = vmax.f32 %v4804, %v4805
    %v4807 = vrot.slane %v4806, 1
    %v4808 = vmax.f32 %v4806, %v4807
    %v4809 = vsel %vm4294, %v4200, -inf
    %v4810 = vsel %vm4296, %v4201, -inf
    %v4811 = vmax.f32 %v4809, %v4810
    %v4812 = vrot.slane %v4811, 4
    %v4813 = vmax.f32 %v4811, %v4812
    %v4814 = vrot.slane %v4813, 2
    %v4815 = vmax.f32 %v4813, %v4814
    %v4816 = vrot.slane %v4815, 1
    %v4817 = vmax.f32 %v4815, %v4816
    %v4818 = vsel %vm4294, %v4202, -inf
    %v4819 = vsel %vm4296, %v4203, -inf
    %v4820 = vmax.f32 %v4818, %v4819
    %v4821 = vrot.slane %v4820, 4
    %v4822 = vmax.f32 %v4820, %v4821
    %v4823 = vrot.slane %v4822, 2
    %v4824 = vmax.f32 %v4822, %v4823
    %v4825 = vrot.slane %v4824, 1
    %v4826 = vmax.f32 %v4824, %v4825
    %v4827 = vsel %vm4294, %v4204, -inf
    %v4828 = vsel %vm4296, %v4205, -inf
    %v4829 = vmax.f32 %v4827, %v4828
    %v4830 = vrot.slane %v4829, 4
    %v4831 = vmax.f32 %v4829, %v4830
    %v4832 = vrot.slane %v4831, 2
    %v4833 = vmax.f32 %v4831, %v4832
    %v4834 = vrot.slane %v4833, 1
    %v4835 = vmax.f32 %v4833, %v4834
    %v4836 = vsel %vm4294, %v4206, -inf
    %v4837 = vsel %vm4296, %v4207, -inf
    %v4838 = vmax.f32 %v4836, %v4837
    %v4839 = vrot.slane %v4838, 4
    %v4840 = vmax.f32 %v4838, %v4839
    %v4841 = vrot.slane %v4840, 2
    %v4842 = vmax.f32 %v4840, %v4841
    %v4843 = vrot.slane %v4842, 1
    %v4844 = vmax.f32 %v4842, %v4843
    %v4845 = vsel %vm4294, %v4208, -inf
    %v4846 = vsel %vm4296, %v4209, -inf
    %v4847 = vmax.f32 %v4845, %v4846
    %v4848 = vrot.slane %v4847, 4
    %v4849 = vmax.f32 %v4847, %v4848
    %v4850 = vrot.slane %v4849, 2
    %v4851 = vmax.f32 %v4849, %v4850
    %v4852 = vrot.slane %v4851, 1
    %v4853 = vmax.f32 %v4851, %v4852
    %v4854 = vsel %vm4294, %v4210, -inf
    %v4855 = vsel %vm4296, %v4211, -inf
    %v4856 = vmax.f32 %v4854, %v4855
    %v4857 = vrot.slane %v4856, 4
    %v4858 = vmax.f32 %v4856, %v4857
    %v4859 = vrot.slane %v4858, 2
    %v4860 = vmax.f32 %v4858, %v4859
    %v4861 = vrot.slane %v4860, 1
    %v4862 = vmax.f32 %v4860, %v4861
    %v4863 = vsel %vm4294, %v4212, -inf
    %v4864 = vsel %vm4296, %v4213, -inf
    %v4865 = vmax.f32 %v4863, %v4864
    %v4866 = vrot.slane %v4865, 4
    %v4867 = vmax.f32 %v4865, %v4866
    %v4868 = vrot.slane %v4867, 2
    %v4869 = vmax.f32 %v4867, %v4868
    %v4870 = vrot.slane %v4869, 1
    %v4871 = vmax.f32 %v4869, %v4870
    %v4872 = vsel %vm4294, %v4214, -inf
    %v4873 = vsel %vm4296, %v4215, -inf
    %v4874 = vmax.f32 %v4872, %v4873
    %v4875 = vrot.slane %v4874, 4
    %v4876 = vmax.f32 %v4874, %v4875
    %v4877 = vrot.slane %v4876, 2
    %v4878 = vmax.f32 %v4876, %v4877
    %v4879 = vrot.slane %v4878, 1
    %v4880 = vmax.f32 %v4878, %v4879
    %v4881 = vsel %vm4294, %v4216, -inf
    %v4882 = vsel %vm4296, %v4217, -inf
    %v4883 = vmax.f32 %v4881, %v4882
    %v4884 = vrot.slane %v4883, 4
    %v4885 = vmax.f32 %v4883, %v4884
    %v4886 = vrot.slane %v4885, 2
    %v4887 = vmax.f32 %v4885, %v4886
    %v4888 = vrot.slane %v4887, 1
    %v4889 = vmax.f32 %v4887, %v4888
    %v4890 = vsel %vm4294, %v4218, -inf
    %v4891 = vsel %vm4296, %v4219, -inf
    %v4892 = vmax.f32 %v4890, %v4891
    %v4893 = vrot.slane %v4892, 4
    %v4894 = vmax.f32 %v4892, %v4893
    %v4895 = vrot.slane %v4894, 2
    %v4896 = vmax.f32 %v4894, %v4895
    %v4897 = vrot.slane %v4896, 1
    %v4898 = vmax.f32 %v4896, %v4897
    %v4899 = vsel %vm4294, %v4220, -inf
    %v4900 = vsel %vm4296, %v4221, -inf
    %v4901 = vmax.f32 %v4899, %v4900
    %v4902 = vrot.slane %v4901, 4
    %v4903 = vmax.f32 %v4901, %v4902
    %v4904 = vrot.slane %v4903, 2
    %v4905 = vmax.f32 %v4903, %v4904
    %v4906 = vrot.slane %v4905, 1
    %v4907 = vmax.f32 %v4905, %v4906
    %v4908 = vsel %vm4294, %v4222, -inf
    %v4909 = vsel %vm4296, %v4223, -inf
    %v4910 = vmax.f32 %v4908, %v4909
    %v4911 = vrot.slane %v4910, 4
    %v4912 = vmax.f32 %v4910, %v4911
    %v4913 = vrot.slane %v4912, 2
    %v4914 = vmax.f32 %v4912, %v4913
    %v4915 = vrot.slane %v4914, 1
    %v4916 = vmax.f32 %v4914, %v4915
    %v4917 = vsel %vm4294, %v4224, -inf
    %v4918 = vsel %vm4296, %v4225, -inf
    %v4919 = vmax.f32 %v4917, %v4918
    %v4920 = vrot.slane %v4919, 4
    %v4921 = vmax.f32 %v4919, %v4920
    %v4922 = vrot.slane %v4921, 2
    %v4923 = vmax.f32 %v4921, %v4922
    %v4924 = vrot.slane %v4923, 1
    %v4925 = vmax.f32 %v4923, %v4924
    %v4926 = vsel %vm4294, %v4226, -inf
    %v4927 = vsel %vm4296, %v4227, -inf
    %v4928 = vmax.f32 %v4926, %v4927
    %v4929 = vrot.slane %v4928, 4
    %v4930 = vmax.f32 %v4928, %v4929
    %v4931 = vrot.slane %v4930, 2
    %v4932 = vmax.f32 %v4930, %v4931
    %v4933 = vrot.slane %v4932, 1
    %v4934 = vmax.f32 %v4932, %v4933
    %v4935 = vsel %vm4294, %v4228, -inf
    %v4936 = vsel %vm4296, %v4229, -inf
    %v4937 = vmax.f32 %v4935, %v4936
    %v4938 = vrot.slane %v4937, 4
    %v4939 = vmax.f32 %v4937, %v4938
    %v4940 = vrot.slane %v4939, 2
    %v4941 = vmax.f32 %v4939, %v4940
    %v4942 = vrot.slane %v4941, 1
    %v4943 = vmax.f32 %v4941, %v4942
    %v4944 = vsel %vm4294, %v4230, -inf
    %v4945 = vsel %vm4296, %v4231, -inf
    %v4946 = vmax.f32 %v4944, %v4945
    %v4947 = vrot.slane %v4946, 4
    %v4948 = vmax.f32 %v4946, %v4947
    %v4949 = vrot.slane %v4948, 2
    %v4950 = vmax.f32 %v4948, %v4949
    %v4951 = vrot.slane %v4950, 1
    %v4952 = vmax.f32 %v4950, %v4951
    %v4953 = vsel %vm4294, %v4232, -inf
    %v4954 = vsel %vm4296, %v4233, -inf
    %v4955 = vmax.f32 %v4953, %v4954
    %v4956 = vrot.slane %v4955, 4
    %v4957 = vmax.f32 %v4955, %v4956
    %v4958 = vrot.slane %v4957, 2
    %v4959 = vmax.f32 %v4957, %v4958
    %v4960 = vrot.slane %v4959, 1
    %v4961 = vmax.f32 %v4959, %v4960
    %v4962 = vsel %vm4294, %v4234, -inf
    %v4963 = vsel %vm4296, %v4235, -inf
    %v4964 = vmax.f32 %v4962, %v4963
    %v4965 = vrot.slane %v4964, 4
    %v4966 = vmax.f32 %v4964, %v4965
    %v4967 = vrot.slane %v4966, 2
    %v4968 = vmax.f32 %v4966, %v4967
    %v4969 = vrot.slane %v4968, 1
    %v4970 = vmax.f32 %v4968, %v4969
    %v4971 = vsel %vm4294, %v4236, -inf
    %v4972 = vsel %vm4296, %v4237, -inf
    %v4973 = vmax.f32 %v4971, %v4972
    %v4974 = vrot.slane %v4973, 4
    %v4975 = vmax.f32 %v4973, %v4974
    %v4976 = vrot.slane %v4975, 2
    %v4977 = vmax.f32 %v4975, %v4976
    %v4978 = vrot.slane %v4977, 1
    %v4979 = vmax.f32 %v4977, %v4978
    %v4980 = vsel %vm4294, %v4238, -inf
    %v4981 = vsel %vm4296, %v4239, -inf
    %v4982 = vmax.f32 %v4980, %v4981
    %v4983 = vrot.slane %v4982, 4
    %v4984 = vmax.f32 %v4982, %v4983
    %v4985 = vrot.slane %v4984, 2
    %v4986 = vmax.f32 %v4984, %v4985
    %v4987 = vrot.slane %v4986, 1
    %v4988 = vmax.f32 %v4986, %v4987
    %v4989 = vsel %vm4294, %v4240, -inf
    %v4990 = vsel %vm4296, %v4241, -inf
    %v4991 = vmax.f32 %v4989, %v4990
    %v4992 = vrot.slane %v4991, 4
    %v4993 = vmax.f32 %v4991, %v4992
    %v4994 = vrot.slane %v4993, 2
    %v4995 = vmax.f32 %v4993, %v4994
    %v4996 = vrot.slane %v4995, 1
    %v4997 = vmax.f32 %v4995, %v4996
    %v4998 = vsel %vm4294, %v4242, -inf
    %v4999 = vsel %vm4296, %v4243, -inf
    %v5000 = vmax.f32 %v4998, %v4999
    %v5001 = vrot.slane %v5000, 4
    %v5002 = vmax.f32 %v5000, %v5001
    %v5003 = vrot.slane %v5002, 2
    %v5004 = vmax.f32 %v5002, %v5003
    %v5005 = vrot.slane %v5004, 1
    %v5006 = vmax.f32 %v5004, %v5005
    %v5007 = vsel %vm4294, %v4244, -inf
    %v5008 = vsel %vm4296, %v4245, -inf
    %v5009 = vmax.f32 %v5007, %v5008
    %v5010 = vrot.slane %v5009, 4
    %v5011 = vmax.f32 %v5009, %v5010
    %v5012 = vrot.slane %v5011, 2
    %v5013 = vmax.f32 %v5011, %v5012
    %v5014 = vrot.slane %v5013, 1
    %v5015 = vmax.f32 %v5013, %v5014
    %v5016 = vsel %vm4294, %v4246, -inf
    %v5017 = vsel %vm4296, %v4247, -inf
    %v5018 = vmax.f32 %v5016, %v5017
    %v5019 = vrot.slane %v5018, 4
    %v5020 = vmax.f32 %v5018, %v5019
    %v5021 = vrot.slane %v5020, 2
    %v5022 = vmax.f32 %v5020, %v5021
    %v5023 = vrot.slane %v5022, 1
    %v5024 = vmax.f32 %v5022, %v5023
    %v5025 = vsel %vm4294, %v4248, -inf
    %v5026 = vsel %vm4296, %v4249, -inf
    %v5027 = vmax.f32 %v5025, %v5026
    %v5028 = vrot.slane %v5027, 4
    %v5029 = vmax.f32 %v5027, %v5028
    %v5030 = vrot.slane %v5029, 2
    %v5031 = vmax.f32 %v5029, %v5030
    %v5032 = vrot.slane %v5031, 1
    %v5033 = vmax.f32 %v5031, %v5032
    %v5034 = vsel %vm4294, %v4250, -inf
    %v5035 = vsel %vm4296, %v4251, -inf
    %v5036 = vmax.f32 %v5034, %v5035
    %v5037 = vrot.slane %v5036, 4
    %v5038 = vmax.f32 %v5036, %v5037
    %v5039 = vrot.slane %v5038, 2
    %v5040 = vmax.f32 %v5038, %v5039
    %v5041 = vrot.slane %v5040, 1
    %v5042 = vmax.f32 %v5040, %v5041
    %v5043 = vsel %vm4294, %v4252, -inf
    %v5044 = vsel %vm4296, %v4253, -inf
    %v5045 = vmax.f32 %v5043, %v5044
    %v5046 = vrot.slane %v5045, 4
    %v5047 = vmax.f32 %v5045, %v5046
    %v5048 = vrot.slane %v5047, 2
    %v5049 = vmax.f32 %v5047, %v5048
    %v5050 = vrot.slane %v5049, 1
    %v5051 = vmax.f32 %v5049, %v5050
    %v5052 = vsel %vm4294, %v4254, -inf
    %v5053 = vsel %vm4296, %v4255, -inf
    %v5054 = vmax.f32 %v5052, %v5053
    %v5055 = vrot.slane %v5054, 4
    %v5056 = vmax.f32 %v5054, %v5055
    %v5057 = vrot.slane %v5056, 2
    %v5058 = vmax.f32 %v5056, %v5057
    %v5059 = vrot.slane %v5058, 1
    %v5060 = vmax.f32 %v5058, %v5059
    %v5061 = vsel %vm4294, %v4256, -inf
    %v5062 = vsel %vm4296, %v4257, -inf
    %v5063 = vmax.f32 %v5061, %v5062
    %v5064 = vrot.slane %v5063, 4
    %v5065 = vmax.f32 %v5063, %v5064
    %v5066 = vrot.slane %v5065, 2
    %v5067 = vmax.f32 %v5065, %v5066
    %v5068 = vrot.slane %v5067, 1
    %v5069 = vmax.f32 %v5067, %v5068
    %v5070 = vsel %vm4294, %v4258, -inf
    %v5071 = vsel %vm4296, %v4259, -inf
    %v5072 = vmax.f32 %v5070, %v5071
    %v5073 = vrot.slane %v5072, 4
    %v5074 = vmax.f32 %v5072, %v5073
    %v5075 = vrot.slane %v5074, 2
    %v5076 = vmax.f32 %v5074, %v5075
    %v5077 = vrot.slane %v5076, 1
    %v5078 = vmax.f32 %v5076, %v5077
    %v5079 = vsel %vm4294, %v4260, -inf
    %v5080 = vsel %vm4296, %v4261, -inf
    %v5081 = vmax.f32 %v5079, %v5080
    %v5082 = vrot.slane %v5081, 4
    %v5083 = vmax.f32 %v5081, %v5082
    %v5084 = vrot.slane %v5083, 2
    %v5085 = vmax.f32 %v5083, %v5084
    %v5086 = vrot.slane %v5085, 1
    %v5087 = vmax.f32 %v5085, %v5086
    %v5088 = vsel %vm4294, %v4262, -inf
    %v5089 = vsel %vm4296, %v4263, -inf
    %v5090 = vmax.f32 %v5088, %v5089
    %v5091 = vrot.slane %v5090, 4
    %v5092 = vmax.f32 %v5090, %v5091
    %v5093 = vrot.slane %v5092, 2
    %v5094 = vmax.f32 %v5092, %v5093
    %v5095 = vrot.slane %v5094, 1
    %v5096 = vmax.f32 %v5094, %v5095
    %v5097 = vsel %vm4294, %v4264, -inf
    %v5098 = vsel %vm4296, %v4265, -inf
    %v5099 = vmax.f32 %v5097, %v5098
    %v5100 = vrot.slane %v5099, 4
    %v5101 = vmax.f32 %v5099, %v5100
    %v5102 = vrot.slane %v5101, 2
    %v5103 = vmax.f32 %v5101, %v5102
    %v5104 = vrot.slane %v5103, 1
    %v5105 = vmax.f32 %v5103, %v5104
    %v5106 = vsel %vm4294, %v4266, -inf
    %v5107 = vsel %vm4296, %v4267, -inf
    %v5108 = vmax.f32 %v5106, %v5107
    %v5109 = vrot.slane %v5108, 4
    %v5110 = vmax.f32 %v5108, %v5109
    %v5111 = vrot.slane %v5110, 2
    %v5112 = vmax.f32 %v5110, %v5111
    %v5113 = vrot.slane %v5112, 1
    %v5114 = vmax.f32 %v5112, %v5113
    %v5115 = vsel %vm4294, %v4268, -inf
    %v5116 = vsel %vm4296, %v4269, -inf
    %v5117 = vmax.f32 %v5115, %v5116
    %v5118 = vrot.slane %v5117, 4
    %v5119 = vmax.f32 %v5117, %v5118
    %v5120 = vrot.slane %v5119, 2
    %v5121 = vmax.f32 %v5119, %v5120
    %v5122 = vrot.slane %v5121, 1
    %v5123 = vmax.f32 %v5121, %v5122
    %v5124 = vsel %vm4294, %v4270, -inf
    %v5125 = vsel %vm4296, %v4271, -inf
    %v5126 = vmax.f32 %v5124, %v5125
    %v5127 = vrot.slane %v5126, 4
    %v5128 = vmax.f32 %v5126, %v5127
    %v5129 = vrot.slane %v5128, 2
    %v5130 = vmax.f32 %v5128, %v5129
    %v5131 = vrot.slane %v5130, 1
    %v5132 = vmax.f32 %v5130, %v5131
    %v5133 = vsel %vm4294, %v4272, -inf
    %v5134 = vsel %vm4296, %v4273, -inf
    %v5135 = vmax.f32 %v5133, %v5134
    %v5136 = vrot.slane %v5135, 4
    %v5137 = vmax.f32 %v5135, %v5136
    %v5138 = vrot.slane %v5137, 2
    %v5139 = vmax.f32 %v5137, %v5138
    %v5140 = vrot.slane %v5139, 1
    %v5141 = vmax.f32 %v5139, %v5140
    %v5142 = vsel %vm4294, %v4274, -inf
    %v5143 = vsel %vm4296, %v4275, -inf
    %v5144 = vmax.f32 %v5142, %v5143
    %v5145 = vrot.slane %v5144, 4
    %v5146 = vmax.f32 %v5144, %v5145
    %v5147 = vrot.slane %v5146, 2
    %v5148 = vmax.f32 %v5146, %v5147
    %v5149 = vrot.slane %v5148, 1
    %v5150 = vmax.f32 %v5148, %v5149
    %v5151 = vsel %vm4294, %v4276, -inf
    %v5152 = vsel %vm4296, %v4277, -inf
    %v5153 = vmax.f32 %v5151, %v5152
    %v5154 = vrot.slane %v5153, 4
    %v5155 = vmax.f32 %v5153, %v5154
    %v5156 = vrot.slane %v5155, 2
    %v5157 = vmax.f32 %v5155, %v5156
    %v5158 = vrot.slane %v5157, 1
    %v5159 = vmax.f32 %v5157, %v5158
    %v5160 = vsel %vm4294, %v4278, -inf
    %v5161 = vsel %vm4296, %v4279, -inf
    %v5162 = vmax.f32 %v5160, %v5161
    %v5163 = vrot.slane %v5162, 4
    %v5164 = vmax.f32 %v5162, %v5163
    %v5165 = vrot.slane %v5164, 2
    %v5166 = vmax.f32 %v5164, %v5165
    %v5167 = vrot.slane %v5166, 1
    %v5168 = vmax.f32 %v5166, %v5167
    %v5169 = vsel %vm4294, %v4280, -inf
    %v5170 = vsel %vm4296, %v4281, -inf
    %v5171 = vmax.f32 %v5169, %v5170
    %v5172 = vrot.slane %v5171, 4
    %v5173 = vmax.f32 %v5171, %v5172
    %v5174 = vrot.slane %v5173, 2
    %v5175 = vmax.f32 %v5173, %v5174
    %v5176 = vrot.slane %v5175, 1
    %v5177 = vmax.f32 %v5175, %v5176
    %v5178 = vsel %vm4294, %v4282, -inf
    %v5179 = vsel %vm4296, %v4283, -inf
    %v5180 = vmax.f32 %v5178, %v5179
    %v5181 = vrot.slane %v5180, 4
    %v5182 = vmax.f32 %v5180, %v5181
    %v5183 = vrot.slane %v5182, 2
    %v5184 = vmax.f32 %v5182, %v5183
    %v5185 = vrot.slane %v5184, 1
    %v5186 = vmax.f32 %v5184, %v5185
    %v5187 = vsel %vm4294, %v4284, -inf
    %v5188 = vsel %vm4296, %v4285, -inf
    %v5189 = vmax.f32 %v5187, %v5188
    %v5190 = vrot.slane %v5189, 4
    %v5191 = vmax.f32 %v5189, %v5190
    %v5192 = vrot.slane %v5191, 2
    %v5193 = vmax.f32 %v5191, %v5192
    %v5194 = vrot.slane %v5193, 1
    %v5195 = vmax.f32 %v5193, %v5194
    %v5196 = vsel %vm4294, %v4286, -inf
    %v5197 = vsel %vm4296, %v4287, -inf
    %v5198 = vmax.f32 %v5196, %v5197
    %v5199 = vrot.slane %v5198, 4
    %v5200 = vmax.f32 %v5198, %v5199
    %v5201 = vrot.slane %v5200, 2
    %v5202 = vmax.f32 %v5200, %v5201
    %v5203 = vrot.slane %v5202, 1
    %v5204 = vmax.f32 %v5202, %v5203
    %v5205 = vsel %vm4294, %v4288, -inf
    %v5206 = vsel %vm4296, %v4289, -inf
    %v5207 = vmax.f32 %v5205, %v5206
    %v5208 = vrot.slane %v5207, 4
    %v5209 = vmax.f32 %v5207, %v5208
    %v5210 = vrot.slane %v5209, 2
    %v5211 = vmax.f32 %v5209, %v5210
    %v5212 = vrot.slane %v5211, 1
    %v5213 = vmax.f32 %v5211, %v5212
    %v5214 = vsel %vm4294, %v4290, -inf
    %v5215 = vsel %vm4296, %v4291, -inf
    %v5216 = vmax.f32 %v5214, %v5215
    %v5217 = vrot.slane %v5216, 4
    %v5218 = vmax.f32 %v5216, %v5217
    %v5219 = vrot.slane %v5218, 2
    %v5220 = vmax.f32 %v5218, %v5219
    %v5221 = vrot.slane %v5220, 1
    %v5222 = vmax.f32 %v5220, %v5221
    %v5223 = vsel %vm4294, %v4292, -inf
    %v5224 = vsel %vm4296, %v4293, -inf
    %v5225 = vmax.f32 %v5223, %v5224
    %v5226 = vrot.slane %v5225, 4
    %v5227 = vmax.f32 %v5225, %v5226
    %v5228 = vrot.slane %v5227, 2
    %v5229 = vmax.f32 %v5227, %v5228
    %v5230 = vrot.slane %v5229, 1
    %v5231 = vmax.f32 %v5229, %v5230
    %vm5232 = vcmask 1044480
    %v5233 = vrot.slane %v966, 3
    %v5234 = vrot.slane %v969, 3
    %v5235 = vsel %vm5232, %v5233, %v5234
    %v5236 = vrot.slane %v974, 3
    %v5237 = vrot.slane %v977, 3
    %v5238 = vsel %vm5232, %v5236, %v5237
    %v5239 = vrot.slane %v982, 3
    %v5240 = vrot.slane %v985, 3
    %v5241 = vsel %vm5232, %v5239, %v5240
    %v5242 = vrot.slane %v990, 3
    %v5243 = vrot.slane %v993, 3
    %v5244 = vsel %vm5232, %v5242, %v5243
    %v5245 = vrot.slane %v998, 3
    %v5246 = vrot.slane %v1001, 3
    %v5247 = vsel %vm5232, %v5245, %v5246
    %v5248 = vrot.slane %v1006, 3
    %v5249 = vrot.slane %v1009, 3
    %v5250 = vsel %vm5232, %v5248, %v5249
    %v5251 = vrot.slane %v1014, 3
    %v5252 = vrot.slane %v1017, 3
    %v5253 = vsel %vm5232, %v5251, %v5252
    %v5254 = vrot.slane %v1022, 3
    %v5255 = vrot.slane %v1025, 3
    %v5256 = vsel %vm5232, %v5254, %v5255
    %v5257 = vrot.slane %v1030, 3
    %v5258 = vrot.slane %v1033, 3
    %v5259 = vsel %vm5232, %v5257, %v5258
    %v5260 = vrot.slane %v1038, 3
    %v5261 = vrot.slane %v1041, 3
    %v5262 = vsel %vm5232, %v5260, %v5261
    %v5263 = vrot.slane %v1046, 3
    %v5264 = vrot.slane %v1049, 3
    %v5265 = vsel %vm5232, %v5263, %v5264
    %v5266 = vrot.slane %v1054, 3
    %v5267 = vrot.slane %v1057, 3
    %v5268 = vsel %vm5232, %v5266, %v5267
    %v5269 = vrot.slane %v1062, 3
    %v5270 = vrot.slane %v1065, 3
    %v5271 = vsel %vm5232, %v5269, %v5270
    %v5272 = vrot.slane %v1070, 3
    %v5273 = vrot.slane %v1073, 3
    %v5274 = vsel %vm5232, %v5272, %v5273
    %v5275 = vrot.slane %v1078, 3
    %v5276 = vrot.slane %v1081, 3
    %v5277 = vsel %vm5232, %v5275, %v5276
    %v5278 = vrot.slane %v1086, 3
    %v5279 = vrot.slane %v1089, 3
    %v5280 = vsel %vm5232, %v5278, %v5279
    %v5281 = vrot.slane %v1094, 3
    %v5282 = vrot.slane %v1097, 3
    %v5283 = vsel %vm5232, %v5281, %v5282
    %v5284 = vrot.slane %v1102, 3
    %v5285 = vrot.slane %v1105, 3
    %v5286 = vsel %vm5232, %v5284, %v5285
    %v5287 = vrot.slane %v1110, 3
    %v5288 = vrot.slane %v1113, 3
    %v5289 = vsel %vm5232, %v5287, %v5288
    %v5290 = vrot.slane %v1118, 3
    %v5291 = vrot.slane %v1121, 3
    %v5292 = vsel %vm5232, %v5290, %v5291
    %v5293 = vrot.slane %v1126, 3
    %v5294 = vrot.slane %v1129, 3
    %v5295 = vsel %vm5232, %v5293, %v5294
    %v5296 = vrot.slane %v1134, 3
    %v5297 = vrot.slane %v1137, 3
    %v5298 = vsel %vm5232, %v5296, %v5297
    %v5299 = vrot.slane %v1142, 3
    %v5300 = vrot.slane %v1145, 3
    %v5301 = vsel %vm5232, %v5299, %v5300
    %v5302 = vrot.slane %v1150, 3
    %v5303 = vrot.slane %v1153, 3
    %v5304 = vsel %vm5232, %v5302, %v5303
    %v5305 = vrot.slane %v1158, 3
    %v5306 = vrot.slane %v1161, 3
    %v5307 = vsel %vm5232, %v5305, %v5306
    %v5308 = vrot.slane %v1166, 3
    %v5309 = vrot.slane %v1169, 3
    %v5310 = vsel %vm5232, %v5308, %v5309
    %v5311 = vrot.slane %v1174, 3
    %v5312 = vrot.slane %v1177, 3
    %v5313 = vsel %vm5232, %v5311, %v5312
    %v5314 = vrot.slane %v1182, 3
    %v5315 = vrot.slane %v1185, 3
    %v5316 = vsel %vm5232, %v5314, %v5315
    %v5317 = vrot.slane %v1190, 3
    %v5318 = vrot.slane %v1193, 3
    %v5319 = vsel %vm5232, %v5317, %v5318
    %v5320 = vrot.slane %v1198, 3
    %v5321 = vrot.slane %v1201, 3
    %v5322 = vsel %vm5232, %v5320, %v5321
    %v5323 = vrot.slane %v1206, 3
    %v5324 = vrot.slane %v1209, 3
    %v5325 = vsel %vm5232, %v5323, %v5324
    %v5326 = vrot.slane %v1214, 3
    %v5327 = vrot.slane %v1217, 3
    %v5328 = vsel %vm5232, %v5326, %v5327
    %v5329 = vrot.slane %v1222, 3
    %v5330 = vrot.slane %v1225, 3
    %v5331 = vsel %vm5232, %v5329, %v5330
    %v5332 = vrot.slane %v1230, 3
    %v5333 = vrot.slane %v1233, 3
    %v5334 = vsel %vm5232, %v5332, %v5333
    %v5335 = vrot.slane %v1238, 3
    %v5336 = vrot.slane %v1241, 3
    %v5337 = vsel %vm5232, %v5335, %v5336
    %v5338 = vrot.slane %v1246, 3
    %v5339 = vrot.slane %v1249, 3
    %v5340 = vsel %vm5232, %v5338, %v5339
    %v5341 = vrot.slane %v1254, 3
    %v5342 = vrot.slane %v1257, 3
    %v5343 = vsel %vm5232, %v5341, %v5342
    %v5344 = vrot.slane %v1262, 3
    %v5345 = vrot.slane %v1265, 3
    %v5346 = vsel %vm5232, %v5344, %v5345
    %v5347 = vrot.slane %v1270, 3
    %v5348 = vrot.slane %v1273, 3
    %v5349 = vsel %vm5232, %v5347, %v5348
    %v5350 = vrot.slane %v1278, 3
    %v5351 = vrot.slane %v1281, 3
    %v5352 = vsel %vm5232, %v5350, %v5351
    %v5353 = vrot.slane %v1286, 3
    %v5354 = vrot.slane %v1289, 3
    %v5355 = vsel %vm5232, %v5353, %v5354
    %v5356 = vrot.slane %v1294, 3
    %v5357 = vrot.slane %v1297, 3
    %v5358 = vsel %vm5232, %v5356, %v5357
    %v5359 = vrot.slane %v1302, 3
    %v5360 = vrot.slane %v1305, 3
    %v5361 = vsel %vm5232, %v5359, %v5360
    %v5362 = vrot.slane %v1310, 3
    %v5363 = vrot.slane %v1313, 3
    %v5364 = vsel %vm5232, %v5362, %v5363
    %v5365 = vrot.slane %v1318, 3
    %v5366 = vrot.slane %v1321, 3
    %v5367 = vsel %vm5232, %v5365, %v5366
    %v5368 = vrot.slane %v1326, 3
    %v5369 = vrot.slane %v1329, 3
    %v5370 = vsel %vm5232, %v5368, %v5369
    %v5371 = vrot.slane %v1334, 3
    %v5372 = vrot.slane %v1337, 3
    %v5373 = vsel %vm5232, %v5371, %v5372
    %v5374 = vrot.slane %v1342, 3
    %v5375 = vrot.slane %v1345, 3
    %v5376 = vsel %vm5232, %v5374, %v5375
    %v5377 = vrot.slane %v1350, 3
    %v5378 = vrot.slane %v1353, 3
    %v5379 = vsel %vm5232, %v5377, %v5378
    %v5380 = vrot.slane %v1358, 3
    %v5381 = vrot.slane %v1361, 3
    %v5382 = vsel %vm5232, %v5380, %v5381
    %v5383 = vrot.slane %v1366, 3
    %v5384 = vrot.slane %v1369, 3
    %v5385 = vsel %vm5232, %v5383, %v5384
    %v5386 = vrot.slane %v1374, 3
    %v5387 = vrot.slane %v1377, 3
    %v5388 = vsel %vm5232, %v5386, %v5387
    %v5389 = vrot.slane %v1382, 3
    %v5390 = vrot.slane %v1385, 3
    %v5391 = vsel %vm5232, %v5389, %v5390
    %v5392 = vrot.slane %v1390, 3
    %v5393 = vrot.slane %v1393, 3
    %v5394 = vsel %vm5232, %v5392, %v5393
    %v5395 = vrot.slane %v1398, 3
    %v5396 = vrot.slane %v1401, 3
    %v5397 = vsel %vm5232, %v5395, %v5396
    %v5398 = vrot.slane %v1406, 3
    %v5399 = vrot.slane %v1409, 3
    %v5400 = vsel %vm5232, %v5398, %v5399
    %v5401 = vrot.slane %v1414, 3
    %v5402 = vrot.slane %v1417, 3
    %v5403 = vsel %vm5232, %v5401, %v5402
    %v5404 = vrot.slane %v1422, 3
    %v5405 = vrot.slane %v1425, 3
    %v5406 = vsel %vm5232, %v5404, %v5405
    %v5407 = vrot.slane %v1430, 3
    %v5408 = vrot.slane %v1433, 3
    %v5409 = vsel %vm5232, %v5407, %v5408
    %v5410 = vrot.slane %v1438, 3
    %v5411 = vrot.slane %v1441, 3
    %v5412 = vsel %vm5232, %v5410, %v5411
    %v5413 = vrot.slane %v1446, 3
    %v5414 = vrot.slane %v1449, 3
    %v5415 = vsel %vm5232, %v5413, %v5414
    %v5416 = vrot.slane %v1454, 3
    %v5417 = vrot.slane %v1457, 3
    %v5418 = vsel %vm5232, %v5416, %v5417
    %v5419 = vrot.slane %v1462, 3
    %v5420 = vrot.slane %v1465, 3
    %v5421 = vsel %vm5232, %v5419, %v5420
    %v5422 = vrot.slane %v1470, 3
    %v5423 = vrot.slane %v1473, 3
    %v5424 = vsel %vm5232, %v5422, %v5423
    %v5425 = vrot.slane %v1478, 3
    %v5426 = vrot.slane %v1481, 3
    %v5427 = vsel %vm5232, %v5425, %v5426
    %v5428 = vrot.slane %v1486, 3
    %v5429 = vrot.slane %v1489, 3
    %v5430 = vsel %vm5232, %v5428, %v5429
    %v5431 = vrot.slane %v1494, 3
    %v5432 = vrot.slane %v1497, 3
    %v5433 = vsel %vm5232, %v5431, %v5432
    %v5434 = vrot.slane %v1502, 3
    %v5435 = vrot.slane %v1505, 3
    %v5436 = vsel %vm5232, %v5434, %v5435
    %v5437 = vrot.slane %v1510, 3
    %v5438 = vrot.slane %v1513, 3
    %v5439 = vsel %vm5232, %v5437, %v5438
    %v5440 = vrot.slane %v1518, 3
    %v5441 = vrot.slane %v1521, 3
    %v5442 = vsel %vm5232, %v5440, %v5441
    %v5443 = vrot.slane %v1526, 3
    %v5444 = vrot.slane %v1529, 3
    %v5445 = vsel %vm5232, %v5443, %v5444
    %v5446 = vrot.slane %v1534, 3
    %v5447 = vrot.slane %v1537, 3
    %v5448 = vsel %vm5232, %v5446, %v5447
    %v5449 = vrot.slane %v1542, 3
    %v5450 = vrot.slane %v1545, 3
    %v5451 = vsel %vm5232, %v5449, %v5450
    %v5452 = vrot.slane %v1550, 3
    %v5453 = vrot.slane %v1553, 3
    %v5454 = vsel %vm5232, %v5452, %v5453
    %v5455 = vrot.slane %v1558, 3
    %v5456 = vrot.slane %v1561, 3
    %v5457 = vsel %vm5232, %v5455, %v5456
    %v5458 = vrot.slane %v1566, 3
    %v5459 = vrot.slane %v1569, 3
    %v5460 = vsel %vm5232, %v5458, %v5459
    %v5461 = vrot.slane %v1574, 3
    %v5462 = vrot.slane %v1577, 3
    %v5463 = vsel %vm5232, %v5461, %v5462
    %v5464 = vrot.slane %v1582, 3
    %v5465 = vrot.slane %v1585, 3
    %v5466 = vsel %vm5232, %v5464, %v5465
    %v5467 = vrot.slane %v1590, 3
    %v5468 = vrot.slane %v1593, 3
    %v5469 = vsel %vm5232, %v5467, %v5468
    %v5470 = vrot.slane %v1598, 3
    %v5471 = vrot.slane %v1601, 3
    %v5472 = vsel %vm5232, %v5470, %v5471
    %v5473 = vrot.slane %v1606, 3
    %v5474 = vrot.slane %v1609, 3
    %v5475 = vsel %vm5232, %v5473, %v5474
    %v5476 = vrot.slane %v1614, 3
    %v5477 = vrot.slane %v1617, 3
    %v5478 = vsel %vm5232, %v5476, %v5477
    %v5479 = vrot.slane %v1622, 3
    %v5480 = vrot.slane %v1625, 3
    %v5481 = vsel %vm5232, %v5479, %v5480
    %v5482 = vrot.slane %v1630, 3
    %v5483 = vrot.slane %v1633, 3
    %v5484 = vsel %vm5232, %v5482, %v5483
    %v5485 = vrot.slane %v1638, 3
    %v5486 = vrot.slane %v1641, 3
    %v5487 = vsel %vm5232, %v5485, %v5486
    %v5488 = vrot.slane %v1646, 3
    %v5489 = vrot.slane %v1649, 3
    %v5490 = vsel %vm5232, %v5488, %v5489
    %v5491 = vrot.slane %v1654, 3
    %v5492 = vrot.slane %v1657, 3
    %v5493 = vsel %vm5232, %v5491, %v5492
    %v5494 = vrot.slane %v1662, 3
    %v5495 = vrot.slane %v1665, 3
    %v5496 = vsel %vm5232, %v5494, %v5495
    %v5497 = vrot.slane %v1670, 3
    %v5498 = vrot.slane %v1673, 3
    %v5499 = vsel %vm5232, %v5497, %v5498
    %v5500 = vrot.slane %v1678, 3
    %v5501 = vrot.slane %v1681, 3
    %v5502 = vsel %vm5232, %v5500, %v5501
    %v5503 = vrot.slane %v1686, 3
    %v5504 = vrot.slane %v1689, 3
    %v5505 = vsel %vm5232, %v5503, %v5504
    %v5506 = vrot.slane %v1694, 3
    %v5507 = vrot.slane %v1697, 3
    %v5508 = vsel %vm5232, %v5506, %v5507
    %v5509 = vrot.slane %v1702, 3
    %v5510 = vrot.slane %v1705, 3
    %v5511 = vsel %vm5232, %v5509, %v5510
    %v5512 = vrot.slane %v1710, 3
    %v5513 = vrot.slane %v1713, 3
    %v5514 = vsel %vm5232, %v5512, %v5513
    %v5515 = vrot.slane %v1718, 3
    %v5516 = vrot.slane %v1721, 3
    %v5517 = vsel %vm5232, %v5515, %v5516
    %v5518 = vrot.slane %v1726, 3
    %v5519 = vrot.slane %v1729, 3
    %v5520 = vsel %vm5232, %v5518, %v5519
    %v5521 = vrot.slane %v1734, 3
    %v5522 = vrot.slane %v1737, 3
    %v5523 = vsel %vm5232, %v5521, %v5522
    %v5524 = vrot.slane %v1742, 3
    %v5525 = vrot.slane %v1745, 3
    %v5526 = vsel %vm5232, %v5524, %v5525
    %v5527 = vrot.slane %v1750, 3
    %v5528 = vrot.slane %v1753, 3
    %v5529 = vsel %vm5232, %v5527, %v5528
    %v5530 = vrot.slane %v1758, 3
    %v5531 = vrot.slane %v1761, 3
    %v5532 = vsel %vm5232, %v5530, %v5531
    %v5533 = vrot.slane %v1766, 3
    %v5534 = vrot.slane %v1769, 3
    %v5535 = vsel %vm5232, %v5533, %v5534
    %v5536 = vrot.slane %v1774, 3
    %v5537 = vrot.slane %v1777, 3
    %v5538 = vsel %vm5232, %v5536, %v5537
    %v5539 = vrot.slane %v1782, 3
    %v5540 = vrot.slane %v1785, 3
    %v5541 = vsel %vm5232, %v5539, %v5540
    %v5542 = vrot.slane %v1790, 3
    %v5543 = vrot.slane %v1793, 3
    %v5544 = vsel %vm5232, %v5542, %v5543
    %5545 = vrot.lane.b32.xlu0 %v5235, 125
    %v5546 = vpop.permute.xlu0 %5545
    %5547 = vrot.lane.b32.xlu0 %v5234, 125
    %v5548 = vpop.permute.xlu0 %5547
    %5549 = vrot.lane.b32.xlu0 %v5238, 125
    %v5550 = vpop.permute.xlu0 %5549
    %5551 = vrot.lane.b32.xlu0 %v5237, 125
    %v5552 = vpop.permute.xlu0 %5551
    %5553 = vrot.lane.b32.xlu0 %v5241, 125
    %v5554 = vpop.permute.xlu0 %5553
    %5555 = vrot.lane.b32.xlu0 %v5240, 125
    %v5556 = vpop.permute.xlu0 %5555
    %5557 = vrot.lane.b32.xlu0 %v5244, 125
    %v5558 = vpop.permute.xlu0 %5557
    %5559 = vrot.lane.b32.xlu0 %v5243, 125
    %v5560 = vpop.permute.xlu0 %5559
    %5561 = vrot.lane.b32.xlu0 %v5247, 125
    %v5562 = vpop.permute.xlu0 %5561
    %5563 = vrot.lane.b32.xlu0 %v5246, 125
    %v5564 = vpop.permute.xlu0 %5563
    %5565 = vrot.lane.b32.xlu0 %v5250, 125
    %v5566 = vpop.permute.xlu0 %5565
    %5567 = vrot.lane.b32.xlu0 %v5249, 125
    %v5568 = vpop.permute.xlu0 %5567
    %5569 = vrot.lane.b32.xlu0 %v5253, 125
    %v5570 = vpop.permute.xlu0 %5569
    %5571 = vrot.lane.b32.xlu0 %v5252, 125
    %v5572 = vpop.permute.xlu0 %5571
    %5573 = vrot.lane.b32.xlu0 %v5256, 125
    %v5574 = vpop.permute.xlu0 %5573
    %5575 = vrot.lane.b32.xlu0 %v5255, 125
    %v5576 = vpop.permute.xlu0 %5575
    %5577 = vrot.lane.b32.xlu0 %v5259, 125
    %v5578 = vpop.permute.xlu0 %5577
    %5579 = vrot.lane.b32.xlu0 %v5258, 125
    %v5580 = vpop.permute.xlu0 %5579
    %5581 = vrot.lane.b32.xlu0 %v5262, 125
    %v5582 = vpop.permute.xlu0 %5581
    %5583 = vrot.lane.b32.xlu0 %v5261, 125
    %v5584 = vpop.permute.xlu0 %5583
    %5585 = vrot.lane.b32.xlu0 %v5265, 125
    %v5586 = vpop.permute.xlu0 %5585
    %5587 = vrot.lane.b32.xlu0 %v5264, 125
    %v5588 = vpop.permute.xlu0 %5587
    %5589 = vrot.lane.b32.xlu0 %v5268, 125
    %v5590 = vpop.permute.xlu0 %5589
    %5591 = vrot.lane.b32.xlu0 %v5267, 125
    %v5592 = vpop.permute.xlu0 %5591
    %5593 = vrot.lane.b32.xlu0 %v5271, 125
    %v5594 = vpop.permute.xlu0 %5593
    %5595 = vrot.lane.b32.xlu0 %v5270, 125
    %v5596 = vpop.permute.xlu0 %5595
    %5597 = vrot.lane.b32.xlu0 %v5274, 125
    %v5598 = vpop.permute.xlu0 %5597
    %5599 = vrot.lane.b32.xlu0 %v5273, 125
    %v5600 = vpop.permute.xlu0 %5599
    %5601 = vrot.lane.b32.xlu0 %v5277, 125
    %v5602 = vpop.permute.xlu0 %5601
    %5603 = vrot.lane.b32.xlu0 %v5276, 125
    %v5604 = vpop.permute.xlu0 %5603
    %5605 = vrot.lane.b32.xlu0 %v5280, 125
    %v5606 = vpop.permute.xlu0 %5605
    %5607 = vrot.lane.b32.xlu0 %v5279, 125
    %v5608 = vpop.permute.xlu0 %5607
    %5609 = vrot.lane.b32.xlu0 %v5283, 125
    %v5610 = vpop.permute.xlu0 %5609
    %5611 = vrot.lane.b32.xlu0 %v5282, 125
    %v5612 = vpop.permute.xlu0 %5611
    %5613 = vrot.lane.b32.xlu0 %v5286, 125
    %v5614 = vpop.permute.xlu0 %5613
    %5615 = vrot.lane.b32.xlu0 %v5285, 125
    %v5616 = vpop.permute.xlu0 %5615
    %5617 = vrot.lane.b32.xlu0 %v5289, 125
    %v5618 = vpop.permute.xlu0 %5617
    %5619 = vrot.lane.b32.xlu0 %v5288, 125
    %v5620 = vpop.permute.xlu0 %5619
    %5621 = vrot.lane.b32.xlu0 %v5292, 125
    %v5622 = vpop.permute.xlu0 %5621
    %5623 = vrot.lane.b32.xlu0 %v5291, 125
    %v5624 = vpop.permute.xlu0 %5623
    %5625 = vrot.lane.b32.xlu0 %v5295, 125
    %v5626 = vpop.permute.xlu0 %5625
    %5627 = vrot.lane.b32.xlu0 %v5294, 125
    %v5628 = vpop.permute.xlu0 %5627
    %5629 = vrot.lane.b32.xlu0 %v5298, 125
    %v5630 = vpop.permute.xlu0 %5629
    %5631 = vrot.lane.b32.xlu0 %v5297, 125
    %v5632 = vpop.permute.xlu0 %5631
    %5633 = vrot.lane.b32.xlu0 %v5301, 125
    %v5634 = vpop.permute.xlu0 %5633
    %5635 = vrot.lane.b32.xlu0 %v5300, 125
    %v5636 = vpop.permute.xlu0 %5635
    %5637 = vrot.lane.b32.xlu0 %v5304, 125
    %v5638 = vpop.permute.xlu0 %5637
    %5639 = vrot.lane.b32.xlu0 %v5303, 125
    %v5640 = vpop.permute.xlu0 %5639
    %5641 = vrot.lane.b32.xlu0 %v5307, 125
    %v5642 = vpop.permute.xlu0 %5641
    %5643 = vrot.lane.b32.xlu0 %v5306, 125
    %v5644 = vpop.permute.xlu0 %5643
    %5645 = vrot.lane.b32.xlu0 %v5310, 125
    %v5646 = vpop.permute.xlu0 %5645
    %5647 = vrot.lane.b32.xlu0 %v5309, 125
    %v5648 = vpop.permute.xlu0 %5647
    %5649 = vrot.lane.b32.xlu0 %v5313, 125
    %v5650 = vpop.permute.xlu0 %5649
    %5651 = vrot.lane.b32.xlu0 %v5312, 125
    %v5652 = vpop.permute.xlu0 %5651
    %5653 = vrot.lane.b32.xlu0 %v5316, 125
    %v5654 = vpop.permute.xlu0 %5653
    %5655 = vrot.lane.b32.xlu0 %v5315, 125
    %v5656 = vpop.permute.xlu0 %5655
    %5657 = vrot.lane.b32.xlu0 %v5319, 125
    %v5658 = vpop.permute.xlu0 %5657
    %5659 = vrot.lane.b32.xlu0 %v5318, 125
    %v5660 = vpop.permute.xlu0 %5659
    %5661 = vrot.lane.b32.xlu0 %v5322, 125
    %v5662 = vpop.permute.xlu0 %5661
    %5663 = vrot.lane.b32.xlu0 %v5321, 125
    %v5664 = vpop.permute.xlu0 %5663
    %5665 = vrot.lane.b32.xlu0 %v5325, 125
    %v5666 = vpop.permute.xlu0 %5665
    %5667 = vrot.lane.b32.xlu0 %v5324, 125
    %v5668 = vpop.permute.xlu0 %5667
    %5669 = vrot.lane.b32.xlu0 %v5328, 125
    %v5670 = vpop.permute.xlu0 %5669
    %5671 = vrot.lane.b32.xlu0 %v5327, 125
    %v5672 = vpop.permute.xlu0 %5671
    %5673 = vrot.lane.b32.xlu0 %v5331, 125
    %v5674 = vpop.permute.xlu0 %5673
    %5675 = vrot.lane.b32.xlu0 %v5330, 125
    %v5676 = vpop.permute.xlu0 %5675
    %5677 = vrot.lane.b32.xlu0 %v5334, 125
    %v5678 = vpop.permute.xlu0 %5677
    %5679 = vrot.lane.b32.xlu0 %v5333, 125
    %v5680 = vpop.permute.xlu0 %5679
    %5681 = vrot.lane.b32.xlu0 %v5337, 125
    %v5682 = vpop.permute.xlu0 %5681
    %5683 = vrot.lane.b32.xlu0 %v5336, 125
    %v5684 = vpop.permute.xlu0 %5683
    %5685 = vrot.lane.b32.xlu0 %v5340, 125
    %v5686 = vpop.permute.xlu0 %5685
    %5687 = vrot.lane.b32.xlu0 %v5339, 125
    %v5688 = vpop.permute.xlu0 %5687
    %5689 = vrot.lane.b32.xlu0 %v5343, 125
    %v5690 = vpop.permute.xlu0 %5689
    %5691 = vrot.lane.b32.xlu0 %v5342, 125
    %v5692 = vpop.permute.xlu0 %5691
    %5693 = vrot.lane.b32.xlu0 %v5346, 125
    %v5694 = vpop.permute.xlu0 %5693
    %5695 = vrot.lane.b32.xlu0 %v5345, 125
    %v5696 = vpop.permute.xlu0 %5695
    %5697 = vrot.lane.b32.xlu0 %v5349, 125
    %v5698 = vpop.permute.xlu0 %5697
    %5699 = vrot.lane.b32.xlu0 %v5348, 125
    %v5700 = vpop.permute.xlu0 %5699
    %5701 = vrot.lane.b32.xlu0 %v5352, 125
    %v5702 = vpop.permute.xlu0 %5701
    %5703 = vrot.lane.b32.xlu0 %v5351, 125
    %v5704 = vpop.permute.xlu0 %5703
    %5705 = vrot.lane.b32.xlu0 %v5355, 125
    %v5706 = vpop.permute.xlu0 %5705
    %5707 = vrot.lane.b32.xlu0 %v5354, 125
    %v5708 = vpop.permute.xlu0 %5707
    %5709 = vrot.lane.b32.xlu0 %v5358, 125
    %v5710 = vpop.permute.xlu0 %5709
    %5711 = vrot.lane.b32.xlu0 %v5357, 125
    %v5712 = vpop.permute.xlu0 %5711
    %5713 = vrot.lane.b32.xlu0 %v5361, 125
    %v5714 = vpop.permute.xlu0 %5713
    %5715 = vrot.lane.b32.xlu0 %v5360, 125
    %v5716 = vpop.permute.xlu0 %5715
    %5717 = vrot.lane.b32.xlu0 %v5364, 125
    %v5718 = vpop.permute.xlu0 %5717
    %5719 = vrot.lane.b32.xlu0 %v5363, 125
    %v5720 = vpop.permute.xlu0 %5719
    %5721 = vrot.lane.b32.xlu0 %v5367, 125
    %v5722 = vpop.permute.xlu0 %5721
    %5723 = vrot.lane.b32.xlu0 %v5366, 125
    %v5724 = vpop.permute.xlu0 %5723
    %5725 = vrot.lane.b32.xlu0 %v5370, 125
    %v5726 = vpop.permute.xlu0 %5725
    %5727 = vrot.lane.b32.xlu0 %v5369, 125
    %v5728 = vpop.permute.xlu0 %5727
    %5729 = vrot.lane.b32.xlu0 %v5373, 125
    %v5730 = vpop.permute.xlu0 %5729
    %5731 = vrot.lane.b32.xlu0 %v5372, 125
    %v5732 = vpop.permute.xlu0 %5731
    %5733 = vrot.lane.b32.xlu0 %v5376, 125
    %v5734 = vpop.permute.xlu0 %5733
    %5735 = vrot.lane.b32.xlu0 %v5375, 125
    %v5736 = vpop.permute.xlu0 %5735
    %5737 = vrot.lane.b32.xlu0 %v5379, 125
    %v5738 = vpop.permute.xlu0 %5737
    %5739 = vrot.lane.b32.xlu0 %v5378, 125
    %v5740 = vpop.permute.xlu0 %5739
    %5741 = vrot.lane.b32.xlu0 %v5382, 125
    %v5742 = vpop.permute.xlu0 %5741
    %5743 = vrot.lane.b32.xlu0 %v5381, 125
    %v5744 = vpop.permute.xlu0 %5743
    %5745 = vrot.lane.b32.xlu0 %v5385, 125
    %v5746 = vpop.permute.xlu0 %5745
    %5747 = vrot.lane.b32.xlu0 %v5384, 125
    %v5748 = vpop.permute.xlu0 %5747
    %5749 = vrot.lane.b32.xlu0 %v5388, 125
    %v5750 = vpop.permute.xlu0 %5749
    %5751 = vrot.lane.b32.xlu0 %v5387, 125
    %v5752 = vpop.permute.xlu0 %5751
    %5753 = vrot.lane.b32.xlu0 %v5391, 125
    %v5754 = vpop.permute.xlu0 %5753
    %5755 = vrot.lane.b32.xlu0 %v5390, 125
    %v5756 = vpop.permute.xlu0 %5755
    %5757 = vrot.lane.b32.xlu0 %v5394, 125
    %v5758 = vpop.permute.xlu0 %5757
    %5759 = vrot.lane.b32.xlu0 %v5393, 125
    %v5760 = vpop.permute.xlu0 %5759
    %5761 = vrot.lane.b32.xlu0 %v5397, 125
    %v5762 = vpop.permute.xlu0 %5761
    %5763 = vrot.lane.b32.xlu0 %v5396, 125
    %v5764 = vpop.permute.xlu0 %5763
    %5765 = vrot.lane.b32.xlu0 %v5400, 125
    %v5766 = vpop.permute.xlu0 %5765
    %5767 = vrot.lane.b32.xlu0 %v5399, 125
    %v5768 = vpop.permute.xlu0 %5767
    %5769 = vrot.lane.b32.xlu0 %v5403, 125
    %v5770 = vpop.permute.xlu0 %5769
    %5771 = vrot.lane.b32.xlu0 %v5402, 125
    %v5772 = vpop.permute.xlu0 %5771
    %5773 = vrot.lane.b32.xlu0 %v5406, 125
    %v5774 = vpop.permute.xlu0 %5773
    %5775 = vrot.lane.b32.xlu0 %v5405, 125
    %v5776 = vpop.permute.xlu0 %5775
    %5777 = vrot.lane.b32.xlu0 %v5409, 125
    %v5778 = vpop.permute.xlu0 %5777
    %5779 = vrot.lane.b32.xlu0 %v5408, 125
    %v5780 = vpop.permute.xlu0 %5779
    %5781 = vrot.lane.b32.xlu0 %v5412, 125
    %v5782 = vpop.permute.xlu0 %5781
    %5783 = vrot.lane.b32.xlu0 %v5411, 125
    %v5784 = vpop.permute.xlu0 %5783
    %5785 = vrot.lane.b32.xlu0 %v5415, 125
    %v5786 = vpop.permute.xlu0 %5785
    %5787 = vrot.lane.b32.xlu0 %v5414, 125
    %v5788 = vpop.permute.xlu0 %5787
    %5789 = vrot.lane.b32.xlu0 %v5418, 125
    %v5790 = vpop.permute.xlu0 %5789
    %5791 = vrot.lane.b32.xlu0 %v5417, 125
    %v5792 = vpop.permute.xlu0 %5791
    %5793 = vrot.lane.b32.xlu0 %v5421, 125
    %v5794 = vpop.permute.xlu0 %5793
    %5795 = vrot.lane.b32.xlu0 %v5420, 125
    %v5796 = vpop.permute.xlu0 %5795
    %5797 = vrot.lane.b32.xlu0 %v5424, 125
    %v5798 = vpop.permute.xlu0 %5797
    %5799 = vrot.lane.b32.xlu0 %v5423, 125
    %v5800 = vpop.permute.xlu0 %5799
    %5801 = vrot.lane.b32.xlu0 %v5427, 125
    %v5802 = vpop.permute.xlu0 %5801
    %5803 = vrot.lane.b32.xlu0 %v5426, 125
    %v5804 = vpop.permute.xlu0 %5803
    %5805 = vrot.lane.b32.xlu0 %v5430, 125
    %v5806 = vpop.permute.xlu0 %5805
    %5807 = vrot.lane.b32.xlu0 %v5429, 125
    %v5808 = vpop.permute.xlu0 %5807
    %5809 = vrot.lane.b32.xlu0 %v5433, 125
    %v5810 = vpop.permute.xlu0 %5809
    %5811 = vrot.lane.b32.xlu0 %v5432, 125
    %v5812 = vpop.permute.xlu0 %5811
    %5813 = vrot.lane.b32.xlu0 %v5436, 125
    %v5814 = vpop.permute.xlu0 %5813
    %5815 = vrot.lane.b32.xlu0 %v5435, 125
    %v5816 = vpop.permute.xlu0 %5815
    %5817 = vrot.lane.b32.xlu0 %v5439, 125
    %v5818 = vpop.permute.xlu0 %5817
    %5819 = vrot.lane.b32.xlu0 %v5438, 125
    %v5820 = vpop.permute.xlu0 %5819
    %5821 = vrot.lane.b32.xlu0 %v5442, 125
    %v5822 = vpop.permute.xlu0 %5821
    %5823 = vrot.lane.b32.xlu0 %v5441, 125
    %v5824 = vpop.permute.xlu0 %5823
    %5825 = vrot.lane.b32.xlu0 %v5445, 125
    %v5826 = vpop.permute.xlu0 %5825
    %5827 = vrot.lane.b32.xlu0 %v5444, 125
    %v5828 = vpop.permute.xlu0 %5827
    %5829 = vrot.lane.b32.xlu0 %v5448, 125
    %v5830 = vpop.permute.xlu0 %5829
    %5831 = vrot.lane.b32.xlu0 %v5447, 125
    %v5832 = vpop.permute.xlu0 %5831
    %5833 = vrot.lane.b32.xlu0 %v5451, 125
    %v5834 = vpop.permute.xlu0 %5833
    %5835 = vrot.lane.b32.xlu0 %v5450, 125
    %v5836 = vpop.permute.xlu0 %5835
    %5837 = vrot.lane.b32.xlu0 %v5454, 125
    %v5838 = vpop.permute.xlu0 %5837
    %5839 = vrot.lane.b32.xlu0 %v5453, 125
    %v5840 = vpop.permute.xlu0 %5839
    %5841 = vrot.lane.b32.xlu0 %v5457, 125
    %v5842 = vpop.permute.xlu0 %5841
    %5843 = vrot.lane.b32.xlu0 %v5456, 125
    %v5844 = vpop.permute.xlu0 %5843
    %5845 = vrot.lane.b32.xlu0 %v5460, 125
    %v5846 = vpop.permute.xlu0 %5845
    %5847 = vrot.lane.b32.xlu0 %v5459, 125
    %v5848 = vpop.permute.xlu0 %5847
    %5849 = vrot.lane.b32.xlu0 %v5463, 125
    %v5850 = vpop.permute.xlu0 %5849
    %5851 = vrot.lane.b32.xlu0 %v5462, 125
    %v5852 = vpop.permute.xlu0 %5851
    %5853 = vrot.lane.b32.xlu0 %v5466, 125
    %v5854 = vpop.permute.xlu0 %5853
    %5855 = vrot.lane.b32.xlu0 %v5465, 125
    %v5856 = vpop.permute.xlu0 %5855
    %5857 = vrot.lane.b32.xlu0 %v5469, 125
    %v5858 = vpop.permute.xlu0 %5857
    %5859 = vrot.lane.b32.xlu0 %v5468, 125
    %v5860 = vpop.permute.xlu0 %5859
    %5861 = vrot.lane.b32.xlu0 %v5472, 125
    %v5862 = vpop.permute.xlu0 %5861
    %5863 = vrot.lane.b32.xlu0 %v5471, 125
    %v5864 = vpop.permute.xlu0 %5863
    %5865 = vrot.lane.b32.xlu0 %v5475, 125
    %v5866 = vpop.permute.xlu0 %5865
    %5867 = vrot.lane.b32.xlu0 %v5474, 125
    %v5868 = vpop.permute.xlu0 %5867
    %5869 = vrot.lane.b32.xlu0 %v5478, 125
    %v5870 = vpop.permute.xlu0 %5869
    %5871 = vrot.lane.b32.xlu0 %v5477, 125
    %v5872 = vpop.permute.xlu0 %5871
    %5873 = vrot.lane.b32.xlu0 %v5481, 125
    %v5874 = vpop.permute.xlu0 %5873
    %5875 = vrot.lane.b32.xlu0 %v5480, 125
    %v5876 = vpop.permute.xlu0 %5875
    %5877 = vrot.lane.b32.xlu0 %v5484, 125
    %v5878 = vpop.permute.xlu0 %5877
    %5879 = vrot.lane.b32.xlu0 %v5483, 125
    %v5880 = vpop.permute.xlu0 %5879
    %5881 = vrot.lane.b32.xlu0 %v5487, 125
    %v5882 = vpop.permute.xlu0 %5881
    %5883 = vrot.lane.b32.xlu0 %v5486, 125
    %v5884 = vpop.permute.xlu0 %5883
    %5885 = vrot.lane.b32.xlu0 %v5490, 125
    %v5886 = vpop.permute.xlu0 %5885
    %5887 = vrot.lane.b32.xlu0 %v5489, 125
    %v5888 = vpop.permute.xlu0 %5887
    %5889 = vrot.lane.b32.xlu0 %v5493, 125
    %v5890 = vpop.permute.xlu0 %5889
    %5891 = vrot.lane.b32.xlu0 %v5492, 125
    %v5892 = vpop.permute.xlu0 %5891
    %5893 = vrot.lane.b32.xlu0 %v5496, 125
    %v5894 = vpop.permute.xlu0 %5893
    %5895 = vrot.lane.b32.xlu0 %v5495, 125
    %v5896 = vpop.permute.xlu0 %5895
    %5897 = vrot.lane.b32.xlu0 %v5499, 125
    %v5898 = vpop.permute.xlu0 %5897
    %5899 = vrot.lane.b32.xlu0 %v5498, 125
    %v5900 = vpop.permute.xlu0 %5899
    %5901 = vrot.lane.b32.xlu0 %v5502, 125
    %v5902 = vpop.permute.xlu0 %5901
    %5903 = vrot.lane.b32.xlu0 %v5501, 125
    %v5904 = vpop.permute.xlu0 %5903
    %5905 = vrot.lane.b32.xlu0 %v5505, 125
    %v5906 = vpop.permute.xlu0 %5905
    %5907 = vrot.lane.b32.xlu0 %v5504, 125
    %v5908 = vpop.permute.xlu0 %5907
    %5909 = vrot.lane.b32.xlu0 %v5508, 125
    %v5910 = vpop.permute.xlu0 %5909
    %5911 = vrot.lane.b32.xlu0 %v5507, 125
    %v5912 = vpop.permute.xlu0 %5911
    %5913 = vrot.lane.b32.xlu0 %v5511, 125
    %v5914 = vpop.permute.xlu0 %5913
    %5915 = vrot.lane.b32.xlu0 %v5510, 125
    %v5916 = vpop.permute.xlu0 %5915
    %5917 = vrot.lane.b32.xlu0 %v5514, 125
    %v5918 = vpop.permute.xlu0 %5917
    %5919 = vrot.lane.b32.xlu0 %v5513, 125
    %v5920 = vpop.permute.xlu0 %5919
    %5921 = vrot.lane.b32.xlu0 %v5517, 125
    %v5922 = vpop.permute.xlu0 %5921
    %5923 = vrot.lane.b32.xlu0 %v5516, 125
    %v5924 = vpop.permute.xlu0 %5923
    %5925 = vrot.lane.b32.xlu0 %v5520, 125
    %v5926 = vpop.permute.xlu0 %5925
    %5927 = vrot.lane.b32.xlu0 %v5519, 125
    %v5928 = vpop.permute.xlu0 %5927
    %5929 = vrot.lane.b32.xlu0 %v5523, 125
    %v5930 = vpop.permute.xlu0 %5929
    %5931 = vrot.lane.b32.xlu0 %v5522, 125
    %v5932 = vpop.permute.xlu0 %5931
    %5933 = vrot.lane.b32.xlu0 %v5526, 125
    %v5934 = vpop.permute.xlu0 %5933
    %5935 = vrot.lane.b32.xlu0 %v5525, 125
    %v5936 = vpop.permute.xlu0 %5935
    %5937 = vrot.lane.b32.xlu0 %v5529, 125
    %v5938 = vpop.permute.xlu0 %5937
    %5939 = vrot.lane.b32.xlu0 %v5528, 125
    %v5940 = vpop.permute.xlu0 %5939
    %5941 = vrot.lane.b32.xlu0 %v5532, 125
    %v5942 = vpop.permute.xlu0 %5941
    %5943 = vrot.lane.b32.xlu0 %v5531, 125
    %v5944 = vpop.permute.xlu0 %5943
    %5945 = vrot.lane.b32.xlu0 %v5535, 125
    %v5946 = vpop.permute.xlu0 %5945
    %5947 = vrot.lane.b32.xlu0 %v5534, 125
    %v5948 = vpop.permute.xlu0 %5947
    %5949 = vrot.lane.b32.xlu0 %v5538, 125
    %v5950 = vpop.permute.xlu0 %5949
    %5951 = vrot.lane.b32.xlu0 %v5537, 125
    %v5952 = vpop.permute.xlu0 %5951
    %5953 = vrot.lane.b32.xlu0 %v5541, 125
    %v5954 = vpop.permute.xlu0 %5953
    %5955 = vrot.lane.b32.xlu0 %v5540, 125
    %v5956 = vpop.permute.xlu0 %5955
    %5957 = vrot.lane.b32.xlu0 %v5544, 125
    %v5958 = vpop.permute.xlu0 %5957
    %5959 = vrot.lane.b32.xlu0 %v5543, 125
    %v5960 = vpop.permute.xlu0 %5959
    %v6169 = vadd.f32 %v4086, %v5546
    %v6170 = vadd.f32 %v4087, %v5548
    %v6171 = vadd.f32 %v4088, %v5550
    %v6172 = vadd.f32 %v4089, %v5552
    %v6173 = vadd.f32 %v4090, %v5554
    %v6174 = vadd.f32 %v4091, %v5556
    %v6175 = vadd.f32 %v4092, %v5558
    %v6176 = vadd.f32 %v4093, %v5560
    %v6177 = vadd.f32 %v4094, %v5562
    %v6178 = vadd.f32 %v4095, %v5564
    %v6179 = vadd.f32 %v4096, %v5566
    %v6180 = vadd.f32 %v4097, %v5568
    %v6181 = vadd.f32 %v4098, %v5570
    %v6182 = vadd.f32 %v4099, %v5572
    %v6183 = vadd.f32 %v4100, %v5574
    %v6184 = vadd.f32 %v4101, %v5576
    %v6185 = vadd.f32 %v4102, %v5578
    %v6186 = vadd.f32 %v4103, %v5580
    %v6187 = vadd.f32 %v4104, %v5582
    %v6188 = vadd.f32 %v4105, %v5584
    %v6189 = vadd.f32 %v4106, %v5586
    %v6190 = vadd.f32 %v4107, %v5588
    %v6191 = vadd.f32 %v4108, %v5590
    %v6192 = vadd.f32 %v4109, %v5592
    %v6193 = vadd.f32 %v4110, %v5594
    %v6194 = vadd.f32 %v4111, %v5596
    %v6195 = vadd.f32 %v4112, %v5598
    %v6196 = vadd.f32 %v4113, %v5600
    %v6197 = vadd.f32 %v4114, %v5602
    %v6198 = vadd.f32 %v4115, %v5604
    %v6199 = vadd.f32 %v4116, %v5606
    %v6200 = vadd.f32 %v4117, %v5608
    %v6201 = vadd.f32 %v4118, %v5610
    %v6202 = vadd.f32 %v4119, %v5612
    %v6203 = vadd.f32 %v4120, %v5614
    %v6204 = vadd.f32 %v4121, %v5616
    %v6205 = vadd.f32 %v4122, %v5618
    %v6206 = vadd.f32 %v4123, %v5620
    %v6207 = vadd.f32 %v4124, %v5622
    %v6208 = vadd.f32 %v4125, %v5624
    %v6209 = vadd.f32 %v4126, %v5626
    %v6210 = vadd.f32 %v4127, %v5628
    %v6211 = vadd.f32 %v4128, %v5630
    %v6212 = vadd.f32 %v4129, %v5632
    %v6213 = vadd.f32 %v4130, %v5634
    %v6214 = vadd.f32 %v4131, %v5636
    %v6215 = vadd.f32 %v4132, %v5638
    %v6216 = vadd.f32 %v4133, %v5640
    %v6217 = vadd.f32 %v4134, %v5642
    %v6218 = vadd.f32 %v4135, %v5644
    %v6219 = vadd.f32 %v4136, %v5646
    %v6220 = vadd.f32 %v4137, %v5648
    %v6221 = vadd.f32 %v4138, %v5650
    %v6222 = vadd.f32 %v4139, %v5652
    %v6223 = vadd.f32 %v4140, %v5654
    %v6224 = vadd.f32 %v4141, %v5656
    %v6225 = vadd.f32 %v4142, %v5658
    %v6226 = vadd.f32 %v4143, %v5660
    %v6227 = vadd.f32 %v4144, %v5662
    %v6228 = vadd.f32 %v4145, %v5664
    %v6229 = vadd.f32 %v4146, %v5666
    %v6230 = vadd.f32 %v4147, %v5668
    %v6231 = vadd.f32 %v4148, %v5670
    %v6232 = vadd.f32 %v4149, %v5672
    %v6233 = vadd.f32 %v4150, %v5674
    %v6234 = vadd.f32 %v4151, %v5676
    %v6235 = vadd.f32 %v4152, %v5678
    %v6236 = vadd.f32 %v4153, %v5680
    %v6237 = vadd.f32 %v4154, %v5682
    %v6238 = vadd.f32 %v4155, %v5684
    %v6239 = vadd.f32 %v4156, %v5686
    %v6240 = vadd.f32 %v4157, %v5688
    %v6241 = vadd.f32 %v4158, %v5690
    %v6242 = vadd.f32 %v4159, %v5692
    %v6243 = vadd.f32 %v4160, %v5694
    %v6244 = vadd.f32 %v4161, %v5696
    %v6245 = vadd.f32 %v4162, %v5698
    %v6246 = vadd.f32 %v4163, %v5700
    %v6247 = vadd.f32 %v4164, %v5702
    %v6248 = vadd.f32 %v4165, %v5704
    %v6249 = vadd.f32 %v4166, %v5706
    %v6250 = vadd.f32 %v4167, %v5708
    %v6251 = vadd.f32 %v4168, %v5710
    %v6252 = vadd.f32 %v4169, %v5712
    %v6253 = vadd.f32 %v4170, %v5714
    %v6254 = vadd.f32 %v4171, %v5716
    %v6255 = vadd.f32 %v4172, %v5718
    %v6256 = vadd.f32 %v4173, %v5720
    %v6257 = vadd.f32 %v4174, %v5722
    %v6258 = vadd.f32 %v4175, %v5724
    %v6259 = vadd.f32 %v4176, %v5726
    %v6260 = vadd.f32 %v4177, %v5728
    %v6261 = vadd.f32 %v4178, %v5730
    %v6262 = vadd.f32 %v4179, %v5732
    %v6263 = vadd.f32 %v4180, %v5734
    %v6264 = vadd.f32 %v4181, %v5736
    %v6265 = vadd.f32 %v4182, %v5738
    %v6266 = vadd.f32 %v4183, %v5740
    %v6267 = vadd.f32 %v4184, %v5742
    %v6268 = vadd.f32 %v4185, %v5744
    %v6269 = vadd.f32 %v4186, %v5746
    %v6270 = vadd.f32 %v4187, %v5748
    %v6271 = vadd.f32 %v4188, %v5750
    %v6272 = vadd.f32 %v4189, %v5752
    %v6273 = vadd.f32 %v4190, %v5754
    %v6274 = vadd.f32 %v4191, %v5756
    %v6275 = vadd.f32 %v4192, %v5758
    %v6276 = vadd.f32 %v4193, %v5760
    %v6277 = vadd.f32 %v4194, %v5762
    %v6278 = vadd.f32 %v4195, %v5764
    %v6279 = vadd.f32 %v4196, %v5766
    %v6280 = vadd.f32 %v4197, %v5768
    %v6281 = vadd.f32 %v4198, %v5770
    %v6282 = vadd.f32 %v4199, %v5772
    %v6283 = vadd.f32 %v4200, %v5774
    %v6284 = vadd.f32 %v4201, %v5776
    %v6285 = vadd.f32 %v4202, %v5778
    %v6286 = vadd.f32 %v4203, %v5780
    %v6287 = vadd.f32 %v4204, %v5782
    %v6288 = vadd.f32 %v4205, %v5784
    %v6289 = vadd.f32 %v4206, %v5786
    %v6290 = vadd.f32 %v4207, %v5788
    %v6291 = vadd.f32 %v4208, %v5790
    %v6292 = vadd.f32 %v4209, %v5792
    %v6293 = vadd.f32 %v4210, %v5794
    %v6294 = vadd.f32 %v4211, %v5796
    %v6295 = vadd.f32 %v4212, %v5798
    %v6296 = vadd.f32 %v4213, %v5800
    %v6297 = vadd.f32 %v4214, %v5802
    %v6298 = vadd.f32 %v4215, %v5804
    %v6299 = vadd.f32 %v4216, %v5806
    %v6300 = vadd.f32 %v4217, %v5808
    %v6301 = vadd.f32 %v4218, %v5810
    %v6302 = vadd.f32 %v4219, %v5812
    %v6303 = vadd.f32 %v4220, %v5814
    %v6304 = vadd.f32 %v4221, %v5816
    %v6305 = vadd.f32 %v4222, %v5818
    %v6306 = vadd.f32 %v4223, %v5820
    %v6307 = vadd.f32 %v4224, %v5822
    %v6308 = vadd.f32 %v4225, %v5824
    %v6309 = vadd.f32 %v4226, %v5826
    %v6310 = vadd.f32 %v4227, %v5828
    %v6311 = vadd.f32 %v4228, %v5830
    %v6312 = vadd.f32 %v4229, %v5832
    %v6313 = vadd.f32 %v4230, %v5834
    %v6314 = vadd.f32 %v4231, %v5836
    %v6315 = vadd.f32 %v4232, %v5838
    %v6316 = vadd.f32 %v4233, %v5840
    %v6317 = vadd.f32 %v4234, %v5842
    %v6318 = vadd.f32 %v4235, %v5844
    %v6319 = vadd.f32 %v4236, %v5846
    %v6320 = vadd.f32 %v4237, %v5848
    %v6321 = vadd.f32 %v4238, %v5850
    %v6322 = vadd.f32 %v4239, %v5852
    %v6323 = vadd.f32 %v4240, %v5854
    %v6324 = vadd.f32 %v4241, %v5856
    %v6325 = vadd.f32 %v4242, %v5858
    %v6326 = vadd.f32 %v4243, %v5860
    %v6327 = vadd.f32 %v4244, %v5862
    %v6328 = vadd.f32 %v4245, %v5864
    %v6329 = vadd.f32 %v4246, %v5866
    %v6330 = vadd.f32 %v4247, %v5868
    %v6331 = vadd.f32 %v4248, %v5870
    %v6332 = vadd.f32 %v4249, %v5872
    %v6333 = vadd.f32 %v4250, %v5874
    %v6334 = vadd.f32 %v4251, %v5876
    %v6335 = vadd.f32 %v4252, %v5878
    %v6336 = vadd.f32 %v4253, %v5880
    %v6337 = vadd.f32 %v4254, %v5882
    %v6338 = vadd.f32 %v4255, %v5884
    %v6339 = vadd.f32 %v4256, %v5886
    %v6340 = vadd.f32 %v4257, %v5888
    %v6341 = vadd.f32 %v4258, %v5890
    %v6342 = vadd.f32 %v4259, %v5892
    %v6343 = vadd.f32 %v4260, %v5894
    %v6344 = vadd.f32 %v4261, %v5896
    %v6345 = vadd.f32 %v4262, %v5898
    %v6346 = vadd.f32 %v4263, %v5900
    %v6347 = vadd.f32 %v4264, %v5902
    %v6348 = vadd.f32 %v4265, %v5904
    %v6349 = vadd.f32 %v4266, %v5906
    %v6350 = vadd.f32 %v4267, %v5908
    %v6351 = vadd.f32 %v4268, %v5910
    %v6352 = vadd.f32 %v4269, %v5912
    %v6353 = vadd.f32 %v4270, %v5914
    %v6354 = vadd.f32 %v4271, %v5916
    %v6355 = vadd.f32 %v4272, %v5918
    %v6356 = vadd.f32 %v4273, %v5920
    %v6357 = vadd.f32 %v4274, %v5922
    %v6358 = vadd.f32 %v4275, %v5924
    %v6359 = vadd.f32 %v4276, %v5926
    %v6360 = vadd.f32 %v4277, %v5928
    %v6361 = vadd.f32 %v4278, %v5930
    %v6362 = vadd.f32 %v4279, %v5932
    %v6363 = vadd.f32 %v4280, %v5934
    %v6364 = vadd.f32 %v4281, %v5936
    %v6365 = vadd.f32 %v4282, %v5938
    %v6366 = vadd.f32 %v4283, %v5940
    %v6367 = vadd.f32 %v4284, %v5942
    %v6368 = vadd.f32 %v4285, %v5944
    %v6369 = vadd.f32 %v4286, %v5946
    %v6370 = vadd.f32 %v4287, %v5948
    %v6371 = vadd.f32 %v4288, %v5950
    %v6372 = vadd.f32 %v4289, %v5952
    %v6373 = vadd.f32 %v4290, %v5954
    %v6374 = vadd.f32 %v4291, %v5956
    %v6375 = vadd.f32 %v4292, %v5958
    %v6376 = vadd.f32 %v4293, %v5960
    %vm6377 = vcmask 31768
    %v6378 = vsel %vm6377, %v6169, -inf
    %vm6379 = vcmask 28696
    %v6380 = vsel %vm6379, %v6170, -inf
    %v6381 = vmax.f32 %v6378, %v6380
    %v6382 = vrot.slane %v6381, 4
    %v6383 = vmax.f32 %v6381, %v6382
    %v6384 = vrot.slane %v6383, 2
    %v6385 = vmax.f32 %v6383, %v6384
    %v6386 = vrot.slane %v6385, 1
    %v6387 = vmax.f32 %v6385, %v6386
    %v6388 = vsel %vm6377, %v6171, -inf
    %v6389 = vsel %vm6379, %v6172, -inf
    %v6390 = vmax.f32 %v6388, %v6389
    %v6391 = vrot.slane %v6390, 4
    %v6392 = vmax.f32 %v6390, %v6391
    %v6393 = vrot.slane %v6392, 2
    %v6394 = vmax.f32 %v6392, %v6393
    %v6395 = vrot.slane %v6394, 1
    %v6396 = vmax.f32 %v6394, %v6395
    %v6397 = vsel %vm6377, %v6173, -inf
    %v6398 = vsel %vm6379, %v6174, -inf
    %v6399 = vmax.f32 %v6397, %v6398
    %v6400 = vrot.slane %v6399, 4
    %v6401 = vmax.f32 %v6399, %v6400
    %v6402 = vrot.slane %v6401, 2
    %v6403 = vmax.f32 %v6401, %v6402
    %v6404 = vrot.slane %v6403, 1
    %v6405 = vmax.f32 %v6403, %v6404
    %v6406 = vsel %vm6377, %v6175, -inf
    %v6407 = vsel %vm6379, %v6176, -inf
    %v6408 = vmax.f32 %v6406, %v6407
    %v6409 = vrot.slane %v6408, 4
    %v6410 = vmax.f32 %v6408, %v6409
    %v6411 = vrot.slane %v6410, 2
    %v6412 = vmax.f32 %v6410, %v6411
    %v6413 = vrot.slane %v6412, 1
    %v6414 = vmax.f32 %v6412, %v6413
    %v6415 = vsel %vm6377, %v6177, -inf
    %v6416 = vsel %vm6379, %v6178, -inf
    %v6417 = vmax.f32 %v6415, %v6416
    %v6418 = vrot.slane %v6417, 4
    %v6419 = vmax.f32 %v6417, %v6418
    %v6420 = vrot.slane %v6419, 2
    %v6421 = vmax.f32 %v6419, %v6420
    %v6422 = vrot.slane %v6421, 1
    %v6423 = vmax.f32 %v6421, %v6422
    %v6424 = vsel %vm6377, %v6179, -inf
    %v6425 = vsel %vm6379, %v6180, -inf
    %v6426 = vmax.f32 %v6424, %v6425
    %v6427 = vrot.slane %v6426, 4
    %v6428 = vmax.f32 %v6426, %v6427
    %v6429 = vrot.slane %v6428, 2
    %v6430 = vmax.f32 %v6428, %v6429
    %v6431 = vrot.slane %v6430, 1
    %v6432 = vmax.f32 %v6430, %v6431
    %v6433 = vsel %vm6377, %v6181, -inf
    %v6434 = vsel %vm6379, %v6182, -inf
    %v6435 = vmax.f32 %v6433, %v6434
    %v6436 = vrot.slane %v6435, 4
    %v6437 = vmax.f32 %v6435, %v6436
    %v6438 = vrot.slane %v6437, 2
    %v6439 = vmax.f32 %v6437, %v6438
    %v6440 = vrot.slane %v6439, 1
    %v6441 = vmax.f32 %v6439, %v6440
    %v6442 = vsel %vm6377, %v6183, -inf
    %v6443 = vsel %vm6379, %v6184, -inf
    %v6444 = vmax.f32 %v6442, %v6443
    %v6445 = vrot.slane %v6444, 4
    %v6446 = vmax.f32 %v6444, %v6445
    %v6447 = vrot.slane %v6446, 2
    %v6448 = vmax.f32 %v6446, %v6447
    %v6449 = vrot.slane %v6448, 1
    %v6450 = vmax.f32 %v6448, %v6449
    %v6451 = vsel %vm6377, %v6185, -inf
    %v6452 = vsel %vm6379, %v6186, -inf
    %v6453 = vmax.f32 %v6451, %v6452
    %v6454 = vrot.slane %v6453, 4
    %v6455 = vmax.f32 %v6453, %v6454
    %v6456 = vrot.slane %v6455, 2
    %v6457 = vmax.f32 %v6455, %v6456
    %v6458 = vrot.slane %v6457, 1
    %v6459 = vmax.f32 %v6457, %v6458
    %v6460 = vsel %vm6377, %v6187, -inf
    %v6461 = vsel %vm6379, %v6188, -inf
    %v6462 = vmax.f32 %v6460, %v6461
    %v6463 = vrot.slane %v6462, 4
    %v6464 = vmax.f32 %v6462, %v6463
    %v6465 = vrot.slane %v6464, 2
    %v6466 = vmax.f32 %v6464, %v6465
    %v6467 = vrot.slane %v6466, 1
    %v6468 = vmax.f32 %v6466, %v6467
    %v6469 = vsel %vm6377, %v6189, -inf
    %v6470 = vsel %vm6379, %v6190, -inf
    %v6471 = vmax.f32 %v6469, %v6470
    %v6472 = vrot.slane %v6471, 4
    %v6473 = vmax.f32 %v6471, %v6472
    %v6474 = vrot.slane %v6473, 2
    %v6475 = vmax.f32 %v6473, %v6474
    %v6476 = vrot.slane %v6475, 1
    %v6477 = vmax.f32 %v6475, %v6476
    %v6478 = vsel %vm6377, %v6191, -inf
    %v6479 = vsel %vm6379, %v6192, -inf
    %v6480 = vmax.f32 %v6478, %v6479
    %v6481 = vrot.slane %v6480, 4
    %v6482 = vmax.f32 %v6480, %v6481
    %v6483 = vrot.slane %v6482, 2
    %v6484 = vmax.f32 %v6482, %v6483
    %v6485 = vrot.slane %v6484, 1
    %v6486 = vmax.f32 %v6484, %v6485
    %v6487 = vsel %vm6377, %v6193, -inf
    %v6488 = vsel %vm6379, %v6194, -inf
    %v6489 = vmax.f32 %v6487, %v6488
    %v6490 = vrot.slane %v6489, 4
    %v6491 = vmax.f32 %v6489, %v6490
    %v6492 = vrot.slane %v6491, 2
    %v6493 = vmax.f32 %v6491, %v6492
    %v6494 = vrot.slane %v6493, 1
    %v6495 = vmax.f32 %v6493, %v6494
    %v6496 = vsel %vm6377, %v6195, -inf
    %v6497 = vsel %vm6379, %v6196, -inf
    %v6498 = vmax.f32 %v6496, %v6497
    %v6499 = vrot.slane %v6498, 4
    %v6500 = vmax.f32 %v6498, %v6499
    %v6501 = vrot.slane %v6500, 2
    %v6502 = vmax.f32 %v6500, %v6501
    %v6503 = vrot.slane %v6502, 1
    %v6504 = vmax.f32 %v6502, %v6503
    %v6505 = vsel %vm6377, %v6197, -inf
    %v6506 = vsel %vm6379, %v6198, -inf
    %v6507 = vmax.f32 %v6505, %v6506
    %v6508 = vrot.slane %v6507, 4
    %v6509 = vmax.f32 %v6507, %v6508
    %v6510 = vrot.slane %v6509, 2
    %v6511 = vmax.f32 %v6509, %v6510
    %v6512 = vrot.slane %v6511, 1
    %v6513 = vmax.f32 %v6511, %v6512
    %v6514 = vsel %vm6377, %v6199, -inf
    %v6515 = vsel %vm6379, %v6200, -inf
    %v6516 = vmax.f32 %v6514, %v6515
    %v6517 = vrot.slane %v6516, 4
    %v6518 = vmax.f32 %v6516, %v6517
    %v6519 = vrot.slane %v6518, 2
    %v6520 = vmax.f32 %v6518, %v6519
    %v6521 = vrot.slane %v6520, 1
    %v6522 = vmax.f32 %v6520, %v6521
    %v6523 = vsel %vm6377, %v6201, -inf
    %v6524 = vsel %vm6379, %v6202, -inf
    %v6525 = vmax.f32 %v6523, %v6524
    %v6526 = vrot.slane %v6525, 4
    %v6527 = vmax.f32 %v6525, %v6526
    %v6528 = vrot.slane %v6527, 2
    %v6529 = vmax.f32 %v6527, %v6528
    %v6530 = vrot.slane %v6529, 1
    %v6531 = vmax.f32 %v6529, %v6530
    %v6532 = vsel %vm6377, %v6203, -inf
    %v6533 = vsel %vm6379, %v6204, -inf
    %v6534 = vmax.f32 %v6532, %v6533
    %v6535 = vrot.slane %v6534, 4
    %v6536 = vmax.f32 %v6534, %v6535
    %v6537 = vrot.slane %v6536, 2
    %v6538 = vmax.f32 %v6536, %v6537
    %v6539 = vrot.slane %v6538, 1
    %v6540 = vmax.f32 %v6538, %v6539
    %v6541 = vsel %vm6377, %v6205, -inf
    %v6542 = vsel %vm6379, %v6206, -inf
    %v6543 = vmax.f32 %v6541, %v6542
    %v6544 = vrot.slane %v6543, 4
    %v6545 = vmax.f32 %v6543, %v6544
    %v6546 = vrot.slane %v6545, 2
    %v6547 = vmax.f32 %v6545, %v6546
    %v6548 = vrot.slane %v6547, 1
    %v6549 = vmax.f32 %v6547, %v6548
    %v6550 = vsel %vm6377, %v6207, -inf
    %v6551 = vsel %vm6379, %v6208, -inf
    %v6552 = vmax.f32 %v6550, %v6551
    %v6553 = vrot.slane %v6552, 4
    %v6554 = vmax.f32 %v6552, %v6553
    %v6555 = vrot.slane %v6554, 2
    %v6556 = vmax.f32 %v6554, %v6555
    %v6557 = vrot.slane %v6556, 1
    %v6558 = vmax.f32 %v6556, %v6557
    %v6559 = vsel %vm6377, %v6209, -inf
    %v6560 = vsel %vm6379, %v6210, -inf
    %v6561 = vmax.f32 %v6559, %v6560
    %v6562 = vrot.slane %v6561, 4
    %v6563 = vmax.f32 %v6561, %v6562
    %v6564 = vrot.slane %v6563, 2
    %v6565 = vmax.f32 %v6563, %v6564
    %v6566 = vrot.slane %v6565, 1
    %v6567 = vmax.f32 %v6565, %v6566
    %v6568 = vsel %vm6377, %v6211, -inf
    %v6569 = vsel %vm6379, %v6212, -inf
    %v6570 = vmax.f32 %v6568, %v6569
    %v6571 = vrot.slane %v6570, 4
    %v6572 = vmax.f32 %v6570, %v6571
    %v6573 = vrot.slane %v6572, 2
    %v6574 = vmax.f32 %v6572, %v6573
    %v6575 = vrot.slane %v6574, 1
    %v6576 = vmax.f32 %v6574, %v6575
    %v6577 = vsel %vm6377, %v6213, -inf
    %v6578 = vsel %vm6379, %v6214, -inf
    %v6579 = vmax.f32 %v6577, %v6578
    %v6580 = vrot.slane %v6579, 4
    %v6581 = vmax.f32 %v6579, %v6580
    %v6582 = vrot.slane %v6581, 2
    %v6583 = vmax.f32 %v6581, %v6582
    %v6584 = vrot.slane %v6583, 1
    %v6585 = vmax.f32 %v6583, %v6584
    %v6586 = vsel %vm6377, %v6215, -inf
    %v6587 = vsel %vm6379, %v6216, -inf
    %v6588 = vmax.f32 %v6586, %v6587
    %v6589 = vrot.slane %v6588, 4
    %v6590 = vmax.f32 %v6588, %v6589
    %v6591 = vrot.slane %v6590, 2
    %v6592 = vmax.f32 %v6590, %v6591
    %v6593 = vrot.slane %v6592, 1
    %v6594 = vmax.f32 %v6592, %v6593
    %v6595 = vsel %vm6377, %v6217, -inf
    %v6596 = vsel %vm6379, %v6218, -inf
    %v6597 = vmax.f32 %v6595, %v6596
    %v6598 = vrot.slane %v6597, 4
    %v6599 = vmax.f32 %v6597, %v6598
    %v6600 = vrot.slane %v6599, 2
    %v6601 = vmax.f32 %v6599, %v6600
    %v6602 = vrot.slane %v6601, 1
    %v6603 = vmax.f32 %v6601, %v6602
    %v6604 = vsel %vm6377, %v6219, -inf
    %v6605 = vsel %vm6379, %v6220, -inf
    %v6606 = vmax.f32 %v6604, %v6605
    %v6607 = vrot.slane %v6606, 4
    %v6608 = vmax.f32 %v6606, %v6607
    %v6609 = vrot.slane %v6608, 2
    %v6610 = vmax.f32 %v6608, %v6609
    %v6611 = vrot.slane %v6610, 1
    %v6612 = vmax.f32 %v6610, %v6611
    %v6613 = vsel %vm6377, %v6221, -inf
    %v6614 = vsel %vm6379, %v6222, -inf
    %v6615 = vmax.f32 %v6613, %v6614
    %v6616 = vrot.slane %v6615, 4
    %v6617 = vmax.f32 %v6615, %v6616
    %v6618 = vrot.slane %v6617, 2
    %v6619 = vmax.f32 %v6617, %v6618
    %v6620 = vrot.slane %v6619, 1
    %v6621 = vmax.f32 %v6619, %v6620
    %v6622 = vsel %vm6377, %v6223, -inf
    %v6623 = vsel %vm6379, %v6224, -inf
    %v6624 = vmax.f32 %v6622, %v6623
    %v6625 = vrot.slane %v6624, 4
    %v6626 = vmax.f32 %v6624, %v6625
    %v6627 = vrot.slane %v6626, 2
    %v6628 = vmax.f32 %v6626, %v6627
    %v6629 = vrot.slane %v6628, 1
    %v6630 = vmax.f32 %v6628, %v6629
    %v6631 = vsel %vm6377, %v6225, -inf
    %v6632 = vsel %vm6379, %v6226, -inf
    %v6633 = vmax.f32 %v6631, %v6632
    %v6634 = vrot.slane %v6633, 4
    %v6635 = vmax.f32 %v6633, %v6634
    %v6636 = vrot.slane %v6635, 2
    %v6637 = vmax.f32 %v6635, %v6636
    %v6638 = vrot.slane %v6637, 1
    %v6639 = vmax.f32 %v6637, %v6638
    %v6640 = vsel %vm6377, %v6227, -inf
    %v6641 = vsel %vm6379, %v6228, -inf
    %v6642 = vmax.f32 %v6640, %v6641
    %v6643 = vrot.slane %v6642, 4
    %v6644 = vmax.f32 %v6642, %v6643
    %v6645 = vrot.slane %v6644, 2
    %v6646 = vmax.f32 %v6644, %v6645
    %v6647 = vrot.slane %v6646, 1
    %v6648 = vmax.f32 %v6646, %v6647
    %v6649 = vsel %vm6377, %v6229, -inf
    %v6650 = vsel %vm6379, %v6230, -inf
    %v6651 = vmax.f32 %v6649, %v6650
    %v6652 = vrot.slane %v6651, 4
    %v6653 = vmax.f32 %v6651, %v6652
    %v6654 = vrot.slane %v6653, 2
    %v6655 = vmax.f32 %v6653, %v6654
    %v6656 = vrot.slane %v6655, 1
    %v6657 = vmax.f32 %v6655, %v6656
    %v6658 = vsel %vm6377, %v6231, -inf
    %v6659 = vsel %vm6379, %v6232, -inf
    %v6660 = vmax.f32 %v6658, %v6659
    %v6661 = vrot.slane %v6660, 4
    %v6662 = vmax.f32 %v6660, %v6661
    %v6663 = vrot.slane %v6662, 2
    %v6664 = vmax.f32 %v6662, %v6663
    %v6665 = vrot.slane %v6664, 1
    %v6666 = vmax.f32 %v6664, %v6665
    %v6667 = vsel %vm6377, %v6233, -inf
    %v6668 = vsel %vm6379, %v6234, -inf
    %v6669 = vmax.f32 %v6667, %v6668
    %v6670 = vrot.slane %v6669, 4
    %v6671 = vmax.f32 %v6669, %v6670
    %v6672 = vrot.slane %v6671, 2
    %v6673 = vmax.f32 %v6671, %v6672
    %v6674 = vrot.slane %v6673, 1
    %v6675 = vmax.f32 %v6673, %v6674
    %v6676 = vsel %vm6377, %v6235, -inf
    %v6677 = vsel %vm6379, %v6236, -inf
    %v6678 = vmax.f32 %v6676, %v6677
    %v6679 = vrot.slane %v6678, 4
    %v6680 = vmax.f32 %v6678, %v6679
    %v6681 = vrot.slane %v6680, 2
    %v6682 = vmax.f32 %v6680, %v6681
    %v6683 = vrot.slane %v6682, 1
    %v6684 = vmax.f32 %v6682, %v6683
    %v6685 = vsel %vm6377, %v6237, -inf
    %v6686 = vsel %vm6379, %v6238, -inf
    %v6687 = vmax.f32 %v6685, %v6686
    %v6688 = vrot.slane %v6687, 4
    %v6689 = vmax.f32 %v6687, %v6688
    %v6690 = vrot.slane %v6689, 2
    %v6691 = vmax.f32 %v6689, %v6690
    %v6692 = vrot.slane %v6691, 1
    %v6693 = vmax.f32 %v6691, %v6692
    %v6694 = vsel %vm6377, %v6239, -inf
    %v6695 = vsel %vm6379, %v6240, -inf
    %v6696 = vmax.f32 %v6694, %v6695
    %v6697 = vrot.slane %v6696, 4
    %v6698 = vmax.f32 %v6696, %v6697
    %v6699 = vrot.slane %v6698, 2
    %v6700 = vmax.f32 %v6698, %v6699
    %v6701 = vrot.slane %v6700, 1
    %v6702 = vmax.f32 %v6700, %v6701
    %v6703 = vsel %vm6377, %v6241, -inf
    %v6704 = vsel %vm6379, %v6242, -inf
    %v6705 = vmax.f32 %v6703, %v6704
    %v6706 = vrot.slane %v6705, 4
    %v6707 = vmax.f32 %v6705, %v6706
    %v6708 = vrot.slane %v6707, 2
    %v6709 = vmax.f32 %v6707, %v6708
    %v6710 = vrot.slane %v6709, 1
    %v6711 = vmax.f32 %v6709, %v6710
    %v6712 = vsel %vm6377, %v6243, -inf
    %v6713 = vsel %vm6379, %v6244, -inf
    %v6714 = vmax.f32 %v6712, %v6713
    %v6715 = vrot.slane %v6714, 4
    %v6716 = vmax.f32 %v6714, %v6715
    %v6717 = vrot.slane %v6716, 2
    %v6718 = vmax.f32 %v6716, %v6717
    %v6719 = vrot.slane %v6718, 1
    %v6720 = vmax.f32 %v6718, %v6719
    %v6721 = vsel %vm6377, %v6245, -inf
    %v6722 = vsel %vm6379, %v6246, -inf
    %v6723 = vmax.f32 %v6721, %v6722
    %v6724 = vrot.slane %v6723, 4
    %v6725 = vmax.f32 %v6723, %v6724
    %v6726 = vrot.slane %v6725, 2
    %v6727 = vmax.f32 %v6725, %v6726
    %v6728 = vrot.slane %v6727, 1
    %v6729 = vmax.f32 %v6727, %v6728
    %v6730 = vsel %vm6377, %v6247, -inf
    %v6731 = vsel %vm6379, %v6248, -inf
    %v6732 = vmax.f32 %v6730, %v6731
    %v6733 = vrot.slane %v6732, 4
    %v6734 = vmax.f32 %v6732, %v6733
    %v6735 = vrot.slane %v6734, 2
    %v6736 = vmax.f32 %v6734, %v6735
    %v6737 = vrot.slane %v6736, 1
    %v6738 = vmax.f32 %v6736, %v6737
    %v6739 = vsel %vm6377, %v6249, -inf
    %v6740 = vsel %vm6379, %v6250, -inf
    %v6741 = vmax.f32 %v6739, %v6740
    %v6742 = vrot.slane %v6741, 4
    %v6743 = vmax.f32 %v6741, %v6742
    %v6744 = vrot.slane %v6743, 2
    %v6745 = vmax.f32 %v6743, %v6744
    %v6746 = vrot.slane %v6745, 1
    %v6747 = vmax.f32 %v6745, %v6746
    %v6748 = vsel %vm6377, %v6251, -inf
    %v6749 = vsel %vm6379, %v6252, -inf
    %v6750 = vmax.f32 %v6748, %v6749
    %v6751 = vrot.slane %v6750, 4
    %v6752 = vmax.f32 %v6750, %v6751
    %v6753 = vrot.slane %v6752, 2
    %v6754 = vmax.f32 %v6752, %v6753
    %v6755 = vrot.slane %v6754, 1
    %v6756 = vmax.f32 %v6754, %v6755
    %v6757 = vsel %vm6377, %v6253, -inf
    %v6758 = vsel %vm6379, %v6254, -inf
    %v6759 = vmax.f32 %v6757, %v6758
    %v6760 = vrot.slane %v6759, 4
    %v6761 = vmax.f32 %v6759, %v6760
    %v6762 = vrot.slane %v6761, 2
    %v6763 = vmax.f32 %v6761, %v6762
    %v6764 = vrot.slane %v6763, 1
    %v6765 = vmax.f32 %v6763, %v6764
    %v6766 = vsel %vm6377, %v6255, -inf
    %v6767 = vsel %vm6379, %v6256, -inf
    %v6768 = vmax.f32 %v6766, %v6767
    %v6769 = vrot.slane %v6768, 4
    %v6770 = vmax.f32 %v6768, %v6769
    %v6771 = vrot.slane %v6770, 2
    %v6772 = vmax.f32 %v6770, %v6771
    %v6773 = vrot.slane %v6772, 1
    %v6774 = vmax.f32 %v6772, %v6773
    %v6775 = vsel %vm6377, %v6257, -inf
    %v6776 = vsel %vm6379, %v6258, -inf
    %v6777 = vmax.f32 %v6775, %v6776
    %v6778 = vrot.slane %v6777, 4
    %v6779 = vmax.f32 %v6777, %v6778
    %v6780 = vrot.slane %v6779, 2
    %v6781 = vmax.f32 %v6779, %v6780
    %v6782 = vrot.slane %v6781, 1
    %v6783 = vmax.f32 %v6781, %v6782
    %v6784 = vsel %vm6377, %v6259, -inf
    %v6785 = vsel %vm6379, %v6260, -inf
    %v6786 = vmax.f32 %v6784, %v6785
    %v6787 = vrot.slane %v6786, 4
    %v6788 = vmax.f32 %v6786, %v6787
    %v6789 = vrot.slane %v6788, 2
    %v6790 = vmax.f32 %v6788, %v6789
    %v6791 = vrot.slane %v6790, 1
    %v6792 = vmax.f32 %v6790, %v6791
    %v6793 = vsel %vm6377, %v6261, -inf
    %v6794 = vsel %vm6379, %v6262, -inf
    %v6795 = vmax.f32 %v6793, %v6794
    %v6796 = vrot.slane %v6795, 4
    %v6797 = vmax.f32 %v6795, %v6796
    %v6798 = vrot.slane %v6797, 2
    %v6799 = vmax.f32 %v6797, %v6798
    %v6800 = vrot.slane %v6799, 1
    %v6801 = vmax.f32 %v6799, %v6800
    %v6802 = vsel %vm6377, %v6263, -inf
    %v6803 = vsel %vm6379, %v6264, -inf
    %v6804 = vmax.f32 %v6802, %v6803
    %v6805 = vrot.slane %v6804, 4
    %v6806 = vmax.f32 %v6804, %v6805
    %v6807 = vrot.slane %v6806, 2
    %v6808 = vmax.f32 %v6806, %v6807
    %v6809 = vrot.slane %v6808, 1
    %v6810 = vmax.f32 %v6808, %v6809
    %v6811 = vsel %vm6377, %v6265, -inf
    %v6812 = vsel %vm6379, %v6266, -inf
    %v6813 = vmax.f32 %v6811, %v6812
    %v6814 = vrot.slane %v6813, 4
    %v6815 = vmax.f32 %v6813, %v6814
    %v6816 = vrot.slane %v6815, 2
    %v6817 = vmax.f32 %v6815, %v6816
    %v6818 = vrot.slane %v6817, 1
    %v6819 = vmax.f32 %v6817, %v6818
    %v6820 = vsel %vm6377, %v6267, -inf
    %v6821 = vsel %vm6379, %v6268, -inf
    %v6822 = vmax.f32 %v6820, %v6821
    %v6823 = vrot.slane %v6822, 4
    %v6824 = vmax.f32 %v6822, %v6823
    %v6825 = vrot.slane %v6824, 2
    %v6826 = vmax.f32 %v6824, %v6825
    %v6827 = vrot.slane %v6826, 1
    %v6828 = vmax.f32 %v6826, %v6827
    %v6829 = vsel %vm6377, %v6269, -inf
    %v6830 = vsel %vm6379, %v6270, -inf
    %v6831 = vmax.f32 %v6829, %v6830
    %v6832 = vrot.slane %v6831, 4
    %v6833 = vmax.f32 %v6831, %v6832
    %v6834 = vrot.slane %v6833, 2
    %v6835 = vmax.f32 %v6833, %v6834
    %v6836 = vrot.slane %v6835, 1
    %v6837 = vmax.f32 %v6835, %v6836
    %v6838 = vsel %vm6377, %v6271, -inf
    %v6839 = vsel %vm6379, %v6272, -inf
    %v6840 = vmax.f32 %v6838, %v6839
    %v6841 = vrot.slane %v6840, 4
    %v6842 = vmax.f32 %v6840, %v6841
    %v6843 = vrot.slane %v6842, 2
    %v6844 = vmax.f32 %v6842, %v6843
    %v6845 = vrot.slane %v6844, 1
    %v6846 = vmax.f32 %v6844, %v6845
    %v6847 = vsel %vm6377, %v6273, -inf
    %v6848 = vsel %vm6379, %v6274, -inf
    %v6849 = vmax.f32 %v6847, %v6848
    %v6850 = vrot.slane %v6849, 4
    %v6851 = vmax.f32 %v6849, %v6850
    %v6852 = vrot.slane %v6851, 2
    %v6853 = vmax.f32 %v6851, %v6852
    %v6854 = vrot.slane %v6853, 1
    %v6855 = vmax.f32 %v6853, %v6854
    %v6856 = vsel %vm6377, %v6275, -inf
    %v6857 = vsel %vm6379, %v6276, -inf
    %v6858 = vmax.f32 %v6856, %v6857
    %v6859 = vrot.slane %v6858, 4
    %v6860 = vmax.f32 %v6858, %v6859
    %v6861 = vrot.slane %v6860, 2
    %v6862 = vmax.f32 %v6860, %v6861
    %v6863 = vrot.slane %v6862, 1
    %v6864 = vmax.f32 %v6862, %v6863
    %v6865 = vsel %vm6377, %v6277, -inf
    %v6866 = vsel %vm6379, %v6278, -inf
    %v6867 = vmax.f32 %v6865, %v6866
    %v6868 = vrot.slane %v6867, 4
    %v6869 = vmax.f32 %v6867, %v6868
    %v6870 = vrot.slane %v6869, 2
    %v6871 = vmax.f32 %v6869, %v6870
    %v6872 = vrot.slane %v6871, 1
    %v6873 = vmax.f32 %v6871, %v6872
    %v6874 = vsel %vm6377, %v6279, -inf
    %v6875 = vsel %vm6379, %v6280, -inf
    %v6876 = vmax.f32 %v6874, %v6875
    %v6877 = vrot.slane %v6876, 4
    %v6878 = vmax.f32 %v6876, %v6877
    %v6879 = vrot.slane %v6878, 2
    %v6880 = vmax.f32 %v6878, %v6879
    %v6881 = vrot.slane %v6880, 1
    %v6882 = vmax.f32 %v6880, %v6881
    %v6883 = vsel %vm6377, %v6281, -inf
    %v6884 = vsel %vm6379, %v6282, -inf
    %v6885 = vmax.f32 %v6883, %v6884
    %v6886 = vrot.slane %v6885, 4
    %v6887 = vmax.f32 %v6885, %v6886
    %v6888 = vrot.slane %v6887, 2
    %v6889 = vmax.f32 %v6887, %v6888
    %v6890 = vrot.slane %v6889, 1
    %v6891 = vmax.f32 %v6889, %v6890
    %v6892 = vsel %vm6377, %v6283, -inf
    %v6893 = vsel %vm6379, %v6284, -inf
    %v6894 = vmax.f32 %v6892, %v6893
    %v6895 = vrot.slane %v6894, 4
    %v6896 = vmax.f32 %v6894, %v6895
    %v6897 = vrot.slane %v6896, 2
    %v6898 = vmax.f32 %v6896, %v6897
    %v6899 = vrot.slane %v6898, 1
    %v6900 = vmax.f32 %v6898, %v6899
    %v6901 = vsel %vm6377, %v6285, -inf
    %v6902 = vsel %vm6379, %v6286, -inf
    %v6903 = vmax.f32 %v6901, %v6902
    %v6904 = vrot.slane %v6903, 4
    %v6905 = vmax.f32 %v6903, %v6904
    %v6906 = vrot.slane %v6905, 2
    %v6907 = vmax.f32 %v6905, %v6906
    %v6908 = vrot.slane %v6907, 1
    %v6909 = vmax.f32 %v6907, %v6908
    %v6910 = vsel %vm6377, %v6287, -inf
    %v6911 = vsel %vm6379, %v6288, -inf
    %v6912 = vmax.f32 %v6910, %v6911
    %v6913 = vrot.slane %v6912, 4
    %v6914 = vmax.f32 %v6912, %v6913
    %v6915 = vrot.slane %v6914, 2
    %v6916 = vmax.f32 %v6914, %v6915
    %v6917 = vrot.slane %v6916, 1
    %v6918 = vmax.f32 %v6916, %v6917
    %v6919 = vsel %vm6377, %v6289, -inf
    %v6920 = vsel %vm6379, %v6290, -inf
    %v6921 = vmax.f32 %v6919, %v6920
    %v6922 = vrot.slane %v6921, 4
    %v6923 = vmax.f32 %v6921, %v6922
    %v6924 = vrot.slane %v6923, 2
    %v6925 = vmax.f32 %v6923, %v6924
    %v6926 = vrot.slane %v6925, 1
    %v6927 = vmax.f32 %v6925, %v6926
    %v6928 = vsel %vm6377, %v6291, -inf
    %v6929 = vsel %vm6379, %v6292, -inf
    %v6930 = vmax.f32 %v6928, %v6929
    %v6931 = vrot.slane %v6930, 4
    %v6932 = vmax.f32 %v6930, %v6931
    %v6933 = vrot.slane %v6932, 2
    %v6934 = vmax.f32 %v6932, %v6933
    %v6935 = vrot.slane %v6934, 1
    %v6936 = vmax.f32 %v6934, %v6935
    %v6937 = vsel %vm6377, %v6293, -inf
    %v6938 = vsel %vm6379, %v6294, -inf
    %v6939 = vmax.f32 %v6937, %v6938
    %v6940 = vrot.slane %v6939, 4
    %v6941 = vmax.f32 %v6939, %v6940
    %v6942 = vrot.slane %v6941, 2
    %v6943 = vmax.f32 %v6941, %v6942
    %v6944 = vrot.slane %v6943, 1
    %v6945 = vmax.f32 %v6943, %v6944
    %v6946 = vsel %vm6377, %v6295, -inf
    %v6947 = vsel %vm6379, %v6296, -inf
    %v6948 = vmax.f32 %v6946, %v6947
    %v6949 = vrot.slane %v6948, 4
    %v6950 = vmax.f32 %v6948, %v6949
    %v6951 = vrot.slane %v6950, 2
    %v6952 = vmax.f32 %v6950, %v6951
    %v6953 = vrot.slane %v6952, 1
    %v6954 = vmax.f32 %v6952, %v6953
    %v6955 = vsel %vm6377, %v6297, -inf
    %v6956 = vsel %vm6379, %v6298, -inf
    %v6957 = vmax.f32 %v6955, %v6956
    %v6958 = vrot.slane %v6957, 4
    %v6959 = vmax.f32 %v6957, %v6958
    %v6960 = vrot.slane %v6959, 2
    %v6961 = vmax.f32 %v6959, %v6960
    %v6962 = vrot.slane %v6961, 1
    %v6963 = vmax.f32 %v6961, %v6962
    %v6964 = vsel %vm6377, %v6299, -inf
    %v6965 = vsel %vm6379, %v6300, -inf
    %v6966 = vmax.f32 %v6964, %v6965
    %v6967 = vrot.slane %v6966, 4
    %v6968 = vmax.f32 %v6966, %v6967
    %v6969 = vrot.slane %v6968, 2
    %v6970 = vmax.f32 %v6968, %v6969
    %v6971 = vrot.slane %v6970, 1
    %v6972 = vmax.f32 %v6970, %v6971
    %v6973 = vsel %vm6377, %v6301, -inf
    %v6974 = vsel %vm6379, %v6302, -inf
    %v6975 = vmax.f32 %v6973, %v6974
    %v6976 = vrot.slane %v6975, 4
    %v6977 = vmax.f32 %v6975, %v6976
    %v6978 = vrot.slane %v6977, 2
    %v6979 = vmax.f32 %v6977, %v6978
    %v6980 = vrot.slane %v6979, 1
    %v6981 = vmax.f32 %v6979, %v6980
    %v6982 = vsel %vm6377, %v6303, -inf
    %v6983 = vsel %vm6379, %v6304, -inf
    %v6984 = vmax.f32 %v6982, %v6983
    %v6985 = vrot.slane %v6984, 4
    %v6986 = vmax.f32 %v6984, %v6985
    %v6987 = vrot.slane %v6986, 2
    %v6988 = vmax.f32 %v6986, %v6987
    %v6989 = vrot.slane %v6988, 1
    %v6990 = vmax.f32 %v6988, %v6989
    %v6991 = vsel %vm6377, %v6305, -inf
    %v6992 = vsel %vm6379, %v6306, -inf
    %v6993 = vmax.f32 %v6991, %v6992
    %v6994 = vrot.slane %v6993, 4
    %v6995 = vmax.f32 %v6993, %v6994
    %v6996 = vrot.slane %v6995, 2
    %v6997 = vmax.f32 %v6995, %v6996
    %v6998 = vrot.slane %v6997, 1
    %v6999 = vmax.f32 %v6997, %v6998
    %v7000 = vsel %vm6377, %v6307, -inf
    %v7001 = vsel %vm6379, %v6308, -inf
    %v7002 = vmax.f32 %v7000, %v7001
    %v7003 = vrot.slane %v7002, 4
    %v7004 = vmax.f32 %v7002, %v7003
    %v7005 = vrot.slane %v7004, 2
    %v7006 = vmax.f32 %v7004, %v7005
    %v7007 = vrot.slane %v7006, 1
    %v7008 = vmax.f32 %v7006, %v7007
    %v7009 = vsel %vm6377, %v6309, -inf
    %v7010 = vsel %vm6379, %v6310, -inf
    %v7011 = vmax.f32 %v7009, %v7010
    %v7012 = vrot.slane %v7011, 4
    %v7013 = vmax.f32 %v7011, %v7012
    %v7014 = vrot.slane %v7013, 2
    %v7015 = vmax.f32 %v7013, %v7014
    %v7016 = vrot.slane %v7015, 1
    %v7017 = vmax.f32 %v7015, %v7016
    %v7018 = vsel %vm6377, %v6311, -inf
    %v7019 = vsel %vm6379, %v6312, -inf
    %v7020 = vmax.f32 %v7018, %v7019
    %v7021 = vrot.slane %v7020, 4
    %v7022 = vmax.f32 %v7020, %v7021
    %v7023 = vrot.slane %v7022, 2
    %v7024 = vmax.f32 %v7022, %v7023
    %v7025 = vrot.slane %v7024, 1
    %v7026 = vmax.f32 %v7024, %v7025
    %v7027 = vsel %vm6377, %v6313, -inf
    %v7028 = vsel %vm6379, %v6314, -inf
    %v7029 = vmax.f32 %v7027, %v7028
    %v7030 = vrot.slane %v7029, 4
    %v7031 = vmax.f32 %v7029, %v7030
    %v7032 = vrot.slane %v7031, 2
    %v7033 = vmax.f32 %v7031, %v7032
    %v7034 = vrot.slane %v7033, 1
    %v7035 = vmax.f32 %v7033, %v7034
    %v7036 = vsel %vm6377, %v6315, -inf
    %v7037 = vsel %vm6379, %v6316, -inf
    %v7038 = vmax.f32 %v7036, %v7037
    %v7039 = vrot.slane %v7038, 4
    %v7040 = vmax.f32 %v7038, %v7039
    %v7041 = vrot.slane %v7040, 2
    %v7042 = vmax.f32 %v7040, %v7041
    %v7043 = vrot.slane %v7042, 1
    %v7044 = vmax.f32 %v7042, %v7043
    %v7045 = vsel %vm6377, %v6317, -inf
    %v7046 = vsel %vm6379, %v6318, -inf
    %v7047 = vmax.f32 %v7045, %v7046
    %v7048 = vrot.slane %v7047, 4
    %v7049 = vmax.f32 %v7047, %v7048
    %v7050 = vrot.slane %v7049, 2
    %v7051 = vmax.f32 %v7049, %v7050
    %v7052 = vrot.slane %v7051, 1
    %v7053 = vmax.f32 %v7051, %v7052
    %v7054 = vsel %vm6377, %v6319, -inf
    %v7055 = vsel %vm6379, %v6320, -inf
    %v7056 = vmax.f32 %v7054, %v7055
    %v7057 = vrot.slane %v7056, 4
    %v7058 = vmax.f32 %v7056, %v7057
    %v7059 = vrot.slane %v7058, 2
    %v7060 = vmax.f32 %v7058, %v7059
    %v7061 = vrot.slane %v7060, 1
    %v7062 = vmax.f32 %v7060, %v7061
    %v7063 = vsel %vm6377, %v6321, -inf
    %v7064 = vsel %vm6379, %v6322, -inf
    %v7065 = vmax.f32 %v7063, %v7064
    %v7066 = vrot.slane %v7065, 4
    %v7067 = vmax.f32 %v7065, %v7066
    %v7068 = vrot.slane %v7067, 2
    %v7069 = vmax.f32 %v7067, %v7068
    %v7070 = vrot.slane %v7069, 1
    %v7071 = vmax.f32 %v7069, %v7070
    %v7072 = vsel %vm6377, %v6323, -inf
    %v7073 = vsel %vm6379, %v6324, -inf
    %v7074 = vmax.f32 %v7072, %v7073
    %v7075 = vrot.slane %v7074, 4
    %v7076 = vmax.f32 %v7074, %v7075
    %v7077 = vrot.slane %v7076, 2
    %v7078 = vmax.f32 %v7076, %v7077
    %v7079 = vrot.slane %v7078, 1
    %v7080 = vmax.f32 %v7078, %v7079
    %v7081 = vsel %vm6377, %v6325, -inf
    %v7082 = vsel %vm6379, %v6326, -inf
    %v7083 = vmax.f32 %v7081, %v7082
    %v7084 = vrot.slane %v7083, 4
    %v7085 = vmax.f32 %v7083, %v7084
    %v7086 = vrot.slane %v7085, 2
    %v7087 = vmax.f32 %v7085, %v7086
    %v7088 = vrot.slane %v7087, 1
    %v7089 = vmax.f32 %v7087, %v7088
    %v7090 = vsel %vm6377, %v6327, -inf
    %v7091 = vsel %vm6379, %v6328, -inf
    %v7092 = vmax.f32 %v7090, %v7091
    %v7093 = vrot.slane %v7092, 4
    %v7094 = vmax.f32 %v7092, %v7093
    %v7095 = vrot.slane %v7094, 2
    %v7096 = vmax.f32 %v7094, %v7095
    %v7097 = vrot.slane %v7096, 1
    %v7098 = vmax.f32 %v7096, %v7097
    %v7099 = vsel %vm6377, %v6329, -inf
    %v7100 = vsel %vm6379, %v6330, -inf
    %v7101 = vmax.f32 %v7099, %v7100
    %v7102 = vrot.slane %v7101, 4
    %v7103 = vmax.f32 %v7101, %v7102
    %v7104 = vrot.slane %v7103, 2
    %v7105 = vmax.f32 %v7103, %v7104
    %v7106 = vrot.slane %v7105, 1
    %v7107 = vmax.f32 %v7105, %v7106
    %v7108 = vsel %vm6377, %v6331, -inf
    %v7109 = vsel %vm6379, %v6332, -inf
    %v7110 = vmax.f32 %v7108, %v7109
    %v7111 = vrot.slane %v7110, 4
    %v7112 = vmax.f32 %v7110, %v7111
    %v7113 = vrot.slane %v7112, 2
    %v7114 = vmax.f32 %v7112, %v7113
    %v7115 = vrot.slane %v7114, 1
    %v7116 = vmax.f32 %v7114, %v7115
    %v7117 = vsel %vm6377, %v6333, -inf
    %v7118 = vsel %vm6379, %v6334, -inf
    %v7119 = vmax.f32 %v7117, %v7118
    %v7120 = vrot.slane %v7119, 4
    %v7121 = vmax.f32 %v7119, %v7120
    %v7122 = vrot.slane %v7121, 2
    %v7123 = vmax.f32 %v7121, %v7122
    %v7124 = vrot.slane %v7123, 1
    %v7125 = vmax.f32 %v7123, %v7124
    %v7126 = vsel %vm6377, %v6335, -inf
    %v7127 = vsel %vm6379, %v6336, -inf
    %v7128 = vmax.f32 %v7126, %v7127
    %v7129 = vrot.slane %v7128, 4
    %v7130 = vmax.f32 %v7128, %v7129
    %v7131 = vrot.slane %v7130, 2
    %v7132 = vmax.f32 %v7130, %v7131
    %v7133 = vrot.slane %v7132, 1
    %v7134 = vmax.f32 %v7132, %v7133
    %v7135 = vsel %vm6377, %v6337, -inf
    %v7136 = vsel %vm6379, %v6338, -inf
    %v7137 = vmax.f32 %v7135, %v7136
    %v7138 = vrot.slane %v7137, 4
    %v7139 = vmax.f32 %v7137, %v7138
    %v7140 = vrot.slane %v7139, 2
    %v7141 = vmax.f32 %v7139, %v7140
    %v7142 = vrot.slane %v7141, 1
    %v7143 = vmax.f32 %v7141, %v7142
    %v7144 = vsel %vm6377, %v6339, -inf
    %v7145 = vsel %vm6379, %v6340, -inf
    %v7146 = vmax.f32 %v7144, %v7145
    %v7147 = vrot.slane %v7146, 4
    %v7148 = vmax.f32 %v7146, %v7147
    %v7149 = vrot.slane %v7148, 2
    %v7150 = vmax.f32 %v7148, %v7149
    %v7151 = vrot.slane %v7150, 1
    %v7152 = vmax.f32 %v7150, %v7151
    %v7153 = vsel %vm6377, %v6341, -inf
    %v7154 = vsel %vm6379, %v6342, -inf
    %v7155 = vmax.f32 %v7153, %v7154
    %v7156 = vrot.slane %v7155, 4
    %v7157 = vmax.f32 %v7155, %v7156
    %v7158 = vrot.slane %v7157, 2
    %v7159 = vmax.f32 %v7157, %v7158
    %v7160 = vrot.slane %v7159, 1
    %v7161 = vmax.f32 %v7159, %v7160
    %v7162 = vsel %vm6377, %v6343, -inf
    %v7163 = vsel %vm6379, %v6344, -inf
    %v7164 = vmax.f32 %v7162, %v7163
    %v7165 = vrot.slane %v7164, 4
    %v7166 = vmax.f32 %v7164, %v7165
    %v7167 = vrot.slane %v7166, 2
    %v7168 = vmax.f32 %v7166, %v7167
    %v7169 = vrot.slane %v7168, 1
    %v7170 = vmax.f32 %v7168, %v7169
    %v7171 = vsel %vm6377, %v6345, -inf
    %v7172 = vsel %vm6379, %v6346, -inf
    %v7173 = vmax.f32 %v7171, %v7172
    %v7174 = vrot.slane %v7173, 4
    %v7175 = vmax.f32 %v7173, %v7174
    %v7176 = vrot.slane %v7175, 2
    %v7177 = vmax.f32 %v7175, %v7176
    %v7178 = vrot.slane %v7177, 1
    %v7179 = vmax.f32 %v7177, %v7178
    %v7180 = vsel %vm6377, %v6347, -inf
    %v7181 = vsel %vm6379, %v6348, -inf
    %v7182 = vmax.f32 %v7180, %v7181
    %v7183 = vrot.slane %v7182, 4
    %v7184 = vmax.f32 %v7182, %v7183
    %v7185 = vrot.slane %v7184, 2
    %v7186 = vmax.f32 %v7184, %v7185
    %v7187 = vrot.slane %v7186, 1
    %v7188 = vmax.f32 %v7186, %v7187
    %v7189 = vsel %vm6377, %v6349, -inf
    %v7190 = vsel %vm6379, %v6350, -inf
    %v7191 = vmax.f32 %v7189, %v7190
    %v7192 = vrot.slane %v7191, 4
    %v7193 = vmax.f32 %v7191, %v7192
    %v7194 = vrot.slane %v7193, 2
    %v7195 = vmax.f32 %v7193, %v7194
    %v7196 = vrot.slane %v7195, 1
    %v7197 = vmax.f32 %v7195, %v7196
    %v7198 = vsel %vm6377, %v6351, -inf
    %v7199 = vsel %vm6379, %v6352, -inf
    %v7200 = vmax.f32 %v7198, %v7199
    %v7201 = vrot.slane %v7200, 4
    %v7202 = vmax.f32 %v7200, %v7201
    %v7203 = vrot.slane %v7202, 2
    %v7204 = vmax.f32 %v7202, %v7203
    %v7205 = vrot.slane %v7204, 1
    %v7206 = vmax.f32 %v7204, %v7205
    %v7207 = vsel %vm6377, %v6353, -inf
    %v7208 = vsel %vm6379, %v6354, -inf
    %v7209 = vmax.f32 %v7207, %v7208
    %v7210 = vrot.slane %v7209, 4
    %v7211 = vmax.f32 %v7209, %v7210
    %v7212 = vrot.slane %v7211, 2
    %v7213 = vmax.f32 %v7211, %v7212
    %v7214 = vrot.slane %v7213, 1
    %v7215 = vmax.f32 %v7213, %v7214
    %v7216 = vsel %vm6377, %v6355, -inf
    %v7217 = vsel %vm6379, %v6356, -inf
    %v7218 = vmax.f32 %v7216, %v7217
    %v7219 = vrot.slane %v7218, 4
    %v7220 = vmax.f32 %v7218, %v7219
    %v7221 = vrot.slane %v7220, 2
    %v7222 = vmax.f32 %v7220, %v7221
    %v7223 = vrot.slane %v7222, 1
    %v7224 = vmax.f32 %v7222, %v7223
    %v7225 = vsel %vm6377, %v6357, -inf
    %v7226 = vsel %vm6379, %v6358, -inf
    %v7227 = vmax.f32 %v7225, %v7226
    %v7228 = vrot.slane %v7227, 4
    %v7229 = vmax.f32 %v7227, %v7228
    %v7230 = vrot.slane %v7229, 2
    %v7231 = vmax.f32 %v7229, %v7230
    %v7232 = vrot.slane %v7231, 1
    %v7233 = vmax.f32 %v7231, %v7232
    %v7234 = vsel %vm6377, %v6359, -inf
    %v7235 = vsel %vm6379, %v6360, -inf
    %v7236 = vmax.f32 %v7234, %v7235
    %v7237 = vrot.slane %v7236, 4
    %v7238 = vmax.f32 %v7236, %v7237
    %v7239 = vrot.slane %v7238, 2
    %v7240 = vmax.f32 %v7238, %v7239
    %v7241 = vrot.slane %v7240, 1
    %v7242 = vmax.f32 %v7240, %v7241
    %v7243 = vsel %vm6377, %v6361, -inf
    %v7244 = vsel %vm6379, %v6362, -inf
    %v7245 = vmax.f32 %v7243, %v7244
    %v7246 = vrot.slane %v7245, 4
    %v7247 = vmax.f32 %v7245, %v7246
    %v7248 = vrot.slane %v7247, 2
    %v7249 = vmax.f32 %v7247, %v7248
    %v7250 = vrot.slane %v7249, 1
    %v7251 = vmax.f32 %v7249, %v7250
    %v7252 = vsel %vm6377, %v6363, -inf
    %v7253 = vsel %vm6379, %v6364, -inf
    %v7254 = vmax.f32 %v7252, %v7253
    %v7255 = vrot.slane %v7254, 4
    %v7256 = vmax.f32 %v7254, %v7255
    %v7257 = vrot.slane %v7256, 2
    %v7258 = vmax.f32 %v7256, %v7257
    %v7259 = vrot.slane %v7258, 1
    %v7260 = vmax.f32 %v7258, %v7259
    %v7261 = vsel %vm6377, %v6365, -inf
    %v7262 = vsel %vm6379, %v6366, -inf
    %v7263 = vmax.f32 %v7261, %v7262
    %v7264 = vrot.slane %v7263, 4
    %v7265 = vmax.f32 %v7263, %v7264
    %v7266 = vrot.slane %v7265, 2
    %v7267 = vmax.f32 %v7265, %v7266
    %v7268 = vrot.slane %v7267, 1
    %v7269 = vmax.f32 %v7267, %v7268
    %v7270 = vsel %vm6377, %v6367, -inf
    %v7271 = vsel %vm6379, %v6368, -inf
    %v7272 = vmax.f32 %v7270, %v7271
    %v7273 = vrot.slane %v7272, 4
    %v7274 = vmax.f32 %v7272, %v7273
    %v7275 = vrot.slane %v7274, 2
    %v7276 = vmax.f32 %v7274, %v7275
    %v7277 = vrot.slane %v7276, 1
    %v7278 = vmax.f32 %v7276, %v7277
    %v7279 = vsel %vm6377, %v6369, -inf
    %v7280 = vsel %vm6379, %v6370, -inf
    %v7281 = vmax.f32 %v7279, %v7280
    %v7282 = vrot.slane %v7281, 4
    %v7283 = vmax.f32 %v7281, %v7282
    %v7284 = vrot.slane %v7283, 2
    %v7285 = vmax.f32 %v7283, %v7284
    %v7286 = vrot.slane %v7285, 1
    %v7287 = vmax.f32 %v7285, %v7286
    %v7288 = vsel %vm6377, %v6371, -inf
    %v7289 = vsel %vm6379, %v6372, -inf
    %v7290 = vmax.f32 %v7288, %v7289
    %v7291 = vrot.slane %v7290, 4
    %v7292 = vmax.f32 %v7290, %v7291
    %v7293 = vrot.slane %v7292, 2
    %v7294 = vmax.f32 %v7292, %v7293
    %v7295 = vrot.slane %v7294, 1
    %v7296 = vmax.f32 %v7294, %v7295
    %v7297 = vsel %vm6377, %v6373, -inf
    %v7298 = vsel %vm6379, %v6374, -inf
    %v7299 = vmax.f32 %v7297, %v7298
    %v7300 = vrot.slane %v7299, 4
    %v7301 = vmax.f32 %v7299, %v7300
    %v7302 = vrot.slane %v7301, 2
    %v7303 = vmax.f32 %v7301, %v7302
    %v7304 = vrot.slane %v7303, 1
    %v7305 = vmax.f32 %v7303, %v7304
    %v7306 = vsel %vm6377, %v6375, -inf
    %v7307 = vsel %vm6379, %v6376, -inf
    %v7308 = vmax.f32 %v7306, %v7307
    %v7309 = vrot.slane %v7308, 4
    %v7310 = vmax.f32 %v7308, %v7309
    %v7311 = vrot.slane %v7310, 2
    %v7312 = vmax.f32 %v7310, %v7311
    %v7313 = vrot.slane %v7312, 1
    %v7314 = vmax.f32 %v7312, %v7313
    %vm7315 = vcmask 1043456
    %v7316 = vrot.slane %v966, 4
    %v7317 = vrot.slane %v969, 4
    %v7318 = vsel %vm7315, %v7316, %v7317
    %v7319 = vrot.slane %v974, 4
    %v7320 = vrot.slane %v977, 4
    %v7321 = vsel %vm7315, %v7319, %v7320
    %v7322 = vrot.slane %v982, 4
    %v7323 = vrot.slane %v985, 4
    %v7324 = vsel %vm7315, %v7322, %v7323
    %v7325 = vrot.slane %v990, 4
    %v7326 = vrot.slane %v993, 4
    %v7327 = vsel %vm7315, %v7325, %v7326
    %v7328 = vrot.slane %v998, 4
    %v7329 = vrot.slane %v1001, 4
    %v7330 = vsel %vm7315, %v7328, %v7329
    %v7331 = vrot.slane %v1006, 4
    %v7332 = vrot.slane %v1009, 4
    %v7333 = vsel %vm7315, %v7331, %v7332
    %v7334 = vrot.slane %v1014, 4
    %v7335 = vrot.slane %v1017, 4
    %v7336 = vsel %vm7315, %v7334, %v7335
    %v7337 = vrot.slane %v1022, 4
    %v7338 = vrot.slane %v1025, 4
    %v7339 = vsel %vm7315, %v7337, %v7338
    %v7340 = vrot.slane %v1030, 4
    %v7341 = vrot.slane %v1033, 4
    %v7342 = vsel %vm7315, %v7340, %v7341
    %v7343 = vrot.slane %v1038, 4
    %v7344 = vrot.slane %v1041, 4
    %v7345 = vsel %vm7315, %v7343, %v7344
    %v7346 = vrot.slane %v1046, 4
    %v7347 = vrot.slane %v1049, 4
    %v7348 = vsel %vm7315, %v7346, %v7347
    %v7349 = vrot.slane %v1054, 4
    %v7350 = vrot.slane %v1057, 4
    %v7351 = vsel %vm7315, %v7349, %v7350
    %v7352 = vrot.slane %v1062, 4
    %v7353 = vrot.slane %v1065, 4
    %v7354 = vsel %vm7315, %v7352, %v7353
    %v7355 = vrot.slane %v1070, 4
    %v7356 = vrot.slane %v1073, 4
    %v7357 = vsel %vm7315, %v7355, %v7356
    %v7358 = vrot.slane %v1078, 4
    %v7359 = vrot.slane %v1081, 4
    %v7360 = vsel %vm7315, %v7358, %v7359
    %v7361 = vrot.slane %v1086, 4
    %v7362 = vrot.slane %v1089, 4
    %v7363 = vsel %vm7315, %v7361, %v7362
    %v7364 = vrot.slane %v1094, 4
    %v7365 = vrot.slane %v1097, 4
    %v7366 = vsel %vm7315, %v7364, %v7365
    %v7367 = vrot.slane %v1102, 4
    %v7368 = vrot.slane %v1105, 4
    %v7369 = vsel %vm7315, %v7367, %v7368
    %v7370 = vrot.slane %v1110, 4
    %v7371 = vrot.slane %v1113, 4
    %v7372 = vsel %vm7315, %v7370, %v7371
    %v7373 = vrot.slane %v1118, 4
    %v7374 = vrot.slane %v1121, 4
    %v7375 = vsel %vm7315, %v7373, %v7374
    %v7376 = vrot.slane %v1126, 4
    %v7377 = vrot.slane %v1129, 4
    %v7378 = vsel %vm7315, %v7376, %v7377
    %v7379 = vrot.slane %v1134, 4
    %v7380 = vrot.slane %v1137, 4
    %v7381 = vsel %vm7315, %v7379, %v7380
    %v7382 = vrot.slane %v1142, 4
    %v7383 = vrot.slane %v1145, 4
    %v7384 = vsel %vm7315, %v7382, %v7383
    %v7385 = vrot.slane %v1150, 4
    %v7386 = vrot.slane %v1153, 4
    %v7387 = vsel %vm7315, %v7385, %v7386
    %v7388 = vrot.slane %v1158, 4
    %v7389 = vrot.slane %v1161, 4
    %v7390 = vsel %vm7315, %v7388, %v7389
    %v7391 = vrot.slane %v1166, 4
    %v7392 = vrot.slane %v1169, 4
    %v7393 = vsel %vm7315, %v7391, %v7392
    %v7394 = vrot.slane %v1174, 4
    %v7395 = vrot.slane %v1177, 4
    %v7396 = vsel %vm7315, %v7394, %v7395
    %v7397 = vrot.slane %v1182, 4
    %v7398 = vrot.slane %v1185, 4
    %v7399 = vsel %vm7315, %v7397, %v7398
    %v7400 = vrot.slane %v1190, 4
    %v7401 = vrot.slane %v1193, 4
    %v7402 = vsel %vm7315, %v7400, %v7401
    %v7403 = vrot.slane %v1198, 4
    %v7404 = vrot.slane %v1201, 4
    %v7405 = vsel %vm7315, %v7403, %v7404
    %v7406 = vrot.slane %v1206, 4
    %v7407 = vrot.slane %v1209, 4
    %v7408 = vsel %vm7315, %v7406, %v7407
    %v7409 = vrot.slane %v1214, 4
    %v7410 = vrot.slane %v1217, 4
    %v7411 = vsel %vm7315, %v7409, %v7410
    %v7412 = vrot.slane %v1222, 4
    %v7413 = vrot.slane %v1225, 4
    %v7414 = vsel %vm7315, %v7412, %v7413
    %v7415 = vrot.slane %v1230, 4
    %v7416 = vrot.slane %v1233, 4
    %v7417 = vsel %vm7315, %v7415, %v7416
    %v7418 = vrot.slane %v1238, 4
    %v7419 = vrot.slane %v1241, 4
    %v7420 = vsel %vm7315, %v7418, %v7419
    %v7421 = vrot.slane %v1246, 4
    %v7422 = vrot.slane %v1249, 4
    %v7423 = vsel %vm7315, %v7421, %v7422
    %v7424 = vrot.slane %v1254, 4
    %v7425 = vrot.slane %v1257, 4
    %v7426 = vsel %vm7315, %v7424, %v7425
    %v7427 = vrot.slane %v1262, 4
    %v7428 = vrot.slane %v1265, 4
    %v7429 = vsel %vm7315, %v7427, %v7428
    %v7430 = vrot.slane %v1270, 4
    %v7431 = vrot.slane %v1273, 4
    %v7432 = vsel %vm7315, %v7430, %v7431
    %v7433 = vrot.slane %v1278, 4
    %v7434 = vrot.slane %v1281, 4
    %v7435 = vsel %vm7315, %v7433, %v7434
    %v7436 = vrot.slane %v1286, 4
    %v7437 = vrot.slane %v1289, 4
    %v7438 = vsel %vm7315, %v7436, %v7437
    %v7439 = vrot.slane %v1294, 4
    %v7440 = vrot.slane %v1297, 4
    %v7441 = vsel %vm7315, %v7439, %v7440
    %v7442 = vrot.slane %v1302, 4
    %v7443 = vrot.slane %v1305, 4
    %v7444 = vsel %vm7315, %v7442, %v7443
    %v7445 = vrot.slane %v1310, 4
    %v7446 = vrot.slane %v1313, 4
    %v7447 = vsel %vm7315, %v7445, %v7446
    %v7448 = vrot.slane %v1318, 4
    %v7449 = vrot.slane %v1321, 4
    %v7450 = vsel %vm7315, %v7448, %v7449
    %v7451 = vrot.slane %v1326, 4
    %v7452 = vrot.slane %v1329, 4
    %v7453 = vsel %vm7315, %v7451, %v7452
    %v7454 = vrot.slane %v1334, 4
    %v7455 = vrot.slane %v1337, 4
    %v7456 = vsel %vm7315, %v7454, %v7455
    %v7457 = vrot.slane %v1342, 4
    %v7458 = vrot.slane %v1345, 4
    %v7459 = vsel %vm7315, %v7457, %v7458
    %v7460 = vrot.slane %v1350, 4
    %v7461 = vrot.slane %v1353, 4
    %v7462 = vsel %vm7315, %v7460, %v7461
    %v7463 = vrot.slane %v1358, 4
    %v7464 = vrot.slane %v1361, 4
    %v7465 = vsel %vm7315, %v7463, %v7464
    %v7466 = vrot.slane %v1366, 4
    %v7467 = vrot.slane %v1369, 4
    %v7468 = vsel %vm7315, %v7466, %v7467
    %v7469 = vrot.slane %v1374, 4
    %v7470 = vrot.slane %v1377, 4
    %v7471 = vsel %vm7315, %v7469, %v7470
    %v7472 = vrot.slane %v1382, 4
    %v7473 = vrot.slane %v1385, 4
    %v7474 = vsel %vm7315, %v7472, %v7473
    %v7475 = vrot.slane %v1390, 4
    %v7476 = vrot.slane %v1393, 4
    %v7477 = vsel %vm7315, %v7475, %v7476
    %v7478 = vrot.slane %v1398, 4
    %v7479 = vrot.slane %v1401, 4
    %v7480 = vsel %vm7315, %v7478, %v7479
    %v7481 = vrot.slane %v1406, 4
    %v7482 = vrot.slane %v1409, 4
    %v7483 = vsel %vm7315, %v7481, %v7482
    %v7484 = vrot.slane %v1414, 4
    %v7485 = vrot.slane %v1417, 4
    %v7486 = vsel %vm7315, %v7484, %v7485
    %v7487 = vrot.slane %v1422, 4
    %v7488 = vrot.slane %v1425, 4
    %v7489 = vsel %vm7315, %v7487, %v7488
    %v7490 = vrot.slane %v1430, 4
    %v7491 = vrot.slane %v1433, 4
    %v7492 = vsel %vm7315, %v7490, %v7491
    %v7493 = vrot.slane %v1438, 4
    %v7494 = vrot.slane %v1441, 4
    %v7495 = vsel %vm7315, %v7493, %v7494
    %v7496 = vrot.slane %v1446, 4
    %v7497 = vrot.slane %v1449, 4
    %v7498 = vsel %vm7315, %v7496, %v7497
    %v7499 = vrot.slane %v1454, 4
    %v7500 = vrot.slane %v1457, 4
    %v7501 = vsel %vm7315, %v7499, %v7500
    %v7502 = vrot.slane %v1462, 4
    %v7503 = vrot.slane %v1465, 4
    %v7504 = vsel %vm7315, %v7502, %v7503
    %v7505 = vrot.slane %v1470, 4
    %v7506 = vrot.slane %v1473, 4
    %v7507 = vsel %vm7315, %v7505, %v7506
    %v7508 = vrot.slane %v1478, 4
    %v7509 = vrot.slane %v1481, 4
    %v7510 = vsel %vm7315, %v7508, %v7509
    %v7511 = vrot.slane %v1486, 4
    %v7512 = vrot.slane %v1489, 4
    %v7513 = vsel %vm7315, %v7511, %v7512
    %v7514 = vrot.slane %v1494, 4
    %v7515 = vrot.slane %v1497, 4
    %v7516 = vsel %vm7315, %v7514, %v7515
    %v7517 = vrot.slane %v1502, 4
    %v7518 = vrot.slane %v1505, 4
    %v7519 = vsel %vm7315, %v7517, %v7518
    %v7520 = vrot.slane %v1510, 4
    %v7521 = vrot.slane %v1513, 4
    %v7522 = vsel %vm7315, %v7520, %v7521
    %v7523 = vrot.slane %v1518, 4
    %v7524 = vrot.slane %v1521, 4
    %v7525 = vsel %vm7315, %v7523, %v7524
    %v7526 = vrot.slane %v1526, 4
    %v7527 = vrot.slane %v1529, 4
    %v7528 = vsel %vm7315, %v7526, %v7527
    %v7529 = vrot.slane %v1534, 4
    %v7530 = vrot.slane %v1537, 4
    %v7531 = vsel %vm7315, %v7529, %v7530
    %v7532 = vrot.slane %v1542, 4
    %v7533 = vrot.slane %v1545, 4
    %v7534 = vsel %vm7315, %v7532, %v7533
    %v7535 = vrot.slane %v1550, 4
    %v7536 = vrot.slane %v1553, 4
    %v7537 = vsel %vm7315, %v7535, %v7536
    %v7538 = vrot.slane %v1558, 4
    %v7539 = vrot.slane %v1561, 4
    %v7540 = vsel %vm7315, %v7538, %v7539
    %v7541 = vrot.slane %v1566, 4
    %v7542 = vrot.slane %v1569, 4
    %v7543 = vsel %vm7315, %v7541, %v7542
    %v7544 = vrot.slane %v1574, 4
    %v7545 = vrot.slane %v1577, 4
    %v7546 = vsel %vm7315, %v7544, %v7545
    %v7547 = vrot.slane %v1582, 4
    %v7548 = vrot.slane %v1585, 4
    %v7549 = vsel %vm7315, %v7547, %v7548
    %v7550 = vrot.slane %v1590, 4
    %v7551 = vrot.slane %v1593, 4
    %v7552 = vsel %vm7315, %v7550, %v7551
    %v7553 = vrot.slane %v1598, 4
    %v7554 = vrot.slane %v1601, 4
    %v7555 = vsel %vm7315, %v7553, %v7554
    %v7556 = vrot.slane %v1606, 4
    %v7557 = vrot.slane %v1609, 4
    %v7558 = vsel %vm7315, %v7556, %v7557
    %v7559 = vrot.slane %v1614, 4
    %v7560 = vrot.slane %v1617, 4
    %v7561 = vsel %vm7315, %v7559, %v7560
    %v7562 = vrot.slane %v1622, 4
    %v7563 = vrot.slane %v1625, 4
    %v7564 = vsel %vm7315, %v7562, %v7563
    %v7565 = vrot.slane %v1630, 4
    %v7566 = vrot.slane %v1633, 4
    %v7567 = vsel %vm7315, %v7565, %v7566
    %v7568 = vrot.slane %v1638, 4
    %v7569 = vrot.slane %v1641, 4
    %v7570 = vsel %vm7315, %v7568, %v7569
    %v7571 = vrot.slane %v1646, 4
    %v7572 = vrot.slane %v1649, 4
    %v7573 = vsel %vm7315, %v7571, %v7572
    %v7574 = vrot.slane %v1654, 4
    %v7575 = vrot.slane %v1657, 4
    %v7576 = vsel %vm7315, %v7574, %v7575
    %v7577 = vrot.slane %v1662, 4
    %v7578 = vrot.slane %v1665, 4
    %v7579 = vsel %vm7315, %v7577, %v7578
    %v7580 = vrot.slane %v1670, 4
    %v7581 = vrot.slane %v1673, 4
    %v7582 = vsel %vm7315, %v7580, %v7581
    %v7583 = vrot.slane %v1678, 4
    %v7584 = vrot.slane %v1681, 4
    %v7585 = vsel %vm7315, %v7583, %v7584
    %v7586 = vrot.slane %v1686, 4
    %v7587 = vrot.slane %v1689, 4
    %v7588 = vsel %vm7315, %v7586, %v7587
    %v7589 = vrot.slane %v1694, 4
    %v7590 = vrot.slane %v1697, 4
    %v7591 = vsel %vm7315, %v7589, %v7590
    %v7592 = vrot.slane %v1702, 4
    %v7593 = vrot.slane %v1705, 4
    %v7594 = vsel %vm7315, %v7592, %v7593
    %v7595 = vrot.slane %v1710, 4
    %v7596 = vrot.slane %v1713, 4
    %v7597 = vsel %vm7315, %v7595, %v7596
    %v7598 = vrot.slane %v1718, 4
    %v7599 = vrot.slane %v1721, 4
    %v7600 = vsel %vm7315, %v7598, %v7599
    %v7601 = vrot.slane %v1726, 4
    %v7602 = vrot.slane %v1729, 4
    %v7603 = vsel %vm7315, %v7601, %v7602
    %v7604 = vrot.slane %v1734, 4
    %v7605 = vrot.slane %v1737, 4
    %v7606 = vsel %vm7315, %v7604, %v7605
    %v7607 = vrot.slane %v1742, 4
    %v7608 = vrot.slane %v1745, 4
    %v7609 = vsel %vm7315, %v7607, %v7608
    %v7610 = vrot.slane %v1750, 4
    %v7611 = vrot.slane %v1753, 4
    %v7612 = vsel %vm7315, %v7610, %v7611
    %v7613 = vrot.slane %v1758, 4
    %v7614 = vrot.slane %v1761, 4
    %v7615 = vsel %vm7315, %v7613, %v7614
    %v7616 = vrot.slane %v1766, 4
    %v7617 = vrot.slane %v1769, 4
    %v7618 = vsel %vm7315, %v7616, %v7617
    %v7619 = vrot.slane %v1774, 4
    %v7620 = vrot.slane %v1777, 4
    %v7621 = vsel %vm7315, %v7619, %v7620
    %v7622 = vrot.slane %v1782, 4
    %v7623 = vrot.slane %v1785, 4
    %v7624 = vsel %vm7315, %v7622, %v7623
    %v7625 = vrot.slane %v1790, 4
    %v7626 = vrot.slane %v1793, 4
    %v7627 = vsel %vm7315, %v7625, %v7626
    %7628 = vrot.lane.b32.xlu0 %v7318, 124
    %v7629 = vpop.permute.xlu0 %7628
    %7630 = vrot.lane.b32.xlu0 %v7317, 124
    %v7631 = vpop.permute.xlu0 %7630
    %7632 = vrot.lane.b32.xlu0 %v7321, 124
    %v7633 = vpop.permute.xlu0 %7632
    %7634 = vrot.lane.b32.xlu0 %v7320, 124
    %v7635 = vpop.permute.xlu0 %7634
    %7636 = vrot.lane.b32.xlu0 %v7324, 124
    %v7637 = vpop.permute.xlu0 %7636
    %7638 = vrot.lane.b32.xlu0 %v7323, 124
    %v7639 = vpop.permute.xlu0 %7638
    %7640 = vrot.lane.b32.xlu0 %v7327, 124
    %v7641 = vpop.permute.xlu0 %7640
    %7642 = vrot.lane.b32.xlu0 %v7326, 124
    %v7643 = vpop.permute.xlu0 %7642
    %7644 = vrot.lane.b32.xlu0 %v7330, 124
    %v7645 = vpop.permute.xlu0 %7644
    %7646 = vrot.lane.b32.xlu0 %v7329, 124
    %v7647 = vpop.permute.xlu0 %7646
    %7648 = vrot.lane.b32.xlu0 %v7333, 124
    %v7649 = vpop.permute.xlu0 %7648
    %7650 = vrot.lane.b32.xlu0 %v7332, 124
    %v7651 = vpop.permute.xlu0 %7650
    %7652 = vrot.lane.b32.xlu0 %v7336, 124
    %v7653 = vpop.permute.xlu0 %7652
    %7654 = vrot.lane.b32.xlu0 %v7335, 124
    %v7655 = vpop.permute.xlu0 %7654
    %7656 = vrot.lane.b32.xlu0 %v7339, 124
    %v7657 = vpop.permute.xlu0 %7656
    %7658 = vrot.lane.b32.xlu0 %v7338, 124
    %v7659 = vpop.permute.xlu0 %7658
    %7660 = vrot.lane.b32.xlu0 %v7342, 124
    %v7661 = vpop.permute.xlu0 %7660
    %7662 = vrot.lane.b32.xlu0 %v7341, 124
    %v7663 = vpop.permute.xlu0 %7662
    %7664 = vrot.lane.b32.xlu0 %v7345, 124
    %v7665 = vpop.permute.xlu0 %7664
    %7666 = vrot.lane.b32.xlu0 %v7344, 124
    %v7667 = vpop.permute.xlu0 %7666
    %7668 = vrot.lane.b32.xlu0 %v7348, 124
    %v7669 = vpop.permute.xlu0 %7668
    %7670 = vrot.lane.b32.xlu0 %v7347, 124
    %v7671 = vpop.permute.xlu0 %7670
    %7672 = vrot.lane.b32.xlu0 %v7351, 124
    %v7673 = vpop.permute.xlu0 %7672
    %7674 = vrot.lane.b32.xlu0 %v7350, 124
    %v7675 = vpop.permute.xlu0 %7674
    %7676 = vrot.lane.b32.xlu0 %v7354, 124
    %v7677 = vpop.permute.xlu0 %7676
    %7678 = vrot.lane.b32.xlu0 %v7353, 124
    %v7679 = vpop.permute.xlu0 %7678
    %7680 = vrot.lane.b32.xlu0 %v7357, 124
    %v7681 = vpop.permute.xlu0 %7680
    %7682 = vrot.lane.b32.xlu0 %v7356, 124
    %v7683 = vpop.permute.xlu0 %7682
    %7684 = vrot.lane.b32.xlu0 %v7360, 124
    %v7685 = vpop.permute.xlu0 %7684
    %7686 = vrot.lane.b32.xlu0 %v7359, 124
    %v7687 = vpop.permute.xlu0 %7686
    %7688 = vrot.lane.b32.xlu0 %v7363, 124
    %v7689 = vpop.permute.xlu0 %7688
    %7690 = vrot.lane.b32.xlu0 %v7362, 124
    %v7691 = vpop.permute.xlu0 %7690
    %7692 = vrot.lane.b32.xlu0 %v7366, 124
    %v7693 = vpop.permute.xlu0 %7692
    %7694 = vrot.lane.b32.xlu0 %v7365, 124
    %v7695 = vpop.permute.xlu0 %7694
    %7696 = vrot.lane.b32.xlu0 %v7369, 124
    %v7697 = vpop.permute.xlu0 %7696
    %7698 = vrot.lane.b32.xlu0 %v7368, 124
    %v7699 = vpop.permute.xlu0 %7698
    %7700 = vrot.lane.b32.xlu0 %v7372, 124
    %v7701 = vpop.permute.xlu0 %7700
    %7702 = vrot.lane.b32.xlu0 %v7371, 124
    %v7703 = vpop.permute.xlu0 %7702
    %7704 = vrot.lane.b32.xlu0 %v7375, 124
    %v7705 = vpop.permute.xlu0 %7704
    %7706 = vrot.lane.b32.xlu0 %v7374, 124
    %v7707 = vpop.permute.xlu0 %7706
    %7708 = vrot.lane.b32.xlu0 %v7378, 124
    %v7709 = vpop.permute.xlu0 %7708
    %7710 = vrot.lane.b32.xlu0 %v7377, 124
    %v7711 = vpop.permute.xlu0 %7710
    %7712 = vrot.lane.b32.xlu0 %v7381, 124
    %v7713 = vpop.permute.xlu0 %7712
    %7714 = vrot.lane.b32.xlu0 %v7380, 124
    %v7715 = vpop.permute.xlu0 %7714
    %7716 = vrot.lane.b32.xlu0 %v7384, 124
    %v7717 = vpop.permute.xlu0 %7716
    %7718 = vrot.lane.b32.xlu0 %v7383, 124
    %v7719 = vpop.permute.xlu0 %7718
    %7720 = vrot.lane.b32.xlu0 %v7387, 124
    %v7721 = vpop.permute.xlu0 %7720
    %7722 = vrot.lane.b32.xlu0 %v7386, 124
    %v7723 = vpop.permute.xlu0 %7722
    %7724 = vrot.lane.b32.xlu0 %v7390, 124
    %v7725 = vpop.permute.xlu0 %7724
    %7726 = vrot.lane.b32.xlu0 %v7389, 124
    %v7727 = vpop.permute.xlu0 %7726
    %7728 = vrot.lane.b32.xlu0 %v7393, 124
    %v7729 = vpop.permute.xlu0 %7728
    %7730 = vrot.lane.b32.xlu0 %v7392, 124
    %v7731 = vpop.permute.xlu0 %7730
    %7732 = vrot.lane.b32.xlu0 %v7396, 124
    %v7733 = vpop.permute.xlu0 %7732
    %7734 = vrot.lane.b32.xlu0 %v7395, 124
    %v7735 = vpop.permute.xlu0 %7734
    %7736 = vrot.lane.b32.xlu0 %v7399, 124
    %v7737 = vpop.permute.xlu0 %7736
    %7738 = vrot.lane.b32.xlu0 %v7398, 124
    %v7739 = vpop.permute.xlu0 %7738
    %7740 = vrot.lane.b32.xlu0 %v7402, 124
    %v7741 = vpop.permute.xlu0 %7740
    %7742 = vrot.lane.b32.xlu0 %v7401, 124
    %v7743 = vpop.permute.xlu0 %7742
    %7744 = vrot.lane.b32.xlu0 %v7405, 124
    %v7745 = vpop.permute.xlu0 %7744
    %7746 = vrot.lane.b32.xlu0 %v7404, 124
    %v7747 = vpop.permute.xlu0 %7746
    %7748 = vrot.lane.b32.xlu0 %v7408, 124
    %v7749 = vpop.permute.xlu0 %7748
    %7750 = vrot.lane.b32.xlu0 %v7407, 124
    %v7751 = vpop.permute.xlu0 %7750
    %7752 = vrot.lane.b32.xlu0 %v7411, 124
    %v7753 = vpop.permute.xlu0 %7752
    %7754 = vrot.lane.b32.xlu0 %v7410, 124
    %v7755 = vpop.permute.xlu0 %7754
    %7756 = vrot.lane.b32.xlu0 %v7414, 124
    %v7757 = vpop.permute.xlu0 %7756
    %7758 = vrot.lane.b32.xlu0 %v7413, 124
    %v7759 = vpop.permute.xlu0 %7758
    %7760 = vrot.lane.b32.xlu0 %v7417, 124
    %v7761 = vpop.permute.xlu0 %7760
    %7762 = vrot.lane.b32.xlu0 %v7416, 124
    %v7763 = vpop.permute.xlu0 %7762
    %7764 = vrot.lane.b32.xlu0 %v7420, 124
    %v7765 = vpop.permute.xlu0 %7764
    %7766 = vrot.lane.b32.xlu0 %v7419, 124
    %v7767 = vpop.permute.xlu0 %7766
    %7768 = vrot.lane.b32.xlu0 %v7423, 124
    %v7769 = vpop.permute.xlu0 %7768
    %7770 = vrot.lane.b32.xlu0 %v7422, 124
    %v7771 = vpop.permute.xlu0 %7770
    %7772 = vrot.lane.b32.xlu0 %v7426, 124
    %v7773 = vpop.permute.xlu0 %7772
    %7774 = vrot.lane.b32.xlu0 %v7425, 124
    %v7775 = vpop.permute.xlu0 %7774
    %7776 = vrot.lane.b32.xlu0 %v7429, 124
    %v7777 = vpop.permute.xlu0 %7776
    %7778 = vrot.lane.b32.xlu0 %v7428, 124
    %v7779 = vpop.permute.xlu0 %7778
    %7780 = vrot.lane.b32.xlu0 %v7432, 124
    %v7781 = vpop.permute.xlu0 %7780
    %7782 = vrot.lane.b32.xlu0 %v7431, 124
    %v7783 = vpop.permute.xlu0 %7782
    %7784 = vrot.lane.b32.xlu0 %v7435, 124
    %v7785 = vpop.permute.xlu0 %7784
    %7786 = vrot.lane.b32.xlu0 %v7434, 124
    %v7787 = vpop.permute.xlu0 %7786
    %7788 = vrot.lane.b32.xlu0 %v7438, 124
    %v7789 = vpop.permute.xlu0 %7788
    %7790 = vrot.lane.b32.xlu0 %v7437, 124
    %v7791 = vpop.permute.xlu0 %7790
    %7792 = vrot.lane.b32.xlu0 %v7441, 124
    %v7793 = vpop.permute.xlu0 %7792
    %7794 = vrot.lane.b32.xlu0 %v7440, 124
    %v7795 = vpop.permute.xlu0 %7794
    %7796 = vrot.lane.b32.xlu0 %v7444, 124
    %v7797 = vpop.permute.xlu0 %7796
    %7798 = vrot.lane.b32.xlu0 %v7443, 124
    %v7799 = vpop.permute.xlu0 %7798
    %7800 = vrot.lane.b32.xlu0 %v7447, 124
    %v7801 = vpop.permute.xlu0 %7800
    %7802 = vrot.lane.b32.xlu0 %v7446, 124
    %v7803 = vpop.permute.xlu0 %7802
    %7804 = vrot.lane.b32.xlu0 %v7450, 124
    %v7805 = vpop.permute.xlu0 %7804
    %7806 = vrot.lane.b32.xlu0 %v7449, 124
    %v7807 = vpop.permute.xlu0 %7806
    %7808 = vrot.lane.b32.xlu0 %v7453, 124
    %v7809 = vpop.permute.xlu0 %7808
    %7810 = vrot.lane.b32.xlu0 %v7452, 124
    %v7811 = vpop.permute.xlu0 %7810
    %7812 = vrot.lane.b32.xlu0 %v7456, 124
    %v7813 = vpop.permute.xlu0 %7812
    %7814 = vrot.lane.b32.xlu0 %v7455, 124
    %v7815 = vpop.permute.xlu0 %7814
    %7816 = vrot.lane.b32.xlu0 %v7459, 124
    %v7817 = vpop.permute.xlu0 %7816
    %7818 = vrot.lane.b32.xlu0 %v7458, 124
    %v7819 = vpop.permute.xlu0 %7818
    %7820 = vrot.lane.b32.xlu0 %v7462, 124
    %v7821 = vpop.permute.xlu0 %7820
    %7822 = vrot.lane.b32.xlu0 %v7461, 124
    %v7823 = vpop.permute.xlu0 %7822
    %7824 = vrot.lane.b32.xlu0 %v7465, 124
    %v7825 = vpop.permute.xlu0 %7824
    %7826 = vrot.lane.b32.xlu0 %v7464, 124
    %v7827 = vpop.permute.xlu0 %7826
    %7828 = vrot.lane.b32.xlu0 %v7468, 124
    %v7829 = vpop.permute.xlu0 %7828
    %7830 = vrot.lane.b32.xlu0 %v7467, 124
    %v7831 = vpop.permute.xlu0 %7830
    %7832 = vrot.lane.b32.xlu0 %v7471, 124
    %v7833 = vpop.permute.xlu0 %7832
    %7834 = vrot.lane.b32.xlu0 %v7470, 124
    %v7835 = vpop.permute.xlu0 %7834
    %7836 = vrot.lane.b32.xlu0 %v7474, 124
    %v7837 = vpop.permute.xlu0 %7836
    %7838 = vrot.lane.b32.xlu0 %v7473, 124
    %v7839 = vpop.permute.xlu0 %7838
    %7840 = vrot.lane.b32.xlu0 %v7477, 124
    %v7841 = vpop.permute.xlu0 %7840
    %7842 = vrot.lane.b32.xlu0 %v7476, 124
    %v7843 = vpop.permute.xlu0 %7842
    %7844 = vrot.lane.b32.xlu0 %v7480, 124
    %v7845 = vpop.permute.xlu0 %7844
    %7846 = vrot.lane.b32.xlu0 %v7479, 124
    %v7847 = vpop.permute.xlu0 %7846
    %7848 = vrot.lane.b32.xlu0 %v7483, 124
    %v7849 = vpop.permute.xlu0 %7848
    %7850 = vrot.lane.b32.xlu0 %v7482, 124
    %v7851 = vpop.permute.xlu0 %7850
    %7852 = vrot.lane.b32.xlu0 %v7486, 124
    %v7853 = vpop.permute.xlu0 %7852
    %7854 = vrot.lane.b32.xlu0 %v7485, 124
    %v7855 = vpop.permute.xlu0 %7854
    %7856 = vrot.lane.b32.xlu0 %v7489, 124
    %v7857 = vpop.permute.xlu0 %7856
    %7858 = vrot.lane.b32.xlu0 %v7488, 124
    %v7859 = vpop.permute.xlu0 %7858
    %7860 = vrot.lane.b32.xlu0 %v7492, 124
    %v7861 = vpop.permute.xlu0 %7860
    %7862 = vrot.lane.b32.xlu0 %v7491, 124
    %v7863 = vpop.permute.xlu0 %7862
    %7864 = vrot.lane.b32.xlu0 %v7495, 124
    %v7865 = vpop.permute.xlu0 %7864
    %7866 = vrot.lane.b32.xlu0 %v7494, 124
    %v7867 = vpop.permute.xlu0 %7866
    %7868 = vrot.lane.b32.xlu0 %v7498, 124
    %v7869 = vpop.permute.xlu0 %7868
    %7870 = vrot.lane.b32.xlu0 %v7497, 124
    %v7871 = vpop.permute.xlu0 %7870
    %7872 = vrot.lane.b32.xlu0 %v7501, 124
    %v7873 = vpop.permute.xlu0 %7872
    %7874 = vrot.lane.b32.xlu0 %v7500, 124
    %v7875 = vpop.permute.xlu0 %7874
    %7876 = vrot.lane.b32.xlu0 %v7504, 124
    %v7877 = vpop.permute.xlu0 %7876
    %7878 = vrot.lane.b32.xlu0 %v7503, 124
    %v7879 = vpop.permute.xlu0 %7878
    %7880 = vrot.lane.b32.xlu0 %v7507, 124
    %v7881 = vpop.permute.xlu0 %7880
    %7882 = vrot.lane.b32.xlu0 %v7506, 124
    %v7883 = vpop.permute.xlu0 %7882
    %7884 = vrot.lane.b32.xlu0 %v7510, 124
    %v7885 = vpop.permute.xlu0 %7884
    %7886 = vrot.lane.b32.xlu0 %v7509, 124
    %v7887 = vpop.permute.xlu0 %7886
    %7888 = vrot.lane.b32.xlu0 %v7513, 124
    %v7889 = vpop.permute.xlu0 %7888
    %7890 = vrot.lane.b32.xlu0 %v7512, 124
    %v7891 = vpop.permute.xlu0 %7890
    %7892 = vrot.lane.b32.xlu0 %v7516, 124
    %v7893 = vpop.permute.xlu0 %7892
    %7894 = vrot.lane.b32.xlu0 %v7515, 124
    %v7895 = vpop.permute.xlu0 %7894
    %7896 = vrot.lane.b32.xlu0 %v7519, 124
    %v7897 = vpop.permute.xlu0 %7896
    %7898 = vrot.lane.b32.xlu0 %v7518, 124
    %v7899 = vpop.permute.xlu0 %7898
    %7900 = vrot.lane.b32.xlu0 %v7522, 124
    %v7901 = vpop.permute.xlu0 %7900
    %7902 = vrot.lane.b32.xlu0 %v7521, 124
    %v7903 = vpop.permute.xlu0 %7902
    %7904 = vrot.lane.b32.xlu0 %v7525, 124
    %v7905 = vpop.permute.xlu0 %7904
    %7906 = vrot.lane.b32.xlu0 %v7524, 124
    %v7907 = vpop.permute.xlu0 %7906
    %7908 = vrot.lane.b32.xlu0 %v7528, 124
    %v7909 = vpop.permute.xlu0 %7908
    %7910 = vrot.lane.b32.xlu0 %v7527, 124
    %v7911 = vpop.permute.xlu0 %7910
    %7912 = vrot.lane.b32.xlu0 %v7531, 124
    %v7913 = vpop.permute.xlu0 %7912
    %7914 = vrot.lane.b32.xlu0 %v7530, 124
    %v7915 = vpop.permute.xlu0 %7914
    %7916 = vrot.lane.b32.xlu0 %v7534, 124
    %v7917 = vpop.permute.xlu0 %7916
    %7918 = vrot.lane.b32.xlu0 %v7533, 124
    %v7919 = vpop.permute.xlu0 %7918
    %7920 = vrot.lane.b32.xlu0 %v7537, 124
    %v7921 = vpop.permute.xlu0 %7920
    %7922 = vrot.lane.b32.xlu0 %v7536, 124
    %v7923 = vpop.permute.xlu0 %7922
    %7924 = vrot.lane.b32.xlu0 %v7540, 124
    %v7925 = vpop.permute.xlu0 %7924
    %7926 = vrot.lane.b32.xlu0 %v7539, 124
    %v7927 = vpop.permute.xlu0 %7926
    %7928 = vrot.lane.b32.xlu0 %v7543, 124
    %v7929 = vpop.permute.xlu0 %7928
    %7930 = vrot.lane.b32.xlu0 %v7542, 124
    %v7931 = vpop.permute.xlu0 %7930
    %7932 = vrot.lane.b32.xlu0 %v7546, 124
    %v7933 = vpop.permute.xlu0 %7932
    %7934 = vrot.lane.b32.xlu0 %v7545, 124
    %v7935 = vpop.permute.xlu0 %7934
    %7936 = vrot.lane.b32.xlu0 %v7549, 124
    %v7937 = vpop.permute.xlu0 %7936
    %7938 = vrot.lane.b32.xlu0 %v7548, 124
    %v7939 = vpop.permute.xlu0 %7938
    %7940 = vrot.lane.b32.xlu0 %v7552, 124
    %v7941 = vpop.permute.xlu0 %7940
    %7942 = vrot.lane.b32.xlu0 %v7551, 124
    %v7943 = vpop.permute.xlu0 %7942
    %7944 = vrot.lane.b32.xlu0 %v7555, 124
    %v7945 = vpop.permute.xlu0 %7944
    %7946 = vrot.lane.b32.xlu0 %v7554, 124
    %v7947 = vpop.permute.xlu0 %7946
    %7948 = vrot.lane.b32.xlu0 %v7558, 124
    %v7949 = vpop.permute.xlu0 %7948
    %7950 = vrot.lane.b32.xlu0 %v7557, 124
    %v7951 = vpop.permute.xlu0 %7950
    %7952 = vrot.lane.b32.xlu0 %v7561, 124
    %v7953 = vpop.permute.xlu0 %7952
    %7954 = vrot.lane.b32.xlu0 %v7560, 124
    %v7955 = vpop.permute.xlu0 %7954
    %7956 = vrot.lane.b32.xlu0 %v7564, 124
    %v7957 = vpop.permute.xlu0 %7956
    %7958 = vrot.lane.b32.xlu0 %v7563, 124
    %v7959 = vpop.permute.xlu0 %7958
    %7960 = vrot.lane.b32.xlu0 %v7567, 124
    %v7961 = vpop.permute.xlu0 %7960
    %7962 = vrot.lane.b32.xlu0 %v7566, 124
    %v7963 = vpop.permute.xlu0 %7962
    %7964 = vrot.lane.b32.xlu0 %v7570, 124
    %v7965 = vpop.permute.xlu0 %7964
    %7966 = vrot.lane.b32.xlu0 %v7569, 124
    %v7967 = vpop.permute.xlu0 %7966
    %7968 = vrot.lane.b32.xlu0 %v7573, 124
    %v7969 = vpop.permute.xlu0 %7968
    %7970 = vrot.lane.b32.xlu0 %v7572, 124
    %v7971 = vpop.permute.xlu0 %7970
    %7972 = vrot.lane.b32.xlu0 %v7576, 124
    %v7973 = vpop.permute.xlu0 %7972
    %7974 = vrot.lane.b32.xlu0 %v7575, 124
    %v7975 = vpop.permute.xlu0 %7974
    %7976 = vrot.lane.b32.xlu0 %v7579, 124
    %v7977 = vpop.permute.xlu0 %7976
    %7978 = vrot.lane.b32.xlu0 %v7578, 124
    %v7979 = vpop.permute.xlu0 %7978
    %7980 = vrot.lane.b32.xlu0 %v7582, 124
    %v7981 = vpop.permute.xlu0 %7980
    %7982 = vrot.lane.b32.xlu0 %v7581, 124
    %v7983 = vpop.permute.xlu0 %7982
    %7984 = vrot.lane.b32.xlu0 %v7585, 124
    %v7985 = vpop.permute.xlu0 %7984
    %7986 = vrot.lane.b32.xlu0 %v7584, 124
    %v7987 = vpop.permute.xlu0 %7986
    %7988 = vrot.lane.b32.xlu0 %v7588, 124
    %v7989 = vpop.permute.xlu0 %7988
    %7990 = vrot.lane.b32.xlu0 %v7587, 124
    %v7991 = vpop.permute.xlu0 %7990
    %7992 = vrot.lane.b32.xlu0 %v7591, 124
    %v7993 = vpop.permute.xlu0 %7992
    %7994 = vrot.lane.b32.xlu0 %v7590, 124
    %v7995 = vpop.permute.xlu0 %7994
    %7996 = vrot.lane.b32.xlu0 %v7594, 124
    %v7997 = vpop.permute.xlu0 %7996
    %7998 = vrot.lane.b32.xlu0 %v7593, 124
    %v7999 = vpop.permute.xlu0 %7998
    %8000 = vrot.lane.b32.xlu0 %v7597, 124
    %v8001 = vpop.permute.xlu0 %8000
    %8002 = vrot.lane.b32.xlu0 %v7596, 124
    %v8003 = vpop.permute.xlu0 %8002
    %8004 = vrot.lane.b32.xlu0 %v7600, 124
    %v8005 = vpop.permute.xlu0 %8004
    %8006 = vrot.lane.b32.xlu0 %v7599, 124
    %v8007 = vpop.permute.xlu0 %8006
    %8008 = vrot.lane.b32.xlu0 %v7603, 124
    %v8009 = vpop.permute.xlu0 %8008
    %8010 = vrot.lane.b32.xlu0 %v7602, 124
    %v8011 = vpop.permute.xlu0 %8010
    %8012 = vrot.lane.b32.xlu0 %v7606, 124
    %v8013 = vpop.permute.xlu0 %8012
    %8014 = vrot.lane.b32.xlu0 %v7605, 124
    %v8015 = vpop.permute.xlu0 %8014
    %8016 = vrot.lane.b32.xlu0 %v7609, 124
    %v8017 = vpop.permute.xlu0 %8016
    %8018 = vrot.lane.b32.xlu0 %v7608, 124
    %v8019 = vpop.permute.xlu0 %8018
    %8020 = vrot.lane.b32.xlu0 %v7612, 124
    %v8021 = vpop.permute.xlu0 %8020
    %8022 = vrot.lane.b32.xlu0 %v7611, 124
    %v8023 = vpop.permute.xlu0 %8022
    %8024 = vrot.lane.b32.xlu0 %v7615, 124
    %v8025 = vpop.permute.xlu0 %8024
    %8026 = vrot.lane.b32.xlu0 %v7614, 124
    %v8027 = vpop.permute.xlu0 %8026
    %8028 = vrot.lane.b32.xlu0 %v7618, 124
    %v8029 = vpop.permute.xlu0 %8028
    %8030 = vrot.lane.b32.xlu0 %v7617, 124
    %v8031 = vpop.permute.xlu0 %8030
    %8032 = vrot.lane.b32.xlu0 %v7621, 124
    %v8033 = vpop.permute.xlu0 %8032
    %8034 = vrot.lane.b32.xlu0 %v7620, 124
    %v8035 = vpop.permute.xlu0 %8034
    %8036 = vrot.lane.b32.xlu0 %v7624, 124
    %v8037 = vpop.permute.xlu0 %8036
    %8038 = vrot.lane.b32.xlu0 %v7623, 124
    %v8039 = vpop.permute.xlu0 %8038
    %8040 = vrot.lane.b32.xlu0 %v7627, 124
    %v8041 = vpop.permute.xlu0 %8040
    %8042 = vrot.lane.b32.xlu0 %v7626, 124
    %v8043 = vpop.permute.xlu0 %8042
    %v8252 = vadd.f32 %v6169, %v7629
    %v8253 = vadd.f32 %v6170, %v7631
    %v8254 = vadd.f32 %v6171, %v7633
    %v8255 = vadd.f32 %v6172, %v7635
    %v8256 = vadd.f32 %v6173, %v7637
    %v8257 = vadd.f32 %v6174, %v7639
    %v8258 = vadd.f32 %v6175, %v7641
    %v8259 = vadd.f32 %v6176, %v7643
    %v8260 = vadd.f32 %v6177, %v7645
    %v8261 = vadd.f32 %v6178, %v7647
    %v8262 = vadd.f32 %v6179, %v7649
    %v8263 = vadd.f32 %v6180, %v7651
    %v8264 = vadd.f32 %v6181, %v7653
    %v8265 = vadd.f32 %v6182, %v7655
    %v8266 = vadd.f32 %v6183, %v7657
    %v8267 = vadd.f32 %v6184, %v7659
    %v8268 = vadd.f32 %v6185, %v7661
    %v8269 = vadd.f32 %v6186, %v7663
    %v8270 = vadd.f32 %v6187, %v7665
    %v8271 = vadd.f32 %v6188, %v7667
    %v8272 = vadd.f32 %v6189, %v7669
    %v8273 = vadd.f32 %v6190, %v7671
    %v8274 = vadd.f32 %v6191, %v7673
    %v8275 = vadd.f32 %v6192, %v7675
    %v8276 = vadd.f32 %v6193, %v7677
    %v8277 = vadd.f32 %v6194, %v7679
    %v8278 = vadd.f32 %v6195, %v7681
    %v8279 = vadd.f32 %v6196, %v7683
    %v8280 = vadd.f32 %v6197, %v7685
    %v8281 = vadd.f32 %v6198, %v7687
    %v8282 = vadd.f32 %v6199, %v7689
    %v8283 = vadd.f32 %v6200, %v7691
    %v8284 = vadd.f32 %v6201, %v7693
    %v8285 = vadd.f32 %v6202, %v7695
    %v8286 = vadd.f32 %v6203, %v7697
    %v8287 = vadd.f32 %v6204, %v7699
    %v8288 = vadd.f32 %v6205, %v7701
    %v8289 = vadd.f32 %v6206, %v7703
    %v8290 = vadd.f32 %v6207, %v7705
    %v8291 = vadd.f32 %v6208, %v7707
    %v8292 = vadd.f32 %v6209, %v7709
    %v8293 = vadd.f32 %v6210, %v7711
    %v8294 = vadd.f32 %v6211, %v7713
    %v8295 = vadd.f32 %v6212, %v7715
    %v8296 = vadd.f32 %v6213, %v7717
    %v8297 = vadd.f32 %v6214, %v7719
    %v8298 = vadd.f32 %v6215, %v7721
    %v8299 = vadd.f32 %v6216, %v7723
    %v8300 = vadd.f32 %v6217, %v7725
    %v8301 = vadd.f32 %v6218, %v7727
    %v8302 = vadd.f32 %v6219, %v7729
    %v8303 = vadd.f32 %v6220, %v7731
    %v8304 = vadd.f32 %v6221, %v7733
    %v8305 = vadd.f32 %v6222, %v7735
    %v8306 = vadd.f32 %v6223, %v7737
    %v8307 = vadd.f32 %v6224, %v7739
    %v8308 = vadd.f32 %v6225, %v7741
    %v8309 = vadd.f32 %v6226, %v7743
    %v8310 = vadd.f32 %v6227, %v7745
    %v8311 = vadd.f32 %v6228, %v7747
    %v8312 = vadd.f32 %v6229, %v7749
    %v8313 = vadd.f32 %v6230, %v7751
    %v8314 = vadd.f32 %v6231, %v7753
    %v8315 = vadd.f32 %v6232, %v7755
    %v8316 = vadd.f32 %v6233, %v7757
    %v8317 = vadd.f32 %v6234, %v7759
    %v8318 = vadd.f32 %v6235, %v7761
    %v8319 = vadd.f32 %v6236, %v7763
    %v8320 = vadd.f32 %v6237, %v7765
    %v8321 = vadd.f32 %v6238, %v7767
    %v8322 = vadd.f32 %v6239, %v7769
    %v8323 = vadd.f32 %v6240, %v7771
    %v8324 = vadd.f32 %v6241, %v7773
    %v8325 = vadd.f32 %v6242, %v7775
    %v8326 = vadd.f32 %v6243, %v7777
    %v8327 = vadd.f32 %v6244, %v7779
    %v8328 = vadd.f32 %v6245, %v7781
    %v8329 = vadd.f32 %v6246, %v7783
    %v8330 = vadd.f32 %v6247, %v7785
    %v8331 = vadd.f32 %v6248, %v7787
    %v8332 = vadd.f32 %v6249, %v7789
    %v8333 = vadd.f32 %v6250, %v7791
    %v8334 = vadd.f32 %v6251, %v7793
    %v8335 = vadd.f32 %v6252, %v7795
    %v8336 = vadd.f32 %v6253, %v7797
    %v8337 = vadd.f32 %v6254, %v7799
    %v8338 = vadd.f32 %v6255, %v7801
    %v8339 = vadd.f32 %v6256, %v7803
    %v8340 = vadd.f32 %v6257, %v7805
    %v8341 = vadd.f32 %v6258, %v7807
    %v8342 = vadd.f32 %v6259, %v7809
    %v8343 = vadd.f32 %v6260, %v7811
    %v8344 = vadd.f32 %v6261, %v7813
    %v8345 = vadd.f32 %v6262, %v7815
    %v8346 = vadd.f32 %v6263, %v7817
    %v8347 = vadd.f32 %v6264, %v7819
    %v8348 = vadd.f32 %v6265, %v7821
    %v8349 = vadd.f32 %v6266, %v7823
    %v8350 = vadd.f32 %v6267, %v7825
    %v8351 = vadd.f32 %v6268, %v7827
    %v8352 = vadd.f32 %v6269, %v7829
    %v8353 = vadd.f32 %v6270, %v7831
    %v8354 = vadd.f32 %v6271, %v7833
    %v8355 = vadd.f32 %v6272, %v7835
    %v8356 = vadd.f32 %v6273, %v7837
    %v8357 = vadd.f32 %v6274, %v7839
    %v8358 = vadd.f32 %v6275, %v7841
    %v8359 = vadd.f32 %v6276, %v7843
    %v8360 = vadd.f32 %v6277, %v7845
    %v8361 = vadd.f32 %v6278, %v7847
    %v8362 = vadd.f32 %v6279, %v7849
    %v8363 = vadd.f32 %v6280, %v7851
    %v8364 = vadd.f32 %v6281, %v7853
    %v8365 = vadd.f32 %v6282, %v7855
    %v8366 = vadd.f32 %v6283, %v7857
    %v8367 = vadd.f32 %v6284, %v7859
    %v8368 = vadd.f32 %v6285, %v7861
    %v8369 = vadd.f32 %v6286, %v7863
    %v8370 = vadd.f32 %v6287, %v7865
    %v8371 = vadd.f32 %v6288, %v7867
    %v8372 = vadd.f32 %v6289, %v7869
    %v8373 = vadd.f32 %v6290, %v7871
    %v8374 = vadd.f32 %v6291, %v7873
    %v8375 = vadd.f32 %v6292, %v7875
    %v8376 = vadd.f32 %v6293, %v7877
    %v8377 = vadd.f32 %v6294, %v7879
    %v8378 = vadd.f32 %v6295, %v7881
    %v8379 = vadd.f32 %v6296, %v7883
    %v8380 = vadd.f32 %v6297, %v7885
    %v8381 = vadd.f32 %v6298, %v7887
    %v8382 = vadd.f32 %v6299, %v7889
    %v8383 = vadd.f32 %v6300, %v7891
    %v8384 = vadd.f32 %v6301, %v7893
    %v8385 = vadd.f32 %v6302, %v7895
    %v8386 = vadd.f32 %v6303, %v7897
    %v8387 = vadd.f32 %v6304, %v7899
    %v8388 = vadd.f32 %v6305, %v7901
    %v8389 = vadd.f32 %v6306, %v7903
    %v8390 = vadd.f32 %v6307, %v7905
    %v8391 = vadd.f32 %v6308, %v7907
    %v8392 = vadd.f32 %v6309, %v7909
    %v8393 = vadd.f32 %v6310, %v7911
    %v8394 = vadd.f32 %v6311, %v7913
    %v8395 = vadd.f32 %v6312, %v7915
    %v8396 = vadd.f32 %v6313, %v7917
    %v8397 = vadd.f32 %v6314, %v7919
    %v8398 = vadd.f32 %v6315, %v7921
    %v8399 = vadd.f32 %v6316, %v7923
    %v8400 = vadd.f32 %v6317, %v7925
    %v8401 = vadd.f32 %v6318, %v7927
    %v8402 = vadd.f32 %v6319, %v7929
    %v8403 = vadd.f32 %v6320, %v7931
    %v8404 = vadd.f32 %v6321, %v7933
    %v8405 = vadd.f32 %v6322, %v7935
    %v8406 = vadd.f32 %v6323, %v7937
    %v8407 = vadd.f32 %v6324, %v7939
    %v8408 = vadd.f32 %v6325, %v7941
    %v8409 = vadd.f32 %v6326, %v7943
    %v8410 = vadd.f32 %v6327, %v7945
    %v8411 = vadd.f32 %v6328, %v7947
    %v8412 = vadd.f32 %v6329, %v7949
    %v8413 = vadd.f32 %v6330, %v7951
    %v8414 = vadd.f32 %v6331, %v7953
    %v8415 = vadd.f32 %v6332, %v7955
    %v8416 = vadd.f32 %v6333, %v7957
    %v8417 = vadd.f32 %v6334, %v7959
    %v8418 = vadd.f32 %v6335, %v7961
    %v8419 = vadd.f32 %v6336, %v7963
    %v8420 = vadd.f32 %v6337, %v7965
    %v8421 = vadd.f32 %v6338, %v7967
    %v8422 = vadd.f32 %v6339, %v7969
    %v8423 = vadd.f32 %v6340, %v7971
    %v8424 = vadd.f32 %v6341, %v7973
    %v8425 = vadd.f32 %v6342, %v7975
    %v8426 = vadd.f32 %v6343, %v7977
    %v8427 = vadd.f32 %v6344, %v7979
    %v8428 = vadd.f32 %v6345, %v7981
    %v8429 = vadd.f32 %v6346, %v7983
    %v8430 = vadd.f32 %v6347, %v7985
    %v8431 = vadd.f32 %v6348, %v7987
    %v8432 = vadd.f32 %v6349, %v7989
    %v8433 = vadd.f32 %v6350, %v7991
    %v8434 = vadd.f32 %v6351, %v7993
    %v8435 = vadd.f32 %v6352, %v7995
    %v8436 = vadd.f32 %v6353, %v7997
    %v8437 = vadd.f32 %v6354, %v7999
    %v8438 = vadd.f32 %v6355, %v8001
    %v8439 = vadd.f32 %v6356, %v8003
    %v8440 = vadd.f32 %v6357, %v8005
    %v8441 = vadd.f32 %v6358, %v8007
    %v8442 = vadd.f32 %v6359, %v8009
    %v8443 = vadd.f32 %v6360, %v8011
    %v8444 = vadd.f32 %v6361, %v8013
    %v8445 = vadd.f32 %v6362, %v8015
    %v8446 = vadd.f32 %v6363, %v8017
    %v8447 = vadd.f32 %v6364, %v8019
    %v8448 = vadd.f32 %v6365, %v8021
    %v8449 = vadd.f32 %v6366, %v8023
    %v8450 = vadd.f32 %v6367, %v8025
    %v8451 = vadd.f32 %v6368, %v8027
    %v8452 = vadd.f32 %v6369, %v8029
    %v8453 = vadd.f32 %v6370, %v8031
    %v8454 = vadd.f32 %v6371, %v8033
    %v8455 = vadd.f32 %v6372, %v8035
    %v8456 = vadd.f32 %v6373, %v8037
    %v8457 = vadd.f32 %v6374, %v8039
    %v8458 = vadd.f32 %v6375, %v8041
    %v8459 = vadd.f32 %v6376, %v8043
    %vm8460 = vcmask 64568
    %v8461 = vsel %vm8460, %v8252, -inf
    %vm8462 = vcmask 60472
    %v8463 = vsel %vm8462, %v8253, -inf
    %v8464 = vmax.f32 %v8461, %v8463
    %v8465 = vrot.slane %v8464, 4
    %v8466 = vmax.f32 %v8464, %v8465
    %v8467 = vrot.slane %v8466, 2
    %v8468 = vmax.f32 %v8466, %v8467
    %v8469 = vrot.slane %v8468, 1
    %v8470 = vmax.f32 %v8468, %v8469
    %v8471 = vsel %vm8460, %v8254, -inf
    %v8472 = vsel %vm8462, %v8255, -inf
    %v8473 = vmax.f32 %v8471, %v8472
    %v8474 = vrot.slane %v8473, 4
    %v8475 = vmax.f32 %v8473, %v8474
    %v8476 = vrot.slane %v8475, 2
    %v8477 = vmax.f32 %v8475, %v8476
    %v8478 = vrot.slane %v8477, 1
    %v8479 = vmax.f32 %v8477, %v8478
    %v8480 = vsel %vm8460, %v8256, -inf
    %v8481 = vsel %vm8462, %v8257, -inf
    %v8482 = vmax.f32 %v8480, %v8481
    %v8483 = vrot.slane %v8482, 4
    %v8484 = vmax.f32 %v8482, %v8483
    %v8485 = vrot.slane %v8484, 2
    %v8486 = vmax.f32 %v8484, %v8485
    %v8487 = vrot.slane %v8486, 1
    %v8488 = vmax.f32 %v8486, %v8487
    %v8489 = vsel %vm8460, %v8258, -inf
    %v8490 = vsel %vm8462, %v8259, -inf
    %v8491 = vmax.f32 %v8489, %v8490
    %v8492 = vrot.slane %v8491, 4
    %v8493 = vmax.f32 %v8491, %v8492
    %v8494 = vrot.slane %v8493, 2
    %v8495 = vmax.f32 %v8493, %v8494
    %v8496 = vrot.slane %v8495, 1
    %v8497 = vmax.f32 %v8495, %v8496
    %v8498 = vsel %vm8460, %v8260, -inf
    %v8499 = vsel %vm8462, %v8261, -inf
    %v8500 = vmax.f32 %v8498, %v8499
    %v8501 = vrot.slane %v8500, 4
    %v8502 = vmax.f32 %v8500, %v8501
    %v8503 = vrot.slane %v8502, 2
    %v8504 = vmax.f32 %v8502, %v8503
    %v8505 = vrot.slane %v8504, 1
    %v8506 = vmax.f32 %v8504, %v8505
    %v8507 = vsel %vm8460, %v8262, -inf
    %v8508 = vsel %vm8462, %v8263, -inf
    %v8509 = vmax.f32 %v8507, %v8508
    %v8510 = vrot.slane %v8509, 4
    %v8511 = vmax.f32 %v8509, %v8510
    %v8512 = vrot.slane %v8511, 2
    %v8513 = vmax.f32 %v8511, %v8512
    %v8514 = vrot.slane %v8513, 1
    %v8515 = vmax.f32 %v8513, %v8514
    %v8516 = vsel %vm8460, %v8264, -inf
    %v8517 = vsel %vm8462, %v8265, -inf
    %v8518 = vmax.f32 %v8516, %v8517
    %v8519 = vrot.slane %v8518, 4
    %v8520 = vmax.f32 %v8518, %v8519
    %v8521 = vrot.slane %v8520, 2
    %v8522 = vmax.f32 %v8520, %v8521
    %v8523 = vrot.slane %v8522, 1
    %v8524 = vmax.f32 %v8522, %v8523
    %v8525 = vsel %vm8460, %v8266, -inf
    %v8526 = vsel %vm8462, %v8267, -inf
    %v8527 = vmax.f32 %v8525, %v8526
    %v8528 = vrot.slane %v8527, 4
    %v8529 = vmax.f32 %v8527, %v8528
    %v8530 = vrot.slane %v8529, 2
    %v8531 = vmax.f32 %v8529, %v8530
    %v8532 = vrot.slane %v8531, 1
    %v8533 = vmax.f32 %v8531, %v8532
    %v8534 = vsel %vm8460, %v8268, -inf
    %v8535 = vsel %vm8462, %v8269, -inf
    %v8536 = vmax.f32 %v8534, %v8535
    %v8537 = vrot.slane %v8536, 4
    %v8538 = vmax.f32 %v8536, %v8537
    %v8539 = vrot.slane %v8538, 2
    %v8540 = vmax.f32 %v8538, %v8539
    %v8541 = vrot.slane %v8540, 1
    %v8542 = vmax.f32 %v8540, %v8541
    %v8543 = vsel %vm8460, %v8270, -inf
    %v8544 = vsel %vm8462, %v8271, -inf
    %v8545 = vmax.f32 %v8543, %v8544
    %v8546 = vrot.slane %v8545, 4
    %v8547 = vmax.f32 %v8545, %v8546
    %v8548 = vrot.slane %v8547, 2
    %v8549 = vmax.f32 %v8547, %v8548
    %v8550 = vrot.slane %v8549, 1
    %v8551 = vmax.f32 %v8549, %v8550
    %v8552 = vsel %vm8460, %v8272, -inf
    %v8553 = vsel %vm8462, %v8273, -inf
    %v8554 = vmax.f32 %v8552, %v8553
    %v8555 = vrot.slane %v8554, 4
    %v8556 = vmax.f32 %v8554, %v8555
    %v8557 = vrot.slane %v8556, 2
    %v8558 = vmax.f32 %v8556, %v8557
    %v8559 = vrot.slane %v8558, 1
    %v8560 = vmax.f32 %v8558, %v8559
    %v8561 = vsel %vm8460, %v8274, -inf
    %v8562 = vsel %vm8462, %v8275, -inf
    %v8563 = vmax.f32 %v8561, %v8562
    %v8564 = vrot.slane %v8563, 4
    %v8565 = vmax.f32 %v8563, %v8564
    %v8566 = vrot.slane %v8565, 2
    %v8567 = vmax.f32 %v8565, %v8566
    %v8568 = vrot.slane %v8567, 1
    %v8569 = vmax.f32 %v8567, %v8568
    %v8570 = vsel %vm8460, %v8276, -inf
    %v8571 = vsel %vm8462, %v8277, -inf
    %v8572 = vmax.f32 %v8570, %v8571
    %v8573 = vrot.slane %v8572, 4
    %v8574 = vmax.f32 %v8572, %v8573
    %v8575 = vrot.slane %v8574, 2
    %v8576 = vmax.f32 %v8574, %v8575
    %v8577 = vrot.slane %v8576, 1
    %v8578 = vmax.f32 %v8576, %v8577
    %v8579 = vsel %vm8460, %v8278, -inf
    %v8580 = vsel %vm8462, %v8279, -inf
    %v8581 = vmax.f32 %v8579, %v8580
    %v8582 = vrot.slane %v8581, 4
    %v8583 = vmax.f32 %v8581, %v8582
    %v8584 = vrot.slane %v8583, 2
    %v8585 = vmax.f32 %v8583, %v8584
    %v8586 = vrot.slane %v8585, 1
    %v8587 = vmax.f32 %v8585, %v8586
    %v8588 = vsel %vm8460, %v8280, -inf
    %v8589 = vsel %vm8462, %v8281, -inf
    %v8590 = vmax.f32 %v8588, %v8589
    %v8591 = vrot.slane %v8590, 4
    %v8592 = vmax.f32 %v8590, %v8591
    %v8593 = vrot.slane %v8592, 2
    %v8594 = vmax.f32 %v8592, %v8593
    %v8595 = vrot.slane %v8594, 1
    %v8596 = vmax.f32 %v8594, %v8595
    %v8597 = vsel %vm8460, %v8282, -inf
    %v8598 = vsel %vm8462, %v8283, -inf
    %v8599 = vmax.f32 %v8597, %v8598
    %v8600 = vrot.slane %v8599, 4
    %v8601 = vmax.f32 %v8599, %v8600
    %v8602 = vrot.slane %v8601, 2
    %v8603 = vmax.f32 %v8601, %v8602
    %v8604 = vrot.slane %v8603, 1
    %v8605 = vmax.f32 %v8603, %v8604
    %v8606 = vsel %vm8460, %v8284, -inf
    %v8607 = vsel %vm8462, %v8285, -inf
    %v8608 = vmax.f32 %v8606, %v8607
    %v8609 = vrot.slane %v8608, 4
    %v8610 = vmax.f32 %v8608, %v8609
    %v8611 = vrot.slane %v8610, 2
    %v8612 = vmax.f32 %v8610, %v8611
    %v8613 = vrot.slane %v8612, 1
    %v8614 = vmax.f32 %v8612, %v8613
    %v8615 = vsel %vm8460, %v8286, -inf
    %v8616 = vsel %vm8462, %v8287, -inf
    %v8617 = vmax.f32 %v8615, %v8616
    %v8618 = vrot.slane %v8617, 4
    %v8619 = vmax.f32 %v8617, %v8618
    %v8620 = vrot.slane %v8619, 2
    %v8621 = vmax.f32 %v8619, %v8620
    %v8622 = vrot.slane %v8621, 1
    %v8623 = vmax.f32 %v8621, %v8622
    %v8624 = vsel %vm8460, %v8288, -inf
    %v8625 = vsel %vm8462, %v8289, -inf
    %v8626 = vmax.f32 %v8624, %v8625
    %v8627 = vrot.slane %v8626, 4
    %v8628 = vmax.f32 %v8626, %v8627
    %v8629 = vrot.slane %v8628, 2
    %v8630 = vmax.f32 %v8628, %v8629
    %v8631 = vrot.slane %v8630, 1
    %v8632 = vmax.f32 %v8630, %v8631
    %v8633 = vsel %vm8460, %v8290, -inf
    %v8634 = vsel %vm8462, %v8291, -inf
    %v8635 = vmax.f32 %v8633, %v8634
    %v8636 = vrot.slane %v8635, 4
    %v8637 = vmax.f32 %v8635, %v8636
    %v8638 = vrot.slane %v8637, 2
    %v8639 = vmax.f32 %v8637, %v8638
    %v8640 = vrot.slane %v8639, 1
    %v8641 = vmax.f32 %v8639, %v8640
    %v8642 = vsel %vm8460, %v8292, -inf
    %v8643 = vsel %vm8462, %v8293, -inf
    %v8644 = vmax.f32 %v8642, %v8643
    %v8645 = vrot.slane %v8644, 4
    %v8646 = vmax.f32 %v8644, %v8645
    %v8647 = vrot.slane %v8646, 2
    %v8648 = vmax.f32 %v8646, %v8647
    %v8649 = vrot.slane %v8648, 1
    %v8650 = vmax.f32 %v8648, %v8649
    %v8651 = vsel %vm8460, %v8294, -inf
    %v8652 = vsel %vm8462, %v8295, -inf
    %v8653 = vmax.f32 %v8651, %v8652
    %v8654 = vrot.slane %v8653, 4
    %v8655 = vmax.f32 %v8653, %v8654
    %v8656 = vrot.slane %v8655, 2
    %v8657 = vmax.f32 %v8655, %v8656
    %v8658 = vrot.slane %v8657, 1
    %v8659 = vmax.f32 %v8657, %v8658
    %v8660 = vsel %vm8460, %v8296, -inf
    %v8661 = vsel %vm8462, %v8297, -inf
    %v8662 = vmax.f32 %v8660, %v8661
    %v8663 = vrot.slane %v8662, 4
    %v8664 = vmax.f32 %v8662, %v8663
    %v8665 = vrot.slane %v8664, 2
    %v8666 = vmax.f32 %v8664, %v8665
    %v8667 = vrot.slane %v8666, 1
    %v8668 = vmax.f32 %v8666, %v8667
    %v8669 = vsel %vm8460, %v8298, -inf
    %v8670 = vsel %vm8462, %v8299, -inf
    %v8671 = vmax.f32 %v8669, %v8670
    %v8672 = vrot.slane %v8671, 4
    %v8673 = vmax.f32 %v8671, %v8672
    %v8674 = vrot.slane %v8673, 2
    %v8675 = vmax.f32 %v8673, %v8674
    %v8676 = vrot.slane %v8675, 1
    %v8677 = vmax.f32 %v8675, %v8676
    %v8678 = vsel %vm8460, %v8300, -inf
    %v8679 = vsel %vm8462, %v8301, -inf
    %v8680 = vmax.f32 %v8678, %v8679
    %v8681 = vrot.slane %v8680, 4
    %v8682 = vmax.f32 %v8680, %v8681
    %v8683 = vrot.slane %v8682, 2
    %v8684 = vmax.f32 %v8682, %v8683
    %v8685 = vrot.slane %v8684, 1
    %v8686 = vmax.f32 %v8684, %v8685
    %v8687 = vsel %vm8460, %v8302, -inf
    %v8688 = vsel %vm8462, %v8303, -inf
    %v8689 = vmax.f32 %v8687, %v8688
    %v8690 = vrot.slane %v8689, 4
    %v8691 = vmax.f32 %v8689, %v8690
    %v8692 = vrot.slane %v8691, 2
    %v8693 = vmax.f32 %v8691, %v8692
    %v8694 = vrot.slane %v8693, 1
    %v8695 = vmax.f32 %v8693, %v8694
    %v8696 = vsel %vm8460, %v8304, -inf
    %v8697 = vsel %vm8462, %v8305, -inf
    %v8698 = vmax.f32 %v8696, %v8697
    %v8699 = vrot.slane %v8698, 4
    %v8700 = vmax.f32 %v8698, %v8699
    %v8701 = vrot.slane %v8700, 2
    %v8702 = vmax.f32 %v8700, %v8701
    %v8703 = vrot.slane %v8702, 1
    %v8704 = vmax.f32 %v8702, %v8703
    %v8705 = vsel %vm8460, %v8306, -inf
    %v8706 = vsel %vm8462, %v8307, -inf
    %v8707 = vmax.f32 %v8705, %v8706
    %v8708 = vrot.slane %v8707, 4
    %v8709 = vmax.f32 %v8707, %v8708
    %v8710 = vrot.slane %v8709, 2
    %v8711 = vmax.f32 %v8709, %v8710
    %v8712 = vrot.slane %v8711, 1
    %v8713 = vmax.f32 %v8711, %v8712
    %v8714 = vsel %vm8460, %v8308, -inf
    %v8715 = vsel %vm8462, %v8309, -inf
    %v8716 = vmax.f32 %v8714, %v8715
    %v8717 = vrot.slane %v8716, 4
    %v8718 = vmax.f32 %v8716, %v8717
    %v8719 = vrot.slane %v8718, 2
    %v8720 = vmax.f32 %v8718, %v8719
    %v8721 = vrot.slane %v8720, 1
    %v8722 = vmax.f32 %v8720, %v8721
    %v8723 = vsel %vm8460, %v8310, -inf
    %v8724 = vsel %vm8462, %v8311, -inf
    %v8725 = vmax.f32 %v8723, %v8724
    %v8726 = vrot.slane %v8725, 4
    %v8727 = vmax.f32 %v8725, %v8726
    %v8728 = vrot.slane %v8727, 2
    %v8729 = vmax.f32 %v8727, %v8728
    %v8730 = vrot.slane %v8729, 1
    %v8731 = vmax.f32 %v8729, %v8730
    %v8732 = vsel %vm8460, %v8312, -inf
    %v8733 = vsel %vm8462, %v8313, -inf
    %v8734 = vmax.f32 %v8732, %v8733
    %v8735 = vrot.slane %v8734, 4
    %v8736 = vmax.f32 %v8734, %v8735
    %v8737 = vrot.slane %v8736, 2
    %v8738 = vmax.f32 %v8736, %v8737
    %v8739 = vrot.slane %v8738, 1
    %v8740 = vmax.f32 %v8738, %v8739
    %v8741 = vsel %vm8460, %v8314, -inf
    %v8742 = vsel %vm8462, %v8315, -inf
    %v8743 = vmax.f32 %v8741, %v8742
    %v8744 = vrot.slane %v8743, 4
    %v8745 = vmax.f32 %v8743, %v8744
    %v8746 = vrot.slane %v8745, 2
    %v8747 = vmax.f32 %v8745, %v8746
    %v8748 = vrot.slane %v8747, 1
    %v8749 = vmax.f32 %v8747, %v8748
    %v8750 = vsel %vm8460, %v8316, -inf
    %v8751 = vsel %vm8462, %v8317, -inf
    %v8752 = vmax.f32 %v8750, %v8751
    %v8753 = vrot.slane %v8752, 4
    %v8754 = vmax.f32 %v8752, %v8753
    %v8755 = vrot.slane %v8754, 2
    %v8756 = vmax.f32 %v8754, %v8755
    %v8757 = vrot.slane %v8756, 1
    %v8758 = vmax.f32 %v8756, %v8757
    %v8759 = vsel %vm8460, %v8318, -inf
    %v8760 = vsel %vm8462, %v8319, -inf
    %v8761 = vmax.f32 %v8759, %v8760
    %v8762 = vrot.slane %v8761, 4
    %v8763 = vmax.f32 %v8761, %v8762
    %v8764 = vrot.slane %v8763, 2
    %v8765 = vmax.f32 %v8763, %v8764
    %v8766 = vrot.slane %v8765, 1
    %v8767 = vmax.f32 %v8765, %v8766
    %v8768 = vsel %vm8460, %v8320, -inf
    %v8769 = vsel %vm8462, %v8321, -inf
    %v8770 = vmax.f32 %v8768, %v8769
    %v8771 = vrot.slane %v8770, 4
    %v8772 = vmax.f32 %v8770, %v8771
    %v8773 = vrot.slane %v8772, 2
    %v8774 = vmax.f32 %v8772, %v8773
    %v8775 = vrot.slane %v8774, 1
    %v8776 = vmax.f32 %v8774, %v8775
    %v8777 = vsel %vm8460, %v8322, -inf
    %v8778 = vsel %vm8462, %v8323, -inf
    %v8779 = vmax.f32 %v8777, %v8778
    %v8780 = vrot.slane %v8779, 4
    %v8781 = vmax.f32 %v8779, %v8780
    %v8782 = vrot.slane %v8781, 2
    %v8783 = vmax.f32 %v8781, %v8782
    %v8784 = vrot.slane %v8783, 1
    %v8785 = vmax.f32 %v8783, %v8784
    %v8786 = vsel %vm8460, %v8324, -inf
    %v8787 = vsel %vm8462, %v8325, -inf
    %v8788 = vmax.f32 %v8786, %v8787
    %v8789 = vrot.slane %v8788, 4
    %v8790 = vmax.f32 %v8788, %v8789
    %v8791 = vrot.slane %v8790, 2
    %v8792 = vmax.f32 %v8790, %v8791
    %v8793 = vrot.slane %v8792, 1
    %v8794 = vmax.f32 %v8792, %v8793
    %v8795 = vsel %vm8460, %v8326, -inf
    %v8796 = vsel %vm8462, %v8327, -inf
    %v8797 = vmax.f32 %v8795, %v8796
    %v8798 = vrot.slane %v8797, 4
    %v8799 = vmax.f32 %v8797, %v8798
    %v8800 = vrot.slane %v8799, 2
    %v8801 = vmax.f32 %v8799, %v8800
    %v8802 = vrot.slane %v8801, 1
    %v8803 = vmax.f32 %v8801, %v8802
    %v8804 = vsel %vm8460, %v8328, -inf
    %v8805 = vsel %vm8462, %v8329, -inf
    %v8806 = vmax.f32 %v8804, %v8805
    %v8807 = vrot.slane %v8806, 4
    %v8808 = vmax.f32 %v8806, %v8807
    %v8809 = vrot.slane %v8808, 2
    %v8810 = vmax.f32 %v8808, %v8809
    %v8811 = vrot.slane %v8810, 1
    %v8812 = vmax.f32 %v8810, %v8811
    %v8813 = vsel %vm8460, %v8330, -inf
    %v8814 = vsel %vm8462, %v8331, -inf
    %v8815 = vmax.f32 %v8813, %v8814
    %v8816 = vrot.slane %v8815, 4
    %v8817 = vmax.f32 %v8815, %v8816
    %v8818 = vrot.slane %v8817, 2
    %v8819 = vmax.f32 %v8817, %v8818
    %v8820 = vrot.slane %v8819, 1
    %v8821 = vmax.f32 %v8819, %v8820
    %v8822 = vsel %vm8460, %v8332, -inf
    %v8823 = vsel %vm8462, %v8333, -inf
    %v8824 = vmax.f32 %v8822, %v8823
    %v8825 = vrot.slane %v8824, 4
    %v8826 = vmax.f32 %v8824, %v8825
    %v8827 = vrot.slane %v8826, 2
    %v8828 = vmax.f32 %v8826, %v8827
    %v8829 = vrot.slane %v8828, 1
    %v8830 = vmax.f32 %v8828, %v8829
    %v8831 = vsel %vm8460, %v8334, -inf
    %v8832 = vsel %vm8462, %v8335, -inf
    %v8833 = vmax.f32 %v8831, %v8832
    %v8834 = vrot.slane %v8833, 4
    %v8835 = vmax.f32 %v8833, %v8834
    %v8836 = vrot.slane %v8835, 2
    %v8837 = vmax.f32 %v8835, %v8836
    %v8838 = vrot.slane %v8837, 1
    %v8839 = vmax.f32 %v8837, %v8838
    %v8840 = vsel %vm8460, %v8336, -inf
    %v8841 = vsel %vm8462, %v8337, -inf
    %v8842 = vmax.f32 %v8840, %v8841
    %v8843 = vrot.slane %v8842, 4
    %v8844 = vmax.f32 %v8842, %v8843
    %v8845 = vrot.slane %v8844, 2
    %v8846 = vmax.f32 %v8844, %v8845
    %v8847 = vrot.slane %v8846, 1
    %v8848 = vmax.f32 %v8846, %v8847
    %v8849 = vsel %vm8460, %v8338, -inf
    %v8850 = vsel %vm8462, %v8339, -inf
    %v8851 = vmax.f32 %v8849, %v8850
    %v8852 = vrot.slane %v8851, 4
    %v8853 = vmax.f32 %v8851, %v8852
    %v8854 = vrot.slane %v8853, 2
    %v8855 = vmax.f32 %v8853, %v8854
    %v8856 = vrot.slane %v8855, 1
    %v8857 = vmax.f32 %v8855, %v8856
    %v8858 = vsel %vm8460, %v8340, -inf
    %v8859 = vsel %vm8462, %v8341, -inf
    %v8860 = vmax.f32 %v8858, %v8859
    %v8861 = vrot.slane %v8860, 4
    %v8862 = vmax.f32 %v8860, %v8861
    %v8863 = vrot.slane %v8862, 2
    %v8864 = vmax.f32 %v8862, %v8863
    %v8865 = vrot.slane %v8864, 1
    %v8866 = vmax.f32 %v8864, %v8865
    %v8867 = vsel %vm8460, %v8342, -inf
    %v8868 = vsel %vm8462, %v8343, -inf
    %v8869 = vmax.f32 %v8867, %v8868
    %v8870 = vrot.slane %v8869, 4
    %v8871 = vmax.f32 %v8869, %v8870
    %v8872 = vrot.slane %v8871, 2
    %v8873 = vmax.f32 %v8871, %v8872
    %v8874 = vrot.slane %v8873, 1
    %v8875 = vmax.f32 %v8873, %v8874
    %v8876 = vsel %vm8460, %v8344, -inf
    %v8877 = vsel %vm8462, %v8345, -inf
    %v8878 = vmax.f32 %v8876, %v8877
    %v8879 = vrot.slane %v8878, 4
    %v8880 = vmax.f32 %v8878, %v8879
    %v8881 = vrot.slane %v8880, 2
    %v8882 = vmax.f32 %v8880, %v8881
    %v8883 = vrot.slane %v8882, 1
    %v8884 = vmax.f32 %v8882, %v8883
    %v8885 = vsel %vm8460, %v8346, -inf
    %v8886 = vsel %vm8462, %v8347, -inf
    %v8887 = vmax.f32 %v8885, %v8886
    %v8888 = vrot.slane %v8887, 4
    %v8889 = vmax.f32 %v8887, %v8888
    %v8890 = vrot.slane %v8889, 2
    %v8891 = vmax.f32 %v8889, %v8890
    %v8892 = vrot.slane %v8891, 1
    %v8893 = vmax.f32 %v8891, %v8892
    %v8894 = vsel %vm8460, %v8348, -inf
    %v8895 = vsel %vm8462, %v8349, -inf
    %v8896 = vmax.f32 %v8894, %v8895
    %v8897 = vrot.slane %v8896, 4
    %v8898 = vmax.f32 %v8896, %v8897
    %v8899 = vrot.slane %v8898, 2
    %v8900 = vmax.f32 %v8898, %v8899
    %v8901 = vrot.slane %v8900, 1
    %v8902 = vmax.f32 %v8900, %v8901
    %v8903 = vsel %vm8460, %v8350, -inf
    %v8904 = vsel %vm8462, %v8351, -inf
    %v8905 = vmax.f32 %v8903, %v8904
    %v8906 = vrot.slane %v8905, 4
    %v8907 = vmax.f32 %v8905, %v8906
    %v8908 = vrot.slane %v8907, 2
    %v8909 = vmax.f32 %v8907, %v8908
    %v8910 = vrot.slane %v8909, 1
    %v8911 = vmax.f32 %v8909, %v8910
    %v8912 = vsel %vm8460, %v8352, -inf
    %v8913 = vsel %vm8462, %v8353, -inf
    %v8914 = vmax.f32 %v8912, %v8913
    %v8915 = vrot.slane %v8914, 4
    %v8916 = vmax.f32 %v8914, %v8915
    %v8917 = vrot.slane %v8916, 2
    %v8918 = vmax.f32 %v8916, %v8917
    %v8919 = vrot.slane %v8918, 1
    %v8920 = vmax.f32 %v8918, %v8919
    %v8921 = vsel %vm8460, %v8354, -inf
    %v8922 = vsel %vm8462, %v8355, -inf
    %v8923 = vmax.f32 %v8921, %v8922
    %v8924 = vrot.slane %v8923, 4
    %v8925 = vmax.f32 %v8923, %v8924
    %v8926 = vrot.slane %v8925, 2
    %v8927 = vmax.f32 %v8925, %v8926
    %v8928 = vrot.slane %v8927, 1
    %v8929 = vmax.f32 %v8927, %v8928
    %v8930 = vsel %vm8460, %v8356, -inf
    %v8931 = vsel %vm8462, %v8357, -inf
    %v8932 = vmax.f32 %v8930, %v8931
    %v8933 = vrot.slane %v8932, 4
    %v8934 = vmax.f32 %v8932, %v8933
    %v8935 = vrot.slane %v8934, 2
    %v8936 = vmax.f32 %v8934, %v8935
    %v8937 = vrot.slane %v8936, 1
    %v8938 = vmax.f32 %v8936, %v8937
    %v8939 = vsel %vm8460, %v8358, -inf
    %v8940 = vsel %vm8462, %v8359, -inf
    %v8941 = vmax.f32 %v8939, %v8940
    %v8942 = vrot.slane %v8941, 4
    %v8943 = vmax.f32 %v8941, %v8942
    %v8944 = vrot.slane %v8943, 2
    %v8945 = vmax.f32 %v8943, %v8944
    %v8946 = vrot.slane %v8945, 1
    %v8947 = vmax.f32 %v8945, %v8946
    %v8948 = vsel %vm8460, %v8360, -inf
    %v8949 = vsel %vm8462, %v8361, -inf
    %v8950 = vmax.f32 %v8948, %v8949
    %v8951 = vrot.slane %v8950, 4
    %v8952 = vmax.f32 %v8950, %v8951
    %v8953 = vrot.slane %v8952, 2
    %v8954 = vmax.f32 %v8952, %v8953
    %v8955 = vrot.slane %v8954, 1
    %v8956 = vmax.f32 %v8954, %v8955
    %v8957 = vsel %vm8460, %v8362, -inf
    %v8958 = vsel %vm8462, %v8363, -inf
    %v8959 = vmax.f32 %v8957, %v8958
    %v8960 = vrot.slane %v8959, 4
    %v8961 = vmax.f32 %v8959, %v8960
    %v8962 = vrot.slane %v8961, 2
    %v8963 = vmax.f32 %v8961, %v8962
    %v8964 = vrot.slane %v8963, 1
    %v8965 = vmax.f32 %v8963, %v8964
    %v8966 = vsel %vm8460, %v8364, -inf
    %v8967 = vsel %vm8462, %v8365, -inf
    %v8968 = vmax.f32 %v8966, %v8967
    %v8969 = vrot.slane %v8968, 4
    %v8970 = vmax.f32 %v8968, %v8969
    %v8971 = vrot.slane %v8970, 2
    %v8972 = vmax.f32 %v8970, %v8971
    %v8973 = vrot.slane %v8972, 1
    %v8974 = vmax.f32 %v8972, %v8973
    %v8975 = vsel %vm8460, %v8366, -inf
    %v8976 = vsel %vm8462, %v8367, -inf
    %v8977 = vmax.f32 %v8975, %v8976
    %v8978 = vrot.slane %v8977, 4
    %v8979 = vmax.f32 %v8977, %v8978
    %v8980 = vrot.slane %v8979, 2
    %v8981 = vmax.f32 %v8979, %v8980
    %v8982 = vrot.slane %v8981, 1
    %v8983 = vmax.f32 %v8981, %v8982
    %v8984 = vsel %vm8460, %v8368, -inf
    %v8985 = vsel %vm8462, %v8369, -inf
    %v8986 = vmax.f32 %v8984, %v8985
    %v8987 = vrot.slane %v8986, 4
    %v8988 = vmax.f32 %v8986, %v8987
    %v8989 = vrot.slane %v8988, 2
    %v8990 = vmax.f32 %v8988, %v8989
    %v8991 = vrot.slane %v8990, 1
    %v8992 = vmax.f32 %v8990, %v8991
    %v8993 = vsel %vm8460, %v8370, -inf
    %v8994 = vsel %vm8462, %v8371, -inf
    %v8995 = vmax.f32 %v8993, %v8994
    %v8996 = vrot.slane %v8995, 4
    %v8997 = vmax.f32 %v8995, %v8996
    %v8998 = vrot.slane %v8997, 2
    %v8999 = vmax.f32 %v8997, %v8998
    %v9000 = vrot.slane %v8999, 1
    %v9001 = vmax.f32 %v8999, %v9000
    %v9002 = vsel %vm8460, %v8372, -inf
    %v9003 = vsel %vm8462, %v8373, -inf
    %v9004 = vmax.f32 %v9002, %v9003
    %v9005 = vrot.slane %v9004, 4
    %v9006 = vmax.f32 %v9004, %v9005
    %v9007 = vrot.slane %v9006, 2
    %v9008 = vmax.f32 %v9006, %v9007
    %v9009 = vrot.slane %v9008, 1
    %v9010 = vmax.f32 %v9008, %v9009
    %v9011 = vsel %vm8460, %v8374, -inf
    %v9012 = vsel %vm8462, %v8375, -inf
    %v9013 = vmax.f32 %v9011, %v9012
    %v9014 = vrot.slane %v9013, 4
    %v9015 = vmax.f32 %v9013, %v9014
    %v9016 = vrot.slane %v9015, 2
    %v9017 = vmax.f32 %v9015, %v9016
    %v9018 = vrot.slane %v9017, 1
    %v9019 = vmax.f32 %v9017, %v9018
    %v9020 = vsel %vm8460, %v8376, -inf
    %v9021 = vsel %vm8462, %v8377, -inf
    %v9022 = vmax.f32 %v9020, %v9021
    %v9023 = vrot.slane %v9022, 4
    %v9024 = vmax.f32 %v9022, %v9023
    %v9025 = vrot.slane %v9024, 2
    %v9026 = vmax.f32 %v9024, %v9025
    %v9027 = vrot.slane %v9026, 1
    %v9028 = vmax.f32 %v9026, %v9027
    %v9029 = vsel %vm8460, %v8378, -inf
    %v9030 = vsel %vm8462, %v8379, -inf
    %v9031 = vmax.f32 %v9029, %v9030
    %v9032 = vrot.slane %v9031, 4
    %v9033 = vmax.f32 %v9031, %v9032
    %v9034 = vrot.slane %v9033, 2
    %v9035 = vmax.f32 %v9033, %v9034
    %v9036 = vrot.slane %v9035, 1
    %v9037 = vmax.f32 %v9035, %v9036
    %v9038 = vsel %vm8460, %v8380, -inf
    %v9039 = vsel %vm8462, %v8381, -inf
    %v9040 = vmax.f32 %v9038, %v9039
    %v9041 = vrot.slane %v9040, 4
    %v9042 = vmax.f32 %v9040, %v9041
    %v9043 = vrot.slane %v9042, 2
    %v9044 = vmax.f32 %v9042, %v9043
    %v9045 = vrot.slane %v9044, 1
    %v9046 = vmax.f32 %v9044, %v9045
    %v9047 = vsel %vm8460, %v8382, -inf
    %v9048 = vsel %vm8462, %v8383, -inf
    %v9049 = vmax.f32 %v9047, %v9048
    %v9050 = vrot.slane %v9049, 4
    %v9051 = vmax.f32 %v9049, %v9050
    %v9052 = vrot.slane %v9051, 2
    %v9053 = vmax.f32 %v9051, %v9052
    %v9054 = vrot.slane %v9053, 1
    %v9055 = vmax.f32 %v9053, %v9054
    %v9056 = vsel %vm8460, %v8384, -inf
    %v9057 = vsel %vm8462, %v8385, -inf
    %v9058 = vmax.f32 %v9056, %v9057
    %v9059 = vrot.slane %v9058, 4
    %v9060 = vmax.f32 %v9058, %v9059
    %v9061 = vrot.slane %v9060, 2
    %v9062 = vmax.f32 %v9060, %v9061
    %v9063 = vrot.slane %v9062, 1
    %v9064 = vmax.f32 %v9062, %v9063
    %v9065 = vsel %vm8460, %v8386, -inf
    %v9066 = vsel %vm8462, %v8387, -inf
    %v9067 = vmax.f32 %v9065, %v9066
    %v9068 = vrot.slane %v9067, 4
    %v9069 = vmax.f32 %v9067, %v9068
    %v9070 = vrot.slane %v9069, 2
    %v9071 = vmax.f32 %v9069, %v9070
    %v9072 = vrot.slane %v9071, 1
    %v9073 = vmax.f32 %v9071, %v9072
    %v9074 = vsel %vm8460, %v8388, -inf
    %v9075 = vsel %vm8462, %v8389, -inf
    %v9076 = vmax.f32 %v9074, %v9075
    %v9077 = vrot.slane %v9076, 4
    %v9078 = vmax.f32 %v9076, %v9077
    %v9079 = vrot.slane %v9078, 2
    %v9080 = vmax.f32 %v9078, %v9079
    %v9081 = vrot.slane %v9080, 1
    %v9082 = vmax.f32 %v9080, %v9081
    %v9083 = vsel %vm8460, %v8390, -inf
    %v9084 = vsel %vm8462, %v8391, -inf
    %v9085 = vmax.f32 %v9083, %v9084
    %v9086 = vrot.slane %v9085, 4
    %v9087 = vmax.f32 %v9085, %v9086
    %v9088 = vrot.slane %v9087, 2
    %v9089 = vmax.f32 %v9087, %v9088
    %v9090 = vrot.slane %v9089, 1
    %v9091 = vmax.f32 %v9089, %v9090
    %v9092 = vsel %vm8460, %v8392, -inf
    %v9093 = vsel %vm8462, %v8393, -inf
    %v9094 = vmax.f32 %v9092, %v9093
    %v9095 = vrot.slane %v9094, 4
    %v9096 = vmax.f32 %v9094, %v9095
    %v9097 = vrot.slane %v9096, 2
    %v9098 = vmax.f32 %v9096, %v9097
    %v9099 = vrot.slane %v9098, 1
    %v9100 = vmax.f32 %v9098, %v9099
    %v9101 = vsel %vm8460, %v8394, -inf
    %v9102 = vsel %vm8462, %v8395, -inf
    %v9103 = vmax.f32 %v9101, %v9102
    %v9104 = vrot.slane %v9103, 4
    %v9105 = vmax.f32 %v9103, %v9104
    %v9106 = vrot.slane %v9105, 2
    %v9107 = vmax.f32 %v9105, %v9106
    %v9108 = vrot.slane %v9107, 1
    %v9109 = vmax.f32 %v9107, %v9108
    %v9110 = vsel %vm8460, %v8396, -inf
    %v9111 = vsel %vm8462, %v8397, -inf
    %v9112 = vmax.f32 %v9110, %v9111
    %v9113 = vrot.slane %v9112, 4
    %v9114 = vmax.f32 %v9112, %v9113
    %v9115 = vrot.slane %v9114, 2
    %v9116 = vmax.f32 %v9114, %v9115
    %v9117 = vrot.slane %v9116, 1
    %v9118 = vmax.f32 %v9116, %v9117
    %v9119 = vsel %vm8460, %v8398, -inf
    %v9120 = vsel %vm8462, %v8399, -inf
    %v9121 = vmax.f32 %v9119, %v9120
    %v9122 = vrot.slane %v9121, 4
    %v9123 = vmax.f32 %v9121, %v9122
    %v9124 = vrot.slane %v9123, 2
    %v9125 = vmax.f32 %v9123, %v9124
    %v9126 = vrot.slane %v9125, 1
    %v9127 = vmax.f32 %v9125, %v9126
    %v9128 = vsel %vm8460, %v8400, -inf
    %v9129 = vsel %vm8462, %v8401, -inf
    %v9130 = vmax.f32 %v9128, %v9129
    %v9131 = vrot.slane %v9130, 4
    %v9132 = vmax.f32 %v9130, %v9131
    %v9133 = vrot.slane %v9132, 2
    %v9134 = vmax.f32 %v9132, %v9133
    %v9135 = vrot.slane %v9134, 1
    %v9136 = vmax.f32 %v9134, %v9135
    %v9137 = vsel %vm8460, %v8402, -inf
    %v9138 = vsel %vm8462, %v8403, -inf
    %v9139 = vmax.f32 %v9137, %v9138
    %v9140 = vrot.slane %v9139, 4
    %v9141 = vmax.f32 %v9139, %v9140
    %v9142 = vrot.slane %v9141, 2
    %v9143 = vmax.f32 %v9141, %v9142
    %v9144 = vrot.slane %v9143, 1
    %v9145 = vmax.f32 %v9143, %v9144
    %v9146 = vsel %vm8460, %v8404, -inf
    %v9147 = vsel %vm8462, %v8405, -inf
    %v9148 = vmax.f32 %v9146, %v9147
    %v9149 = vrot.slane %v9148, 4
    %v9150 = vmax.f32 %v9148, %v9149
    %v9151 = vrot.slane %v9150, 2
    %v9152 = vmax.f32 %v9150, %v9151
    %v9153 = vrot.slane %v9152, 1
    %v9154 = vmax.f32 %v9152, %v9153
    %v9155 = vsel %vm8460, %v8406, -inf
    %v9156 = vsel %vm8462, %v8407, -inf
    %v9157 = vmax.f32 %v9155, %v9156
    %v9158 = vrot.slane %v9157, 4
    %v9159 = vmax.f32 %v9157, %v9158
    %v9160 = vrot.slane %v9159, 2
    %v9161 = vmax.f32 %v9159, %v9160
    %v9162 = vrot.slane %v9161, 1
    %v9163 = vmax.f32 %v9161, %v9162
    %v9164 = vsel %vm8460, %v8408, -inf
    %v9165 = vsel %vm8462, %v8409, -inf
    %v9166 = vmax.f32 %v9164, %v9165
    %v9167 = vrot.slane %v9166, 4
    %v9168 = vmax.f32 %v9166, %v9167
    %v9169 = vrot.slane %v9168, 2
    %v9170 = vmax.f32 %v9168, %v9169
    %v9171 = vrot.slane %v9170, 1
    %v9172 = vmax.f32 %v9170, %v9171
    %v9173 = vsel %vm8460, %v8410, -inf
    %v9174 = vsel %vm8462, %v8411, -inf
    %v9175 = vmax.f32 %v9173, %v9174
    %v9176 = vrot.slane %v9175, 4
    %v9177 = vmax.f32 %v9175, %v9176
    %v9178 = vrot.slane %v9177, 2
    %v9179 = vmax.f32 %v9177, %v9178
    %v9180 = vrot.slane %v9179, 1
    %v9181 = vmax.f32 %v9179, %v9180
    %v9182 = vsel %vm8460, %v8412, -inf
    %v9183 = vsel %vm8462, %v8413, -inf
    %v9184 = vmax.f32 %v9182, %v9183
    %v9185 = vrot.slane %v9184, 4
    %v9186 = vmax.f32 %v9184, %v9185
    %v9187 = vrot.slane %v9186, 2
    %v9188 = vmax.f32 %v9186, %v9187
    %v9189 = vrot.slane %v9188, 1
    %v9190 = vmax.f32 %v9188, %v9189
    %v9191 = vsel %vm8460, %v8414, -inf
    %v9192 = vsel %vm8462, %v8415, -inf
    %v9193 = vmax.f32 %v9191, %v9192
    %v9194 = vrot.slane %v9193, 4
    %v9195 = vmax.f32 %v9193, %v9194
    %v9196 = vrot.slane %v9195, 2
    %v9197 = vmax.f32 %v9195, %v9196
    %v9198 = vrot.slane %v9197, 1
    %v9199 = vmax.f32 %v9197, %v9198
    %v9200 = vsel %vm8460, %v8416, -inf
    %v9201 = vsel %vm8462, %v8417, -inf
    %v9202 = vmax.f32 %v9200, %v9201
    %v9203 = vrot.slane %v9202, 4
    %v9204 = vmax.f32 %v9202, %v9203
    %v9205 = vrot.slane %v9204, 2
    %v9206 = vmax.f32 %v9204, %v9205
    %v9207 = vrot.slane %v9206, 1
    %v9208 = vmax.f32 %v9206, %v9207
    %v9209 = vsel %vm8460, %v8418, -inf
    %v9210 = vsel %vm8462, %v8419, -inf
    %v9211 = vmax.f32 %v9209, %v9210
    %v9212 = vrot.slane %v9211, 4
    %v9213 = vmax.f32 %v9211, %v9212
    %v9214 = vrot.slane %v9213, 2
    %v9215 = vmax.f32 %v9213, %v9214
    %v9216 = vrot.slane %v9215, 1
    %v9217 = vmax.f32 %v9215, %v9216
    %v9218 = vsel %vm8460, %v8420, -inf
    %v9219 = vsel %vm8462, %v8421, -inf
    %v9220 = vmax.f32 %v9218, %v9219
    %v9221 = vrot.slane %v9220, 4
    %v9222 = vmax.f32 %v9220, %v9221
    %v9223 = vrot.slane %v9222, 2
    %v9224 = vmax.f32 %v9222, %v9223
    %v9225 = vrot.slane %v9224, 1
    %v9226 = vmax.f32 %v9224, %v9225
    %v9227 = vsel %vm8460, %v8422, -inf
    %v9228 = vsel %vm8462, %v8423, -inf
    %v9229 = vmax.f32 %v9227, %v9228
    %v9230 = vrot.slane %v9229, 4
    %v9231 = vmax.f32 %v9229, %v9230
    %v9232 = vrot.slane %v9231, 2
    %v9233 = vmax.f32 %v9231, %v9232
    %v9234 = vrot.slane %v9233, 1
    %v9235 = vmax.f32 %v9233, %v9234
    %v9236 = vsel %vm8460, %v8424, -inf
    %v9237 = vsel %vm8462, %v8425, -inf
    %v9238 = vmax.f32 %v9236, %v9237
    %v9239 = vrot.slane %v9238, 4
    %v9240 = vmax.f32 %v9238, %v9239
    %v9241 = vrot.slane %v9240, 2
    %v9242 = vmax.f32 %v9240, %v9241
    %v9243 = vrot.slane %v9242, 1
    %v9244 = vmax.f32 %v9242, %v9243
    %v9245 = vsel %vm8460, %v8426, -inf
    %v9246 = vsel %vm8462, %v8427, -inf
    %v9247 = vmax.f32 %v9245, %v9246
    %v9248 = vrot.slane %v9247, 4
    %v9249 = vmax.f32 %v9247, %v9248
    %v9250 = vrot.slane %v9249, 2
    %v9251 = vmax.f32 %v9249, %v9250
    %v9252 = vrot.slane %v9251, 1
    %v9253 = vmax.f32 %v9251, %v9252
    %v9254 = vsel %vm8460, %v8428, -inf
    %v9255 = vsel %vm8462, %v8429, -inf
    %v9256 = vmax.f32 %v9254, %v9255
    %v9257 = vrot.slane %v9256, 4
    %v9258 = vmax.f32 %v9256, %v9257
    %v9259 = vrot.slane %v9258, 2
    %v9260 = vmax.f32 %v9258, %v9259
    %v9261 = vrot.slane %v9260, 1
    %v9262 = vmax.f32 %v9260, %v9261
    %v9263 = vsel %vm8460, %v8430, -inf
    %v9264 = vsel %vm8462, %v8431, -inf
    %v9265 = vmax.f32 %v9263, %v9264
    %v9266 = vrot.slane %v9265, 4
    %v9267 = vmax.f32 %v9265, %v9266
    %v9268 = vrot.slane %v9267, 2
    %v9269 = vmax.f32 %v9267, %v9268
    %v9270 = vrot.slane %v9269, 1
    %v9271 = vmax.f32 %v9269, %v9270
    %v9272 = vsel %vm8460, %v8432, -inf
    %v9273 = vsel %vm8462, %v8433, -inf
    %v9274 = vmax.f32 %v9272, %v9273
    %v9275 = vrot.slane %v9274, 4
    %v9276 = vmax.f32 %v9274, %v9275
    %v9277 = vrot.slane %v9276, 2
    %v9278 = vmax.f32 %v9276, %v9277
    %v9279 = vrot.slane %v9278, 1
    %v9280 = vmax.f32 %v9278, %v9279
    %v9281 = vsel %vm8460, %v8434, -inf
    %v9282 = vsel %vm8462, %v8435, -inf
    %v9283 = vmax.f32 %v9281, %v9282
    %v9284 = vrot.slane %v9283, 4
    %v9285 = vmax.f32 %v9283, %v9284
    %v9286 = vrot.slane %v9285, 2
    %v9287 = vmax.f32 %v9285, %v9286
    %v9288 = vrot.slane %v9287, 1
    %v9289 = vmax.f32 %v9287, %v9288
    %v9290 = vsel %vm8460, %v8436, -inf
    %v9291 = vsel %vm8462, %v8437, -inf
    %v9292 = vmax.f32 %v9290, %v9291
    %v9293 = vrot.slane %v9292, 4
    %v9294 = vmax.f32 %v9292, %v9293
    %v9295 = vrot.slane %v9294, 2
    %v9296 = vmax.f32 %v9294, %v9295
    %v9297 = vrot.slane %v9296, 1
    %v9298 = vmax.f32 %v9296, %v9297
    %v9299 = vsel %vm8460, %v8438, -inf
    %v9300 = vsel %vm8462, %v8439, -inf
    %v9301 = vmax.f32 %v9299, %v9300
    %v9302 = vrot.slane %v9301, 4
    %v9303 = vmax.f32 %v9301, %v9302
    %v9304 = vrot.slane %v9303, 2
    %v9305 = vmax.f32 %v9303, %v9304
    %v9306 = vrot.slane %v9305, 1
    %v9307 = vmax.f32 %v9305, %v9306
    %v9308 = vsel %vm8460, %v8440, -inf
    %v9309 = vsel %vm8462, %v8441, -inf
    %v9310 = vmax.f32 %v9308, %v9309
    %v9311 = vrot.slane %v9310, 4
    %v9312 = vmax.f32 %v9310, %v9311
    %v9313 = vrot.slane %v9312, 2
    %v9314 = vmax.f32 %v9312, %v9313
    %v9315 = vrot.slane %v9314, 1
    %v9316 = vmax.f32 %v9314, %v9315
    %v9317 = vsel %vm8460, %v8442, -inf
    %v9318 = vsel %vm8462, %v8443, -inf
    %v9319 = vmax.f32 %v9317, %v9318
    %v9320 = vrot.slane %v9319, 4
    %v9321 = vmax.f32 %v9319, %v9320
    %v9322 = vrot.slane %v9321, 2
    %v9323 = vmax.f32 %v9321, %v9322
    %v9324 = vrot.slane %v9323, 1
    %v9325 = vmax.f32 %v9323, %v9324
    %v9326 = vsel %vm8460, %v8444, -inf
    %v9327 = vsel %vm8462, %v8445, -inf
    %v9328 = vmax.f32 %v9326, %v9327
    %v9329 = vrot.slane %v9328, 4
    %v9330 = vmax.f32 %v9328, %v9329
    %v9331 = vrot.slane %v9330, 2
    %v9332 = vmax.f32 %v9330, %v9331
    %v9333 = vrot.slane %v9332, 1
    %v9334 = vmax.f32 %v9332, %v9333
    %v9335 = vsel %vm8460, %v8446, -inf
    %v9336 = vsel %vm8462, %v8447, -inf
    %v9337 = vmax.f32 %v9335, %v9336
    %v9338 = vrot.slane %v9337, 4
    %v9339 = vmax.f32 %v9337, %v9338
    %v9340 = vrot.slane %v9339, 2
    %v9341 = vmax.f32 %v9339, %v9340
    %v9342 = vrot.slane %v9341, 1
    %v9343 = vmax.f32 %v9341, %v9342
    %v9344 = vsel %vm8460, %v8448, -inf
    %v9345 = vsel %vm8462, %v8449, -inf
    %v9346 = vmax.f32 %v9344, %v9345
    %v9347 = vrot.slane %v9346, 4
    %v9348 = vmax.f32 %v9346, %v9347
    %v9349 = vrot.slane %v9348, 2
    %v9350 = vmax.f32 %v9348, %v9349
    %v9351 = vrot.slane %v9350, 1
    %v9352 = vmax.f32 %v9350, %v9351
    %v9353 = vsel %vm8460, %v8450, -inf
    %v9354 = vsel %vm8462, %v8451, -inf
    %v9355 = vmax.f32 %v9353, %v9354
    %v9356 = vrot.slane %v9355, 4
    %v9357 = vmax.f32 %v9355, %v9356
    %v9358 = vrot.slane %v9357, 2
    %v9359 = vmax.f32 %v9357, %v9358
    %v9360 = vrot.slane %v9359, 1
    %v9361 = vmax.f32 %v9359, %v9360
    %v9362 = vsel %vm8460, %v8452, -inf
    %v9363 = vsel %vm8462, %v8453, -inf
    %v9364 = vmax.f32 %v9362, %v9363
    %v9365 = vrot.slane %v9364, 4
    %v9366 = vmax.f32 %v9364, %v9365
    %v9367 = vrot.slane %v9366, 2
    %v9368 = vmax.f32 %v9366, %v9367
    %v9369 = vrot.slane %v9368, 1
    %v9370 = vmax.f32 %v9368, %v9369
    %v9371 = vsel %vm8460, %v8454, -inf
    %v9372 = vsel %vm8462, %v8455, -inf
    %v9373 = vmax.f32 %v9371, %v9372
    %v9374 = vrot.slane %v9373, 4
    %v9375 = vmax.f32 %v9373, %v9374
    %v9376 = vrot.slane %v9375, 2
    %v9377 = vmax.f32 %v9375, %v9376
    %v9378 = vrot.slane %v9377, 1
    %v9379 = vmax.f32 %v9377, %v9378
    %v9380 = vsel %vm8460, %v8456, -inf
    %v9381 = vsel %vm8462, %v8457, -inf
    %v9382 = vmax.f32 %v9380, %v9381
    %v9383 = vrot.slane %v9382, 4
    %v9384 = vmax.f32 %v9382, %v9383
    %v9385 = vrot.slane %v9384, 2
    %v9386 = vmax.f32 %v9384, %v9385
    %v9387 = vrot.slane %v9386, 1
    %v9388 = vmax.f32 %v9386, %v9387
    %v9389 = vsel %vm8460, %v8458, -inf
    %v9390 = vsel %vm8462, %v8459, -inf
    %v9391 = vmax.f32 %v9389, %v9390
    %v9392 = vrot.slane %v9391, 4
    %v9393 = vmax.f32 %v9391, %v9392
    %v9394 = vrot.slane %v9393, 2
    %v9395 = vmax.f32 %v9393, %v9394
    %v9396 = vrot.slane %v9395, 1
    %v9397 = vmax.f32 %v9395, %v9396
    %vm9502 = vcmask 1041409
    %v9503 = vsel %vm9502, %v4313, %v4304
    %vm9504 = vcmask 1042434
    %v9505 = vsel %vm9504, %v4322, %v9503
    %vm9506 = vcmask 1043459
    %v9507 = vsel %vm9506, %v4331, %v9505
    %vm9508 = vcmask 1044484
    %v9509 = vsel %vm9508, %v4340, %v9507
    %vm9510 = vcmask 1045509
    %v9511 = vsel %vm9510, %v4349, %v9509
    %vm9512 = vcmask 1046534
    %v9513 = vsel %vm9512, %v4358, %v9511
    %vm9514 = vcmask 1047559
    %v9515 = vsel %vm9514, %v4367, %v9513
    %v9516 = vsel %vm9502, %v4385, %v4376
    %v9517 = vsel %vm9504, %v4394, %v9516
    %v9518 = vsel %vm9506, %v4403, %v9517
    %v9519 = vsel %vm9508, %v4412, %v9518
    %v9520 = vsel %vm9510, %v4421, %v9519
    %v9521 = vsel %vm9512, %v4430, %v9520
    %v9522 = vsel %vm9514, %v4439, %v9521
    %v9523 = vsel %vm9502, %v4457, %v4448
    %v9524 = vsel %vm9504, %v4466, %v9523
    %v9525 = vsel %vm9506, %v4475, %v9524
    %v9526 = vsel %vm9508, %v4484, %v9525
    %v9527 = vsel %vm9510, %v4493, %v9526
    %v9528 = vsel %vm9512, %v4502, %v9527
    %v9529 = vsel %vm9514, %v4511, %v9528
    %v9530 = vsel %vm9502, %v4529, %v4520
    %v9531 = vsel %vm9504, %v4538, %v9530
    %v9532 = vsel %vm9506, %v4547, %v9531
    %v9533 = vsel %vm9508, %v4556, %v9532
    %v9534 = vsel %vm9510, %v4565, %v9533
    %v9535 = vsel %vm9512, %v4574, %v9534
    %v9536 = vsel %vm9514, %v4583, %v9535
    %v9537 = vsel %vm9502, %v4601, %v4592
    %v9538 = vsel %vm9504, %v4610, %v9537
    %v9539 = vsel %vm9506, %v4619, %v9538
    %v9540 = vsel %vm9508, %v4628, %v9539
    %v9541 = vsel %vm9510, %v4637, %v9540
    %v9542 = vsel %vm9512, %v4646, %v9541
    %v9543 = vsel %vm9514, %v4655, %v9542
    %v9544 = vsel %vm9502, %v4673, %v4664
    %v9545 = vsel %vm9504, %v4682, %v9544
    %v9546 = vsel %vm9506, %v4691, %v9545
    %v9547 = vsel %vm9508, %v4700, %v9546
    %v9548 = vsel %vm9510, %v4709, %v9547
    %v9549 = vsel %vm9512, %v4718, %v9548
    %v9550 = vsel %vm9514, %v4727, %v9549
    %v9551 = vsel %vm9502, %v4745, %v4736
    %v9552 = vsel %vm9504, %v4754, %v9551
    %v9553 = vsel %vm9506, %v4763, %v9552
    %v9554 = vsel %vm9508, %v4772, %v9553
    %v9555 = vsel %vm9510, %v4781, %v9554
    %v9556 = vsel %vm9512, %v4790, %v9555
    %v9557 = vsel %vm9514, %v4799, %v9556
    %v9558 = vsel %vm9502, %v4817, %v4808
    %v9559 = vsel %vm9504, %v4826, %v9558
    %v9560 = vsel %vm9506, %v4835, %v9559
    %v9561 = vsel %vm9508, %v4844, %v9560
    %v9562 = vsel %vm9510, %v4853, %v9561
    %v9563 = vsel %vm9512, %v4862, %v9562
    %v9564 = vsel %vm9514, %v4871, %v9563
    %v9565 = vsel %vm9502, %v4889, %v4880
    %v9566 = vsel %vm9504, %v4898, %v9565
    %v9567 = vsel %vm9506, %v4907, %v9566
    %v9568 = vsel %vm9508, %v4916, %v9567
    %v9569 = vsel %vm9510, %v4925, %v9568
    %v9570 = vsel %vm9512, %v4934, %v9569
    %v9571 = vsel %vm9514, %v4943, %v9570
    %v9572 = vsel %vm9502, %v4961, %v4952
    %v9573 = vsel %vm9504, %v4970, %v9572
    %v9574 = vsel %vm9506, %v4979, %v9573
    %v9575 = vsel %vm9508, %v4988, %v9574
    %v9576 = vsel %vm9510, %v4997, %v9575
    %v9577 = vsel %vm9512, %v5006, %v9576
    %v9578 = vsel %vm9514, %v5015, %v9577
    %v9579 = vsel %vm9502, %v5033, %v5024
    %v9580 = vsel %vm9504, %v5042, %v9579
    %v9581 = vsel %vm9506, %v5051, %v9580
    %v9582 = vsel %vm9508, %v5060, %v9581
    %v9583 = vsel %vm9510, %v5069, %v9582
    %v9584 = vsel %vm9512, %v5078, %v9583
    %v9585 = vsel %vm9514, %v5087, %v9584
    %v9586 = vsel %vm9502, %v5105, %v5096
    %v9587 = vsel %vm9504, %v5114, %v9586
    %v9588 = vsel %vm9506, %v5123, %v9587
    %v9589 = vsel %vm9508, %v5132, %v9588
    %v9590 = vsel %vm9510, %v5141, %v9589
    %v9591 = vsel %vm9512, %v5150, %v9590
    %v9592 = vsel %vm9514, %v5159, %v9591
    %v9593 = vsel %vm9502, %v5177, %v5168
    %v9594 = vsel %vm9504, %v5186, %v9593
    %v9595 = vsel %vm9506, %v5195, %v9594
    %v9596 = vsel %vm9508, %v5204, %v9595
    %v9597 = vsel %vm9510, %v5213, %v9596
    %v9598 = vsel %vm9512, %v5222, %v9597
    %v9599 = vsel %vm9514, %v5231, %v9598
    %v9717 = vsel %vm9502, %v6396, %v6387
    %v9718 = vsel %vm9504, %v6405, %v9717
    %v9719 = vsel %vm9506, %v6414, %v9718
    %v9720 = vsel %vm9508, %v6423, %v9719
    %v9721 = vsel %vm9510, %v6432, %v9720
    %v9722 = vsel %vm9512, %v6441, %v9721
    %v9723 = vsel %vm9514, %v6450, %v9722
    %v9724 = vsel %vm9502, %v6468, %v6459
    %v9725 = vsel %vm9504, %v6477, %v9724
    %v9726 = vsel %vm9506, %v6486, %v9725
    %v9727 = vsel %vm9508, %v6495, %v9726
    %v9728 = vsel %vm9510, %v6504, %v9727
    %v9729 = vsel %vm9512, %v6513, %v9728
    %v9730 = vsel %vm9514, %v6522, %v9729
    %v9731 = vsel %vm9502, %v6540, %v6531
    %v9732 = vsel %vm9504, %v6549, %v9731
    %v9733 = vsel %vm9506, %v6558, %v9732
    %v9734 = vsel %vm9508, %v6567, %v9733
    %v9735 = vsel %vm9510, %v6576, %v9734
    %v9736 = vsel %vm9512, %v6585, %v9735
    %v9737 = vsel %vm9514, %v6594, %v9736
    %v9738 = vsel %vm9502, %v6612, %v6603
    %v9739 = vsel %vm9504, %v6621, %v9738
    %v9740 = vsel %vm9506, %v6630, %v9739
    %v9741 = vsel %vm9508, %v6639, %v9740
    %v9742 = vsel %vm9510, %v6648, %v9741
    %v9743 = vsel %vm9512, %v6657, %v9742
    %v9744 = vsel %vm9514, %v6666, %v9743
    %v9745 = vsel %vm9502, %v6684, %v6675
    %v9746 = vsel %vm9504, %v6693, %v9745
    %v9747 = vsel %vm9506, %v6702, %v9746
    %v9748 = vsel %vm9508, %v6711, %v9747
    %v9749 = vsel %vm9510, %v6720, %v9748
    %v9750 = vsel %vm9512, %v6729, %v9749
    %v9751 = vsel %vm9514, %v6738, %v9750
    %v9752 = vsel %vm9502, %v6756, %v6747
    %v9753 = vsel %vm9504, %v6765, %v9752
    %v9754 = vsel %vm9506, %v6774, %v9753
    %v9755 = vsel %vm9508, %v6783, %v9754
    %v9756 = vsel %vm9510, %v6792, %v9755
    %v9757 = vsel %vm9512, %v6801, %v9756
    %v9758 = vsel %vm9514, %v6810, %v9757
    %v9759 = vsel %vm9502, %v6828, %v6819
    %v9760 = vsel %vm9504, %v6837, %v9759
    %v9761 = vsel %vm9506, %v6846, %v9760
    %v9762 = vsel %vm9508, %v6855, %v9761
    %v9763 = vsel %vm9510, %v6864, %v9762
    %v9764 = vsel %vm9512, %v6873, %v9763
    %v9765 = vsel %vm9514, %v6882, %v9764
    %v9766 = vsel %vm9502, %v6900, %v6891
    %v9767 = vsel %vm9504, %v6909, %v9766
    %v9768 = vsel %vm9506, %v6918, %v9767
    %v9769 = vsel %vm9508, %v6927, %v9768
    %v9770 = vsel %vm9510, %v6936, %v9769
    %v9771 = vsel %vm9512, %v6945, %v9770
    %v9772 = vsel %vm9514, %v6954, %v9771
    %v9773 = vsel %vm9502, %v6972, %v6963
    %v9774 = vsel %vm9504, %v6981, %v9773
    %v9775 = vsel %vm9506, %v6990, %v9774
    %v9776 = vsel %vm9508, %v6999, %v9775
    %v9777 = vsel %vm9510, %v7008, %v9776
    %v9778 = vsel %vm9512, %v7017, %v9777
    %v9779 = vsel %vm9514, %v7026, %v9778
    %v9780 = vsel %vm9502, %v7044, %v7035
    %v9781 = vsel %vm9504, %v7053, %v9780
    %v9782 = vsel %vm9506, %v7062, %v9781
    %v9783 = vsel %vm9508, %v7071, %v9782
    %v9784 = vsel %vm9510, %v7080, %v9783
    %v9785 = vsel %vm9512, %v7089, %v9784
    %v9786 = vsel %vm9514, %v7098, %v9785
    %v9787 = vsel %vm9502, %v7116, %v7107
    %v9788 = vsel %vm9504, %v7125, %v9787
    %v9789 = vsel %vm9506, %v7134, %v9788
    %v9790 = vsel %vm9508, %v7143, %v9789
    %v9791 = vsel %vm9510, %v7152, %v9790
    %v9792 = vsel %vm9512, %v7161, %v9791
    %v9793 = vsel %vm9514, %v7170, %v9792
    %v9794 = vsel %vm9502, %v7188, %v7179
    %v9795 = vsel %vm9504, %v7197, %v9794
    %v9796 = vsel %vm9506, %v7206, %v9795
    %v9797 = vsel %vm9508, %v7215, %v9796
    %v9798 = vsel %vm9510, %v7224, %v9797
    %v9799 = vsel %vm9512, %v7233, %v9798
    %v9800 = vsel %vm9514, %v7242, %v9799
    %v9801 = vsel %vm9502, %v7260, %v7251
    %v9802 = vsel %vm9504, %v7269, %v9801
    %v9803 = vsel %vm9506, %v7278, %v9802
    %v9804 = vsel %vm9508, %v7287, %v9803
    %v9805 = vsel %vm9510, %v7296, %v9804
    %v9806 = vsel %vm9512, %v7305, %v9805
    %v9807 = vsel %vm9514, %v7314, %v9806
    %9808 = vrot.lane.b32.xlu0 %v9723, 126
    %v9809 = vpop.permute.xlu0 %9808
    %9810 = vrot.lane.b32.xlu0 %v9730, 126
    %v9811 = vpop.permute.xlu0 %9810
    %9812 = vrot.lane.b32.xlu0 %v9737, 126
    %v9813 = vpop.permute.xlu0 %9812
    %9814 = vrot.lane.b32.xlu0 %v9744, 126
    %v9815 = vpop.permute.xlu0 %9814
    %9816 = vrot.lane.b32.xlu0 %v9751, 126
    %v9817 = vpop.permute.xlu0 %9816
    %9818 = vrot.lane.b32.xlu0 %v9758, 126
    %v9819 = vpop.permute.xlu0 %9818
    %9820 = vrot.lane.b32.xlu0 %v9765, 126
    %v9821 = vpop.permute.xlu0 %9820
    %9822 = vrot.lane.b32.xlu0 %v9772, 126
    %v9823 = vpop.permute.xlu0 %9822
    %9824 = vrot.lane.b32.xlu0 %v9779, 126
    %v9825 = vpop.permute.xlu0 %9824
    %9826 = vrot.lane.b32.xlu0 %v9786, 126
    %v9827 = vpop.permute.xlu0 %9826
    %9828 = vrot.lane.b32.xlu0 %v9793, 126
    %v9829 = vpop.permute.xlu0 %9828
    %9830 = vrot.lane.b32.xlu0 %v9800, 126
    %v9831 = vpop.permute.xlu0 %9830
    %9832 = vrot.lane.b32.xlu0 %v9807, 126
    %v9833 = vpop.permute.xlu0 %9832
    %v9951 = vsel %vm9502, %v8479, %v8470
    %v9952 = vsel %vm9504, %v8488, %v9951
    %v9953 = vsel %vm9506, %v8497, %v9952
    %v9954 = vsel %vm9508, %v8506, %v9953
    %v9955 = vsel %vm9510, %v8515, %v9954
    %v9956 = vsel %vm9512, %v8524, %v9955
    %v9957 = vsel %vm9514, %v8533, %v9956
    %v9958 = vsel %vm9502, %v8551, %v8542
    %v9959 = vsel %vm9504, %v8560, %v9958
    %v9960 = vsel %vm9506, %v8569, %v9959
    %v9961 = vsel %vm9508, %v8578, %v9960
    %v9962 = vsel %vm9510, %v8587, %v9961
    %v9963 = vsel %vm9512, %v8596, %v9962
    %v9964 = vsel %vm9514, %v8605, %v9963
    %v9965 = vsel %vm9502, %v8623, %v8614
    %v9966 = vsel %vm9504, %v8632, %v9965
    %v9967 = vsel %vm9506, %v8641, %v9966
    %v9968 = vsel %vm9508, %v8650, %v9967
    %v9969 = vsel %vm9510, %v8659, %v9968
    %v9970 = vsel %vm9512, %v8668, %v9969
    %v9971 = vsel %vm9514, %v8677, %v9970
    %v9972 = vsel %vm9502, %v8695, %v8686
    %v9973 = vsel %vm9504, %v8704, %v9972
    %v9974 = vsel %vm9506, %v8713, %v9973
    %v9975 = vsel %vm9508, %v8722, %v9974
    %v9976 = vsel %vm9510, %v8731, %v9975
    %v9977 = vsel %vm9512, %v8740, %v9976
    %v9978 = vsel %vm9514, %v8749, %v9977
    %v9979 = vsel %vm9502, %v8767, %v8758
    %v9980 = vsel %vm9504, %v8776, %v9979
    %v9981 = vsel %vm9506, %v8785, %v9980
    %v9982 = vsel %vm9508, %v8794, %v9981
    %v9983 = vsel %vm9510, %v8803, %v9982
    %v9984 = vsel %vm9512, %v8812, %v9983
    %v9985 = vsel %vm9514, %v8821, %v9984
    %v9986 = vsel %vm9502, %v8839, %v8830
    %v9987 = vsel %vm9504, %v8848, %v9986
    %v9988 = vsel %vm9506, %v8857, %v9987
    %v9989 = vsel %vm9508, %v8866, %v9988
    %v9990 = vsel %vm9510, %v8875, %v9989
    %v9991 = vsel %vm9512, %v8884, %v9990
    %v9992 = vsel %vm9514, %v8893, %v9991
    %v9993 = vsel %vm9502, %v8911, %v8902
    %v9994 = vsel %vm9504, %v8920, %v9993
    %v9995 = vsel %vm9506, %v8929, %v9994
    %v9996 = vsel %vm9508, %v8938, %v9995
    %v9997 = vsel %vm9510, %v8947, %v9996
    %v9998 = vsel %vm9512, %v8956, %v9997
    %v9999 = vsel %vm9514, %v8965, %v9998
    %v10000 = vsel %vm9502, %v8983, %v8974
    %v10001 = vsel %vm9504, %v8992, %v10000
    %v10002 = vsel %vm9506, %v9001, %v10001
    %v10003 = vsel %vm9508, %v9010, %v10002
    %v10004 = vsel %vm9510, %v9019, %v10003
    %v10005 = vsel %vm9512, %v9028, %v10004
    %v10006 = vsel %vm9514, %v9037, %v10005
    %v10007 = vsel %vm9502, %v9055, %v9046
    %v10008 = vsel %vm9504, %v9064, %v10007
    %v10009 = vsel %vm9506, %v9073, %v10008
    %v10010 = vsel %vm9508, %v9082, %v10009
    %v10011 = vsel %vm9510, %v9091, %v10010
    %v10012 = vsel %vm9512, %v9100, %v10011
    %v10013 = vsel %vm9514, %v9109, %v10012
    %v10014 = vsel %vm9502, %v9127, %v9118
    %v10015 = vsel %vm9504, %v9136, %v10014
    %v10016 = vsel %vm9506, %v9145, %v10015
    %v10017 = vsel %vm9508, %v9154, %v10016
    %v10018 = vsel %vm9510, %v9163, %v10017
    %v10019 = vsel %vm9512, %v9172, %v10018
    %v10020 = vsel %vm9514, %v9181, %v10019
    %v10021 = vsel %vm9502, %v9199, %v9190
    %v10022 = vsel %vm9504, %v9208, %v10021
    %v10023 = vsel %vm9506, %v9217, %v10022
    %v10024 = vsel %vm9508, %v9226, %v10023
    %v10025 = vsel %vm9510, %v9235, %v10024
    %v10026 = vsel %vm9512, %v9244, %v10025
    %v10027 = vsel %vm9514, %v9253, %v10026
    %v10028 = vsel %vm9502, %v9271, %v9262
    %v10029 = vsel %vm9504, %v9280, %v10028
    %v10030 = vsel %vm9506, %v9289, %v10029
    %v10031 = vsel %vm9508, %v9298, %v10030
    %v10032 = vsel %vm9510, %v9307, %v10031
    %v10033 = vsel %vm9512, %v9316, %v10032
    %v10034 = vsel %vm9514, %v9325, %v10033
    %v10035 = vsel %vm9502, %v9343, %v9334
    %v10036 = vsel %vm9504, %v9352, %v10035
    %v10037 = vsel %vm9506, %v9361, %v10036
    %v10038 = vsel %vm9508, %v9370, %v10037
    %v10039 = vsel %vm9510, %v9379, %v10038
    %v10040 = vsel %vm9512, %v9388, %v10039
    %v10041 = vsel %vm9514, %v9397, %v10040
    %10042 = vrot.lane.b32.xlu0 %v9957, 123
    %v10043 = vpop.permute.xlu0 %10042
    %10044 = vrot.lane.b32.xlu0 %v9964, 123
    %v10045 = vpop.permute.xlu0 %10044
    %10046 = vrot.lane.b32.xlu0 %v9971, 123
    %v10047 = vpop.permute.xlu0 %10046
    %10048 = vrot.lane.b32.xlu0 %v9978, 123
    %v10049 = vpop.permute.xlu0 %10048
    %10050 = vrot.lane.b32.xlu0 %v9985, 123
    %v10051 = vpop.permute.xlu0 %10050
    %10052 = vrot.lane.b32.xlu0 %v9992, 123
    %v10053 = vpop.permute.xlu0 %10052
    %10054 = vrot.lane.b32.xlu0 %v9999, 123
    %v10055 = vpop.permute.xlu0 %10054
    %10056 = vrot.lane.b32.xlu0 %v10006, 123
    %v10057 = vpop.permute.xlu0 %10056
    %10058 = vrot.lane.b32.xlu0 %v10013, 123
    %v10059 = vpop.permute.xlu0 %10058
    %10060 = vrot.lane.b32.xlu0 %v10020, 123
    %v10061 = vpop.permute.xlu0 %10060
    %10062 = vrot.lane.b32.xlu0 %v10027, 123
    %v10063 = vpop.permute.xlu0 %10062
    %10064 = vrot.lane.b32.xlu0 %v10034, 123
    %v10065 = vpop.permute.xlu0 %10064
    %10066 = vrot.lane.b32.xlu0 %v10041, 123
    %v10067 = vpop.permute.xlu0 %10066
    %v10081 = vsel %vm4294, %v9515, %v9809
    %v10082 = vsel %vm4294, %v9522, %v9811
    %v10083 = vsel %vm4294, %v9529, %v9813
    %v10084 = vsel %vm4294, %v9536, %v9815
    %v10085 = vsel %vm4294, %v9543, %v9817
    %v10086 = vsel %vm4294, %v9550, %v9819
    %v10087 = vsel %vm4294, %v9557, %v9821
    %v10088 = vsel %vm4294, %v9564, %v9823
    %v10089 = vsel %vm4294, %v9571, %v9825
    %v10090 = vsel %vm4294, %v9578, %v9827
    %v10091 = vsel %vm4294, %v9585, %v9829
    %v10092 = vsel %vm4294, %v9592, %v9831
    %v10093 = vsel %vm4294, %v9599, %v9833
    %vm10094 = vcmask 15360
    %v10095 = vsel %vm10094, %v10081, %v10043
    %v10096 = vsel %vm10094, %v10082, %v10045
    %v10097 = vsel %vm10094, %v10083, %v10047
    %v10098 = vsel %vm10094, %v10084, %v10049
    %v10099 = vsel %vm10094, %v10085, %v10051
    %v10100 = vsel %vm10094, %v10086, %v10053
    %v10101 = vsel %vm10094, %v10087, %v10055
    %v10102 = vsel %vm10094, %v10088, %v10057
    %v10103 = vsel %vm10094, %v10089, %v10059
    %v10104 = vsel %vm10094, %v10090, %v10061
    %v10105 = vsel %vm10094, %v10091, %v10063
    %v10106 = vsel %vm10094, %v10092, %v10065
    %v10107 = vsel %vm10094, %v10093, %v10067
    %v10108 = vld [vmem:[%s2] sm:$0x1]
    %v10110 = vlaneseq
    %v10111 = vshrl.u32 %v10110, 7
    %v10112 = vsub.s32 0, %v10111
    %v10113 = vrot.slane %v10108, %v10112
    %v10115 = vadd.f32 %v10095, %v10113
    %v10116 = vadd.f32 %v10096, %v10113
    %v10117 = vadd.f32 %v10097, %v10113
    %v10118 = vadd.f32 %v10098, %v10113
    %v10119 = vadd.f32 %v10099, %v10113
    %v10120 = vadd.f32 %v10100, %v10113
    %v10121 = vadd.f32 %v10101, %v10113
    %v10122 = vadd.f32 %v10102, %v10113
    %v10123 = vadd.f32 %v10103, %v10113
    %v10124 = vadd.f32 %v10104, %v10113
    %v10125 = vadd.f32 %v10105, %v10113
    %v10126 = vadd.f32 %v10106, %v10113
    %v10127 = vadd.f32 %v10107, %v10113
    %v10128 = vmax.f32 %v10115, 0.0
    %v10129 = vmax.f32 %v10116, 0.0
    %v10130 = vmax.f32 %v10117, 0.0
    %v10131 = vmax.f32 %v10118, 0.0
    %v10132 = vmax.f32 %v10119, 0.0
    %v10133 = vmax.f32 %v10120, 0.0
    %v10134 = vmax.f32 %v10121, 0.0
    %v10135 = vmax.f32 %v10122, 0.0
    %v10136 = vmax.f32 %v10123, 0.0
    %v10137 = vmax.f32 %v10124, 0.0
    %v10138 = vmax.f32 %v10125, 0.0
    %v10139 = vmax.f32 %v10126, 0.0
    %v10140 = vmax.f32 %v10127, 0.0
    %v10141 = vld [vmem:[%s3] sm:$0x7]
    %v10142 = vld [vmem:[%s4] sm:$0x1]
    %v10144 = vlaneseq
    %v10145 = vshrl.u32 %v10144, 7
    %v10146 = vsub.s32 0, %v10145
    %v10147 = vrot.slane %v10142, %v10146
    %vm10149 = vcmask 23552
    %v10151 = vsel %vm10149, %v10128, 0
    %v10154 = vsel %vm10149, %v10129, 0
    %v10157 = vsel %vm10149, %v10130, 0
    %v10160 = vsel %vm10149, %v10131, 0
    %v10163 = vsel %vm10149, %v10132, 0
    %v10166 = vsel %vm10149, %v10133, 0
    %v10169 = vsel %vm10149, %v10134, 0
    %v10172 = vsel %vm10149, %v10135, 0
    %v10175 = vsel %vm10149, %v10136, 0
    %v10178 = vsel %vm10149, %v10137, 0
    %v10181 = vsel %vm10149, %v10138, 0
    %v10184 = vsel %vm10149, %v10139, 0
    %v10187 = vsel %vm10149, %v10140, 0
    %vm10189 = vcmask 1042432
    %v10191 = vsel %vm10189, %v10141, 0
    %10193 = vmatprep.subr.mxu0 0.0
    %10194 = vmatpush1.msra.mxu0 %v10191
    %10195 = vmatprep.subr.mxu0 0.0
    %10196 = vmatpush1.msra.mxu0 0.0
    %10197 = vmatprep.subr.mxu0 0.0
    %10198 = vmatpush1.msra.mxu0 0.0
    %10199 = vmatprep.subr.mxu0 0.0
    %10200 = vmatpush1.msra.mxu0 0.0
    %10201 = vmatprep.subr.mxu0 0.0
    %10202 = vmatpush1.msra.mxu0 0.0
    %10203 = vmatprep.subr.mxu0 0.0
    %10204 = vmatpush1.msra.mxu0 0.0
    %10205 = vmatprep.subr.mxu0 0.0
    %10206 = vmatpush1.msra.mxu0 0.0
    %10207 = vmatprep.subr.mxu0 0.0
    %10208 = vmatpush1.msra.mxu0 0.0
    %10209 = vmatprep.subr.mxu0 0.0
    %10210 = vmatpush1.msra.mxu0 0.0
    %10211 = vmatprep.subr.mxu0 0.0
    %10212 = vmatpush1.msra.mxu0 0.0
    %10213 = vmatprep.subr.mxu0 0.0
    %10214 = vmatpush1.msra.mxu0 0.0
    %10215 = vmatprep.subr.mxu0 0.0
    %10216 = vmatpush1.msra.mxu0 0.0
    %10217 = vmatprep.subr.mxu0 0.0
    %10218 = vmatpush1.msra.mxu0 0.0
    %10219 = vmatprep.subr.mxu0 0.0
    %10220 = vmatpush1.msra.mxu0 0.0
    %10221 = vmatprep.subr.mxu0 0.0
    %10222 = vmatpush1.msra.mxu0 0.0
    %10223 = vmatprep.subr.mxu0 0.0
    %10224 = vmatpush1.msra.mxu0 0.0
    %10225 = vmatprep.subr.mxu0 0.0
    %10226 = vmatpush1.msra.mxu0 0.0
    %10227 = vmatprep.subr.mxu0 0.0
    %10228 = vmatpush1.msra.mxu0 0.0
    %10229 = vmatprep.subr.mxu0 0.0
    %10230 = vmatpush1.msra.mxu0 0.0
    %10231 = vmatprep.subr.mxu0 0.0
    %10232 = vmatpush1.msra.mxu0 0.0
    %10233 = vmatprep.subr.mxu0 0.0
    %10234 = vmatpush1.msra.mxu0 0.0
    %10235 = vmatprep.subr.mxu0 0.0
    %10236 = vmatpush1.msra.mxu0 0.0
    %10237 = vmatprep.subr.mxu0 0.0
    %10238 = vmatpush1.msra.mxu0 0.0
    %10239 = vmatprep.subr.mxu0 0.0
    %10240 = vmatpush1.msra.mxu0 0.0
    %10241 = vmatprep.subr.mxu0 0.0
    %10242 = vmatpush1.msra.mxu0 0.0
    %10243 = vmatprep.subr.mxu0 0.0
    %10244 = vmatpush1.msra.mxu0 0.0
    %10245 = vmatprep.subr.mxu0 0.0
    %10246 = vmatpush1.msra.mxu0 0.0
    %10247 = vmatprep.subr.mxu0 0.0
    %10248 = vmatpush1.msra.mxu0 0.0
    %10249 = vmatprep.subr.mxu0 0.0
    %10250 = vmatpush1.msra.mxu0 0.0
    %10251 = vmatprep.subr.mxu0 0.0
    %10252 = vmatpush1.msra.mxu0 0.0
    %10253 = vmatprep.subr.mxu0 0.0
    %10254 = vmatpush1.msra.mxu0 0.0
    %10255 = vmatprep.subr.mxu0 0.0
    %10256 = vmatpush1.msra.mxu0 0.0
    %10257 = vmatprep.mubr.f32.mxu0 0.0
    %10258 = vmatmul.mubr.f32.gmra.mrb[0].mxu0 %v10151
    %v10259 = vpop.f32.mrb[0].mxu0
    %v10260 = vadd.f32 %v10147, %v10259
    %v10261 = vpop.f32.mrb[0].mxu0
    %10262 = vmatprep.mubr.f32.mxu0 0.0
    %10263 = vmatmul.mubr.f32.gmra.mrb[0].mxu0 %v10154
    %v10264 = vpop.f32.mrb[0].mxu0
    %v10265 = vadd.f32 %v10147, %v10264
    %v10266 = vpop.f32.mrb[0].mxu0
    %10267 = vmatprep.mubr.f32.mxu0 0.0
    %10268 = vmatmul.mubr.f32.gmra.mrb[0].mxu0 %v10157
    %v10269 = vpop.f32.mrb[0].mxu0
    %v10270 = vadd.f32 %v10147, %v10269
    %v10271 = vpop.f32.mrb[0].mxu0
    %10272 = vmatprep.mubr.f32.mxu0 0.0
    %10273 = vmatmul.mubr.f32.gmra.mrb[0].mxu0 %v10160
    %v10274 = vpop.f32.mrb[0].mxu0
    %v10275 = vadd.f32 %v10147, %v10274
    %v10276 = vpop.f32.mrb[0].mxu0
    %10277 = vmatprep.mubr.f32.mxu0 0.0
    %10278 = vmatmul.mubr.f32.gmra.mrb[0].mxu0 %v10163
    %v10279 = vpop.f32.mrb[0].mxu0
    %v10280 = vadd.f32 %v10147, %v10279
    %v10281 = vpop.f32.mrb[0].mxu0
    %10282 = vmatprep.mubr.f32.mxu0 0.0
    %10283 = vmatmul.mubr.f32.gmra.mrb[0].mxu0 %v10166
    %v10284 = vpop.f32.mrb[0].mxu0
    %v10285 = vadd.f32 %v10147, %v10284
    %v10286 = vpop.f32.mrb[0].mxu0
    %10287 = vmatprep.mubr.f32.mxu0 0.0
    %10288 = vmatmul.mubr.f32.gmra.mrb[0].mxu0 %v10169
    %v10289 = vpop.f32.mrb[0].mxu0
    %v10290 = vadd.f32 %v10147, %v10289
    %v10291 = vpop.f32.mrb[0].mxu0
    %10292 = vmatprep.mubr.f32.mxu0 0.0
    %10293 = vmatmul.mubr.f32.gmra.mrb[0].mxu0 %v10172
    %v10294 = vpop.f32.mrb[0].mxu0
    %v10295 = vadd.f32 %v10147, %v10294
    %v10296 = vpop.f32.mrb[0].mxu0
    %10297 = vmatprep.mubr.f32.mxu0 0.0
    %10298 = vmatmul.mubr.f32.gmra.mrb[0].mxu0 %v10175
    %v10299 = vpop.f32.mrb[0].mxu0
    %v10300 = vadd.f32 %v10147, %v10299
    %v10301 = vpop.f32.mrb[0].mxu0
    %10302 = vmatprep.mubr.f32.mxu0 0.0
    %10303 = vmatmul.mubr.f32.gmra.mrb[0].mxu0 %v10178
    %v10304 = vpop.f32.mrb[0].mxu0
    %v10305 = vadd.f32 %v10147, %v10304
    %v10306 = vpop.f32.mrb[0].mxu0
    %10307 = vmatprep.mubr.f32.mxu0 0.0
    %10308 = vmatmul.mubr.f32.gmra.mrb[0].mxu0 %v10181
    %v10309 = vpop.f32.mrb[0].mxu0
    %v10310 = vadd.f32 %v10147, %v10309
    %v10311 = vpop.f32.mrb[0].mxu0
    %10312 = vmatprep.mubr.f32.mxu0 0.0
    %10313 = vmatmul.mubr.f32.gmra.mrb[0].mxu0 %v10184
    %v10314 = vpop.f32.mrb[0].mxu0
    %v10315 = vadd.f32 %v10147, %v10314
    %v10316 = vpop.f32.mrb[0].mxu0
    %10317 = vmatprep.mubr.f32.mxu0 0.0
    %10318 = vmatmul.mubr.f32.gmra.mrb[0].mxu0 %v10187
    %v10319 = vpop.f32.mrb[0].mxu0
    %v10320 = vadd.f32 %v10147, %v10319
    %v10321 = vpop.f32.mrb[0].mxu0
    %10322 = vdwg.mxu0
    %vm10323 = vcmask 39936
    %10324 = vst.msk [vmem:[%s5] sm:$0xff] %vm10323, %v10260
    %10325 = vst.msk [vmem:[%s5 + $0x8] sm:$0xff] %vm10323, %v10265
    %10326 = vst.msk [vmem:[%s5 + $0x10] sm:$0xff] %vm10323, %v10270
    %10327 = vst.msk [vmem:[%s5 + $0x18] sm:$0xff] %vm10323, %v10275
    %10328 = vst.msk [vmem:[%s5 + $0x20] sm:$0xff] %vm10323, %v10280
    %10329 = vst.msk [vmem:[%s5 + $0x28] sm:$0xff] %vm10323, %v10285
    %10330 = vst.msk [vmem:[%s5 + $0x30] sm:$0xff] %vm10323, %v10290
    %10331 = vst.msk [vmem:[%s5 + $0x38] sm:$0xff] %vm10323, %v10295
    %10332 = vst.msk [vmem:[%s5 + $0x40] sm:$0xff] %vm10323, %v10300
    %10333 = vst.msk [vmem:[%s5 + $0x48] sm:$0xff] %vm10323, %v10305
    %10334 = vst.msk [vmem:[%s5 + $0x50] sm:$0xff] %vm10323, %v10310
    %10335 = vst.msk [vmem:[%s5 + $0x58] sm:$0xff] %vm10323, %v10315
    %10336 = vst.msk [vmem:[%s5 + $0x60] sm:$0xff] %vm10323, %v10320
    // Predicated region
    $region26: #{tpu_custom_call.1} parent=1 // pred_check
      _
    $region27: #{tpu_custom_call.1} parent=1 // pred_check_branch
      %10338 = sbr.rel (0) target = $region29
    $region28: #{tpu_custom_call.1} parent=1 // pred_region
      _
    $region29: #{tpu_custom_call.1} parent=1 // pred_fallthru
      _
    // Predicated region
    $region30: #{tpu_custom_call.1} parent=1 // pred_check
      _
    $region31: #{tpu_custom_call.1} parent=1 // pred_check_branch
      %10340 = sbr.rel (0) target = $region33
    $region32: #{tpu_custom_call.1} parent=1 // pred_region
      _
    $region33: #{tpu_custom_call.1} parent=1 // pred_fallthru
      _
    %10341 = vsyncpa [#allocation3], 1

</llo_original>
